<compile_context>
chip_gen: v6e
topology: v6e:2x2x1
jax: 0.10.0
libtpu: 0.0.40
codegen_flags: <defaults>
</compile_context>

<pallas_src>
import math

import jax
import jax.numpy as jnp
from jax import lax
from jax.experimental import pallas as pl
from jax.experimental.pallas import tpu as pltpu


def _round_up(x, m):
    return -(-x // m) * m


def _vmem_limit_bytes():
    # Per-generation VMEM cap: big tiles on v5e/v6e (128 MiB), conservative on
    # v7x (64 MiB).  Fallback is safe everywhere.
    cap = 64 * 1024 * 1024
    try:
        cap = int(pltpu.get_tpu_info().vmem_capacity_bytes)
    except Exception:
        pass
    return int(max(32 * 1024 * 1024,
                   min(cap - 16 * 1024 * 1024, 100 * 1024 * 1024)))


# --------------------------- fused DownConv kernel ---------------------------

def _make_fused_kernel(H, W, K1, Cp, DD):
    """One grid step = one batch element x two conv2 output D-planes."""
    HW = H * W
    K2 = 3 * Cp
    f32 = jnp.float32

    def kernel(xa_ref, xb_ref, xc_ref, w1_ref, b1_ref, w2_ref, b2_ref,
               o_ref, p_ref, ring_ref):
        # xa/xb/xc: (1, 2, H+2, W, K1) kw-folded padded-input windows at
        #           D-block indices dd, dd+1, dd+2 (padded plane p lives in
        #           window (p//2 - dd), local p%2).
        # w1: (3, 3, K1, Cp)   w2: (3, 3, 3*Cp, Cp)   b*: (1, Cp) f32
        # o_ref: (1, 2, H, W, Cp)   p_ref: (1, 1, H//2, W//2, Cp)
        # ring_ref: (4, H+2, W+2, Cp) bf16 -- padded-h1 plane q in slot q % 4.
        dd = pl.program_id(1)
        windows = (xa_ref, xb_ref, xc_ref)

        bias1 = b1_ref[...].astype(f32)                   # hoisted
        bias2 = b2_ref[...].astype(f32)

        def dot32(a, b):
            return jnp.dot(a, b, preferred_element_type=f32)

        def x_slab(win, li, kh):
            # kw-pre-folded conv1 operand: (HW, 3*Cin); view + reshape only,
            # no lane-misaligned concat in the kernel.
            return windows[win][0, li, kh:kh + H].reshape(HW, K1)

        def pad_hw(y):
            # (H, W, Cp) -> (H+2, W+2, Cp) zero spatial border, so conv2 can
            # slice kh/kw windows without boundary masking.
            zc = jnp.zeros((H, 1, Cp), y.dtype)
            y = jnp.concatenate([zc, y, zc], axis=1)
            zr = jnp.zeros((1, W + 2, Cp), y.dtype)
            return jnp.concatenate([zr, y, zr], axis=0)

        # ---- step-0 warm-up: q=0 zero D-halo plane + h1 plane 0 (q=1). ------
        @pl.when(dd == 0)
        def _():
            ring_ref[0] = jnp.zeros((H + 2, W + 2, Cp), ring_ref.dtype)
            acc = jnp.zeros((HW, Cp), f32)
            for kd, (win, li) in enumerate(((0, 0), (0, 1), (1, 0))):
                for kh in range(3):
                    acc = acc + dot32(x_slab(win, li, kh), w1_ref[kd, kh])
            h0 = jnp.maximum(acc + bias1, 0.0).astype(ring_ref.dtype)
            ring_ref[1] = pad_hw(h0.reshape(H, W, Cp))

        # ---- conv1: the two new h1 planes this step introduces. -------------
        #   hA = h1[2dd+1] -> padded-h1 q = 2dd+2
        #   hB = h1[2dd+2] -> padded-h1 q = 2dd+3
        # Each input slab (relative padded plane r = 1..4, kh) is built once
        # and feeds both accumulators (tap kd = r-1 for hA, r-2 for hB).
        accA = jnp.zeros((HW, Cp), f32)
        accB = jnp.zeros((HW, Cp), f32)
        for r, (win, li) in ((1, (0, 1)), (2, (1, 0)), (3, (1, 1)), (4, (2, 0))):
            for kh in range(3):
                slab = x_slab(win, li, kh)
                if 0 <= r - 1 <= 2:
                    accA = accA + dot32(slab, w1_ref[r - 1, kh])
                if 0 <= r - 2 <= 2:
                    accB = accB + dot32(slab, w1_ref[r - 2, kh])
        hA = jnp.maximum(accA + bias1, 0.0)
        hB = jnp.maximum(accB + bias1, 0.0)
        # On the last step q = 2dd+3 = D+1 is conv2's zero D-halo, not a real
        # conv1 output: mask it to zero.
        hB = hB * (dd < DD - 1).astype(f32)
        padA = pad_hw(hA.astype(ring_ref.dtype).reshape(H, W, Cp))
        padB = pad_hw(hB.astype(ring_ref.dtype).reshape(H, W, Cp))

        # Slot of plane q is q % 4; 2*dd % 4 depends only on dd's parity, so
        # the stores use static slot indices.
        @pl.when(dd % 2 == 0)
        def _():
            ring_ref[2] = padA
            ring_ref[3] = padB

        @pl.when(dd % 2 == 1)
        def _():
            ring_ref[0] = padA
            ring_ref[1] = padB

        # ---- conv2 + bias + ReLU on ring planes q = 2dd .. 2dd+3. -----------
        # Each (plane, kh) im2col slab is built once and accumulated into both
        # output-plane accumulators with the appropriate kd tap of w2.
        acc0 = jnp.zeros((HW, Cp), f32)                   # output plane 2dd
        acc1 = jnp.zeros((HW, Cp), f32)                   # output plane 2dd+1
        for t in range(4):
            plane = ring_ref[(2 * dd + t) % 4]            # (H+2, W+2, Cp) bf16
            for kh in range(3):
                rows = plane[kh:kh + H]                   # (H, W+2, Cp)
                slab = jnp.concatenate(
                    [rows[:, kw:kw + W] for kw in range(3)],
                    axis=-1).reshape(HW, K2)
                if t <= 2:
                    acc0 = acc0 + dot32(slab, w2_ref[t, kh])
                if t >= 1:
                    acc1 = acc1 + dot32(slab, w2_ref[t - 1, kh])
        y0 = jnp.maximum(acc0 + bias2, 0.0).reshape(H, W, Cp)
        y1 = jnp.maximum(acc1 + bias2, 0.0).reshape(H, W, Cp)
        o_ref[0, 0] = y0.astype(o_ref.dtype)
        o_ref[0, 1] = y1.astype(o_ref.dtype)

        # ---- fused MaxPool3d(2): before_pool never round-trips through HBM.
        m = jnp.maximum(y0, y1).reshape(H // 2, 2, W // 2, 2, Cp)
        m = jnp.maximum(m[:, 0], m[:, 1])
        m = jnp.maximum(m[:, :, 0], m[:, :, 1])
        p_ref[0, 0] = m.astype(p_ref.dtype)

    return kernel


def fused_downconv(x1, w1, b1, w2, b2, *, D, H, W, Cp,
                   out_dtype=jnp.bfloat16):
    """Fused Conv3d+ReLU -> Conv3d+ReLU -> MaxPool3d(2), channels-last.

    x1: (N, D+4, H+2, W, 3*Cin)  kw-folded, spatially zero-padded, bf16.
    Returns (before_pool_padded, pooled_padded) with Cp channels, `out_dtype`.
    """
    N, Dp4, Hp2, Wb, K1 = x1.shape
    assert Dp4 == D + 4 and Hp2 == H + 2 and Wb == W
    DD = D // 2
    kernel = _make_fused_kernel(H, W, K1, Cp, DD)

    out_shape = (
        jax.ShapeDtypeStruct((N, D, H, W, Cp), out_dtype),
        jax.ShapeDtypeStruct((N, DD, H // 2, W // 2, Cp), out_dtype),
    )
    in_specs = [
        pl.BlockSpec((1, 2, H + 2, W, K1), lambda n, dd: (n, dd, 0, 0, 0)),
        pl.BlockSpec((1, 2, H + 2, W, K1), lambda n, dd: (n, dd + 1, 0, 0, 0)),
        pl.BlockSpec((1, 2, H + 2, W, K1), lambda n, dd: (n, dd + 2, 0, 0, 0)),
        pl.BlockSpec(w1.shape, lambda n, dd: (0, 0, 0, 0)),
        pl.BlockSpec(b1.shape, lambda n, dd: (0, 0)),
        pl.BlockSpec(w2.shape, lambda n, dd: (0, 0, 0, 0)),
        pl.BlockSpec(b2.shape, lambda n, dd: (0, 0)),
    ]
    out_specs = (
        pl.BlockSpec((1, 2, H, W, Cp), lambda n, dd: (n, dd, 0, 0, 0)),
        pl.BlockSpec((1, 1, H // 2, W // 2, Cp), lambda n, dd: (n, dd, 0, 0, 0)),
    )
    scratch_shapes = [pltpu.VMEM((4, H + 2, W + 2, Cp), jnp.bfloat16)]

    flops = 2 * N * D * H * W * Cp * (9 * K1 + 27 * Cp)
    bytes_out = sum(math.prod(s.shape) * jnp.dtype(s.dtype).itemsize
                    for s in out_shape)
    bytes_in = (3 * x1.size * x1.dtype.itemsize
                + w1.size * w1.dtype.itemsize + w2.size * w2.dtype.itemsize
                + (b1.size + b2.size) * 4)
    cost = pl.CostEstimate(flops=int(flops), transcendentals=0,
                           bytes_accessed=int(bytes_in + bytes_out))

    return pl.pallas_call(
        kernel,
        out_shape=out_shape,
        grid=(N, DD),
        in_specs=in_specs,
        out_specs=out_specs,
        scratch_shapes=scratch_shapes,
        compiler_params=pltpu.CompilerParams(
            # N is parallel (megacore); D is serial so the h1 ring is valid.
            dimension_semantics=("parallel", "arbitrary"),
            vmem_limit_bytes=_vmem_limit_bytes()),
        cost_estimate=cost,
    )(x1, x1, x1, w1, b1, w2, b2)


# ----------------------------- Parameter prep --------------------------------

def _prep_conv_params(w, b, cin_pad, cp):
    """(Cout,Cin,3,3,3) torch layout -> (3,3,3*cin_pad,cp) bf16 taps (K ordered
    kw*cin_pad + ci) and a (1, cp) f32 bias row."""
    cout, cin = w.shape[0], w.shape[1]
    wt = jnp.transpose(w, (2, 3, 4, 1, 0))                # (kd, kh, kw, ci, co)
    wt = jnp.pad(wt, ((0, 0), (0, 0), (0, 0),
                      (0, cin_pad - cin), (0, cp - cout)))
    wt = wt.reshape(3, 3, 3 * cin_pad, cp).astype(jnp.bfloat16)
    bb = jnp.pad(b, (0, cp - cout)).astype(jnp.float32).reshape(1, cp)
    return wt, bb


def init_downconv_params(key, in_channels, out_channels):
    """Deterministic init mirroring torch Conv3d default (kaiming_uniform, a=sqrt(5))."""
    params = {}
    k = key
    for name, cin, cout in (("conv1", in_channels, out_channels),
                            ("conv2", out_channels, out_channels)):
        k, kw, kb = jax.random.split(k, 3)
        fan_in = cin * 3 * 3 * 3
        bound = 1.0 / jnp.sqrt(jnp.float32(fan_in))
        params[name + "_w"] = jax.random.uniform(
            kw, (cout, cin, 3, 3, 3), jnp.float32, -bound, bound)
        params[name + "_b"] = jax.random.uniform(
            kb, (cout,), jnp.float32, -bound, bound)
    return params


# ----------------------------- Module wrapper --------------------------------

@jax.jit
def downconv_forward(x_ncdhw, params):
    """DownConv forward.  x: (N, C, D, H, W) -> (pooled, before_pool), NCDHW f32."""
    N, Cin, D, H, W = x_ncdhw.shape
    assert D % 2 == 0 and H % 2 == 0 and W % 2 == 0, \
        "MaxPool3d(2) fusion assumes even spatial dims (PyTorch floors odd dims)"
    Cout = params["conv1_w"].shape[0]
    Cp = _round_up(Cout, 128)            # lane-dense channel padding

    # NCDHW -> NDHWC bf16.  D halo padded (1, 3) so the last grid step's third
    # 2-plane window stays in range; H/W halo (1, 1).
    x = jnp.transpose(x_ncdhw, (0, 2, 3, 4, 1)).astype(jnp.bfloat16)
    xp = jnp.pad(x, ((0, 0), (1, 3), (1, 1), (1, 1), (0, 0)))
    # Wrapper-side kw-im2col fold for conv1 (channel index = kw*Cin + ci):
    # removes the lane-misaligned small-Cin concat from the kernel inner loop.
    x1 = jnp.concatenate([xp[:, :, :, kw:kw + W, :] for kw in range(3)],
                         axis=-1)                          # (N, D+4, H+2, W, 3*Cin)

    w1, b1 = _prep_conv_params(params["conv1_w"], params["conv1_b"], Cin, Cp)
    w2, b2 = _prep_conv_params(params["conv2_w"], params["conv2_b"], Cp, Cp)

    before_p, pooled_p = fused_downconv(x1, w1, b1, w2, b2,
                                        D=D, H=H, W=W, Cp=Cp)

    # Drop channel padding, back to PyTorch NCDHW f32.
    before_pool = jnp.transpose(before_p[..., :Cout],
                                (0, 4, 1, 2, 3)).astype(jnp.float32)
    pooled = jnp.transpose(pooled_p[..., :Cout],
                           (0, 4, 1, 2, 3)).astype(jnp.float32)
    return pooled, before_pool


# ----------------------------- Reference & test ------------------------------

def _reference(x, params):
    # Mirrors the Pallas path's precision choices (bf16 operands, bf16 h1
    # storage, f32 accumulation), so differences are accumulation-order plus
    # the bf16 output rounding only.
    bf = lambda a: a.astype(jnp.bfloat16).astype(jnp.float32)

    def conv(h, w, b):
        y = lax.conv_general_dilated(
            bf(h), bf(w), window_strides=(1, 1, 1), padding=((1, 1),) * 3,
            dimension_numbers=("NCDHW", "OIDHW", "NCDHW"))
        return jax.nn.relu(y + b[None, :, None, None, None])

    h = conv(x, params["conv1_w"], params["conv1_b"])
    h = bf(h)                                            # bf16 ring storage
    h = conv(h, params["conv2_w"], params["conv2_b"])
    pooled = lax.reduce_window(h, -jnp.inf, lax.max,
                               (1, 1, 2, 2, 2), (1, 1, 2, 2, 2), "VALID")
    return pooled, h


if __name__ == "__main__":
    key = jax.random.PRNGKey(0)
    kx, kp = jax.random.split(key)
    N, Cin, Cout, D, H, W = 2, 4, 8, 8, 8, 8
    x = jax.random.normal(kx, (N, Cin, D, H, W), jnp.float32)
    params = init_downconv_params(kp, Cin, Cout)

    pooled, before_pool = downconv_forward(x, params)
    jax.block_until_ready((pooled, before_pool))

    assert pooled.shape == (N, Cout, D // 2, H // 2, W // 2), pooled.shape
    assert before_pool.shape == (N, Cout, D, H, W), before_pool.shape

    ref_pooled, ref_before = _reference(x, params)
    err_b = float(jnp.max(jnp.abs(before_pool - ref_before)))
    err_p = float(jnp.max(jnp.abs(pooled - ref_pooled)))
    # bf16 operands + bf16 activation storage => ~0.4% relative rounding.
    assert err_b < 2e-2, err_b
    assert err_p < 2e-2, err_p

    print("KERNEL_OK")
</pallas_src>

<mosaic_0001>
module attributes {stable_mosaic.version = 11 : i64} {
  func.func @kernel(%arg0: i32, %arg1: i32, %arg2: memref<1x2x10x8x12xbf16, #tpu.memory_space<vmem>>, %arg3: memref<1x2x10x8x12xbf16, #tpu.memory_space<vmem>>, %arg4: memref<1x2x10x8x12xbf16, #tpu.memory_space<vmem>>, %arg5: memref<3x3x12x128xbf16, #tpu.memory_space<vmem>>, %arg6: memref<1x128xf32, #tpu.memory_space<vmem>>, %arg7: memref<3x3x384x128xbf16, #tpu.memory_space<vmem>>, %arg8: memref<1x128xf32, #tpu.memory_space<vmem>>, %arg9: memref<1x2x8x8x128xbf16, #tpu.memory_space<vmem>>, %arg10: memref<1x1x4x4x128xbf16, #tpu.memory_space<vmem>>, %arg11: memref<4x10x10x128xbf16, #tpu.memory_space<vmem>>) attributes {dimension_semantics = [#tpu.dimension_semantics<parallel>, #tpu.dimension_semantics<arbitrary>], iteration_bounds = array<i64: 2, 4>, scalar_prefetch = 0 : i64, scratch_operands = 1 : i64, tpu.core_type = #tpu.core_type<tc>, window_params = [{transform_indices = @transform_0, window_bounds = array<i64: 1, 2, 10, 8, 12>}, {transform_indices = @transform_1, window_bounds = array<i64: 1, 2, 10, 8, 12>}, {transform_indices = @transform_2, window_bounds = array<i64: 1, 2, 10, 8, 12>}, {pipeline_mode = #tpu.pipeline_mode<synchronous>, transform_indices = @transform_3, window_bounds = array<i64: 3, 3, 12, 128>}, {pipeline_mode = #tpu.pipeline_mode<synchronous>, transform_indices = @transform_4, window_bounds = array<i64: 1, 128>}, {pipeline_mode = #tpu.pipeline_mode<synchronous>, transform_indices = @transform_5, window_bounds = array<i64: 3, 3, 384, 128>}, {pipeline_mode = #tpu.pipeline_mode<synchronous>, transform_indices = @transform_6, window_bounds = array<i64: 1, 128>}, {transform_indices = @transform_7, window_bounds = array<i64: 1, 2, 8, 8, 128>}, {transform_indices = @transform_8, window_bounds = array<i64: 1, 1, 4, 4, 128>}]} {
    %c0 = arith.constant 0 : index
    %c0_0 = arith.constant 0 : index
    %0 = vector.load %arg6[%c0, %c0_0] : memref<1x128xf32, #tpu.memory_space<vmem>>, vector<1x128xf32>
    %c0_1 = arith.constant 0 : index
    %c0_2 = arith.constant 0 : index
    %1 = vector.load %arg8[%c0_1, %c0_2] : memref<1x128xf32, #tpu.memory_space<vmem>>, vector<1x128xf32>
    %c0_i32 = arith.constant 0 : i32
    %2 = arith.cmpi eq, %arg1, %c0_i32 : i32
    %3 = arith.extui %2 : i1 to i32
    %c0_i32_3 = arith.constant 0 : i32
    %4 = arith.cmpi ne, %3, %c0_i32_3 : i32
    scf.if %4 {
      %cst_325 = arith.constant 0.000000e+00 : bf16
      %406 = vector.broadcast %cst_325 : bf16 to vector<10x10x128xbf16>
      %c0_326 = arith.constant 0 : index
      %c0_327 = arith.constant 0 : index
      %c0_328 = arith.constant 0 : index
      %c0_329 = arith.constant 0 : index
      %407 = vector.load %arg11[%c0_326, %c0_327, %c0_328, %c0_329] : memref<4x10x10x128xbf16, #tpu.memory_space<vmem>>, vector<1x10x10x128xbf16>
      %408 = vector.shape_cast %407 : vector<1x10x10x128xbf16> to vector<10x10x128xbf16>
      %409 = vector.shape_cast %406 : vector<10x10x128xbf16> to vector<1x10x10x128xbf16>
      tpu.vector_store %arg11[%c0_326, %c0_327, %c0_328, %c0_329], %409 {strides = array<i32>} : memref<4x10x10x128xbf16, #tpu.memory_space<vmem>>, vector<1x10x10x128xbf16>,
      %cst_330 = arith.constant 0.000000e+00 : f32
      %410 = vector.broadcast %cst_330 : f32 to vector<64x128xf32>
      %c0_331 = arith.constant 0 : index
      %c0_332 = arith.constant 0 : index
      %c0_333 = arith.constant 0 : index
      %c0_334 = arith.constant 0 : index
      %c0_335 = arith.constant 0 : index
      %411 = vector.load %arg2[%c0_331, %c0_332, %c0_333, %c0_334, %c0_335] : memref<1x2x10x8x12xbf16, #tpu.memory_space<vmem>>, vector<1x1x8x8x12xbf16>
      %412 = vector.shape_cast %411 : vector<1x1x8x8x12xbf16> to vector<8x8x12xbf16>
      %413 = vector.shape_cast %412 : vector<8x8x12xbf16> to vector<64x12xbf16>
      %c0_336 = arith.constant 0 : index
      %c0_337 = arith.constant 0 : index
      %c0_338 = arith.constant 0 : index
      %c0_339 = arith.constant 0 : index
      %414 = vector.load %arg5[%c0_336, %c0_337, %c0_338, %c0_339] : memref<3x3x12x128xbf16, #tpu.memory_space<vmem>>, vector<1x1x12x128xbf16>
      %415 = vector.shape_cast %414 : vector<1x1x12x128xbf16> to vector<12x128xbf16>
      %cst_340 = arith.constant dense<0.000000e+00> : vector<64x128xf32>
      %416 = tpu.matmul %413, %415, %cst_340 {dimension_numbers = #tpu.dot_dimension_numbers<[1], [0], [0], [1], [0, 0, 1, 1], [], []>} : vector<64x12xbf16>, vector<12x128xbf16>, vector<64x128xf32> -> vector<64x128xf32>
      %417 = arith.addf %410, %416 : vector<64x128xf32>
      %c0_341 = arith.constant 0 : index
      %c0_342 = arith.constant 0 : index
      %c1_343 = arith.constant 1 : index
      %c0_344 = arith.constant 0 : index
      %c0_345 = arith.constant 0 : index
      %418 = vector.load %arg2[%c0_341, %c0_342, %c1_343, %c0_344, %c0_345] : memref<1x2x10x8x12xbf16, #tpu.memory_space<vmem>>, vector<1x1x8x8x12xbf16>
      %419 = vector.shape_cast %418 : vector<1x1x8x8x12xbf16> to vector<8x8x12xbf16>
      %420 = vector.shape_cast %419 : vector<8x8x12xbf16> to vector<64x12xbf16>
      %c0_346 = arith.constant 0 : index
      %c1_347 = arith.constant 1 : index
      %c0_348 = arith.constant 0 : index
      %c0_349 = arith.constant 0 : index
      %421 = vector.load %arg5[%c0_346, %c1_347, %c0_348, %c0_349] : memref<3x3x12x128xbf16, #tpu.memory_space<vmem>>, vector<1x1x12x128xbf16>
      %422 = vector.shape_cast %421 : vector<1x1x12x128xbf16> to vector<12x128xbf16>
      %cst_350 = arith.constant dense<0.000000e+00> : vector<64x128xf32>
      %423 = tpu.matmul %420, %422, %cst_350 {dimension_numbers = #tpu.dot_dimension_numbers<[1], [0], [0], [1], [0, 0, 1, 1], [], []>} : vector<64x12xbf16>, vector<12x128xbf16>, vector<64x128xf32> -> vector<64x128xf32>
      %424 = arith.addf %417, %423 : vector<64x128xf32>
      %c0_351 = arith.constant 0 : index
      %c0_352 = arith.constant 0 : index
      %c2_353 = arith.constant 2 : index
      %c0_354 = arith.constant 0 : index
      %c0_355 = arith.constant 0 : index
      %425 = vector.load %arg2[%c0_351, %c0_352, %c2_353, %c0_354, %c0_355] : memref<1x2x10x8x12xbf16, #tpu.memory_space<vmem>>, vector<1x1x8x8x12xbf16>
      %426 = vector.shape_cast %425 : vector<1x1x8x8x12xbf16> to vector<8x8x12xbf16>
      %427 = vector.shape_cast %426 : vector<8x8x12xbf16> to vector<64x12xbf16>
      %c0_356 = arith.constant 0 : index
      %c2_357 = arith.constant 2 : index
      %c0_358 = arith.constant 0 : index
      %c0_359 = arith.constant 0 : index
      %428 = vector.load %arg5[%c0_356, %c2_357, %c0_358, %c0_359] : memref<3x3x12x128xbf16, #tpu.memory_space<vmem>>, vector<1x1x12x128xbf16>
      %429 = vector.shape_cast %428 : vector<1x1x12x128xbf16> to vector<12x128xbf16>
      %cst_360 = arith.constant dense<0.000000e+00> : vector<64x128xf32>
      %430 = tpu.matmul %427, %429, %cst_360 {dimension_numbers = #tpu.dot_dimension_numbers<[1], [0], [0], [1], [0, 0, 1, 1], [], []>} : vector<64x12xbf16>, vector<12x128xbf16>, vector<64x128xf32> -> vector<64x128xf32>
      %431 = arith.addf %424, %430 : vector<64x128xf32>
      %c0_361 = arith.constant 0 : index
      %c1_362 = arith.constant 1 : index
      %c0_363 = arith.constant 0 : index
      %c0_364 = arith.constant 0 : index
      %c0_365 = arith.constant 0 : index
      %432 = vector.load %arg2[%c0_361, %c1_362, %c0_363, %c0_364, %c0_365] : memref<1x2x10x8x12xbf16, #tpu.memory_space<vmem>>, vector<1x1x8x8x12xbf16>
      %433 = vector.shape_cast %432 : vector<1x1x8x8x12xbf16> to vector<8x8x12xbf16>
      %434 = vector.shape_cast %433 : vector<8x8x12xbf16> to vector<64x12xbf16>
      %c1_366 = arith.constant 1 : index
      %c0_367 = arith.constant 0 : index
      %c0_368 = arith.constant 0 : index
      %c0_369 = arith.constant 0 : index
      %435 = vector.load %arg5[%c1_366, %c0_367, %c0_368, %c0_369] : memref<3x3x12x128xbf16, #tpu.memory_space<vmem>>, vector<1x1x12x128xbf16>
      %436 = vector.shape_cast %435 : vector<1x1x12x128xbf16> to vector<12x128xbf16>
      %cst_370 = arith.constant dense<0.000000e+00> : vector<64x128xf32>
      %437 = tpu.matmul %434, %436, %cst_370 {dimension_numbers = #tpu.dot_dimension_numbers<[1], [0], [0], [1], [0, 0, 1, 1], [], []>} : vector<64x12xbf16>, vector<12x128xbf16>, vector<64x128xf32> -> vector<64x128xf32>
      %438 = arith.addf %431, %437 : vector<64x128xf32>
      %c0_371 = arith.constant 0 : index
      %c1_372 = arith.constant 1 : index
      %c1_373 = arith.constant 1 : index
      %c0_374 = arith.constant 0 : index
      %c0_375 = arith.constant 0 : index
      %439 = vector.load %arg2[%c0_371, %c1_372, %c1_373, %c0_374, %c0_375] : memref<1x2x10x8x12xbf16, #tpu.memory_space<vmem>>, vector<1x1x8x8x12xbf16>
      %440 = vector.shape_cast %439 : vector<1x1x8x8x12xbf16> to vector<8x8x12xbf16>
      %441 = vector.shape_cast %440 : vector<8x8x12xbf16> to vector<64x12xbf16>
      %c1_376 = arith.constant 1 : index
      %c1_377 = arith.constant 1 : index
      %c0_378 = arith.constant 0 : index
      %c0_379 = arith.constant 0 : index
      %442 = vector.load %arg5[%c1_376, %c1_377, %c0_378, %c0_379] : memref<3x3x12x128xbf16, #tpu.memory_space<vmem>>, vector<1x1x12x128xbf16>
      %443 = vector.shape_cast %442 : vector<1x1x12x128xbf16> to vector<12x128xbf16>
      %cst_380 = arith.constant dense<0.000000e+00> : vector<64x128xf32>
      %444 = tpu.matmul %441, %443, %cst_380 {dimension_numbers = #tpu.dot_dimension_numbers<[1], [0], [0], [1], [0, 0, 1, 1], [], []>} : vector<64x12xbf16>, vector<12x128xbf16>, vector<64x128xf32> -> vector<64x128xf32>
      %445 = arith.addf %438, %444 : vector<64x128xf32>
      %c0_381 = arith.constant 0 : index
      %c1_382 = arith.constant 1 : index
      %c2_383 = arith.constant 2 : index
      %c0_384 = arith.constant 0 : index
      %c0_385 = arith.constant 0 : index
      %446 = vector.load %arg2[%c0_381, %c1_382, %c2_383, %c0_384, %c0_385] : memref<1x2x10x8x12xbf16, #tpu.memory_space<vmem>>, vector<1x1x8x8x12xbf16>
      %447 = vector.shape_cast %446 : vector<1x1x8x8x12xbf16> to vector<8x8x12xbf16>
      %448 = vector.shape_cast %447 : vector<8x8x12xbf16> to vector<64x12xbf16>
      %c1_386 = arith.constant 1 : index
      %c2_387 = arith.constant 2 : index
      %c0_388 = arith.constant 0 : index
      %c0_389 = arith.constant 0 : index
      %449 = vector.load %arg5[%c1_386, %c2_387, %c0_388, %c0_389] : memref<3x3x12x128xbf16, #tpu.memory_space<vmem>>, vector<1x1x12x128xbf16>
      %450 = vector.shape_cast %449 : vector<1x1x12x128xbf16> to vector<12x128xbf16>
      %cst_390 = arith.constant dense<0.000000e+00> : vector<64x128xf32>
      %451 = tpu.matmul %448, %450, %cst_390 {dimension_numbers = #tpu.dot_dimension_numbers<[1], [0], [0], [1], [0, 0, 1, 1], [], []>} : vector<64x12xbf16>, vector<12x128xbf16>, vector<64x128xf32> -> vector<64x128xf32>
      %452 = arith.addf %445, %451 : vector<64x128xf32>
      %c0_391 = arith.constant 0 : index
      %c0_392 = arith.constant 0 : index
      %c0_393 = arith.constant 0 : index
      %c0_394 = arith.constant 0 : index
      %c0_395 = arith.constant 0 : index
      %453 = vector.load %arg3[%c0_391, %c0_392, %c0_393, %c0_394, %c0_395] : memref<1x2x10x8x12xbf16, #tpu.memory_space<vmem>>, vector<1x1x8x8x12xbf16>
      %454 = vector.shape_cast %453 : vector<1x1x8x8x12xbf16> to vector<8x8x12xbf16>
      %455 = vector.shape_cast %454 : vector<8x8x12xbf16> to vector<64x12xbf16>
      %c2_396 = arith.constant 2 : index
      %c0_397 = arith.constant 0 : index
      %c0_398 = arith.constant 0 : index
      %c0_399 = arith.constant 0 : index
      %456 = vector.load %arg5[%c2_396, %c0_397, %c0_398, %c0_399] : memref<3x3x12x128xbf16, #tpu.memory_space<vmem>>, vector<1x1x12x128xbf16>
      %457 = vector.shape_cast %456 : vector<1x1x12x128xbf16> to vector<12x128xbf16>
      %cst_400 = arith.constant dense<0.000000e+00> : vector<64x128xf32>
      %458 = tpu.matmul %455, %457, %cst_400 {dimension_numbers = #tpu.dot_dimension_numbers<[1], [0], [0], [1], [0, 0, 1, 1], [], []>} : vector<64x12xbf16>, vector<12x128xbf16>, vector<64x128xf32> -> vector<64x128xf32>
      %459 = arith.addf %452, %458 : vector<64x128xf32>
      %c0_401 = arith.constant 0 : index
      %c0_402 = arith.constant 0 : index
      %c1_403 = arith.constant 1 : index
      %c0_404 = arith.constant 0 : index
      %c0_405 = arith.constant 0 : index
      %460 = vector.load %arg3[%c0_401, %c0_402, %c1_403, %c0_404, %c0_405] : memref<1x2x10x8x12xbf16, #tpu.memory_space<vmem>>, vector<1x1x8x8x12xbf16>
      %461 = vector.shape_cast %460 : vector<1x1x8x8x12xbf16> to vector<8x8x12xbf16>
      %462 = vector.shape_cast %461 : vector<8x8x12xbf16> to vector<64x12xbf16>
      %c2_406 = arith.constant 2 : index
      %c1_407 = arith.constant 1 : index
      %c0_408 = arith.constant 0 : index
      %c0_409 = arith.constant 0 : index
      %463 = vector.load %arg5[%c2_406, %c1_407, %c0_408, %c0_409] : memref<3x3x12x128xbf16, #tpu.memory_space<vmem>>, vector<1x1x12x128xbf16>
      %464 = vector.shape_cast %463 : vector<1x1x12x128xbf16> to vector<12x128xbf16>
      %cst_410 = arith.constant dense<0.000000e+00> : vector<64x128xf32>
      %465 = tpu.matmul %462, %464, %cst_410 {dimension_numbers = #tpu.dot_dimension_numbers<[1], [0], [0], [1], [0, 0, 1, 1], [], []>} : vector<64x12xbf16>, vector<12x128xbf16>, vector<64x128xf32> -> vector<64x128xf32>
      %466 = arith.addf %459, %465 : vector<64x128xf32>
      %c0_411 = arith.constant 0 : index
      %c0_412 = arith.constant 0 : index
      %c2_413 = arith.constant 2 : index
      %c0_414 = arith.constant 0 : index
      %c0_415 = arith.constant 0 : index
      %467 = vector.load %arg3[%c0_411, %c0_412, %c2_413, %c0_414, %c0_415] : memref<1x2x10x8x12xbf16, #tpu.memory_space<vmem>>, vector<1x1x8x8x12xbf16>
      %468 = vector.shape_cast %467 : vector<1x1x8x8x12xbf16> to vector<8x8x12xbf16>
      %469 = vector.shape_cast %468 : vector<8x8x12xbf16> to vector<64x12xbf16>
      %c2_416 = arith.constant 2 : index
      %c2_417 = arith.constant 2 : index
      %c0_418 = arith.constant 0 : index
      %c0_419 = arith.constant 0 : index
      %470 = vector.load %arg5[%c2_416, %c2_417, %c0_418, %c0_419] : memref<3x3x12x128xbf16, #tpu.memory_space<vmem>>, vector<1x1x12x128xbf16>
      %471 = vector.shape_cast %470 : vector<1x1x12x128xbf16> to vector<12x128xbf16>
      %cst_420 = arith.constant dense<0.000000e+00> : vector<64x128xf32>
      %472 = tpu.matmul %469, %471, %cst_420 {dimension_numbers = #tpu.dot_dimension_numbers<[1], [0], [0], [1], [0, 0, 1, 1], [], []>} : vector<64x12xbf16>, vector<12x128xbf16>, vector<64x128xf32> -> vector<64x128xf32>
      %473 = arith.addf %466, %472 : vector<64x128xf32>
      %474 = vector.broadcast %0 : vector<1x128xf32> to vector<64x128xf32>
      %475 = arith.addf %473, %474 : vector<64x128xf32>
      %cst_421 = arith.constant 0.000000e+00 : f32
      %476 = vector.broadcast %cst_421 : f32 to vector<64x128xf32>
      %477 = arith.maximumf %475, %476 : vector<64x128xf32>
      %478 = arith.truncf %477 : vector<64x128xf32> to vector<64x128xbf16>
      %479 = vector.shape_cast %478 : vector<64x128xbf16> to vector<8x8x128xbf16>
      %cst_422 = arith.constant 0.000000e+00 : bf16
      %480 = vector.broadcast %cst_422 : bf16 to vector<8x1x128xbf16>
      %481 = tpu.concatenate %480, %479, %480 in 1 : vector<8x1x128xbf16>, vector<8x8x128xbf16>, vector<8x1x128xbf16> -> vector<8x10x128xbf16>
      %cst_423 = arith.constant 0.000000e+00 : bf16
      %482 = vector.broadcast %cst_423 : bf16 to vector<1x10x128xbf16>
      %483 = tpu.concatenate %482, %481, %482 in 0 : vector<1x10x128xbf16>, vector<8x10x128xbf16>, vector<1x10x128xbf16> -> vector<10x10x128xbf16>
      %c1_424 = arith.constant 1 : index
      %c0_425 = arith.constant 0 : index
      %c0_426 = arith.constant 0 : index
      %c0_427 = arith.constant 0 : index
      %484 = vector.load %arg11[%c1_424, %c0_425, %c0_426, %c0_427] : memref<4x10x10x128xbf16, #tpu.memory_space<vmem>>, vector<1x10x10x128xbf16>
      %485 = vector.shape_cast %484 : vector<1x10x10x128xbf16> to vector<10x10x128xbf16>
      %486 = vector.shape_cast %483 : vector<10x10x128xbf16> to vector<1x10x10x128xbf16>
      tpu.vector_store %arg11[%c1_424, %c0_425, %c0_426, %c0_427], %486 {strides = array<i32>} : memref<4x10x10x128xbf16, #tpu.memory_space<vmem>>, vector<1x10x10x128xbf16>,
    } else {
    }
    %cst = arith.constant 0.000000e+00 : f32
    %5 = vector.broadcast %cst : f32 to vector<64x128xf32>
    %cst_4 = arith.constant 0.000000e+00 : f32
    %6 = vector.broadcast %cst_4 : f32 to vector<64x128xf32>
    %c0_5 = arith.constant 0 : index
    %c1 = arith.constant 1 : index
    %c0_6 = arith.constant 0 : index
    %c0_7 = arith.constant 0 : index
    %c0_8 = arith.constant 0 : index
    %7 = vector.load %arg2[%c0_5, %c1, %c0_6, %c0_7, %c0_8] : memref<1x2x10x8x12xbf16, #tpu.memory_space<vmem>>, vector<1x1x8x8x12xbf16>
    %8 = vector.shape_cast %7 : vector<1x1x8x8x12xbf16> to vector<8x8x12xbf16>
    %9 = vector.shape_cast %8 : vector<8x8x12xbf16> to vector<64x12xbf16>
    %c0_9 = arith.constant 0 : index
    %c0_10 = arith.constant 0 : index
    %c0_11 = arith.constant 0 : index
    %c0_12 = arith.constant 0 : index
    %10 = vector.load %arg5[%c0_9, %c0_10, %c0_11, %c0_12] : memref<3x3x12x128xbf16, #tpu.memory_space<vmem>>, vector<1x1x12x128xbf16>
    %11 = vector.shape_cast %10 : vector<1x1x12x128xbf16> to vector<12x128xbf16>
    %cst_13 = arith.constant dense<0.000000e+00> : vector<64x128xf32>
    %12 = tpu.matmul %9, %11, %cst_13 {dimension_numbers = #tpu.dot_dimension_numbers<[1], [0], [0], [1], [0, 0, 1, 1], [], []>} : vector<64x12xbf16>, vector<12x128xbf16>, vector<64x128xf32> -> vector<64x128xf32>
    %13 = arith.addf %5, %12 : vector<64x128xf32>
    %c0_14 = arith.constant 0 : index
    %c1_15 = arith.constant 1 : index
    %c1_16 = arith.constant 1 : index
    %c0_17 = arith.constant 0 : index
    %c0_18 = arith.constant 0 : index
    %14 = vector.load %arg2[%c0_14, %c1_15, %c1_16, %c0_17, %c0_18] : memref<1x2x10x8x12xbf16, #tpu.memory_space<vmem>>, vector<1x1x8x8x12xbf16>
    %15 = vector.shape_cast %14 : vector<1x1x8x8x12xbf16> to vector<8x8x12xbf16>
    %16 = vector.shape_cast %15 : vector<8x8x12xbf16> to vector<64x12xbf16>
    %c0_19 = arith.constant 0 : index
    %c1_20 = arith.constant 1 : index
    %c0_21 = arith.constant 0 : index
    %c0_22 = arith.constant 0 : index
    %17 = vector.load %arg5[%c0_19, %c1_20, %c0_21, %c0_22] : memref<3x3x12x128xbf16, #tpu.memory_space<vmem>>, vector<1x1x12x128xbf16>
    %18 = vector.shape_cast %17 : vector<1x1x12x128xbf16> to vector<12x128xbf16>
    %cst_23 = arith.constant dense<0.000000e+00> : vector<64x128xf32>
    %19 = tpu.matmul %16, %18, %cst_23 {dimension_numbers = #tpu.dot_dimension_numbers<[1], [0], [0], [1], [0, 0, 1, 1], [], []>} : vector<64x12xbf16>, vector<12x128xbf16>, vector<64x128xf32> -> vector<64x128xf32>
    %20 = arith.addf %13, %19 : vector<64x128xf32>
    %c0_24 = arith.constant 0 : index
    %c1_25 = arith.constant 1 : index
    %c2 = arith.constant 2 : index
    %c0_26 = arith.constant 0 : index
    %c0_27 = arith.constant 0 : index
    %21 = vector.load %arg2[%c0_24, %c1_25, %c2, %c0_26, %c0_27] : memref<1x2x10x8x12xbf16, #tpu.memory_space<vmem>>, vector<1x1x8x8x12xbf16>
    %22 = vector.shape_cast %21 : vector<1x1x8x8x12xbf16> to vector<8x8x12xbf16>
    %23 = vector.shape_cast %22 : vector<8x8x12xbf16> to vector<64x12xbf16>
    %c0_28 = arith.constant 0 : index
    %c2_29 = arith.constant 2 : index
    %c0_30 = arith.constant 0 : index
    %c0_31 = arith.constant 0 : index
    %24 = vector.load %arg5[%c0_28, %c2_29, %c0_30, %c0_31] : memref<3x3x12x128xbf16, #tpu.memory_space<vmem>>, vector<1x1x12x128xbf16>
    %25 = vector.shape_cast %24 : vector<1x1x12x128xbf16> to vector<12x128xbf16>
    %cst_32 = arith.constant dense<0.000000e+00> : vector<64x128xf32>
    %26 = tpu.matmul %23, %25, %cst_32 {dimension_numbers = #tpu.dot_dimension_numbers<[1], [0], [0], [1], [0, 0, 1, 1], [], []>} : vector<64x12xbf16>, vector<12x128xbf16>, vector<64x128xf32> -> vector<64x128xf32>
    %27 = arith.addf %20, %26 : vector<64x128xf32>
    %c0_33 = arith.constant 0 : index
    %c0_34 = arith.constant 0 : index
    %c0_35 = arith.constant 0 : index
    %c0_36 = arith.constant 0 : index
    %c0_37 = arith.constant 0 : index
    %28 = vector.load %arg3[%c0_33, %c0_34, %c0_35, %c0_36, %c0_37] : memref<1x2x10x8x12xbf16, #tpu.memory_space<vmem>>, vector<1x1x8x8x12xbf16>
    %29 = vector.shape_cast %28 : vector<1x1x8x8x12xbf16> to vector<8x8x12xbf16>
    %30 = vector.shape_cast %29 : vector<8x8x12xbf16> to vector<64x12xbf16>
    %c1_38 = arith.constant 1 : index
    %c0_39 = arith.constant 0 : index
    %c0_40 = arith.constant 0 : index
    %c0_41 = arith.constant 0 : index
    %31 = vector.load %arg5[%c1_38, %c0_39, %c0_40, %c0_41] : memref<3x3x12x128xbf16, #tpu.memory_space<vmem>>, vector<1x1x12x128xbf16>
    %32 = vector.shape_cast %31 : vector<1x1x12x128xbf16> to vector<12x128xbf16>
    %cst_42 = arith.constant dense<0.000000e+00> : vector<64x128xf32>
    %33 = tpu.matmul %30, %32, %cst_42 {dimension_numbers = #tpu.dot_dimension_numbers<[1], [0], [0], [1], [0, 0, 1, 1], [], []>} : vector<64x12xbf16>, vector<12x128xbf16>, vector<64x128xf32> -> vector<64x128xf32>
    %34 = arith.addf %27, %33 : vector<64x128xf32>
    %c0_43 = arith.constant 0 : index
    %c0_44 = arith.constant 0 : index
    %c0_45 = arith.constant 0 : index
    %c0_46 = arith.constant 0 : index
    %35 = vector.load %arg5[%c0_43, %c0_44, %c0_45, %c0_46] : memref<3x3x12x128xbf16, #tpu.memory_space<vmem>>, vector<1x1x12x128xbf16>
    %36 = vector.shape_cast %35 : vector<1x1x12x128xbf16> to vector<12x128xbf16>
    %cst_47 = arith.constant dense<0.000000e+00> : vector<64x128xf32>
    %37 = tpu.matmul %30, %36, %cst_47 {dimension_numbers = #tpu.dot_dimension_numbers<[1], [0], [0], [1], [0, 0, 1, 1], [], []>} : vector<64x12xbf16>, vector<12x128xbf16>, vector<64x128xf32> -> vector<64x128xf32>
    %38 = arith.addf %6, %37 : vector<64x128xf32>
    %c0_48 = arith.constant 0 : index
    %c0_49 = arith.constant 0 : index
    %c1_50 = arith.constant 1 : index
    %c0_51 = arith.constant 0 : index
    %c0_52 = arith.constant 0 : index
    %39 = vector.load %arg3[%c0_48, %c0_49, %c1_50, %c0_51, %c0_52] : memref<1x2x10x8x12xbf16, #tpu.memory_space<vmem>>, vector<1x1x8x8x12xbf16>
    %40 = vector.shape_cast %39 : vector<1x1x8x8x12xbf16> to vector<8x8x12xbf16>
    %41 = vector.shape_cast %40 : vector<8x8x12xbf16> to vector<64x12xbf16>
    %c1_53 = arith.constant 1 : index
    %c1_54 = arith.constant 1 : index
    %c0_55 = arith.constant 0 : index
    %c0_56 = arith.constant 0 : index
    %42 = vector.load %arg5[%c1_53, %c1_54, %c0_55, %c0_56] : memref<3x3x12x128xbf16, #tpu.memory_space<vmem>>, vector<1x1x12x128xbf16>
    %43 = vector.shape_cast %42 : vector<1x1x12x128xbf16> to vector<12x128xbf16>
    %cst_57 = arith.constant dense<0.000000e+00> : vector<64x128xf32>
    %44 = tpu.matmul %41, %43, %cst_57 {dimension_numbers = #tpu.dot_dimension_numbers<[1], [0], [0], [1], [0, 0, 1, 1], [], []>} : vector<64x12xbf16>, vector<12x128xbf16>, vector<64x128xf32> -> vector<64x128xf32>
    %45 = arith.addf %34, %44 : vector<64x128xf32>
    %c0_58 = arith.constant 0 : index
    %c1_59 = arith.constant 1 : index
    %c0_60 = arith.constant 0 : index
    %c0_61 = arith.constant 0 : index
    %46 = vector.load %arg5[%c0_58, %c1_59, %c0_60, %c0_61] : memref<3x3x12x128xbf16, #tpu.memory_space<vmem>>, vector<1x1x12x128xbf16>
    %47 = vector.shape_cast %46 : vector<1x1x12x128xbf16> to vector<12x128xbf16>
    %cst_62 = arith.constant dense<0.000000e+00> : vector<64x128xf32>
    %48 = tpu.matmul %41, %47, %cst_62 {dimension_numbers = #tpu.dot_dimension_numbers<[1], [0], [0], [1], [0, 0, 1, 1], [], []>} : vector<64x12xbf16>, vector<12x128xbf16>, vector<64x128xf32> -> vector<64x128xf32>
    %49 = arith.addf %38, %48 : vector<64x128xf32>
    %c0_63 = arith.constant 0 : index
    %c0_64 = arith.constant 0 : index
    %c2_65 = arith.constant 2 : index
    %c0_66 = arith.constant 0 : index
    %c0_67 = arith.constant 0 : index
    %50 = vector.load %arg3[%c0_63, %c0_64, %c2_65, %c0_66, %c0_67] : memref<1x2x10x8x12xbf16, #tpu.memory_space<vmem>>, vector<1x1x8x8x12xbf16>
    %51 = vector.shape_cast %50 : vector<1x1x8x8x12xbf16> to vector<8x8x12xbf16>
    %52 = vector.shape_cast %51 : vector<8x8x12xbf16> to vector<64x12xbf16>
    %c1_68 = arith.constant 1 : index
    %c2_69 = arith.constant 2 : index
    %c0_70 = arith.constant 0 : index
    %c0_71 = arith.constant 0 : index
    %53 = vector.load %arg5[%c1_68, %c2_69, %c0_70, %c0_71] : memref<3x3x12x128xbf16, #tpu.memory_space<vmem>>, vector<1x1x12x128xbf16>
    %54 = vector.shape_cast %53 : vector<1x1x12x128xbf16> to vector<12x128xbf16>
    %cst_72 = arith.constant dense<0.000000e+00> : vector<64x128xf32>
    %55 = tpu.matmul %52, %54, %cst_72 {dimension_numbers = #tpu.dot_dimension_numbers<[1], [0], [0], [1], [0, 0, 1, 1], [], []>} : vector<64x12xbf16>, vector<12x128xbf16>, vector<64x128xf32> -> vector<64x128xf32>
    %56 = arith.addf %45, %55 : vector<64x128xf32>
    %c0_73 = arith.constant 0 : index
    %c2_74 = arith.constant 2 : index
    %c0_75 = arith.constant 0 : index
    %c0_76 = arith.constant 0 : index
    %57 = vector.load %arg5[%c0_73, %c2_74, %c0_75, %c0_76] : memref<3x3x12x128xbf16, #tpu.memory_space<vmem>>, vector<1x1x12x128xbf16>
    %58 = vector.shape_cast %57 : vector<1x1x12x128xbf16> to vector<12x128xbf16>
    %cst_77 = arith.constant dense<0.000000e+00> : vector<64x128xf32>
    %59 = tpu.matmul %52, %58, %cst_77 {dimension_numbers = #tpu.dot_dimension_numbers<[1], [0], [0], [1], [0, 0, 1, 1], [], []>} : vector<64x12xbf16>, vector<12x128xbf16>, vector<64x128xf32> -> vector<64x128xf32>
    %60 = arith.addf %49, %59 : vector<64x128xf32>
    %c0_78 = arith.constant 0 : index
    %c1_79 = arith.constant 1 : index
    %c0_80 = arith.constant 0 : index
    %c0_81 = arith.constant 0 : index
    %c0_82 = arith.constant 0 : index
    %61 = vector.load %arg3[%c0_78, %c1_79, %c0_80, %c0_81, %c0_82] : memref<1x2x10x8x12xbf16, #tpu.memory_space<vmem>>, vector<1x1x8x8x12xbf16>
    %62 = vector.shape_cast %61 : vector<1x1x8x8x12xbf16> to vector<8x8x12xbf16>
    %63 = vector.shape_cast %62 : vector<8x8x12xbf16> to vector<64x12xbf16>
    %c2_83 = arith.constant 2 : index
    %c0_84 = arith.constant 0 : index
    %c0_85 = arith.constant 0 : index
    %c0_86 = arith.constant 0 : index
    %64 = vector.load %arg5[%c2_83, %c0_84, %c0_85, %c0_86] : memref<3x3x12x128xbf16, #tpu.memory_space<vmem>>, vector<1x1x12x128xbf16>
    %65 = vector.shape_cast %64 : vector<1x1x12x128xbf16> to vector<12x128xbf16>
    %cst_87 = arith.constant dense<0.000000e+00> : vector<64x128xf32>
    %66 = tpu.matmul %63, %65, %cst_87 {dimension_numbers = #tpu.dot_dimension_numbers<[1], [0], [0], [1], [0, 0, 1, 1], [], []>} : vector<64x12xbf16>, vector<12x128xbf16>, vector<64x128xf32> -> vector<64x128xf32>
    %67 = arith.addf %56, %66 : vector<64x128xf32>
    %c1_88 = arith.constant 1 : index
    %c0_89 = arith.constant 0 : index
    %c0_90 = arith.constant 0 : index
    %c0_91 = arith.constant 0 : index
    %68 = vector.load %arg5[%c1_88, %c0_89, %c0_90, %c0_91] : memref<3x3x12x128xbf16, #tpu.memory_space<vmem>>, vector<1x1x12x128xbf16>
    %69 = vector.shape_cast %68 : vector<1x1x12x128xbf16> to vector<12x128xbf16>
    %cst_92 = arith.constant dense<0.000000e+00> : vector<64x128xf32>
    %70 = tpu.matmul %63, %69, %cst_92 {dimension_numbers = #tpu.dot_dimension_numbers<[1], [0], [0], [1], [0, 0, 1, 1], [], []>} : vector<64x12xbf16>, vector<12x128xbf16>, vector<64x128xf32> -> vector<64x128xf32>
    %71 = arith.addf %60, %70 : vector<64x128xf32>
    %c0_93 = arith.constant 0 : index
    %c1_94 = arith.constant 1 : index
    %c1_95 = arith.constant 1 : index
    %c0_96 = arith.constant 0 : index
    %c0_97 = arith.constant 0 : index
    %72 = vector.load %arg3[%c0_93, %c1_94, %c1_95, %c0_96, %c0_97] : memref<1x2x10x8x12xbf16, #tpu.memory_space<vmem>>, vector<1x1x8x8x12xbf16>
    %73 = vector.shape_cast %72 : vector<1x1x8x8x12xbf16> to vector<8x8x12xbf16>
    %74 = vector.shape_cast %73 : vector<8x8x12xbf16> to vector<64x12xbf16>
    %c2_98 = arith.constant 2 : index
    %c1_99 = arith.constant 1 : index
    %c0_100 = arith.constant 0 : index
    %c0_101 = arith.constant 0 : index
    %75 = vector.load %arg5[%c2_98, %c1_99, %c0_100, %c0_101] : memref<3x3x12x128xbf16, #tpu.memory_space<vmem>>, vector<1x1x12x128xbf16>
    %76 = vector.shape_cast %75 : vector<1x1x12x128xbf16> to vector<12x128xbf16>
    %cst_102 = arith.constant dense<0.000000e+00> : vector<64x128xf32>
    %77 = tpu.matmul %74, %76, %cst_102 {dimension_numbers = #tpu.dot_dimension_numbers<[1], [0], [0], [1], [0, 0, 1, 1], [], []>} : vector<64x12xbf16>, vector<12x128xbf16>, vector<64x128xf32> -> vector<64x128xf32>
    %78 = arith.addf %67, %77 : vector<64x128xf32>
    %c1_103 = arith.constant 1 : index
    %c1_104 = arith.constant 1 : index
    %c0_105 = arith.constant 0 : index
    %c0_106 = arith.constant 0 : index
    %79 = vector.load %arg5[%c1_103, %c1_104, %c0_105, %c0_106] : memref<3x3x12x128xbf16, #tpu.memory_space<vmem>>, vector<1x1x12x128xbf16>
    %80 = vector.shape_cast %79 : vector<1x1x12x128xbf16> to vector<12x128xbf16>
    %cst_107 = arith.constant dense<0.000000e+00> : vector<64x128xf32>
    %81 = tpu.matmul %74, %80, %cst_107 {dimension_numbers = #tpu.dot_dimension_numbers<[1], [0], [0], [1], [0, 0, 1, 1], [], []>} : vector<64x12xbf16>, vector<12x128xbf16>, vector<64x128xf32> -> vector<64x128xf32>
    %82 = arith.addf %71, %81 : vector<64x128xf32>
    %c0_108 = arith.constant 0 : index
    %c1_109 = arith.constant 1 : index
    %c2_110 = arith.constant 2 : index
    %c0_111 = arith.constant 0 : index
    %c0_112 = arith.constant 0 : index
    %83 = vector.load %arg3[%c0_108, %c1_109, %c2_110, %c0_111, %c0_112] : memref<1x2x10x8x12xbf16, #tpu.memory_space<vmem>>, vector<1x1x8x8x12xbf16>
    %84 = vector.shape_cast %83 : vector<1x1x8x8x12xbf16> to vector<8x8x12xbf16>
    %85 = vector.shape_cast %84 : vector<8x8x12xbf16> to vector<64x12xbf16>
    %c2_113 = arith.constant 2 : index
    %c2_114 = arith.constant 2 : index
    %c0_115 = arith.constant 0 : index
    %c0_116 = arith.constant 0 : index
    %86 = vector.load %arg5[%c2_113, %c2_114, %c0_115, %c0_116] : memref<3x3x12x128xbf16, #tpu.memory_space<vmem>>, vector<1x1x12x128xbf16>
    %87 = vector.shape_cast %86 : vector<1x1x12x128xbf16> to vector<12x128xbf16>
    %cst_117 = arith.constant dense<0.000000e+00> : vector<64x128xf32>
    %88 = tpu.matmul %85, %87, %cst_117 {dimension_numbers = #tpu.dot_dimension_numbers<[1], [0], [0], [1], [0, 0, 1, 1], [], []>} : vector<64x12xbf16>, vector<12x128xbf16>, vector<64x128xf32> -> vector<64x128xf32>
    %89 = arith.addf %78, %88 : vector<64x128xf32>
    %c1_118 = arith.constant 1 : index
    %c2_119 = arith.constant 2 : index
    %c0_120 = arith.constant 0 : index
    %c0_121 = arith.constant 0 : index
    %90 = vector.load %arg5[%c1_118, %c2_119, %c0_120, %c0_121] : memref<3x3x12x128xbf16, #tpu.memory_space<vmem>>, vector<1x1x12x128xbf16>
    %91 = vector.shape_cast %90 : vector<1x1x12x128xbf16> to vector<12x128xbf16>
    %cst_122 = arith.constant dense<0.000000e+00> : vector<64x128xf32>
    %92 = tpu.matmul %85, %91, %cst_122 {dimension_numbers = #tpu.dot_dimension_numbers<[1], [0], [0], [1], [0, 0, 1, 1], [], []>} : vector<64x12xbf16>, vector<12x128xbf16>, vector<64x128xf32> -> vector<64x128xf32>
    %93 = arith.addf %82, %92 : vector<64x128xf32>
    %c0_123 = arith.constant 0 : index
    %c0_124 = arith.constant 0 : index
    %c0_125 = arith.constant 0 : index
    %c0_126 = arith.constant 0 : index
    %c0_127 = arith.constant 0 : index
    %94 = vector.load %arg4[%c0_123, %c0_124, %c0_125, %c0_126, %c0_127] : memref<1x2x10x8x12xbf16, #tpu.memory_space<vmem>>, vector<1x1x8x8x12xbf16>
    %95 = vector.shape_cast %94 : vector<1x1x8x8x12xbf16> to vector<8x8x12xbf16>
    %96 = vector.shape_cast %95 : vector<8x8x12xbf16> to vector<64x12xbf16>
    %c2_128 = arith.constant 2 : index
    %c0_129 = arith.constant 0 : index
    %c0_130 = arith.constant 0 : index
    %c0_131 = arith.constant 0 : index
    %97 = vector.load %arg5[%c2_128, %c0_129, %c0_130, %c0_131] : memref<3x3x12x128xbf16, #tpu.memory_space<vmem>>, vector<1x1x12x128xbf16>
    %98 = vector.shape_cast %97 : vector<1x1x12x128xbf16> to vector<12x128xbf16>
    %cst_132 = arith.constant dense<0.000000e+00> : vector<64x128xf32>
    %99 = tpu.matmul %96, %98, %cst_132 {dimension_numbers = #tpu.dot_dimension_numbers<[1], [0], [0], [1], [0, 0, 1, 1], [], []>} : vector<64x12xbf16>, vector<12x128xbf16>, vector<64x128xf32> -> vector<64x128xf32>
    %100 = arith.addf %93, %99 : vector<64x128xf32>
    %c0_133 = arith.constant 0 : index
    %c0_134 = arith.constant 0 : index
    %c1_135 = arith.constant 1 : index
    %c0_136 = arith.constant 0 : index
    %c0_137 = arith.constant 0 : index
    %101 = vector.load %arg4[%c0_133, %c0_134, %c1_135, %c0_136, %c0_137] : memref<1x2x10x8x12xbf16, #tpu.memory_space<vmem>>, vector<1x1x8x8x12xbf16>
    %102 = vector.shape_cast %101 : vector<1x1x8x8x12xbf16> to vector<8x8x12xbf16>
    %103 = vector.shape_cast %102 : vector<8x8x12xbf16> to vector<64x12xbf16>
    %c2_138 = arith.constant 2 : index
    %c1_139 = arith.constant 1 : index
    %c0_140 = arith.constant 0 : index
    %c0_141 = arith.constant 0 : index
    %104 = vector.load %arg5[%c2_138, %c1_139, %c0_140, %c0_141] : memref<3x3x12x128xbf16, #tpu.memory_space<vmem>>, vector<1x1x12x128xbf16>
    %105 = vector.shape_cast %104 : vector<1x1x12x128xbf16> to vector<12x128xbf16>
    %cst_142 = arith.constant dense<0.000000e+00> : vector<64x128xf32>
    %106 = tpu.matmul %103, %105, %cst_142 {dimension_numbers = #tpu.dot_dimension_numbers<[1], [0], [0], [1], [0, 0, 1, 1], [], []>} : vector<64x12xbf16>, vector<12x128xbf16>, vector<64x128xf32> -> vector<64x128xf32>
    %107 = arith.addf %100, %106 : vector<64x128xf32>
    %c0_143 = arith.constant 0 : index
    %c0_144 = arith.constant 0 : index
    %c2_145 = arith.constant 2 : index
    %c0_146 = arith.constant 0 : index
    %c0_147 = arith.constant 0 : index
    %108 = vector.load %arg4[%c0_143, %c0_144, %c2_145, %c0_146, %c0_147] : memref<1x2x10x8x12xbf16, #tpu.memory_space<vmem>>, vector<1x1x8x8x12xbf16>
    %109 = vector.shape_cast %108 : vector<1x1x8x8x12xbf16> to vector<8x8x12xbf16>
    %110 = vector.shape_cast %109 : vector<8x8x12xbf16> to vector<64x12xbf16>
    %c2_148 = arith.constant 2 : index
    %c2_149 = arith.constant 2 : index
    %c0_150 = arith.constant 0 : index
    %c0_151 = arith.constant 0 : index
    %111 = vector.load %arg5[%c2_148, %c2_149, %c0_150, %c0_151] : memref<3x3x12x128xbf16, #tpu.memory_space<vmem>>, vector<1x1x12x128xbf16>
    %112 = vector.shape_cast %111 : vector<1x1x12x128xbf16> to vector<12x128xbf16>
    %cst_152 = arith.constant dense<0.000000e+00> : vector<64x128xf32>
    %113 = tpu.matmul %110, %112, %cst_152 {dimension_numbers = #tpu.dot_dimension_numbers<[1], [0], [0], [1], [0, 0, 1, 1], [], []>} : vector<64x12xbf16>, vector<12x128xbf16>, vector<64x128xf32> -> vector<64x128xf32>
    %114 = arith.addf %107, %113 : vector<64x128xf32>
    %115 = vector.broadcast %0 : vector<1x128xf32> to vector<64x128xf32>
    %116 = arith.addf %89, %115 : vector<64x128xf32>
    %cst_153 = arith.constant 0.000000e+00 : f32
    %117 = vector.broadcast %cst_153 : f32 to vector<64x128xf32>
    %118 = arith.maximumf %116, %117 : vector<64x128xf32>
    %119 = vector.broadcast %0 : vector<1x128xf32> to vector<64x128xf32>
    %120 = arith.addf %114, %119 : vector<64x128xf32>
    %cst_154 = arith.constant 0.000000e+00 : f32
    %121 = vector.broadcast %cst_154 : f32 to vector<64x128xf32>
    %122 = arith.maximumf %120, %121 : vector<64x128xf32>
    %c3_i32 = arith.constant 3 : i32
    %123 = arith.cmpi slt, %arg1, %c3_i32 : i32
    %124 = arith.extui %123 : i1 to i32
    %125 = arith.sitofp %124 : i32 to f32
    %126 = vector.broadcast %125 : f32 to vector<64x128xf32>
    %127 = arith.mulf %122, %126 : vector<64x128xf32>
    %128 = arith.truncf %118 : vector<64x128xf32> to vector<64x128xbf16>
    %129 = vector.shape_cast %128 : vector<64x128xbf16> to vector<8x8x128xbf16>
    %cst_155 = arith.constant 0.000000e+00 : bf16
    %130 = vector.broadcast %cst_155 : bf16 to vector<8x1x128xbf16>
    %131 = tpu.concatenate %130, %129, %130 in 1 : vector<8x1x128xbf16>, vector<8x8x128xbf16>, vector<8x1x128xbf16> -> vector<8x10x128xbf16>
    %cst_156 = arith.constant 0.000000e+00 : bf16
    %132 = vector.broadcast %cst_156 : bf16 to vector<1x10x128xbf16>
    %133 = tpu.concatenate %132, %131, %132 in 0 : vector<1x10x128xbf16>, vector<8x10x128xbf16>, vector<1x10x128xbf16> -> vector<10x10x128xbf16>
    %134 = arith.truncf %127 : vector<64x128xf32> to vector<64x128xbf16>
    %135 = vector.shape_cast %134 : vector<64x128xbf16> to vector<8x8x128xbf16>
    %cst_157 = arith.constant 0.000000e+00 : bf16
    %136 = vector.broadcast %cst_157 : bf16 to vector<8x1x128xbf16>
    %137 = tpu.concatenate %136, %135, %136 in 1 : vector<8x1x128xbf16>, vector<8x8x128xbf16>, vector<8x1x128xbf16> -> vector<8x10x128xbf16>
    %cst_158 = arith.constant 0.000000e+00 : bf16
    %138 = vector.broadcast %cst_158 : bf16 to vector<1x10x128xbf16>
    %139 = tpu.concatenate %138, %137, %138 in 0 : vector<1x10x128xbf16>, vector<8x10x128xbf16>, vector<1x10x128xbf16> -> vector<10x10x128xbf16>
    %c2_i32 = arith.constant 2 : i32
    %c0_i32_159 = arith.constant 0 : i32
    %140 = arith.cmpi eq, %c2_i32, %c0_i32_159 : i32
    %c1_i32 = arith.constant 1 : i32
    %141 = arith.select %140, %c1_i32, %c2_i32 : i32
    %142 = arith.remsi %arg1, %141 : i32
    %c0_i32_160 = arith.constant 0 : i32
    %143 = arith.cmpi ne, %142, %c0_i32_160 : i32
    %c0_i32_161 = arith.constant 0 : i32
    %144 = arith.cmpi slt, %142, %c0_i32_161 : i32
    %c0_i32_162 = arith.constant 0 : i32
    %145 = arith.cmpi slt, %141, %c0_i32_162 : i32
    %146 = arith.xori %144, %145 : i1
    %147 = arith.andi %146, %143 : i1
    %148 = arith.addi %142, %141 : i32
    %149 = arith.select %147, %148, %142 : i32
    %c0_i32_163 = arith.constant 0 : i32
    %150 = arith.cmpi eq, %149, %c0_i32_163 : i32
    %151 = arith.extui %150 : i1 to i32
    %c0_i32_164 = arith.constant 0 : i32
    %152 = arith.cmpi ne, %151, %c0_i32_164 : i32
    scf.if %152 {
      %c2_325 = arith.constant 2 : index
      %c0_326 = arith.constant 0 : index
      %c0_327 = arith.constant 0 : index
      %c0_328 = arith.constant 0 : index
      %406 = vector.load %arg11[%c2_325, %c0_326, %c0_327, %c0_328] : memref<4x10x10x128xbf16, #tpu.memory_space<vmem>>, vector<1x10x10x128xbf16>
      %407 = vector.shape_cast %406 : vector<1x10x10x128xbf16> to vector<10x10x128xbf16>
      %408 = vector.shape_cast %133 : vector<10x10x128xbf16> to vector<1x10x10x128xbf16>
      tpu.vector_store %arg11[%c2_325, %c0_326, %c0_327, %c0_328], %408 {strides = array<i32>} : memref<4x10x10x128xbf16, #tpu.memory_space<vmem>>, vector<1x10x10x128xbf16>,
      %c3 = arith.constant 3 : index
      %c0_329 = arith.constant 0 : index
      %c0_330 = arith.constant 0 : index
      %c0_331 = arith.constant 0 : index
      %409 = vector.load %arg11[%c3, %c0_329, %c0_330, %c0_331] : memref<4x10x10x128xbf16, #tpu.memory_space<vmem>>, vector<1x10x10x128xbf16>
      %410 = vector.shape_cast %409 : vector<1x10x10x128xbf16> to vector<10x10x128xbf16>
      %411 = vector.shape_cast %139 : vector<10x10x128xbf16> to vector<1x10x10x128xbf16>
      tpu.vector_store %arg11[%c3, %c0_329, %c0_330, %c0_331], %411 {strides = array<i32>} : memref<4x10x10x128xbf16, #tpu.memory_space<vmem>>, vector<1x10x10x128xbf16>,
    } else {
    }
    %c2_i32_165 = arith.constant 2 : i32
    %c0_i32_166 = arith.constant 0 : i32
    %153 = arith.cmpi eq, %c2_i32_165, %c0_i32_166 : i32
    %c1_i32_167 = arith.constant 1 : i32
    %154 = arith.select %153, %c1_i32_167, %c2_i32_165 : i32
    %155 = arith.remsi %arg1, %154 : i32
    %c0_i32_168 = arith.constant 0 : i32
    %156 = arith.cmpi ne, %155, %c0_i32_168 : i32
    %c0_i32_169 = arith.constant 0 : i32
    %157 = arith.cmpi slt, %155, %c0_i32_169 : i32
    %c0_i32_170 = arith.constant 0 : i32
    %158 = arith.cmpi slt, %154, %c0_i32_170 : i32
    %159 = arith.xori %157, %158 : i1
    %160 = arith.andi %159, %156 : i1
    %161 = arith.addi %155, %154 : i32
    %162 = arith.select %160, %161, %155 : i32
    %c1_i32_171 = arith.constant 1 : i32
    %163 = arith.cmpi eq, %162, %c1_i32_171 : i32
    %164 = arith.extui %163 : i1 to i32
    %c0_i32_172 = arith.constant 0 : i32
    %165 = arith.cmpi ne, %164, %c0_i32_172 : i32
    scf.if %165 {
      %c0_325 = arith.constant 0 : index
      %c0_326 = arith.constant 0 : index
      %c0_327 = arith.constant 0 : index
      %c0_328 = arith.constant 0 : index
      %406 = vector.load %arg11[%c0_325, %c0_326, %c0_327, %c0_328] : memref<4x10x10x128xbf16, #tpu.memory_space<vmem>>, vector<1x10x10x128xbf16>
      %407 = vector.shape_cast %406 : vector<1x10x10x128xbf16> to vector<10x10x128xbf16>
      %408 = vector.shape_cast %133 : vector<10x10x128xbf16> to vector<1x10x10x128xbf16>
      tpu.vector_store %arg11[%c0_325, %c0_326, %c0_327, %c0_328], %408 {strides = array<i32>} : memref<4x10x10x128xbf16, #tpu.memory_space<vmem>>, vector<1x10x10x128xbf16>,
      %c1_329 = arith.constant 1 : index
      %c0_330 = arith.constant 0 : index
      %c0_331 = arith.constant 0 : index
      %c0_332 = arith.constant 0 : index
      %409 = vector.load %arg11[%c1_329, %c0_330, %c0_331, %c0_332] : memref<4x10x10x128xbf16, #tpu.memory_space<vmem>>, vector<1x10x10x128xbf16>
      %410 = vector.shape_cast %409 : vector<1x10x10x128xbf16> to vector<10x10x128xbf16>
      %411 = vector.shape_cast %139 : vector<10x10x128xbf16> to vector<1x10x10x128xbf16>
      tpu.vector_store %arg11[%c1_329, %c0_330, %c0_331, %c0_332], %411 {strides = array<i32>} : memref<4x10x10x128xbf16, #tpu.memory_space<vmem>>, vector<1x10x10x128xbf16>,
    } else {
    }
    %cst_173 = arith.constant 0.000000e+00 : f32
    %166 = vector.broadcast %cst_173 : f32 to vector<64x128xf32>
    %cst_174 = arith.constant 0.000000e+00 : f32
    %167 = vector.broadcast %cst_174 : f32 to vector<64x128xf32>
    %c2_i32_175 = arith.constant 2 : i32
    %168 = arith.muli %c2_i32_175, %arg1 : i32
    %c0_i32_176 = arith.constant 0 : i32
    %169 = arith.addi %168, %c0_i32_176 : i32
    %c4_i32 = arith.constant 4 : i32
    %c0_i32_177 = arith.constant 0 : i32
    %170 = arith.cmpi eq, %c4_i32, %c0_i32_177 : i32
    %c1_i32_178 = arith.constant 1 : i32
    %171 = arith.select %170, %c1_i32_178, %c4_i32 : i32
    %172 = arith.remsi %169, %171 : i32
    %c0_i32_179 = arith.constant 0 : i32
    %173 = arith.cmpi ne, %172, %c0_i32_179 : i32
    %c0_i32_180 = arith.constant 0 : i32
    %174 = arith.cmpi slt, %172, %c0_i32_180 : i32
    %c0_i32_181 = arith.constant 0 : i32
    %175 = arith.cmpi slt, %171, %c0_i32_181 : i32
    %176 = arith.xori %174, %175 : i1
    %177 = arith.andi %176, %173 : i1
    %178 = arith.addi %172, %171 : i32
    %179 = arith.select %177, %178, %172 : i32
    %180 = arith.index_cast %179 : i32 to index
    %c0_182 = arith.constant 0 : index
    %c0_183 = arith.constant 0 : index
    %c0_184 = arith.constant 0 : index
    %181 = vector.load %arg11[%180, %c0_182, %c0_183, %c0_184] : memref<4x10x10x128xbf16, #tpu.memory_space<vmem>>, vector<1x10x10x128xbf16>
    %182 = vector.shape_cast %181 : vector<1x10x10x128xbf16> to vector<10x10x128xbf16>
    %183 = vector.extract_strided_slice %182 {offsets = [0, 0, 0], sizes = [8, 10, 128], strides = [1, 1, 1]} : vector<10x10x128xbf16> to vector<8x10x128xbf16>
    %184 = vector.extract_strided_slice %183 {offsets = [0, 0, 0], sizes = [8, 8, 128], strides = [1, 1, 1]} : vector<8x10x128xbf16> to vector<8x8x128xbf16>
    %185 = vector.extract_strided_slice %183 {offsets = [0, 1, 0], sizes = [8, 8, 128], strides = [1, 1, 1]} : vector<8x10x128xbf16> to vector<8x8x128xbf16>
    %186 = vector.extract_strided_slice %183 {offsets = [0, 2, 0], sizes = [8, 8, 128], strides = [1, 1, 1]} : vector<8x10x128xbf16> to vector<8x8x128xbf16>
    %187 = tpu.concatenate %184, %185, %186 in 2 : vector<8x8x128xbf16>, vector<8x8x128xbf16>, vector<8x8x128xbf16> -> vector<8x8x384xbf16>
    %188 = vector.shape_cast %187 : vector<8x8x384xbf16> to vector<64x384xbf16>
    %c0_185 = arith.constant 0 : index
    %c0_186 = arith.constant 0 : index
    %c0_187 = arith.constant 0 : index
    %c0_188 = arith.constant 0 : index
    %189 = vector.load %arg7[%c0_185, %c0_186, %c0_187, %c0_188] : memref<3x3x384x128xbf16, #tpu.memory_space<vmem>>, vector<1x1x384x128xbf16>
    %190 = vector.shape_cast %189 : vector<1x1x384x128xbf16> to vector<384x128xbf16>
    %cst_189 = arith.constant dense<0.000000e+00> : vector<64x128xf32>
    %191 = tpu.matmul %188, %190, %cst_189 {dimension_numbers = #tpu.dot_dimension_numbers<[1], [0], [0], [1], [0, 0, 1, 1], [], []>} : vector<64x384xbf16>, vector<384x128xbf16>, vector<64x128xf32> -> vector<64x128xf32>
    %192 = arith.addf %166, %191 : vector<64x128xf32>
    %193 = vector.extract_strided_slice %182 {offsets = [1, 0, 0], sizes = [8, 10, 128], strides = [1, 1, 1]} : vector<10x10x128xbf16> to vector<8x10x128xbf16>
    %194 = vector.extract_strided_slice %193 {offsets = [0, 0, 0], sizes = [8, 8, 128], strides = [1, 1, 1]} : vector<8x10x128xbf16> to vector<8x8x128xbf16>
    %195 = vector.extract_strided_slice %193 {offsets = [0, 1, 0], sizes = [8, 8, 128], strides = [1, 1, 1]} : vector<8x10x128xbf16> to vector<8x8x128xbf16>
    %196 = vector.extract_strided_slice %193 {offsets = [0, 2, 0], sizes = [8, 8, 128], strides = [1, 1, 1]} : vector<8x10x128xbf16> to vector<8x8x128xbf16>
    %197 = tpu.concatenate %194, %195, %196 in 2 : vector<8x8x128xbf16>, vector<8x8x128xbf16>, vector<8x8x128xbf16> -> vector<8x8x384xbf16>
    %198 = vector.shape_cast %197 : vector<8x8x384xbf16> to vector<64x384xbf16>
    %c0_190 = arith.constant 0 : index
    %c1_191 = arith.constant 1 : index
    %c0_192 = arith.constant 0 : index
    %c0_193 = arith.constant 0 : index
    %199 = vector.load %arg7[%c0_190, %c1_191, %c0_192, %c0_193] : memref<3x3x384x128xbf16, #tpu.memory_space<vmem>>, vector<1x1x384x128xbf16>
    %200 = vector.shape_cast %199 : vector<1x1x384x128xbf16> to vector<384x128xbf16>
    %cst_194 = arith.constant dense<0.000000e+00> : vector<64x128xf32>
    %201 = tpu.matmul %198, %200, %cst_194 {dimension_numbers = #tpu.dot_dimension_numbers<[1], [0], [0], [1], [0, 0, 1, 1], [], []>} : vector<64x384xbf16>, vector<384x128xbf16>, vector<64x128xf32> -> vector<64x128xf32>
    %202 = arith.addf %192, %201 : vector<64x128xf32>
    %203 = vector.extract_strided_slice %182 {offsets = [2, 0, 0], sizes = [8, 10, 128], strides = [1, 1, 1]} : vector<10x10x128xbf16> to vector<8x10x128xbf16>
    %204 = vector.extract_strided_slice %203 {offsets = [0, 0, 0], sizes = [8, 8, 128], strides = [1, 1, 1]} : vector<8x10x128xbf16> to vector<8x8x128xbf16>
    %205 = vector.extract_strided_slice %203 {offsets = [0, 1, 0], sizes = [8, 8, 128], strides = [1, 1, 1]} : vector<8x10x128xbf16> to vector<8x8x128xbf16>
    %206 = vector.extract_strided_slice %203 {offsets = [0, 2, 0], sizes = [8, 8, 128], strides = [1, 1, 1]} : vector<8x10x128xbf16> to vector<8x8x128xbf16>
    %207 = tpu.concatenate %204, %205, %206 in 2 : vector<8x8x128xbf16>, vector<8x8x128xbf16>, vector<8x8x128xbf16> -> vector<8x8x384xbf16>
    %208 = vector.shape_cast %207 : vector<8x8x384xbf16> to vector<64x384xbf16>
    %c0_195 = arith.constant 0 : index
    %c2_196 = arith.constant 2 : index
    %c0_197 = arith.constant 0 : index
    %c0_198 = arith.constant 0 : index
    %209 = vector.load %arg7[%c0_195, %c2_196, %c0_197, %c0_198] : memref<3x3x384x128xbf16, #tpu.memory_space<vmem>>, vector<1x1x384x128xbf16>
    %210 = vector.shape_cast %209 : vector<1x1x384x128xbf16> to vector<384x128xbf16>
    %cst_199 = arith.constant dense<0.000000e+00> : vector<64x128xf32>
    %211 = tpu.matmul %208, %210, %cst_199 {dimension_numbers = #tpu.dot_dimension_numbers<[1], [0], [0], [1], [0, 0, 1, 1], [], []>} : vector<64x384xbf16>, vector<384x128xbf16>, vector<64x128xf32> -> vector<64x128xf32>
    %212 = arith.addf %202, %211 : vector<64x128xf32>
    %c2_i32_200 = arith.constant 2 : i32
    %213 = arith.muli %c2_i32_200, %arg1 : i32
    %c1_i32_201 = arith.constant 1 : i32
    %214 = arith.addi %213, %c1_i32_201 : i32
    %c4_i32_202 = arith.constant 4 : i32
    %c0_i32_203 = arith.constant 0 : i32
    %215 = arith.cmpi eq, %c4_i32_202, %c0_i32_203 : i32
    %c1_i32_204 = arith.constant 1 : i32
    %216 = arith.select %215, %c1_i32_204, %c4_i32_202 : i32
    %217 = arith.remsi %214, %216 : i32
    %c0_i32_205 = arith.constant 0 : i32
    %218 = arith.cmpi ne, %217, %c0_i32_205 : i32
    %c0_i32_206 = arith.constant 0 : i32
    %219 = arith.cmpi slt, %217, %c0_i32_206 : i32
    %c0_i32_207 = arith.constant 0 : i32
    %220 = arith.cmpi slt, %216, %c0_i32_207 : i32
    %221 = arith.xori %219, %220 : i1
    %222 = arith.andi %221, %218 : i1
    %223 = arith.addi %217, %216 : i32
    %224 = arith.select %222, %223, %217 : i32
    %225 = arith.index_cast %224 : i32 to index
    %c0_208 = arith.constant 0 : index
    %c0_209 = arith.constant 0 : index
    %c0_210 = arith.constant 0 : index
    %226 = vector.load %arg11[%225, %c0_208, %c0_209, %c0_210] : memref<4x10x10x128xbf16, #tpu.memory_space<vmem>>, vector<1x10x10x128xbf16>
    %227 = vector.shape_cast %226 : vector<1x10x10x128xbf16> to vector<10x10x128xbf16>
    %228 = vector.extract_strided_slice %227 {offsets = [0, 0, 0], sizes = [8, 10, 128], strides = [1, 1, 1]} : vector<10x10x128xbf16> to vector<8x10x128xbf16>
    %229 = vector.extract_strided_slice %228 {offsets = [0, 0, 0], sizes = [8, 8, 128], strides = [1, 1, 1]} : vector<8x10x128xbf16> to vector<8x8x128xbf16>
    %230 = vector.extract_strided_slice %228 {offsets = [0, 1, 0], sizes = [8, 8, 128], strides = [1, 1, 1]} : vector<8x10x128xbf16> to vector<8x8x128xbf16>
    %231 = vector.extract_strided_slice %228 {offsets = [0, 2, 0], sizes = [8, 8, 128], strides = [1, 1, 1]} : vector<8x10x128xbf16> to vector<8x8x128xbf16>
    %232 = tpu.concatenate %229, %230, %231 in 2 : vector<8x8x128xbf16>, vector<8x8x128xbf16>, vector<8x8x128xbf16> -> vector<8x8x384xbf16>
    %233 = vector.shape_cast %232 : vector<8x8x384xbf16> to vector<64x384xbf16>
    %c1_211 = arith.constant 1 : index
    %c0_212 = arith.constant 0 : index
    %c0_213 = arith.constant 0 : index
    %c0_214 = arith.constant 0 : index
    %234 = vector.load %arg7[%c1_211, %c0_212, %c0_213, %c0_214] : memref<3x3x384x128xbf16, #tpu.memory_space<vmem>>, vector<1x1x384x128xbf16>
    %235 = vector.shape_cast %234 : vector<1x1x384x128xbf16> to vector<384x128xbf16>
    %cst_215 = arith.constant dense<0.000000e+00> : vector<64x128xf32>
    %236 = tpu.matmul %233, %235, %cst_215 {dimension_numbers = #tpu.dot_dimension_numbers<[1], [0], [0], [1], [0, 0, 1, 1], [], []>} : vector<64x384xbf16>, vector<384x128xbf16>, vector<64x128xf32> -> vector<64x128xf32>
    %237 = arith.addf %212, %236 : vector<64x128xf32>
    %c0_216 = arith.constant 0 : index
    %c0_217 = arith.constant 0 : index
    %c0_218 = arith.constant 0 : index
    %c0_219 = arith.constant 0 : index
    %238 = vector.load %arg7[%c0_216, %c0_217, %c0_218, %c0_219] : memref<3x3x384x128xbf16, #tpu.memory_space<vmem>>, vector<1x1x384x128xbf16>
    %239 = vector.shape_cast %238 : vector<1x1x384x128xbf16> to vector<384x128xbf16>
    %cst_220 = arith.constant dense<0.000000e+00> : vector<64x128xf32>
    %240 = tpu.matmul %233, %239, %cst_220 {dimension_numbers = #tpu.dot_dimension_numbers<[1], [0], [0], [1], [0, 0, 1, 1], [], []>} : vector<64x384xbf16>, vector<384x128xbf16>, vector<64x128xf32> -> vector<64x128xf32>
    %241 = arith.addf %167, %240 : vector<64x128xf32>
    %242 = vector.extract_strided_slice %227 {offsets = [1, 0, 0], sizes = [8, 10, 128], strides = [1, 1, 1]} : vector<10x10x128xbf16> to vector<8x10x128xbf16>
    %243 = vector.extract_strided_slice %242 {offsets = [0, 0, 0], sizes = [8, 8, 128], strides = [1, 1, 1]} : vector<8x10x128xbf16> to vector<8x8x128xbf16>
    %244 = vector.extract_strided_slice %242 {offsets = [0, 1, 0], sizes = [8, 8, 128], strides = [1, 1, 1]} : vector<8x10x128xbf16> to vector<8x8x128xbf16>
    %245 = vector.extract_strided_slice %242 {offsets = [0, 2, 0], sizes = [8, 8, 128], strides = [1, 1, 1]} : vector<8x10x128xbf16> to vector<8x8x128xbf16>
    %246 = tpu.concatenate %243, %244, %245 in 2 : vector<8x8x128xbf16>, vector<8x8x128xbf16>, vector<8x8x128xbf16> -> vector<8x8x384xbf16>
    %247 = vector.shape_cast %246 : vector<8x8x384xbf16> to vector<64x384xbf16>
    %c1_221 = arith.constant 1 : index
    %c1_222 = arith.constant 1 : index
    %c0_223 = arith.constant 0 : index
    %c0_224 = arith.constant 0 : index
    %248 = vector.load %arg7[%c1_221, %c1_222, %c0_223, %c0_224] : memref<3x3x384x128xbf16, #tpu.memory_space<vmem>>, vector<1x1x384x128xbf16>
    %249 = vector.shape_cast %248 : vector<1x1x384x128xbf16> to vector<384x128xbf16>
    %cst_225 = arith.constant dense<0.000000e+00> : vector<64x128xf32>
    %250 = tpu.matmul %247, %249, %cst_225 {dimension_numbers = #tpu.dot_dimension_numbers<[1], [0], [0], [1], [0, 0, 1, 1], [], []>} : vector<64x384xbf16>, vector<384x128xbf16>, vector<64x128xf32> -> vector<64x128xf32>
    %251 = arith.addf %237, %250 : vector<64x128xf32>
    %c0_226 = arith.constant 0 : index
    %c1_227 = arith.constant 1 : index
    %c0_228 = arith.constant 0 : index
    %c0_229 = arith.constant 0 : index
    %252 = vector.load %arg7[%c0_226, %c1_227, %c0_228, %c0_229] : memref<3x3x384x128xbf16, #tpu.memory_space<vmem>>, vector<1x1x384x128xbf16>
    %253 = vector.shape_cast %252 : vector<1x1x384x128xbf16> to vector<384x128xbf16>
    %cst_230 = arith.constant dense<0.000000e+00> : vector<64x128xf32>
    %254 = tpu.matmul %247, %253, %cst_230 {dimension_numbers = #tpu.dot_dimension_numbers<[1], [0], [0], [1], [0, 0, 1, 1], [], []>} : vector<64x384xbf16>, vector<384x128xbf16>, vector<64x128xf32> -> vector<64x128xf32>
    %255 = arith.addf %241, %254 : vector<64x128xf32>
    %256 = vector.extract_strided_slice %227 {offsets = [2, 0, 0], sizes = [8, 10, 128], strides = [1, 1, 1]} : vector<10x10x128xbf16> to vector<8x10x128xbf16>
    %257 = vector.extract_strided_slice %256 {offsets = [0, 0, 0], sizes = [8, 8, 128], strides = [1, 1, 1]} : vector<8x10x128xbf16> to vector<8x8x128xbf16>
    %258 = vector.extract_strided_slice %256 {offsets = [0, 1, 0], sizes = [8, 8, 128], strides = [1, 1, 1]} : vector<8x10x128xbf16> to vector<8x8x128xbf16>
    %259 = vector.extract_strided_slice %256 {offsets = [0, 2, 0], sizes = [8, 8, 128], strides = [1, 1, 1]} : vector<8x10x128xbf16> to vector<8x8x128xbf16>
    %260 = tpu.concatenate %257, %258, %259 in 2 : vector<8x8x128xbf16>, vector<8x8x128xbf16>, vector<8x8x128xbf16> -> vector<8x8x384xbf16>
    %261 = vector.shape_cast %260 : vector<8x8x384xbf16> to vector<64x384xbf16>
    %c1_231 = arith.constant 1 : index
    %c2_232 = arith.constant 2 : index
    %c0_233 = arith.constant 0 : index
    %c0_234 = arith.constant 0 : index
    %262 = vector.load %arg7[%c1_231, %c2_232, %c0_233, %c0_234] : memref<3x3x384x128xbf16, #tpu.memory_space<vmem>>, vector<1x1x384x128xbf16>
    %263 = vector.shape_cast %262 : vector<1x1x384x128xbf16> to vector<384x128xbf16>
    %cst_235 = arith.constant dense<0.000000e+00> : vector<64x128xf32>
    %264 = tpu.matmul %261, %263, %cst_235 {dimension_numbers = #tpu.dot_dimension_numbers<[1], [0], [0], [1], [0, 0, 1, 1], [], []>} : vector<64x384xbf16>, vector<384x128xbf16>, vector<64x128xf32> -> vector<64x128xf32>
    %265 = arith.addf %251, %264 : vector<64x128xf32>
    %c0_236 = arith.constant 0 : index
    %c2_237 = arith.constant 2 : index
    %c0_238 = arith.constant 0 : index
    %c0_239 = arith.constant 0 : index
    %266 = vector.load %arg7[%c0_236, %c2_237, %c0_238, %c0_239] : memref<3x3x384x128xbf16, #tpu.memory_space<vmem>>, vector<1x1x384x128xbf16>
    %267 = vector.shape_cast %266 : vector<1x1x384x128xbf16> to vector<384x128xbf16>
    %cst_240 = arith.constant dense<0.000000e+00> : vector<64x128xf32>
    %268 = tpu.matmul %261, %267, %cst_240 {dimension_numbers = #tpu.dot_dimension_numbers<[1], [0], [0], [1], [0, 0, 1, 1], [], []>} : vector<64x384xbf16>, vector<384x128xbf16>, vector<64x128xf32> -> vector<64x128xf32>
    %269 = arith.addf %255, %268 : vector<64x128xf32>
    %c2_i32_241 = arith.constant 2 : i32
    %270 = arith.muli %c2_i32_241, %arg1 : i32
    %c2_i32_242 = arith.constant 2 : i32
    %271 = arith.addi %270, %c2_i32_242 : i32
    %c4_i32_243 = arith.constant 4 : i32
    %c0_i32_244 = arith.constant 0 : i32
    %272 = arith.cmpi eq, %c4_i32_243, %c0_i32_244 : i32
    %c1_i32_245 = arith.constant 1 : i32
    %273 = arith.select %272, %c1_i32_245, %c4_i32_243 : i32
    %274 = arith.remsi %271, %273 : i32
    %c0_i32_246 = arith.constant 0 : i32
    %275 = arith.cmpi ne, %274, %c0_i32_246 : i32
    %c0_i32_247 = arith.constant 0 : i32
    %276 = arith.cmpi slt, %274, %c0_i32_247 : i32
    %c0_i32_248 = arith.constant 0 : i32
    %277 = arith.cmpi slt, %273, %c0_i32_248 : i32
    %278 = arith.xori %276, %277 : i1
    %279 = arith.andi %278, %275 : i1
    %280 = arith.addi %274, %273 : i32
    %281 = arith.select %279, %280, %274 : i32
    %282 = arith.index_cast %281 : i32 to index
    %c0_249 = arith.constant 0 : index
    %c0_250 = arith.constant 0 : index
    %c0_251 = arith.constant 0 : index
    %283 = vector.load %arg11[%282, %c0_249, %c0_250, %c0_251] : memref<4x10x10x128xbf16, #tpu.memory_space<vmem>>, vector<1x10x10x128xbf16>
    %284 = vector.shape_cast %283 : vector<1x10x10x128xbf16> to vector<10x10x128xbf16>
    %285 = vector.extract_strided_slice %284 {offsets = [0, 0, 0], sizes = [8, 10, 128], strides = [1, 1, 1]} : vector<10x10x128xbf16> to vector<8x10x128xbf16>
    %286 = vector.extract_strided_slice %285 {offsets = [0, 0, 0], sizes = [8, 8, 128], strides = [1, 1, 1]} : vector<8x10x128xbf16> to vector<8x8x128xbf16>
    %287 = vector.extract_strided_slice %285 {offsets = [0, 1, 0], sizes = [8, 8, 128], strides = [1, 1, 1]} : vector<8x10x128xbf16> to vector<8x8x128xbf16>
    %288 = vector.extract_strided_slice %285 {offsets = [0, 2, 0], sizes = [8, 8, 128], strides = [1, 1, 1]} : vector<8x10x128xbf16> to vector<8x8x128xbf16>
    %289 = tpu.concatenate %286, %287, %288 in 2 : vector<8x8x128xbf16>, vector<8x8x128xbf16>, vector<8x8x128xbf16> -> vector<8x8x384xbf16>
    %290 = vector.shape_cast %289 : vector<8x8x384xbf16> to vector<64x384xbf16>
    %c2_252 = arith.constant 2 : index
    %c0_253 = arith.constant 0 : index
    %c0_254 = arith.constant 0 : index
    %c0_255 = arith.constant 0 : index
    %291 = vector.load %arg7[%c2_252, %c0_253, %c0_254, %c0_255] : memref<3x3x384x128xbf16, #tpu.memory_space<vmem>>, vector<1x1x384x128xbf16>
    %292 = vector.shape_cast %291 : vector<1x1x384x128xbf16> to vector<384x128xbf16>
    %cst_256 = arith.constant dense<0.000000e+00> : vector<64x128xf32>
    %293 = tpu.matmul %290, %292, %cst_256 {dimension_numbers = #tpu.dot_dimension_numbers<[1], [0], [0], [1], [0, 0, 1, 1], [], []>} : vector<64x384xbf16>, vector<384x128xbf16>, vector<64x128xf32> -> vector<64x128xf32>
    %294 = arith.addf %265, %293 : vector<64x128xf32>
    %c1_257 = arith.constant 1 : index
    %c0_258 = arith.constant 0 : index
    %c0_259 = arith.constant 0 : index
    %c0_260 = arith.constant 0 : index
    %295 = vector.load %arg7[%c1_257, %c0_258, %c0_259, %c0_260] : memref<3x3x384x128xbf16, #tpu.memory_space<vmem>>, vector<1x1x384x128xbf16>
    %296 = vector.shape_cast %295 : vector<1x1x384x128xbf16> to vector<384x128xbf16>
    %cst_261 = arith.constant dense<0.000000e+00> : vector<64x128xf32>
    %297 = tpu.matmul %290, %296, %cst_261 {dimension_numbers = #tpu.dot_dimension_numbers<[1], [0], [0], [1], [0, 0, 1, 1], [], []>} : vector<64x384xbf16>, vector<384x128xbf16>, vector<64x128xf32> -> vector<64x128xf32>
    %298 = arith.addf %269, %297 : vector<64x128xf32>
    %299 = vector.extract_strided_slice %284 {offsets = [1, 0, 0], sizes = [8, 10, 128], strides = [1, 1, 1]} : vector<10x10x128xbf16> to vector<8x10x128xbf16>
    %300 = vector.extract_strided_slice %299 {offsets = [0, 0, 0], sizes = [8, 8, 128], strides = [1, 1, 1]} : vector<8x10x128xbf16> to vector<8x8x128xbf16>
    %301 = vector.extract_strided_slice %299 {offsets = [0, 1, 0], sizes = [8, 8, 128], strides = [1, 1, 1]} : vector<8x10x128xbf16> to vector<8x8x128xbf16>
    %302 = vector.extract_strided_slice %299 {offsets = [0, 2, 0], sizes = [8, 8, 128], strides = [1, 1, 1]} : vector<8x10x128xbf16> to vector<8x8x128xbf16>
    %303 = tpu.concatenate %300, %301, %302 in 2 : vector<8x8x128xbf16>, vector<8x8x128xbf16>, vector<8x8x128xbf16> -> vector<8x8x384xbf16>
    %304 = vector.shape_cast %303 : vector<8x8x384xbf16> to vector<64x384xbf16>
    %c2_262 = arith.constant 2 : index
    %c1_263 = arith.constant 1 : index
    %c0_264 = arith.constant 0 : index
    %c0_265 = arith.constant 0 : index
    %305 = vector.load %arg7[%c2_262, %c1_263, %c0_264, %c0_265] : memref<3x3x384x128xbf16, #tpu.memory_space<vmem>>, vector<1x1x384x128xbf16>
    %306 = vector.shape_cast %305 : vector<1x1x384x128xbf16> to vector<384x128xbf16>
    %cst_266 = arith.constant dense<0.000000e+00> : vector<64x128xf32>
    %307 = tpu.matmul %304, %306, %cst_266 {dimension_numbers = #tpu.dot_dimension_numbers<[1], [0], [0], [1], [0, 0, 1, 1], [], []>} : vector<64x384xbf16>, vector<384x128xbf16>, vector<64x128xf32> -> vector<64x128xf32>
    %308 = arith.addf %294, %307 : vector<64x128xf32>
    %c1_267 = arith.constant 1 : index
    %c1_268 = arith.constant 1 : index
    %c0_269 = arith.constant 0 : index
    %c0_270 = arith.constant 0 : index
    %309 = vector.load %arg7[%c1_267, %c1_268, %c0_269, %c0_270] : memref<3x3x384x128xbf16, #tpu.memory_space<vmem>>, vector<1x1x384x128xbf16>
    %310 = vector.shape_cast %309 : vector<1x1x384x128xbf16> to vector<384x128xbf16>
    %cst_271 = arith.constant dense<0.000000e+00> : vector<64x128xf32>
    %311 = tpu.matmul %304, %310, %cst_271 {dimension_numbers = #tpu.dot_dimension_numbers<[1], [0], [0], [1], [0, 0, 1, 1], [], []>} : vector<64x384xbf16>, vector<384x128xbf16>, vector<64x128xf32> -> vector<64x128xf32>
    %312 = arith.addf %298, %311 : vector<64x128xf32>
    %313 = vector.extract_strided_slice %284 {offsets = [2, 0, 0], sizes = [8, 10, 128], strides = [1, 1, 1]} : vector<10x10x128xbf16> to vector<8x10x128xbf16>
    %314 = vector.extract_strided_slice %313 {offsets = [0, 0, 0], sizes = [8, 8, 128], strides = [1, 1, 1]} : vector<8x10x128xbf16> to vector<8x8x128xbf16>
    %315 = vector.extract_strided_slice %313 {offsets = [0, 1, 0], sizes = [8, 8, 128], strides = [1, 1, 1]} : vector<8x10x128xbf16> to vector<8x8x128xbf16>
    %316 = vector.extract_strided_slice %313 {offsets = [0, 2, 0], sizes = [8, 8, 128], strides = [1, 1, 1]} : vector<8x10x128xbf16> to vector<8x8x128xbf16>
    %317 = tpu.concatenate %314, %315, %316 in 2 : vector<8x8x128xbf16>, vector<8x8x128xbf16>, vector<8x8x128xbf16> -> vector<8x8x384xbf16>
    %318 = vector.shape_cast %317 : vector<8x8x384xbf16> to vector<64x384xbf16>
    %c2_272 = arith.constant 2 : index
    %c2_273 = arith.constant 2 : index
    %c0_274 = arith.constant 0 : index
    %c0_275 = arith.constant 0 : index
    %319 = vector.load %arg7[%c2_272, %c2_273, %c0_274, %c0_275] : memref<3x3x384x128xbf16, #tpu.memory_space<vmem>>, vector<1x1x384x128xbf16>
    %320 = vector.shape_cast %319 : vector<1x1x384x128xbf16> to vector<384x128xbf16>
    %cst_276 = arith.constant dense<0.000000e+00> : vector<64x128xf32>
    %321 = tpu.matmul %318, %320, %cst_276 {dimension_numbers = #tpu.dot_dimension_numbers<[1], [0], [0], [1], [0, 0, 1, 1], [], []>} : vector<64x384xbf16>, vector<384x128xbf16>, vector<64x128xf32> -> vector<64x128xf32>
    %322 = arith.addf %308, %321 : vector<64x128xf32>
    %c1_277 = arith.constant 1 : index
    %c2_278 = arith.constant 2 : index
    %c0_279 = arith.constant 0 : index
    %c0_280 = arith.constant 0 : index
    %323 = vector.load %arg7[%c1_277, %c2_278, %c0_279, %c0_280] : memref<3x3x384x128xbf16, #tpu.memory_space<vmem>>, vector<1x1x384x128xbf16>
    %324 = vector.shape_cast %323 : vector<1x1x384x128xbf16> to vector<384x128xbf16>
    %cst_281 = arith.constant dense<0.000000e+00> : vector<64x128xf32>
    %325 = tpu.matmul %318, %324, %cst_281 {dimension_numbers = #tpu.dot_dimension_numbers<[1], [0], [0], [1], [0, 0, 1, 1], [], []>} : vector<64x384xbf16>, vector<384x128xbf16>, vector<64x128xf32> -> vector<64x128xf32>
    %326 = arith.addf %312, %325 : vector<64x128xf32>
    %c2_i32_282 = arith.constant 2 : i32
    %327 = arith.muli %c2_i32_282, %arg1 : i32
    %c3_i32_283 = arith.constant 3 : i32
    %328 = arith.addi %327, %c3_i32_283 : i32
    %c4_i32_284 = arith.constant 4 : i32
    %c0_i32_285 = arith.constant 0 : i32
    %329 = arith.cmpi eq, %c4_i32_284, %c0_i32_285 : i32
    %c1_i32_286 = arith.constant 1 : i32
    %330 = arith.select %329, %c1_i32_286, %c4_i32_284 : i32
    %331 = arith.remsi %328, %330 : i32
    %c0_i32_287 = arith.constant 0 : i32
    %332 = arith.cmpi ne, %331, %c0_i32_287 : i32
    %c0_i32_288 = arith.constant 0 : i32
    %333 = arith.cmpi slt, %331, %c0_i32_288 : i32
    %c0_i32_289 = arith.constant 0 : i32
    %334 = arith.cmpi slt, %330, %c0_i32_289 : i32
    %335 = arith.xori %333, %334 : i1
    %336 = arith.andi %335, %332 : i1
    %337 = arith.addi %331, %330 : i32
    %338 = arith.select %336, %337, %331 : i32
    %339 = arith.index_cast %338 : i32 to index
    %c0_290 = arith.constant 0 : index
    %c0_291 = arith.constant 0 : index
    %c0_292 = arith.constant 0 : index
    %340 = vector.load %arg11[%339, %c0_290, %c0_291, %c0_292] : memref<4x10x10x128xbf16, #tpu.memory_space<vmem>>, vector<1x10x10x128xbf16>
    %341 = vector.shape_cast %340 : vector<1x10x10x128xbf16> to vector<10x10x128xbf16>
    %342 = vector.extract_strided_slice %341 {offsets = [0, 0, 0], sizes = [8, 10, 128], strides = [1, 1, 1]} : vector<10x10x128xbf16> to vector<8x10x128xbf16>
    %343 = vector.extract_strided_slice %342 {offsets = [0, 0, 0], sizes = [8, 8, 128], strides = [1, 1, 1]} : vector<8x10x128xbf16> to vector<8x8x128xbf16>
    %344 = vector.extract_strided_slice %342 {offsets = [0, 1, 0], sizes = [8, 8, 128], strides = [1, 1, 1]} : vector<8x10x128xbf16> to vector<8x8x128xbf16>
    %345 = vector.extract_strided_slice %342 {offsets = [0, 2, 0], sizes = [8, 8, 128], strides = [1, 1, 1]} : vector<8x10x128xbf16> to vector<8x8x128xbf16>
    %346 = tpu.concatenate %343, %344, %345 in 2 : vector<8x8x128xbf16>, vector<8x8x128xbf16>, vector<8x8x128xbf16> -> vector<8x8x384xbf16>
    %347 = vector.shape_cast %346 : vector<8x8x384xbf16> to vector<64x384xbf16>
    %c2_293 = arith.constant 2 : index
    %c0_294 = arith.constant 0 : index
    %c0_295 = arith.constant 0 : index
    %c0_296 = arith.constant 0 : index
    %348 = vector.load %arg7[%c2_293, %c0_294, %c0_295, %c0_296] : memref<3x3x384x128xbf16, #tpu.memory_space<vmem>>, vector<1x1x384x128xbf16>
    %349 = vector.shape_cast %348 : vector<1x1x384x128xbf16> to vector<384x128xbf16>
    %cst_297 = arith.constant dense<0.000000e+00> : vector<64x128xf32>
    %350 = tpu.matmul %347, %349, %cst_297 {dimension_numbers = #tpu.dot_dimension_numbers<[1], [0], [0], [1], [0, 0, 1, 1], [], []>} : vector<64x384xbf16>, vector<384x128xbf16>, vector<64x128xf32> -> vector<64x128xf32>
    %351 = arith.addf %326, %350 : vector<64x128xf32>
    %352 = vector.extract_strided_slice %341 {offsets = [1, 0, 0], sizes = [8, 10, 128], strides = [1, 1, 1]} : vector<10x10x128xbf16> to vector<8x10x128xbf16>
    %353 = vector.extract_strided_slice %352 {offsets = [0, 0, 0], sizes = [8, 8, 128], strides = [1, 1, 1]} : vector<8x10x128xbf16> to vector<8x8x128xbf16>
    %354 = vector.extract_strided_slice %352 {offsets = [0, 1, 0], sizes = [8, 8, 128], strides = [1, 1, 1]} : vector<8x10x128xbf16> to vector<8x8x128xbf16>
    %355 = vector.extract_strided_slice %352 {offsets = [0, 2, 0], sizes = [8, 8, 128], strides = [1, 1, 1]} : vector<8x10x128xbf16> to vector<8x8x128xbf16>
    %356 = tpu.concatenate %353, %354, %355 in 2 : vector<8x8x128xbf16>, vector<8x8x128xbf16>, vector<8x8x128xbf16> -> vector<8x8x384xbf16>
    %357 = vector.shape_cast %356 : vector<8x8x384xbf16> to vector<64x384xbf16>
    %c2_298 = arith.constant 2 : index
    %c1_299 = arith.constant 1 : index
    %c0_300 = arith.constant 0 : index
    %c0_301 = arith.constant 0 : index
    %358 = vector.load %arg7[%c2_298, %c1_299, %c0_300, %c0_301] : memref<3x3x384x128xbf16, #tpu.memory_space<vmem>>, vector<1x1x384x128xbf16>
    %359 = vector.shape_cast %358 : vector<1x1x384x128xbf16> to vector<384x128xbf16>
    %cst_302 = arith.constant dense<0.000000e+00> : vector<64x128xf32>
    %360 = tpu.matmul %357, %359, %cst_302 {dimension_numbers = #tpu.dot_dimension_numbers<[1], [0], [0], [1], [0, 0, 1, 1], [], []>} : vector<64x384xbf16>, vector<384x128xbf16>, vector<64x128xf32> -> vector<64x128xf32>
    %361 = arith.addf %351, %360 : vector<64x128xf32>
    %362 = vector.extract_strided_slice %341 {offsets = [2, 0, 0], sizes = [8, 10, 128], strides = [1, 1, 1]} : vector<10x10x128xbf16> to vector<8x10x128xbf16>
    %363 = vector.extract_strided_slice %362 {offsets = [0, 0, 0], sizes = [8, 8, 128], strides = [1, 1, 1]} : vector<8x10x128xbf16> to vector<8x8x128xbf16>
    %364 = vector.extract_strided_slice %362 {offsets = [0, 1, 0], sizes = [8, 8, 128], strides = [1, 1, 1]} : vector<8x10x128xbf16> to vector<8x8x128xbf16>
    %365 = vector.extract_strided_slice %362 {offsets = [0, 2, 0], sizes = [8, 8, 128], strides = [1, 1, 1]} : vector<8x10x128xbf16> to vector<8x8x128xbf16>
    %366 = tpu.concatenate %363, %364, %365 in 2 : vector<8x8x128xbf16>, vector<8x8x128xbf16>, vector<8x8x128xbf16> -> vector<8x8x384xbf16>
    %367 = vector.shape_cast %366 : vector<8x8x384xbf16> to vector<64x384xbf16>
    %c2_303 = arith.constant 2 : index
    %c2_304 = arith.constant 2 : index
    %c0_305 = arith.constant 0 : index
    %c0_306 = arith.constant 0 : index
    %368 = vector.load %arg7[%c2_303, %c2_304, %c0_305, %c0_306] : memref<3x3x384x128xbf16, #tpu.memory_space<vmem>>, vector<1x1x384x128xbf16>
    %369 = vector.shape_cast %368 : vector<1x1x384x128xbf16> to vector<384x128xbf16>
    %cst_307 = arith.constant dense<0.000000e+00> : vector<64x128xf32>
    %370 = tpu.matmul %367, %369, %cst_307 {dimension_numbers = #tpu.dot_dimension_numbers<[1], [0], [0], [1], [0, 0, 1, 1], [], []>} : vector<64x384xbf16>, vector<384x128xbf16>, vector<64x128xf32> -> vector<64x128xf32>
    %371 = arith.addf %361, %370 : vector<64x128xf32>
    %372 = vector.broadcast %1 : vector<1x128xf32> to vector<64x128xf32>
    %373 = arith.addf %322, %372 : vector<64x128xf32>
    %cst_308 = arith.constant 0.000000e+00 : f32
    %374 = vector.broadcast %cst_308 : f32 to vector<64x128xf32>
    %375 = arith.maximumf %373, %374 : vector<64x128xf32>
    %376 = vector.shape_cast %375 : vector<64x128xf32> to vector<8x8x128xf32>
    %377 = vector.broadcast %1 : vector<1x128xf32> to vector<64x128xf32>
    %378 = arith.addf %371, %377 : vector<64x128xf32>
    %cst_309 = arith.constant 0.000000e+00 : f32
    %379 = vector.broadcast %cst_309 : f32 to vector<64x128xf32>
    %380 = arith.maximumf %378, %379 : vector<64x128xf32>
    %381 = vector.shape_cast %380 : vector<64x128xf32> to vector<8x8x128xf32>
    %382 = arith.truncf %376 : vector<8x8x128xf32> to vector<8x8x128xbf16>
    %c0_310 = arith.constant 0 : index
    %c0_311 = arith.constant 0 : index
    %c0_312 = arith.constant 0 : index
    %c0_313 = arith.constant 0 : index
    %c0_314 = arith.constant 0 : index
    %383 = vector.load %arg9[%c0_310, %c0_311, %c0_312, %c0_313, %c0_314] : memref<1x2x8x8x128xbf16, #tpu.memory_space<vmem>>, vector<1x1x8x8x128xbf16>
    %384 = vector.shape_cast %383 : vector<1x1x8x8x128xbf16> to vector<8x8x128xbf16>
    %385 = vector.shape_cast %382 : vector<8x8x128xbf16> to vector<1x1x8x8x128xbf16>
    tpu.vector_store %arg9[%c0_310, %c0_311, %c0_312, %c0_313, %c0_314], %385 {strides = array<i32>} : memref<1x2x8x8x128xbf16, #tpu.memory_space<vmem>>, vector<1x1x8x8x128xbf16>,
    %386 = arith.truncf %381 : vector<8x8x128xf32> to vector<8x8x128xbf16>
    %c0_315 = arith.constant 0 : index
    %c1_316 = arith.constant 1 : index
    %c0_317 = arith.constant 0 : index
    %c0_318 = arith.constant 0 : index
    %c0_319 = arith.constant 0 : index
    %387 = vector.load %arg9[%c0_315, %c1_316, %c0_317, %c0_318, %c0_319] : memref<1x2x8x8x128xbf16, #tpu.memory_space<vmem>>, vector<1x1x8x8x128xbf16>
    %388 = vector.shape_cast %387 : vector<1x1x8x8x128xbf16> to vector<8x8x128xbf16>
    %389 = vector.shape_cast %386 : vector<8x8x128xbf16> to vector<1x1x8x8x128xbf16>
    tpu.vector_store %arg9[%c0_315, %c1_316, %c0_317, %c0_318, %c0_319], %389 {strides = array<i32>} : memref<1x2x8x8x128xbf16, #tpu.memory_space<vmem>>, vector<1x1x8x8x128xbf16>,
    %390 = arith.maximumf %376, %381 : vector<8x8x128xf32>
    %391 = vector.shape_cast %390 : vector<8x8x128xf32> to vector<4x2x4x2x128xf32>
    %392 = vector.extract_strided_slice %391 {offsets = [0, 0, 0, 0, 0], sizes = [4, 1, 4, 2, 128], strides = [1, 1, 1, 1, 1]} : vector<4x2x4x2x128xf32> to vector<4x1x4x2x128xf32>
    %393 = vector.shape_cast %392 : vector<4x1x4x2x128xf32> to vector<4x4x2x128xf32>
    %394 = vector.extract_strided_slice %391 {offsets = [0, 1, 0, 0, 0], sizes = [4, 1, 4, 2, 128], strides = [1, 1, 1, 1, 1]} : vector<4x2x4x2x128xf32> to vector<4x1x4x2x128xf32>
    %395 = vector.shape_cast %394 : vector<4x1x4x2x128xf32> to vector<4x4x2x128xf32>
    %396 = arith.maximumf %393, %395 : vector<4x4x2x128xf32>
    %397 = vector.extract_strided_slice %396 {offsets = [0, 0, 0, 0], sizes = [4, 4, 1, 128], strides = [1, 1, 1, 1]} : vector<4x4x2x128xf32> to vector<4x4x1x128xf32>
    %398 = vector.shape_cast %397 : vector<4x4x1x128xf32> to vector<4x4x128xf32>
    %399 = vector.extract_strided_slice %396 {offsets = [0, 0, 1, 0], sizes = [4, 4, 1, 128], strides = [1, 1, 1, 1]} : vector<4x4x2x128xf32> to vector<4x4x1x128xf32>
    %400 = vector.shape_cast %399 : vector<4x4x1x128xf32> to vector<4x4x128xf32>
    %401 = arith.maximumf %398, %400 : vector<4x4x128xf32>
    %402 = arith.truncf %401 : vector<4x4x128xf32> to vector<4x4x128xbf16>
    %c0_320 = arith.constant 0 : index
    %c0_321 = arith.constant 0 : index
    %c0_322 = arith.constant 0 : index
    %c0_323 = arith.constant 0 : index
    %c0_324 = arith.constant 0 : index
    %403 = vector.load %arg10[%c0_320, %c0_321, %c0_322, %c0_323, %c0_324] : memref<1x1x4x4x128xbf16, #tpu.memory_space<vmem>>, vector<1x1x4x4x128xbf16>
    %404 = vector.shape_cast %403 : vector<1x1x4x4x128xbf16> to vector<4x4x128xbf16>
    %405 = vector.shape_cast %402 : vector<4x4x128xbf16> to vector<1x1x4x4x128xbf16>
    tpu.vector_store %arg10[%c0_320, %c0_321, %c0_322, %c0_323, %c0_324], %405 {strides = array<i32>} : memref<1x1x4x4x128xbf16, #tpu.memory_space<vmem>>, vector<1x1x4x4x128xbf16>,
    return
  }
  func.func @transform_0(%arg0: i32, %arg1: i32) -> (i32, i32, i32, i32, i32) {
    %c0_i32 = arith.constant 0 : i32
    %c0_i32_0 = arith.constant 0 : i32
    %c0_i32_1 = arith.constant 0 : i32
    %c0_i32_2 = arith.constant 0 : i32
    return %arg0, %arg1, %c0_i32, %c0_i32_0, %c0_i32_1 : i32, i32, i32, i32, i32
  }
  func.func @transform_1(%arg0: i32, %arg1: i32) -> (i32, i32, i32, i32, i32) {
    %c1_i32 = arith.constant 1 : i32
    %0 = arith.addi %arg1, %c1_i32 : i32
    %c0_i32 = arith.constant 0 : i32
    %c0_i32_0 = arith.constant 0 : i32
    %c0_i32_1 = arith.constant 0 : i32
    %c0_i32_2 = arith.constant 0 : i32
    return %arg0, %0, %c0_i32, %c0_i32_0, %c0_i32_1 : i32, i32, i32, i32, i32
  }
  func.func @transform_2(%arg0: i32, %arg1: i32) -> (i32, i32, i32, i32, i32) {
    %c2_i32 = arith.constant 2 : i32
    %0 = arith.addi %arg1, %c2_i32 : i32
    %c0_i32 = arith.constant 0 : i32
    %c0_i32_0 = arith.constant 0 : i32
    %c0_i32_1 = arith.constant 0 : i32
    %c0_i32_2 = arith.constant 0 : i32
    return %arg0, %0, %c0_i32, %c0_i32_0, %c0_i32_1 : i32, i32, i32, i32, i32
  }
  func.func @transform_3(%arg0: i32, %arg1: i32) -> (i32, i32, i32, i32) {
    %c0_i32 = arith.constant 0 : i32
    %c0_i32_0 = arith.constant 0 : i32
    %c0_i32_1 = arith.constant 0 : i32
    %c0_i32_2 = arith.constant 0 : i32
    %c0_i32_3 = arith.constant 0 : i32
    return %c0_i32, %c0_i32_0, %c0_i32_1, %c0_i32_2 : i32, i32, i32, i32
  }
  func.func @transform_4(%arg0: i32, %arg1: i32) -> (i32, i32) {
    %c0_i32 = arith.constant 0 : i32
    %c0_i32_0 = arith.constant 0 : i32
    %c0_i32_1 = arith.constant 0 : i32
    return %c0_i32, %c0_i32_0 : i32, i32
  }
  func.func @transform_5(%arg0: i32, %arg1: i32) -> (i32, i32, i32, i32) {
    %c0_i32 = arith.constant 0 : i32
    %c0_i32_0 = arith.constant 0 : i32
    %c0_i32_1 = arith.constant 0 : i32
    %c0_i32_2 = arith.constant 0 : i32
    %c0_i32_3 = arith.constant 0 : i32
    return %c0_i32, %c0_i32_0, %c0_i32_1, %c0_i32_2 : i32, i32, i32, i32
  }
  func.func @transform_6(%arg0: i32, %arg1: i32) -> (i32, i32) {
    %c0_i32 = arith.constant 0 : i32
    %c0_i32_0 = arith.constant 0 : i32
    %c0_i32_1 = arith.constant 0 : i32
    return %c0_i32, %c0_i32_0 : i32, i32
  }
  func.func @transform_7(%arg0: i32, %arg1: i32) -> (i32, i32, i32, i32, i32) {
    %c0_i32 = arith.constant 0 : i32
    %c0_i32_0 = arith.constant 0 : i32
    %c0_i32_1 = arith.constant 0 : i32
    %c0_i32_2 = arith.constant 0 : i32
    return %arg0, %arg1, %c0_i32, %c0_i32_0, %c0_i32_1 : i32, i32, i32, i32, i32
  }
  func.func @transform_8(%arg0: i32, %arg1: i32) -> (i32, i32, i32, i32, i32) {
    %c0_i32 = arith.constant 0 : i32
    %c0_i32_0 = arith.constant 0 : i32
    %c0_i32_1 = arith.constant 0 : i32
    %c0_i32_2 = arith.constant 0 : i32
    return %arg0, %arg1, %c0_i32, %c0_i32_0, %c0_i32_1 : i32, i32, i32, i32, i32
  }
}

</mosaic_0001>

<llo_original>
// kernel: downconv_forward.1
$region0: #{downconv_forward.1}
  #allocation0 [shape = 'u32[]', space=smem, size = 0x4, offset = 0x4, fixed_abs, tag = 'smem constant byte address 0x4 - core index']
  #allocation1 [shape = 'u32[144,128]{1,0:T(1,128)}', space=vmem, size = 0x12000, scoped, tag = 'internal scratch']
  #allocation2 [shape = 'bf16[4,10,10,128]{3,2,1,0:T(8,128)(2,1)}', space=vmem, size = 0x28000, scoped, tag = 'scratch operand']
  %s0 = inlined_call_operand.vmem [shape: bf16[2,12,10,8,12], index: 0, kind: input, shape index: {}, may-alias: {0,1,2}]
  %s1 = inlined_call_operand.vmem [shape: bf16[2,12,10,8,12], index: 1, kind: input, shape index: {}, may-alias: {0,1,2}]
  %s2 = inlined_call_operand.vmem [shape: bf16[2,12,10,8,12], index: 2, kind: input, shape index: {}, may-alias: {0,1,2}]
  %s3 = inlined_call_operand.vmem [shape: bf16[3,3,12,128], index: 3, kind: input, shape index: {}]
  %s4 = inlined_call_operand.vmem [shape: f32[1,128], index: 4, kind: input, shape index: {}]
  %s5 = inlined_call_operand.vmem [shape: bf16[3,3,384,128], index: 5, kind: input, shape index: {}]
  %s6 = inlined_call_operand.vmem [shape: f32[1,128], index: 6, kind: input, shape index: {}]
  %s7 = inlined_call_operand.vmem [shape: bf16[2,8,8,8,128], index: 7, kind: output, shape index: {0}]
  %s8 = inlined_call_operand.vmem [shape: bf16[2,4,4,4,128], index: 8, kind: output, shape index: {1}]
  %9 = xla_tuple %s7, %s8
  %s10 = sld [smem:[#allocation0]]
  $region81: #{downconv_forward.1} parent=0
    _
  %s12 = ssub.s32 1, %s10
  %s13 = scalar_select 0, %s12, %s10
  loop: start=0, step=1, limit=10
  $region2: #{downconv_forward.1} parent=0 // loop_pre_header
    _
  $region3: #{downconv_forward.1} parent=0 // loop_header
    %s15 = sphi 0, %s19
    %p16 = scmp.ge.s32.totalorder %s15, 10
    %s22 = sphi 0, %s34
    %s23 = sphi 0, %s30
    %s24 = sphi 0, %s22
    %s25 = sphi 0, %s23
    %s26 = sphi 0, %s24
    %s27 = sphi 0, %s25
    %s39 = sphi 0, %s41
    %s42 = sphi 0, %s39
    %s43 = sphi 0, %s42
    %s59 = sphi 0, %s43
    %s69 = sphi 0, %s71
    %s72 = sphi 0, %s69
    %s73 = sphi 0, %s72
    %s89 = sphi 0, %s73
    %s99 = sphi 0, %s101
    %s102 = sphi 0, %s99
    %s103 = sphi 0, %s102
    %s119 = sphi 0, %s103
    %s123 = sphi 0, %s123
    %s125 = sphi 0, %s123
    %s126 = sphi 0, %s125
    %s140 = sphi 0, %s126
    %s144 = sphi 0, %s144
    %s146 = sphi 0, %s144
    %s147 = sphi 0, %s146
    %s161 = sphi 0, %s147
    %s165 = sphi 0, %s165
    %s167 = sphi 0, %s165
    %s168 = sphi 0, %s167
    %s182 = sphi 0, %s168
    %s186 = sphi 0, %s186
    %s188 = sphi 0, %s186
    %s189 = sphi 0, %s188
    %s203 = sphi 0, %s189
    %s211 = sphi 0, %s213
    %s214 = sphi 0, %s211
    %s215 = sphi 0, %s214
    %s231 = sphi 0, %s215
    %s239 = sphi 0, %s241
    %s242 = sphi 0, %s239
    %s243 = sphi 0, %s242
    %s259 = sphi 0, %s243
  $region4: #{downconv_forward.1} parent=0 // loop_header_branch
    %18 = sbr.rel (%p16) target = $region8
  $region5: #{downconv_forward.1} parent=0 // loop_body
    %s20 = ssub.s32 %s15, 1
    %s21 = ssub.s32 %s15, 2
    %s28 = sadd.s32 1, %s23
    %p29 = scmp.ge.s32.totalorder %s28, 4
    %s30 = scalar_select %p29, 0, %s28
    %s31 = sadd.s32 1, %s22
    %s32 = scalar_select %p29, %s31, %s22
    %p33 = scmp.ge.s32.totalorder %s32, 2
    %s34 = scalar_select %p33, 0, %s32
    %s35 = ssub.s32 %s22, %s34
    %s36 = ssub.s32 %s23, %s30
    %s37 = sor.u32 %s35, %s36
    %p38 = scmp.eq.s32.totalorder %s37, 0
    %s40 = sadd.s32 %s39, 1
    %s41 = scalar_select %p38, %s39, %s40
    %p44 = pneg %p38
    %p45 = scmp.eq.s32.totalorder %s15, 7
    %p46 = por %p44, %p45
    %p47 = scmp.ne.s32.totalorder %s39, %s42
    %p48 = scmp.eq.s32.totalorder %s15, 0
    %p49 = por %p47, %p48
    %p50 = scmp.ne.s32.totalorder %s39, %s42
    %p51 = scmp.eq.s32.totalorder %s20, 7
    %p52 = por %p50, %p51
    %p53 = scmp.ne.s32.totalorder %s42, %s43
    %p54 = scmp.eq.s32.totalorder %s20, 0
    %p55 = por %p53, %p54
    %p56 = scmp.ne.s32.totalorder %s42, %s43
    %p57 = scmp.eq.s32.totalorder %s21, 7
    %p58 = por %p56, %p57
    %p60 = scmp.ne.s32.totalorder %s43, %s59
    %p61 = scmp.eq.s32.totalorder %s21, 0
    %p62 = por %p60, %p61
    %s63 = sadd.s32 %s23, 1
    %s64 = sadd.s32 %s30, 1
    %s65 = ssub.s32 %s22, %s34
    %s66 = ssub.s32 %s63, %s64
    %s67 = sor.u32 %s65, %s66
    %p68 = scmp.eq.s32.totalorder %s67, 0
    %s70 = sadd.s32 %s69, 1
    %s71 = scalar_select %p68, %s69, %s70
    %p74 = pneg %p68
    %p75 = scmp.eq.s32.totalorder %s15, 7
    %p76 = por %p74, %p75
    %p77 = scmp.ne.s32.totalorder %s69, %s72
    %p78 = scmp.eq.s32.totalorder %s15, 0
    %p79 = por %p77, %p78
    %p80 = scmp.ne.s32.totalorder %s69, %s72
    %p81 = scmp.eq.s32.totalorder %s20, 7
    %p82 = por %p80, %p81
    %p83 = scmp.ne.s32.totalorder %s72, %s73
    %p84 = scmp.eq.s32.totalorder %s20, 0
    %p85 = por %p83, %p84
    %p86 = scmp.ne.s32.totalorder %s72, %s73
    %p87 = scmp.eq.s32.totalorder %s21, 7
    %p88 = por %p86, %p87
    %p90 = scmp.ne.s32.totalorder %s73, %s89
    %p91 = scmp.eq.s32.totalorder %s21, 0
    %p92 = por %p90, %p91
    %s93 = sadd.s32 %s23, 2
    %s94 = sadd.s32 %s30, 2
    %s95 = ssub.s32 %s22, %s34
    %s96 = ssub.s32 %s93, %s94
    %s97 = sor.u32 %s95, %s96
    %p98 = scmp.eq.s32.totalorder %s97, 0
    %s100 = sadd.s32 %s99, 1
    %s101 = scalar_select %p98, %s99, %s100
    %p104 = pneg %p98
    %p105 = scmp.eq.s32.totalorder %s15, 7
    %p106 = por %p104, %p105
    %p107 = scmp.ne.s32.totalorder %s99, %s102
    %p108 = scmp.eq.s32.totalorder %s15, 0
    %p109 = por %p107, %p108
    %p110 = scmp.ne.s32.totalorder %s99, %s102
    %p111 = scmp.eq.s32.totalorder %s20, 7
    %p112 = por %p110, %p111
    %p113 = scmp.ne.s32.totalorder %s102, %s103
    %p114 = scmp.eq.s32.totalorder %s20, 0
    %p115 = por %p113, %p114
    %p116 = scmp.ne.s32.totalorder %s102, %s103
    %p117 = scmp.eq.s32.totalorder %s21, 7
    %p118 = por %p116, %p117
    %p120 = scmp.ne.s32.totalorder %s103, %s119
    %p121 = scmp.eq.s32.totalorder %s21, 0
    %p122 = por %p120, %p121
    %s124 = sadd.s32 %s123, 1
    %p127 = scmp.eq.s32.totalorder %s15, 7
    %p128 = scmp.ne.s32.totalorder %s123, %s125
    %p129 = scmp.eq.s32.totalorder %s15, 0
    %p130 = por %p128, %p129
    %p131 = scmp.ne.s32.totalorder %s123, %s125
    %p132 = scmp.eq.s32.totalorder %s20, 7
    %p133 = por %p131, %p132
    %p134 = scmp.ne.s32.totalorder %s125, %s126
    %p135 = scmp.eq.s32.totalorder %s20, 0
    %p136 = por %p134, %p135
    %p137 = scmp.ne.s32.totalorder %s125, %s126
    %p138 = scmp.eq.s32.totalorder %s21, 7
    %p139 = por %p137, %p138
    %p141 = scmp.ne.s32.totalorder %s126, %s140
    %p142 = scmp.eq.s32.totalorder %s21, 0
    %p143 = por %p141, %p142
    %s145 = sadd.s32 %s144, 1
    %p148 = scmp.eq.s32.totalorder %s15, 7
    %p149 = scmp.ne.s32.totalorder %s144, %s146
    %p150 = scmp.eq.s32.totalorder %s15, 0
    %p151 = por %p149, %p150
    %p152 = scmp.ne.s32.totalorder %s144, %s146
    %p153 = scmp.eq.s32.totalorder %s20, 7
    %p154 = por %p152, %p153
    %p155 = scmp.ne.s32.totalorder %s146, %s147
    %p156 = scmp.eq.s32.totalorder %s20, 0
    %p157 = por %p155, %p156
    %p158 = scmp.ne.s32.totalorder %s146, %s147
    %p159 = scmp.eq.s32.totalorder %s21, 7
    %p160 = por %p158, %p159
    %p162 = scmp.ne.s32.totalorder %s147, %s161
    %p163 = scmp.eq.s32.totalorder %s21, 0
    %p164 = por %p162, %p163
    %s166 = sadd.s32 %s165, 1
    %p169 = scmp.eq.s32.totalorder %s15, 7
    %p170 = scmp.ne.s32.totalorder %s165, %s167
    %p171 = scmp.eq.s32.totalorder %s15, 0
    %p172 = por %p170, %p171
    %p173 = scmp.ne.s32.totalorder %s165, %s167
    %p174 = scmp.eq.s32.totalorder %s20, 7
    %p175 = por %p173, %p174
    %p176 = scmp.ne.s32.totalorder %s167, %s168
    %p177 = scmp.eq.s32.totalorder %s20, 0
    %p178 = por %p176, %p177
    %p179 = scmp.ne.s32.totalorder %s167, %s168
    %p180 = scmp.eq.s32.totalorder %s21, 7
    %p181 = por %p179, %p180
    %p183 = scmp.ne.s32.totalorder %s168, %s182
    %p184 = scmp.eq.s32.totalorder %s21, 0
    %p185 = por %p183, %p184
    %s187 = sadd.s32 %s186, 1
    %p190 = scmp.eq.s32.totalorder %s15, 7
    %p191 = scmp.ne.s32.totalorder %s186, %s188
    %p192 = scmp.eq.s32.totalorder %s15, 0
    %p193 = por %p191, %p192
    %p194 = scmp.ne.s32.totalorder %s186, %s188
    %p195 = scmp.eq.s32.totalorder %s20, 7
    %p196 = por %p194, %p195
    %p197 = scmp.ne.s32.totalorder %s188, %s189
    %p198 = scmp.eq.s32.totalorder %s20, 0
    %p199 = por %p197, %p198
    %p200 = scmp.ne.s32.totalorder %s188, %s189
    %p201 = scmp.eq.s32.totalorder %s21, 7
    %p202 = por %p200, %p201
    %p204 = scmp.ne.s32.totalorder %s189, %s203
    %p205 = scmp.eq.s32.totalorder %s21, 0
    %p206 = por %p204, %p205
    %s207 = ssub.s32 %s22, %s34
    %s208 = ssub.s32 %s23, %s30
    %s209 = sor.u32 %s207, %s208
    %p210 = scmp.eq.s32.totalorder %s209, 0
    %s212 = sadd.s32 %s211, 1
    %s213 = scalar_select %p210, %s211, %s212
    %p216 = pneg %p210
    %p217 = scmp.eq.s32.totalorder %s15, 7
    %p218 = por %p216, %p217
    %p219 = scmp.ne.s32.totalorder %s211, %s214
    %p220 = scmp.eq.s32.totalorder %s15, 0
    %p221 = por %p219, %p220
    %p222 = scmp.ne.s32.totalorder %s211, %s214
    %p223 = scmp.eq.s32.totalorder %s20, 7
    %p224 = por %p222, %p223
    %p225 = scmp.ne.s32.totalorder %s214, %s215
    %p226 = scmp.eq.s32.totalorder %s20, 0
    %p227 = por %p225, %p226
    %p228 = scmp.ne.s32.totalorder %s214, %s215
    %p229 = scmp.eq.s32.totalorder %s21, 7
    %p230 = por %p228, %p229
    %p232 = scmp.ne.s32.totalorder %s215, %s231
    %p233 = scmp.eq.s32.totalorder %s21, 0
    %p234 = por %p232, %p233
    %s235 = ssub.s32 %s22, %s34
    %s236 = ssub.s32 %s23, %s30
    %s237 = sor.u32 %s235, %s236
    %p238 = scmp.eq.s32.totalorder %s237, 0
    %s240 = sadd.s32 %s239, 1
    %s241 = scalar_select %p238, %s239, %s240
    %p244 = pneg %p238
    %p245 = scmp.eq.s32.totalorder %s15, 7
    %p246 = por %p244, %p245
    %p247 = scmp.ne.s32.totalorder %s239, %s242
    %p248 = scmp.eq.s32.totalorder %s15, 0
    %p249 = por %p247, %p248
    %p250 = scmp.ne.s32.totalorder %s239, %s242
    %p251 = scmp.eq.s32.totalorder %s20, 7
    %p252 = por %p250, %p251
    %p253 = scmp.ne.s32.totalorder %s242, %s243
    %p254 = scmp.eq.s32.totalorder %s20, 0
    %p255 = por %p253, %p254
    %p256 = scmp.ne.s32.totalorder %s242, %s243
    %p257 = scmp.eq.s32.totalorder %s21, 7
    %p258 = por %p256, %p257
    %p260 = scmp.ne.s32.totalorder %s243, %s259
    %p261 = scmp.eq.s32.totalorder %s21, 0
    %p262 = por %p260, %p261
    %p263 = scmp.le.s32.totalorder 1, %s15
    %p264 = scmp.lt.s32.totalorder %s15, 9
    %p265 = pnand %p263, %p264
    %p266 = pneg %p265
    // Predicated region
    $region9: #{downconv_forward.1} parent=5 // pred_check
      _
    $region10: #{downconv_forward.1} parent=5 // pred_check_branch
      %268 = sbr.rel (%p265) target = $region12
    $region11: #{downconv_forward.1} parent=5 // pred_region
      %s269 = ssub.s32 %s15, 1
      // Predicated region
      $region13: #{downconv_forward.1} parent=11 // pred_check
        %p270 = pneg %p136
      $region14: #{downconv_forward.1} parent=11 // pred_check_branch
        %272 = sbr.rel (%p270) target = $region16
      $region15: #{downconv_forward.1} parent=11 // pred_region
        _
      $region16: #{downconv_forward.1} parent=11 // pred_fallthru
        _
      // Predicated region
      $region17: #{downconv_forward.1} parent=11 // pred_check
        %p273 = pneg %p157
      $region18: #{downconv_forward.1} parent=11 // pred_check_branch
        %275 = sbr.rel (%p273) target = $region20
      $region19: #{downconv_forward.1} parent=11 // pred_region
        _
      $region20: #{downconv_forward.1} parent=11 // pred_fallthru
        _
      // Predicated region
      $region21: #{downconv_forward.1} parent=11 // pred_check
        %p276 = pneg %p178
      $region22: #{downconv_forward.1} parent=11 // pred_check_branch
        %278 = sbr.rel (%p276) target = $region24
      $region23: #{downconv_forward.1} parent=11 // pred_region
        _
      $region24: #{downconv_forward.1} parent=11 // pred_fallthru
        _
      // Predicated region
      $region25: #{downconv_forward.1} parent=11 // pred_check
        %p279 = pneg %p199
      $region26: #{downconv_forward.1} parent=11 // pred_check_branch
        %281 = sbr.rel (%p279) target = $region28
      $region27: #{downconv_forward.1} parent=11 // pred_region
        _
      $region28: #{downconv_forward.1} parent=11 // pred_fallthru
        _
    $region12: #{downconv_forward.1} parent=5 // pred_fallthru
      _
    %p282 = scmp.lt.s32.totalorder %s15, 8
    // Predicated region
    $region29: #{downconv_forward.1} parent=5 // pred_check
      %p283 = pneg %p282
    $region30: #{downconv_forward.1} parent=5 // pred_check_branch
      %285 = sbr.rel (%p283) target = $region32
    $region31: #{downconv_forward.1} parent=5 // pred_region
      // Predicated region
      $region33: #{downconv_forward.1} parent=31 // pred_check
        %p286 = pneg %p49
      $region34: #{downconv_forward.1} parent=31 // pred_check_branch
        %288 = sbr.rel (%p286) target = $region36
      $region35: #{downconv_forward.1} parent=31 // pred_region
        %s289 = smul.u32 2, %s23
        %p290 = scmp.lt.s32.totalorder %s22, 1
        %s291 = scalar_select %p290, %s22, 1
        %p292 = scmp.lt.s32.totalorder %s289, 11
        %s293 = scalar_select %p292, %s289, 11
        %s294 = smul.addr %s293, 10
        %s295 = smul.addr %s291, 120
        %s296 = sadd.s32 %s294, %s295
        %s297 = smul.addr %s296, 4
        %s298 = scalar_lea.vmem %s0, %s297
        %s299 = smul.u32 2, %s23
      $region36: #{downconv_forward.1} parent=31 // pred_fallthru
        _
      // Predicated region
      $region37: #{downconv_forward.1} parent=31 // pred_check
        %p300 = pneg %p79
      $region38: #{downconv_forward.1} parent=31 // pred_check_branch
        %302 = sbr.rel (%p300) target = $region40
      $region39: #{downconv_forward.1} parent=31 // pred_region
        %s303 = sadd.s32 %s23, 1
        %s304 = smul.u32 2, %s303
        %p305 = scmp.lt.s32.totalorder %s22, 1
        %s306 = scalar_select %p305, %s22, 1
        %p307 = scmp.lt.s32.totalorder %s304, 11
        %s308 = scalar_select %p307, %s304, 11
        %s309 = smul.addr %s308, 10
        %s310 = smul.addr %s306, 120
        %s311 = sadd.s32 %s309, %s310
        %s312 = smul.addr %s311, 4
        %s313 = scalar_lea.vmem %s1, %s312
        %s314 = sadd.s32 %s23, 1
        %s315 = smul.u32 2, %s314
      $region40: #{downconv_forward.1} parent=31 // pred_fallthru
        _
      // Predicated region
      $region41: #{downconv_forward.1} parent=31 // pred_check
        %p316 = pneg %p109
      $region42: #{downconv_forward.1} parent=31 // pred_check_branch
        %318 = sbr.rel (%p316) target = $region44
      $region43: #{downconv_forward.1} parent=31 // pred_region
        %s319 = sadd.s32 %s23, 2
        %s320 = smul.u32 2, %s319
        %p321 = scmp.lt.s32.totalorder %s22, 1
        %s322 = scalar_select %p321, %s22, 1
        %p323 = scmp.lt.s32.totalorder %s320, 11
        %s324 = scalar_select %p323, %s320, 11
        %s325 = smul.addr %s324, 10
        %s326 = smul.addr %s322, 120
        %s327 = sadd.s32 %s325, %s326
        %s328 = smul.addr %s327, 4
        %s329 = scalar_lea.vmem %s2, %s328
        %s330 = sadd.s32 %s23, 2
        %s331 = smul.u32 2, %s330
      $region44: #{downconv_forward.1} parent=31 // pred_fallthru
        _
    $region32: #{downconv_forward.1} parent=5 // pred_fallthru
      _
    %p332 = scmp.le.s32.totalorder 1, %s15
    %p333 = scmp.lt.s32.totalorder %s15, 9
    %p334 = pnand %p332, %p333
    %p335 = pneg %p334
    // Predicated region
    $region45: #{downconv_forward.1} parent=5 // pred_check
      _
    $region46: #{downconv_forward.1} parent=5 // pred_check_branch
      %337 = sbr.rel (%p334) target = $region48
    $region47: #{downconv_forward.1} parent=5 // pred_region
      %s338 = ssub.s32 %s15, 1
      %s339 = smul.u32 2, %s25
      %p340 = scmp.lt.s32.totalorder %s24, 1
      %s341 = scalar_select %p340, %s24, 1
      %p342 = scmp.lt.s32.totalorder %s339, 11
      %s343 = scalar_select %p342, %s339, 11
      %s344 = smul.addr %s343, 10
      %s345 = smul.addr %s341, 120
      %s346 = sadd.s32 %s344, %s345
      %s347 = smul.addr %s346, 4
      %s348 = scalar_lea.vmem %s0, %s347
      %p349 = pneg %p55
      %p350 = pneg %p52
      %s351 = sadd.s32 %s25, 1
      %s352 = smul.u32 2, %s351
      %p353 = scmp.lt.s32.totalorder %s24, 1
      %s354 = scalar_select %p353, %s24, 1
      %p355 = scmp.lt.s32.totalorder %s352, 11
      %s356 = scalar_select %p355, %s352, 11
      %s357 = smul.addr %s356, 10
      %s358 = smul.addr %s354, 120
      %s359 = sadd.s32 %s357, %s358
      %s360 = smul.addr %s359, 4
      %s361 = scalar_lea.vmem %s1, %s360
      %p362 = pneg %p85
      %p363 = pneg %p82
      %s364 = sadd.s32 %s25, 2
      %s365 = smul.u32 2, %s364
      %p366 = scmp.lt.s32.totalorder %s24, 1
      %s367 = scalar_select %p366, %s24, 1
      %p368 = scmp.lt.s32.totalorder %s365, 11
      %s369 = scalar_select %p368, %s365, 11
      %s370 = smul.addr %s369, 10
      %s371 = smul.addr %s367, 120
      %s372 = sadd.s32 %s370, %s371
      %s373 = smul.addr %s372, 4
      %s374 = scalar_lea.vmem %s2, %s373
      %p375 = pneg %p115
      %p376 = pneg %p112
      %p377 = pneg %p136
      %p378 = pneg %p133
      %p379 = pneg %p157
      %p380 = pneg %p154
      %p381 = pneg %p178
      %p382 = pneg %p175
      %p383 = pneg %p199
      %p384 = pneg %p196
      %p385 = pneg %p227
      %p386 = pneg %p224
      %s387 = smul.u32 2, %s25
      %p388 = scmp.lt.s32.totalorder %s24, 1
      %s389 = scalar_select %p388, %s24, 1
      %p390 = scmp.lt.s32.totalorder %s387, 7
      %s391 = scalar_select %p390, %s387, 7
      %s392 = smul.addr %s391, 8
      %s393 = smul.addr %s389, 64
      %s394 = sadd.s32 %s392, %s393
      %s395 = smul.addr %s394, 4
      %s396 = scalar_lea.vmem %s7, %s395
      %p397 = pneg %p255
      %p398 = pneg %p252
      %p399 = scmp.lt.s32.totalorder %s24, 1
      %s400 = scalar_select %p399, %s24, 1
      %p401 = scmp.lt.s32.totalorder %s25, 3
      %s402 = scalar_select %p401, %s25, 3
      %s403 = smul.addr %s402, 4
      %s404 = smul.addr %s400, 16
      %s405 = sadd.s32 %s403, %s404
      %s406 = smul.addr %s405, 2
      %s407 = scalar_lea.vmem %s8, %s406
      %s408 = smul.u32 2, %s25
      %p409 = scmp.lt.s32.totalorder %s24, 1
      %s410 = scalar_select %p409, %s24, 1
      %p411 = scmp.lt.s32.totalorder %s408, 11
      %s412 = scalar_select %p411, %s408, 11
      %s413 = smul.addr %s412, 10
      %s414 = smul.addr %s410, 120
      %s415 = sadd.s32 %s413, %s414
      %s416 = smul.addr %s415, 4
      %s417 = scalar_lea.vmem %s0, %s416
      %s418 = smul.u32 2, %s25
      %s419 = sadd.s32 %s25, 1
      %s420 = smul.u32 2, %s419
      %p421 = scmp.lt.s32.totalorder %s24, 1
      %s422 = scalar_select %p421, %s24, 1
      %p423 = scmp.lt.s32.totalorder %s420, 11
      %s424 = scalar_select %p423, %s420, 11
      %s425 = smul.addr %s424, 10
      %s426 = smul.addr %s422, 120
      %s427 = sadd.s32 %s425, %s426
      %s428 = smul.addr %s427, 4
      %s429 = scalar_lea.vmem %s1, %s428
      %s430 = sadd.s32 %s25, 1
      %s431 = smul.u32 2, %s430
      %s432 = sadd.s32 %s25, 2
      %s433 = smul.u32 2, %s432
      %p434 = scmp.lt.s32.totalorder %s24, 1
      %s435 = scalar_select %p434, %s24, 1
      %p436 = scmp.lt.s32.totalorder %s433, 11
      %s437 = scalar_select %p436, %s433, 11
      %s438 = smul.addr %s437, 10
      %s439 = smul.addr %s435, 120
      %s440 = sadd.s32 %s438, %s439
      %s441 = smul.addr %s440, 4
      %s442 = scalar_lea.vmem %s2, %s441
      %s443 = sadd.s32 %s25, 2
      %s444 = smul.u32 2, %s443
      %s445 = smul.u32 2, %s25
      %p446 = scmp.lt.s32.totalorder %s24, 1
      %s447 = scalar_select %p446, %s24, 1
      %p448 = scmp.lt.s32.totalorder %s445, 7
      %s449 = scalar_select %p448, %s445, 7
      %s450 = smul.addr %s449, 8
      %s451 = smul.addr %s447, 64
      %s452 = sadd.s32 %s450, %s451
      %s453 = smul.addr %s452, 4
      %s454 = scalar_lea.vmem %s7, %s453
      %s455 = smul.u32 2, %s25
      %p456 = scmp.lt.s32.totalorder %s24, 1
      %s457 = scalar_select %p456, %s24, 1
      %p458 = scmp.lt.s32.totalorder %s25, 3
      %s459 = scalar_select %p458, %s25, 3
      %s460 = smul.addr %s459, 4
      %s461 = smul.addr %s457, 16
      %s462 = sadd.s32 %s460, %s461
      %s463 = smul.addr %s462, 2
      %s464 = scalar_lea.vmem %s8, %s463
      %v466 = vld [vmem:[%s4] sm:$0x1]
      %v467 = vld [vmem:[%s6] sm:$0x1]
      %p468 = scmp.eq.s32.totalorder %s25, 0
      // Predicated region
      $region49: #{downconv_forward.1} parent=47 // pred_check
        %p469 = pneg %p468
      $region50: #{downconv_forward.1} parent=47 // pred_check_branch
        %471 = sbr.rel (%p469) target = $region52
      $region51: #{downconv_forward.1} parent=47 // pred_region
        %472 = vst [vmem:[#allocation2] sm:$0xf] 0
        %473 = vst [vmem:[#allocation2 + $0x4] sm:$0x1] 0
        %474 = vst [vmem:[#allocation2 + $0x8] sm:$0xf] 0
        %475 = vst [vmem:[#allocation2 + $0xc] sm:$0x1] 0
        %476 = vst [vmem:[#allocation2 + $0x10] sm:$0xf] 0
        %477 = vst [vmem:[#allocation2 + $0x14] sm:$0x1] 0
        %478 = vst [vmem:[#allocation2 + $0x18] sm:$0xf] 0
        %479 = vst [vmem:[#allocation2 + $0x1c] sm:$0x1] 0
        %480 = vst [vmem:[#allocation2 + $0x20] sm:$0xf] 0
        %481 = vst [vmem:[#allocation2 + $0x24] sm:$0x1] 0
        %482 = vst [vmem:[#allocation2 + $0x28] sm:$0xf] 0
        %483 = vst [vmem:[#allocation2 + $0x2c] sm:$0x1] 0
        %484 = vst [vmem:[#allocation2 + $0x30] sm:$0xf] 0
        %485 = vst [vmem:[#allocation2 + $0x34] sm:$0x1] 0
        %486 = vst [vmem:[#allocation2 + $0x38] sm:$0xf] 0
        %487 = vst [vmem:[#allocation2 + $0x3c] sm:$0x1] 0
        %488 = vst [vmem:[#allocation2 + $0x40] sm:$0xf] 0
        %489 = vst [vmem:[#allocation2 + $0x44] sm:$0x1] 0
        %490 = vst [vmem:[#allocation2 + $0x48] sm:$0xf] 0
        %491 = vst [vmem:[#allocation2 + $0x4c] sm:$0x1] 0
        %v492 = vld [vmem:[%s417] sm:$0xf]
        %v493 = vld [vmem:[%s417 + $0x4] sm:$0xf]
        %v494 = vld [vmem:[%s417 + $0x8] sm:$0xf]
        %v495 = vld [vmem:[%s417 + $0xc] sm:$0xf]
        %v496 = vld [vmem:[%s417 + $0x10] sm:$0xf]
        %v497 = vld [vmem:[%s417 + $0x14] sm:$0xf]
        %v498 = vld [vmem:[%s417 + $0x18] sm:$0xf]
        %v499 = vld [vmem:[%s417 + $0x1c] sm:$0xf]
        %v500 = vld [vmem:[%s3] sm:$0xf]
        %v501 = vld [vmem:[%s3 + $0x4] sm:$0x3]
        %s502 = scalar_lea.vmem %s417, 4
        %v503 = vld [vmem:[%s502] sm:$0xf]
        %v504 = vld [vmem:[%s502 + $0x4] sm:$0xf]
        %v505 = vld [vmem:[%s502 + $0x8] sm:$0xf]
        %v506 = vld [vmem:[%s502 + $0xc] sm:$0xf]
        %v507 = vld [vmem:[%s502 + $0x10] sm:$0xf]
        %v508 = vld [vmem:[%s502 + $0x14] sm:$0xf]
        %v509 = vld [vmem:[%s502 + $0x18] sm:$0xf]
        %v510 = vld [vmem:[%s502 + $0x1c] sm:$0xf]
        %s511 = scalar_lea.vmem %s3, 8
        %v512 = vld [vmem:[%s511] sm:$0xf]
        %v513 = vld [vmem:[%s511 + $0x4] sm:$0x3]
        %v522 = vunpack.c.l.b16 %v503
        %v523 = vunpack.c.l.b16 %v504
        %v524 = vunpack.c.l.b16 %v505
        %v525 = vunpack.c.l.b16 %v506
        %v526 = vunpack.c.l.b16 %v507
        %v527 = vunpack.c.l.b16 %v508
        %v528 = vunpack.c.l.b16 %v509
        %v529 = vunpack.c.l.b16 %v510
        %v530 = vpack.c.b16 %v523, %v522
        %v531 = vpack.c.b16 %v525, %v524
        %v532 = vpack.c.b16 %v527, %v526
        %v533 = vpack.c.b16 %v529, %v528
        %v536 = vunpack.c.l.b16 %v512
        %v537 = vunpack.c.l.b16 %v513
        %v538 = vpack.c.b16 %v537, %v536
        %vm539 = vcmask 97280
        %v541 = vsel %vm539, %v530, 0
        %v544 = vsel %vm539, %v531, 0
        %v547 = vsel %vm539, %v532, 0
        %v550 = vsel %vm539, %v533, 0
        %vm552 = vcmask 1045504
        %v554 = vsel %vm552, %v538, 0
        %556 = vmatprep.subr.bf16.mxu0 0
        %557 = vmatpush1.bf16.msra.mxu0 0
        %558 = vmatprep.subr.bf16.mxu0 0
        %559 = vmatpush1.bf16.msra.mxu0 0
        %560 = vmatprep.subr.bf16.mxu0 0
        %561 = vmatpush1.bf16.msra.mxu0 0
        %562 = vmatprep.subr.bf16.mxu0 0
        %563 = vmatpush1.bf16.msra.mxu0 0
        %564 = vmatprep.subr.bf16.mxu0 0
        %565 = vmatpush1.bf16.msra.mxu0 0
        %566 = vmatprep.subr.bf16.mxu0 0
        %567 = vmatpush1.bf16.msra.mxu0 0
        %568 = vmatprep.subr.bf16.mxu0 0
        %569 = vmatpush1.bf16.msra.mxu0 0
        %570 = vmatprep.subr.bf16.mxu0 0
        %571 = vmatpush1.bf16.msra.mxu0 %v554
        %572 = vmatprep.subr.bf16.mxu0 0
        %573 = vmatpush2.bf16.msra.mxu0 0
        %574 = vmatprep.subr.bf16.mxu0 0
        %575 = vmatpush2.bf16.msra.mxu0 0
        %576 = vmatprep.subr.bf16.mxu0 0
        %577 = vmatpush2.bf16.msra.mxu0 0
        %578 = vmatprep.subr.bf16.mxu0 0
        %579 = vmatpush2.bf16.msra.mxu0 0
        %580 = vmatprep.subr.bf16.mxu0 0
        %581 = vmatpush2.bf16.msra.mxu0 0
        %582 = vmatprep.subr.bf16.mxu0 0
        %583 = vmatpush2.bf16.msra.mxu0 0
        %584 = vmatprep.subr.bf16.mxu0 0
        %585 = vmatpush2.bf16.msra.mxu0 0
        %586 = vmatprep.subr.bf16.mxu0 0
        %587 = vmatpush2.bf16.msra.mxu0 0
        %588 = vmatprep.mubr.bf16.mxu0 0
        %589 = vmatmul.mubr.bf16.gmra.mxu0 %v541
        %v590 = vpop.f32.mrf.mxu0
        %v591 = vadd.f32 0.0, %v590
        %v592 = vpop.f32.mrf.mxu0
        %v593 = vpop.f32.mrf.mxu0
        %v594 = vadd.f32 0.0, %v593
        %v595 = vpop.f32.mrf.mxu0
        %596 = vmatprep.mubr.bf16.mxu0 0
        %597 = vmatmul.mubr.bf16.gmra.mxu0 %v544
        %v598 = vpop.f32.mrf.mxu0
        %v599 = vadd.f32 0.0, %v598
        %v600 = vpop.f32.mrf.mxu0
        %v601 = vpop.f32.mrf.mxu0
        %v602 = vadd.f32 0.0, %v601
        %v603 = vpop.f32.mrf.mxu0
        %604 = vmatprep.mubr.bf16.mxu0 0
        %605 = vmatmul.mubr.bf16.gmra.mxu0 %v547
        %v606 = vpop.f32.mrf.mxu0
        %v607 = vadd.f32 0.0, %v606
        %v608 = vpop.f32.mrf.mxu0
        %v609 = vpop.f32.mrf.mxu0
        %v610 = vadd.f32 0.0, %v609
        %v611 = vpop.f32.mrf.mxu0
        %612 = vmatprep.mubr.bf16.mxu0 0
        %613 = vmatmul.mubr.bf16.gmra.mxu0 %v550
        %v614 = vpop.f32.mrf.mxu0
        %v615 = vadd.f32 0.0, %v614
        %v616 = vpop.f32.mrf.mxu0
        %v617 = vpop.f32.mrf.mxu0
        %v618 = vadd.f32 0.0, %v617
        %v619 = vpop.f32.mrf.mxu0
        %620 = vdwg.mxu0
        %v629 = vunpack.c.l.b16 %v492
        %v630 = vunpack.c.l.b16 %v493
        %v631 = vunpack.c.l.b16 %v494
        %v632 = vunpack.c.l.b16 %v495
        %v633 = vunpack.c.l.b16 %v496
        %v634 = vunpack.c.l.b16 %v497
        %v635 = vunpack.c.l.b16 %v498
        %v636 = vunpack.c.l.b16 %v499
        %v637 = vpack.c.b16 %v630, %v629
        %v638 = vpack.c.b16 %v632, %v631
        %v639 = vpack.c.b16 %v634, %v633
        %v640 = vpack.c.b16 %v636, %v635
        %v643 = vunpack.c.l.b16 %v500
        %v644 = vunpack.c.l.b16 %v501
        %v645 = vpack.c.b16 %v644, %v643
        %v647 = vsel %vm539, %v637, 0
        %v650 = vsel %vm539, %v638, 0
        %v653 = vsel %vm539, %v639, 0
        %v656 = vsel %vm539, %v640, 0
        %v659 = vsel %vm552, %v645, 0
        %661 = vmatprep.subr.bf16.mxu0 0
        %662 = vmatpush1.bf16.msra.mxu0 0
        %663 = vmatprep.subr.bf16.mxu0 0
        %664 = vmatpush1.bf16.msra.mxu0 0
        %665 = vmatprep.subr.bf16.mxu0 0
        %666 = vmatpush1.bf16.msra.mxu0 0
        %667 = vmatprep.subr.bf16.mxu0 0
        %668 = vmatpush1.bf16.msra.mxu0 0
        %669 = vmatprep.subr.bf16.mxu0 0
        %670 = vmatpush1.bf16.msra.mxu0 0
        %671 = vmatprep.subr.bf16.mxu0 0
        %672 = vmatpush1.bf16.msra.mxu0 0
        %673 = vmatprep.subr.bf16.mxu0 0
        %674 = vmatpush1.bf16.msra.mxu0 0
        %675 = vmatprep.subr.bf16.mxu0 0
        %676 = vmatpush1.bf16.msra.mxu0 %v659
        %677 = vmatprep.subr.bf16.mxu0 0
        %678 = vmatpush2.bf16.msra.mxu0 0
        %679 = vmatprep.subr.bf16.mxu0 0
        %680 = vmatpush2.bf16.msra.mxu0 0
        %681 = vmatprep.subr.bf16.mxu0 0
        %682 = vmatpush2.bf16.msra.mxu0 0
        %683 = vmatprep.subr.bf16.mxu0 0
        %684 = vmatpush2.bf16.msra.mxu0 0
        %685 = vmatprep.subr.bf16.mxu0 0
        %686 = vmatpush2.bf16.msra.mxu0 0
        %687 = vmatprep.subr.bf16.mxu0 0
        %688 = vmatpush2.bf16.msra.mxu0 0
        %689 = vmatprep.subr.bf16.mxu0 0
        %690 = vmatpush2.bf16.msra.mxu0 0
        %691 = vmatprep.subr.bf16.mxu0 0
        %692 = vmatpush2.bf16.msra.mxu0 0
        %693 = vmatprep.mubr.bf16.mxu0 0
        %694 = vmatmul.mubr.bf16.gmra.mxu0 %v647
        %v695 = vpop.f32.mrf.mxu0
        %v696 = vadd.f32 %v591, %v695
        %v697 = vpop.f32.mrf.mxu0
        %v698 = vpop.f32.mrf.mxu0
        %v699 = vadd.f32 %v594, %v698
        %v700 = vpop.f32.mrf.mxu0
        %701 = vmatprep.mubr.bf16.mxu0 0
        %702 = vmatmul.mubr.bf16.gmra.mxu0 %v650
        %v703 = vpop.f32.mrf.mxu0
        %v704 = vadd.f32 %v599, %v703
        %v705 = vpop.f32.mrf.mxu0
        %v706 = vpop.f32.mrf.mxu0
        %v707 = vadd.f32 %v602, %v706
        %v708 = vpop.f32.mrf.mxu0
        %709 = vmatprep.mubr.bf16.mxu0 0
        %710 = vmatmul.mubr.bf16.gmra.mxu0 %v653
        %v711 = vpop.f32.mrf.mxu0
        %v712 = vadd.f32 %v607, %v711
        %v713 = vpop.f32.mrf.mxu0
        %v714 = vpop.f32.mrf.mxu0
        %v715 = vadd.f32 %v610, %v714
        %v716 = vpop.f32.mrf.mxu0
        %717 = vmatprep.mubr.bf16.mxu0 0
        %718 = vmatmul.mubr.bf16.gmra.mxu0 %v656
        %v719 = vpop.f32.mrf.mxu0
        %v720 = vadd.f32 %v615, %v719
        %v721 = vpop.f32.mrf.mxu0
        %v722 = vpop.f32.mrf.mxu0
        %v723 = vadd.f32 %v618, %v722
        %v724 = vpop.f32.mrf.mxu0
        %725 = vdwg.mxu0
        %s726 = scalar_lea.vmem %s417, 8
        %v727 = vld [vmem:[%s726] sm:$0xf]
        %v728 = vld [vmem:[%s726 + $0x4] sm:$0xf]
        %v729 = vld [vmem:[%s726 + $0x8] sm:$0xf]
        %v730 = vld [vmem:[%s726 + $0xc] sm:$0xf]
        %v731 = vld [vmem:[%s726 + $0x10] sm:$0xf]
        %v732 = vld [vmem:[%s726 + $0x14] sm:$0xf]
        %v733 = vld [vmem:[%s726 + $0x18] sm:$0xf]
        %v734 = vld [vmem:[%s726 + $0x1c] sm:$0xf]
        %s735 = scalar_lea.vmem %s3, 16
        %v736 = vld [vmem:[%s735] sm:$0xf]
        %v737 = vld [vmem:[%s735 + $0x4] sm:$0x3]
        %v746 = vunpack.c.l.b16 %v727
        %v747 = vunpack.c.l.b16 %v728
        %v748 = vunpack.c.l.b16 %v729
        %v749 = vunpack.c.l.b16 %v730
        %v750 = vunpack.c.l.b16 %v731
        %v751 = vunpack.c.l.b16 %v732
        %v752 = vunpack.c.l.b16 %v733
        %v753 = vunpack.c.l.b16 %v734
        %v754 = vpack.c.b16 %v747, %v746
        %v755 = vpack.c.b16 %v749, %v748
        %v756 = vpack.c.b16 %v751, %v750
        %v757 = vpack.c.b16 %v753, %v752
        %v760 = vunpack.c.l.b16 %v736
        %v761 = vunpack.c.l.b16 %v737
        %v762 = vpack.c.b16 %v761, %v760
        %v764 = vsel %vm539, %v754, 0
        %v767 = vsel %vm539, %v755, 0
        %v770 = vsel %vm539, %v756, 0
        %v773 = vsel %vm539, %v757, 0
        %v776 = vsel %vm552, %v762, 0
        %778 = vmatprep.subr.bf16.mxu0 0
        %779 = vmatpush1.bf16.msra.mxu0 0
        %780 = vmatprep.subr.bf16.mxu0 0
        %781 = vmatpush1.bf16.msra.mxu0 0
        %782 = vmatprep.subr.bf16.mxu0 0
        %783 = vmatpush1.bf16.msra.mxu0 0
        %784 = vmatprep.subr.bf16.mxu0 0
        %785 = vmatpush1.bf16.msra.mxu0 0
        %786 = vmatprep.subr.bf16.mxu0 0
        %787 = vmatpush1.bf16.msra.mxu0 0
        %788 = vmatprep.subr.bf16.mxu0 0
        %789 = vmatpush1.bf16.msra.mxu0 0
        %790 = vmatprep.subr.bf16.mxu0 0
        %791 = vmatpush1.bf16.msra.mxu0 0
        %792 = vmatprep.subr.bf16.mxu0 0
        %793 = vmatpush1.bf16.msra.mxu0 %v776
        %794 = vmatprep.subr.bf16.mxu0 0
        %795 = vmatpush2.bf16.msra.mxu0 0
        %796 = vmatprep.subr.bf16.mxu0 0
        %797 = vmatpush2.bf16.msra.mxu0 0
        %798 = vmatprep.subr.bf16.mxu0 0
        %799 = vmatpush2.bf16.msra.mxu0 0
        %800 = vmatprep.subr.bf16.mxu0 0
        %801 = vmatpush2.bf16.msra.mxu0 0
        %802 = vmatprep.subr.bf16.mxu0 0
        %803 = vmatpush2.bf16.msra.mxu0 0
        %804 = vmatprep.subr.bf16.mxu0 0
        %805 = vmatpush2.bf16.msra.mxu0 0
        %806 = vmatprep.subr.bf16.mxu0 0
        %807 = vmatpush2.bf16.msra.mxu0 0
        %808 = vmatprep.subr.bf16.mxu0 0
        %809 = vmatpush2.bf16.msra.mxu0 0
        %810 = vmatprep.mubr.bf16.mxu0 0
        %811 = vmatmul.mubr.bf16.gmra.mxu0 %v764
        %v812 = vpop.f32.mrf.mxu0
        %v813 = vadd.f32 0.0, %v812
        %v814 = vpop.f32.mrf.mxu0
        %v815 = vpop.f32.mrf.mxu0
        %v816 = vadd.f32 0.0, %v815
        %v817 = vpop.f32.mrf.mxu0
        %818 = vmatprep.mubr.bf16.mxu0 0
        %819 = vmatmul.mubr.bf16.gmra.mxu0 %v767
        %v820 = vpop.f32.mrf.mxu0
        %v821 = vadd.f32 0.0, %v820
        %v822 = vpop.f32.mrf.mxu0
        %v823 = vpop.f32.mrf.mxu0
        %v824 = vadd.f32 0.0, %v823
        %v825 = vpop.f32.mrf.mxu0
        %826 = vmatprep.mubr.bf16.mxu0 0
        %827 = vmatmul.mubr.bf16.gmra.mxu0 %v770
        %v828 = vpop.f32.mrf.mxu0
        %v829 = vadd.f32 0.0, %v828
        %v830 = vpop.f32.mrf.mxu0
        %v831 = vpop.f32.mrf.mxu0
        %v832 = vadd.f32 0.0, %v831
        %v833 = vpop.f32.mrf.mxu0
        %834 = vmatprep.mubr.bf16.mxu0 0
        %835 = vmatmul.mubr.bf16.gmra.mxu0 %v773
        %v836 = vpop.f32.mrf.mxu0
        %v837 = vadd.f32 0.0, %v836
        %v838 = vpop.f32.mrf.mxu0
        %v839 = vpop.f32.mrf.mxu0
        %v840 = vadd.f32 0.0, %v839
        %v841 = vpop.f32.mrf.mxu0
        %842 = vdwg.mxu0
        %v843 = vadd.f32 %v696, %v813
        %v844 = vadd.f32 %v699, %v816
        %v845 = vadd.f32 %v704, %v821
        %v846 = vadd.f32 %v707, %v824
        %v847 = vadd.f32 %v712, %v829
        %v848 = vadd.f32 %v715, %v832
        %v849 = vadd.f32 %v720, %v837
        %v850 = vadd.f32 %v723, %v840
        %s851 = scalar_lea.vmem %s417, 40
        %v852 = vld [vmem:[%s851] sm:$0xf]
        %v853 = vld [vmem:[%s851 + $0x4] sm:$0xf]
        %v854 = vld [vmem:[%s851 + $0x8] sm:$0xf]
        %v855 = vld [vmem:[%s851 + $0xc] sm:$0xf]
        %v856 = vld [vmem:[%s851 + $0x10] sm:$0xf]
        %v857 = vld [vmem:[%s851 + $0x14] sm:$0xf]
        %v858 = vld [vmem:[%s851 + $0x18] sm:$0xf]
        %v859 = vld [vmem:[%s851 + $0x1c] sm:$0xf]
        %s860 = scalar_lea.vmem %s3, 24
        %v861 = vld [vmem:[%s860] sm:$0xf]
        %v862 = vld [vmem:[%s860 + $0x4] sm:$0x3]
        %v871 = vunpack.c.l.b16 %v852
        %v872 = vunpack.c.l.b16 %v853
        %v873 = vunpack.c.l.b16 %v854
        %v874 = vunpack.c.l.b16 %v855
        %v875 = vunpack.c.l.b16 %v856
        %v876 = vunpack.c.l.b16 %v857
        %v877 = vunpack.c.l.b16 %v858
        %v878 = vunpack.c.l.b16 %v859
        %v879 = vpack.c.b16 %v872, %v871
        %v880 = vpack.c.b16 %v874, %v873
        %v881 = vpack.c.b16 %v876, %v875
        %v882 = vpack.c.b16 %v878, %v877
        %v885 = vunpack.c.l.b16 %v861
        %v886 = vunpack.c.l.b16 %v862
        %v887 = vpack.c.b16 %v886, %v885
        %v889 = vsel %vm539, %v879, 0
        %v892 = vsel %vm539, %v880, 0
        %v895 = vsel %vm539, %v881, 0
        %v898 = vsel %vm539, %v882, 0
        %v901 = vsel %vm552, %v887, 0
        %903 = vmatprep.subr.bf16.mxu0 0
        %904 = vmatpush1.bf16.msra.mxu0 0
        %905 = vmatprep.subr.bf16.mxu0 0
        %906 = vmatpush1.bf16.msra.mxu0 0
        %907 = vmatprep.subr.bf16.mxu0 0
        %908 = vmatpush1.bf16.msra.mxu0 0
        %909 = vmatprep.subr.bf16.mxu0 0
        %910 = vmatpush1.bf16.msra.mxu0 0
        %911 = vmatprep.subr.bf16.mxu0 0
        %912 = vmatpush1.bf16.msra.mxu0 0
        %913 = vmatprep.subr.bf16.mxu0 0
        %914 = vmatpush1.bf16.msra.mxu0 0
        %915 = vmatprep.subr.bf16.mxu0 0
        %916 = vmatpush1.bf16.msra.mxu0 0
        %917 = vmatprep.subr.bf16.mxu0 0
        %918 = vmatpush1.bf16.msra.mxu0 %v901
        %919 = vmatprep.subr.bf16.mxu0 0
        %920 = vmatpush2.bf16.msra.mxu0 0
        %921 = vmatprep.subr.bf16.mxu0 0
        %922 = vmatpush2.bf16.msra.mxu0 0
        %923 = vmatprep.subr.bf16.mxu0 0
        %924 = vmatpush2.bf16.msra.mxu0 0
        %925 = vmatprep.subr.bf16.mxu0 0
        %926 = vmatpush2.bf16.msra.mxu0 0
        %927 = vmatprep.subr.bf16.mxu0 0
        %928 = vmatpush2.bf16.msra.mxu0 0
        %929 = vmatprep.subr.bf16.mxu0 0
        %930 = vmatpush2.bf16.msra.mxu0 0
        %931 = vmatprep.subr.bf16.mxu0 0
        %932 = vmatpush2.bf16.msra.mxu0 0
        %933 = vmatprep.subr.bf16.mxu0 0
        %934 = vmatpush2.bf16.msra.mxu0 0
        %935 = vmatprep.mubr.bf16.mxu0 0
        %936 = vmatmul.mubr.bf16.gmra.mxu0 %v889
        %v937 = vpop.f32.mrf.mxu0
        %v938 = vadd.f32 0.0, %v937
        %v939 = vpop.f32.mrf.mxu0
        %v940 = vpop.f32.mrf.mxu0
        %v941 = vadd.f32 0.0, %v940
        %v942 = vpop.f32.mrf.mxu0
        %943 = vmatprep.mubr.bf16.mxu0 0
        %944 = vmatmul.mubr.bf16.gmra.mxu0 %v892
        %v945 = vpop.f32.mrf.mxu0
        %v946 = vadd.f32 0.0, %v945
        %v947 = vpop.f32.mrf.mxu0
        %v948 = vpop.f32.mrf.mxu0
        %v949 = vadd.f32 0.0, %v948
        %v950 = vpop.f32.mrf.mxu0
        %951 = vmatprep.mubr.bf16.mxu0 0
        %952 = vmatmul.mubr.bf16.gmra.mxu0 %v895
        %v953 = vpop.f32.mrf.mxu0
        %v954 = vadd.f32 0.0, %v953
        %v955 = vpop.f32.mrf.mxu0
        %v956 = vpop.f32.mrf.mxu0
        %v957 = vadd.f32 0.0, %v956
        %v958 = vpop.f32.mrf.mxu0
        %959 = vmatprep.mubr.bf16.mxu0 0
        %960 = vmatmul.mubr.bf16.gmra.mxu0 %v898
        %v961 = vpop.f32.mrf.mxu0
        %v962 = vadd.f32 0.0, %v961
        %v963 = vpop.f32.mrf.mxu0
        %v964 = vpop.f32.mrf.mxu0
        %v965 = vadd.f32 0.0, %v964
        %v966 = vpop.f32.mrf.mxu0
        %967 = vdwg.mxu0
        %v968 = vadd.f32 %v843, %v938
        %v969 = vadd.f32 %v844, %v941
        %v970 = vadd.f32 %v845, %v946
        %v971 = vadd.f32 %v846, %v949
        %v972 = vadd.f32 %v847, %v954
        %v973 = vadd.f32 %v848, %v957
        %v974 = vadd.f32 %v849, %v962
        %v975 = vadd.f32 %v850, %v965
        %s976 = scalar_lea.vmem %s417, 44
        %v977 = vld [vmem:[%s976] sm:$0xf]
        %v978 = vld [vmem:[%s976 + $0x4] sm:$0xf]
        %v979 = vld [vmem:[%s976 + $0x8] sm:$0xf]
        %v980 = vld [vmem:[%s976 + $0xc] sm:$0xf]
        %v981 = vld [vmem:[%s976 + $0x10] sm:$0xf]
        %v982 = vld [vmem:[%s976 + $0x14] sm:$0xf]
        %v983 = vld [vmem:[%s976 + $0x18] sm:$0xf]
        %v984 = vld [vmem:[%s976 + $0x1c] sm:$0xf]
        %s985 = scalar_lea.vmem %s3, 32
        %v986 = vld [vmem:[%s985] sm:$0xf]
        %v987 = vld [vmem:[%s985 + $0x4] sm:$0x3]
        %v996 = vunpack.c.l.b16 %v977
        %v997 = vunpack.c.l.b16 %v978
        %v998 = vunpack.c.l.b16 %v979
        %v999 = vunpack.c.l.b16 %v980
        %v1000 = vunpack.c.l.b16 %v981
        %v1001 = vunpack.c.l.b16 %v982
        %v1002 = vunpack.c.l.b16 %v983
        %v1003 = vunpack.c.l.b16 %v984
        %v1004 = vpack.c.b16 %v997, %v996
        %v1005 = vpack.c.b16 %v999, %v998
        %v1006 = vpack.c.b16 %v1001, %v1000
        %v1007 = vpack.c.b16 %v1003, %v1002
        %v1010 = vunpack.c.l.b16 %v986
        %v1011 = vunpack.c.l.b16 %v987
        %v1012 = vpack.c.b16 %v1011, %v1010
        %v1014 = vsel %vm539, %v1004, 0
        %v1017 = vsel %vm539, %v1005, 0
        %v1020 = vsel %vm539, %v1006, 0
        %v1023 = vsel %vm539, %v1007, 0
        %v1026 = vsel %vm552, %v1012, 0
        %1028 = vmatprep.subr.bf16.mxu0 0
        %1029 = vmatpush1.bf16.msra.mxu0 0
        %1030 = vmatprep.subr.bf16.mxu0 0
        %1031 = vmatpush1.bf16.msra.mxu0 0
        %1032 = vmatprep.subr.bf16.mxu0 0
        %1033 = vmatpush1.bf16.msra.mxu0 0
        %1034 = vmatprep.subr.bf16.mxu0 0
        %1035 = vmatpush1.bf16.msra.mxu0 0
        %1036 = vmatprep.subr.bf16.mxu0 0
        %1037 = vmatpush1.bf16.msra.mxu0 0
        %1038 = vmatprep.subr.bf16.mxu0 0
        %1039 = vmatpush1.bf16.msra.mxu0 0
        %1040 = vmatprep.subr.bf16.mxu0 0
        %1041 = vmatpush1.bf16.msra.mxu0 0
        %1042 = vmatprep.subr.bf16.mxu0 0
        %1043 = vmatpush1.bf16.msra.mxu0 %v1026
        %1044 = vmatprep.subr.bf16.mxu0 0
        %1045 = vmatpush2.bf16.msra.mxu0 0
        %1046 = vmatprep.subr.bf16.mxu0 0
        %1047 = vmatpush2.bf16.msra.mxu0 0
        %1048 = vmatprep.subr.bf16.mxu0 0
        %1049 = vmatpush2.bf16.msra.mxu0 0
        %1050 = vmatprep.subr.bf16.mxu0 0
        %1051 = vmatpush2.bf16.msra.mxu0 0
        %1052 = vmatprep.subr.bf16.mxu0 0
        %1053 = vmatpush2.bf16.msra.mxu0 0
        %1054 = vmatprep.subr.bf16.mxu0 0
        %1055 = vmatpush2.bf16.msra.mxu0 0
        %1056 = vmatprep.subr.bf16.mxu0 0
        %1057 = vmatpush2.bf16.msra.mxu0 0
        %1058 = vmatprep.subr.bf16.mxu0 0
        %1059 = vmatpush2.bf16.msra.mxu0 0
        %1060 = vmatprep.mubr.bf16.mxu0 0
        %1061 = vmatmul.mubr.bf16.gmra.mxu0 %v1014
        %v1062 = vpop.f32.mrf.mxu0
        %v1063 = vadd.f32 0.0, %v1062
        %v1064 = vpop.f32.mrf.mxu0
        %v1065 = vpop.f32.mrf.mxu0
        %v1066 = vadd.f32 0.0, %v1065
        %v1067 = vpop.f32.mrf.mxu0
        %1068 = vmatprep.mubr.bf16.mxu0 0
        %1069 = vmatmul.mubr.bf16.gmra.mxu0 %v1017
        %v1070 = vpop.f32.mrf.mxu0
        %v1071 = vadd.f32 0.0, %v1070
        %v1072 = vpop.f32.mrf.mxu0
        %v1073 = vpop.f32.mrf.mxu0
        %v1074 = vadd.f32 0.0, %v1073
        %v1075 = vpop.f32.mrf.mxu0
        %1076 = vmatprep.mubr.bf16.mxu0 0
        %1077 = vmatmul.mubr.bf16.gmra.mxu0 %v1020
        %v1078 = vpop.f32.mrf.mxu0
        %v1079 = vadd.f32 0.0, %v1078
        %v1080 = vpop.f32.mrf.mxu0
        %v1081 = vpop.f32.mrf.mxu0
        %v1082 = vadd.f32 0.0, %v1081
        %v1083 = vpop.f32.mrf.mxu0
        %1084 = vmatprep.mubr.bf16.mxu0 0
        %1085 = vmatmul.mubr.bf16.gmra.mxu0 %v1023
        %v1086 = vpop.f32.mrf.mxu0
        %v1087 = vadd.f32 0.0, %v1086
        %v1088 = vpop.f32.mrf.mxu0
        %v1089 = vpop.f32.mrf.mxu0
        %v1090 = vadd.f32 0.0, %v1089
        %v1091 = vpop.f32.mrf.mxu0
        %1092 = vdwg.mxu0
        %v1093 = vadd.f32 %v968, %v1063
        %v1094 = vadd.f32 %v969, %v1066
        %v1095 = vadd.f32 %v970, %v1071
        %v1096 = vadd.f32 %v971, %v1074
        %v1097 = vadd.f32 %v972, %v1079
        %v1098 = vadd.f32 %v973, %v1082
        %v1099 = vadd.f32 %v974, %v1087
        %v1100 = vadd.f32 %v975, %v1090
        %s1101 = scalar_lea.vmem %s417, 48
        %v1102 = vld [vmem:[%s1101] sm:$0xf]
        %v1103 = vld [vmem:[%s1101 + $0x4] sm:$0xf]
        %v1104 = vld [vmem:[%s1101 + $0x8] sm:$0xf]
        %v1105 = vld [vmem:[%s1101 + $0xc] sm:$0xf]
        %v1106 = vld [vmem:[%s1101 + $0x10] sm:$0xf]
        %v1107 = vld [vmem:[%s1101 + $0x14] sm:$0xf]
        %v1108 = vld [vmem:[%s1101 + $0x18] sm:$0xf]
        %v1109 = vld [vmem:[%s1101 + $0x1c] sm:$0xf]
        %s1110 = scalar_lea.vmem %s3, 40
        %v1111 = vld [vmem:[%s1110] sm:$0xf]
        %v1112 = vld [vmem:[%s1110 + $0x4] sm:$0x3]
        %v1121 = vunpack.c.l.b16 %v1102
        %v1122 = vunpack.c.l.b16 %v1103
        %v1123 = vunpack.c.l.b16 %v1104
        %v1124 = vunpack.c.l.b16 %v1105
        %v1125 = vunpack.c.l.b16 %v1106
        %v1126 = vunpack.c.l.b16 %v1107
        %v1127 = vunpack.c.l.b16 %v1108
        %v1128 = vunpack.c.l.b16 %v1109
        %v1129 = vpack.c.b16 %v1122, %v1121
        %v1130 = vpack.c.b16 %v1124, %v1123
        %v1131 = vpack.c.b16 %v1126, %v1125
        %v1132 = vpack.c.b16 %v1128, %v1127
        %v1135 = vunpack.c.l.b16 %v1111
        %v1136 = vunpack.c.l.b16 %v1112
        %v1137 = vpack.c.b16 %v1136, %v1135
        %v1139 = vsel %vm539, %v1129, 0
        %v1142 = vsel %vm539, %v1130, 0
        %v1145 = vsel %vm539, %v1131, 0
        %v1148 = vsel %vm539, %v1132, 0
        %v1151 = vsel %vm552, %v1137, 0
        %1153 = vmatprep.subr.bf16.mxu0 0
        %1154 = vmatpush1.bf16.msra.mxu0 0
        %1155 = vmatprep.subr.bf16.mxu0 0
        %1156 = vmatpush1.bf16.msra.mxu0 0
        %1157 = vmatprep.subr.bf16.mxu0 0
        %1158 = vmatpush1.bf16.msra.mxu0 0
        %1159 = vmatprep.subr.bf16.mxu0 0
        %1160 = vmatpush1.bf16.msra.mxu0 0
        %1161 = vmatprep.subr.bf16.mxu0 0
        %1162 = vmatpush1.bf16.msra.mxu0 0
        %1163 = vmatprep.subr.bf16.mxu0 0
        %1164 = vmatpush1.bf16.msra.mxu0 0
        %1165 = vmatprep.subr.bf16.mxu0 0
        %1166 = vmatpush1.bf16.msra.mxu0 0
        %1167 = vmatprep.subr.bf16.mxu0 0
        %1168 = vmatpush1.bf16.msra.mxu0 %v1151
        %1169 = vmatprep.subr.bf16.mxu0 0
        %1170 = vmatpush2.bf16.msra.mxu0 0
        %1171 = vmatprep.subr.bf16.mxu0 0
        %1172 = vmatpush2.bf16.msra.mxu0 0
        %1173 = vmatprep.subr.bf16.mxu0 0
        %1174 = vmatpush2.bf16.msra.mxu0 0
        %1175 = vmatprep.subr.bf16.mxu0 0
        %1176 = vmatpush2.bf16.msra.mxu0 0
        %1177 = vmatprep.subr.bf16.mxu0 0
        %1178 = vmatpush2.bf16.msra.mxu0 0
        %1179 = vmatprep.subr.bf16.mxu0 0
        %1180 = vmatpush2.bf16.msra.mxu0 0
        %1181 = vmatprep.subr.bf16.mxu0 0
        %1182 = vmatpush2.bf16.msra.mxu0 0
        %1183 = vmatprep.subr.bf16.mxu0 0
        %1184 = vmatpush2.bf16.msra.mxu0 0
        %1185 = vmatprep.mubr.bf16.mxu0 0
        %1186 = vmatmul.mubr.bf16.gmra.mxu0 %v1139
        %v1187 = vpop.f32.mrf.mxu0
        %v1188 = vadd.f32 0.0, %v1187
        %v1189 = vpop.f32.mrf.mxu0
        %v1190 = vpop.f32.mrf.mxu0
        %v1191 = vadd.f32 0.0, %v1190
        %v1192 = vpop.f32.mrf.mxu0
        %1193 = vmatprep.mubr.bf16.mxu0 0
        %1194 = vmatmul.mubr.bf16.gmra.mxu0 %v1142
        %v1195 = vpop.f32.mrf.mxu0
        %v1196 = vadd.f32 0.0, %v1195
        %v1197 = vpop.f32.mrf.mxu0
        %v1198 = vpop.f32.mrf.mxu0
        %v1199 = vadd.f32 0.0, %v1198
        %v1200 = vpop.f32.mrf.mxu0
        %1201 = vmatprep.mubr.bf16.mxu0 0
        %1202 = vmatmul.mubr.bf16.gmra.mxu0 %v1145
        %v1203 = vpop.f32.mrf.mxu0
        %v1204 = vadd.f32 0.0, %v1203
        %v1205 = vpop.f32.mrf.mxu0
        %v1206 = vpop.f32.mrf.mxu0
        %v1207 = vadd.f32 0.0, %v1206
        %v1208 = vpop.f32.mrf.mxu0
        %1209 = vmatprep.mubr.bf16.mxu0 0
        %1210 = vmatmul.mubr.bf16.gmra.mxu0 %v1148
        %v1211 = vpop.f32.mrf.mxu0
        %v1212 = vadd.f32 0.0, %v1211
        %v1213 = vpop.f32.mrf.mxu0
        %v1214 = vpop.f32.mrf.mxu0
        %v1215 = vadd.f32 0.0, %v1214
        %v1216 = vpop.f32.mrf.mxu0
        %1217 = vdwg.mxu0
        %v1218 = vadd.f32 %v1093, %v1188
        %v1219 = vadd.f32 %v1094, %v1191
        %v1220 = vadd.f32 %v1095, %v1196
        %v1221 = vadd.f32 %v1096, %v1199
        %v1222 = vadd.f32 %v1097, %v1204
        %v1223 = vadd.f32 %v1098, %v1207
        %v1224 = vadd.f32 %v1099, %v1212
        %v1225 = vadd.f32 %v1100, %v1215
        %v1226 = vld [vmem:[%s429] sm:$0xf]
        %v1227 = vld [vmem:[%s429 + $0x4] sm:$0xf]
        %v1228 = vld [vmem:[%s429 + $0x8] sm:$0xf]
        %v1229 = vld [vmem:[%s429 + $0xc] sm:$0xf]
        %v1230 = vld [vmem:[%s429 + $0x10] sm:$0xf]
        %v1231 = vld [vmem:[%s429 + $0x14] sm:$0xf]
        %v1232 = vld [vmem:[%s429 + $0x18] sm:$0xf]
        %v1233 = vld [vmem:[%s429 + $0x1c] sm:$0xf]
        %s1234 = scalar_lea.vmem %s3, 48
        %v1235 = vld [vmem:[%s1234] sm:$0xf]
        %v1236 = vld [vmem:[%s1234 + $0x4] sm:$0x3]
        %v1245 = vunpack.c.l.b16 %v1226
        %v1246 = vunpack.c.l.b16 %v1227
        %v1247 = vunpack.c.l.b16 %v1228
        %v1248 = vunpack.c.l.b16 %v1229
        %v1249 = vunpack.c.l.b16 %v1230
        %v1250 = vunpack.c.l.b16 %v1231
        %v1251 = vunpack.c.l.b16 %v1232
        %v1252 = vunpack.c.l.b16 %v1233
        %v1253 = vpack.c.b16 %v1246, %v1245
        %v1254 = vpack.c.b16 %v1248, %v1247
        %v1255 = vpack.c.b16 %v1250, %v1249
        %v1256 = vpack.c.b16 %v1252, %v1251
        %v1259 = vunpack.c.l.b16 %v1235
        %v1260 = vunpack.c.l.b16 %v1236
        %v1261 = vpack.c.b16 %v1260, %v1259
        %v1263 = vsel %vm539, %v1253, 0
        %v1266 = vsel %vm539, %v1254, 0
        %v1269 = vsel %vm539, %v1255, 0
        %v1272 = vsel %vm539, %v1256, 0
        %v1275 = vsel %vm552, %v1261, 0
        %1277 = vmatprep.subr.bf16.mxu0 0
        %1278 = vmatpush1.bf16.msra.mxu0 0
        %1279 = vmatprep.subr.bf16.mxu0 0
        %1280 = vmatpush1.bf16.msra.mxu0 0
        %1281 = vmatprep.subr.bf16.mxu0 0
        %1282 = vmatpush1.bf16.msra.mxu0 0
        %1283 = vmatprep.subr.bf16.mxu0 0
        %1284 = vmatpush1.bf16.msra.mxu0 0
        %1285 = vmatprep.subr.bf16.mxu0 0
        %1286 = vmatpush1.bf16.msra.mxu0 0
        %1287 = vmatprep.subr.bf16.mxu0 0
        %1288 = vmatpush1.bf16.msra.mxu0 0
        %1289 = vmatprep.subr.bf16.mxu0 0
        %1290 = vmatpush1.bf16.msra.mxu0 0
        %1291 = vmatprep.subr.bf16.mxu0 0
        %1292 = vmatpush1.bf16.msra.mxu0 %v1275
        %1293 = vmatprep.subr.bf16.mxu0 0
        %1294 = vmatpush2.bf16.msra.mxu0 0
        %1295 = vmatprep.subr.bf16.mxu0 0
        %1296 = vmatpush2.bf16.msra.mxu0 0
        %1297 = vmatprep.subr.bf16.mxu0 0
        %1298 = vmatpush2.bf16.msra.mxu0 0
        %1299 = vmatprep.subr.bf16.mxu0 0
        %1300 = vmatpush2.bf16.msra.mxu0 0
        %1301 = vmatprep.subr.bf16.mxu0 0
        %1302 = vmatpush2.bf16.msra.mxu0 0
        %1303 = vmatprep.subr.bf16.mxu0 0
        %1304 = vmatpush2.bf16.msra.mxu0 0
        %1305 = vmatprep.subr.bf16.mxu0 0
        %1306 = vmatpush2.bf16.msra.mxu0 0
        %1307 = vmatprep.subr.bf16.mxu0 0
        %1308 = vmatpush2.bf16.msra.mxu0 0
        %1309 = vmatprep.mubr.bf16.mxu0 0
        %1310 = vmatmul.mubr.bf16.gmra.mxu0 %v1263
        %v1311 = vpop.f32.mrf.mxu0
        %v1312 = vadd.f32 0.0, %v1311
        %v1313 = vpop.f32.mrf.mxu0
        %v1314 = vpop.f32.mrf.mxu0
        %v1315 = vadd.f32 0.0, %v1314
        %v1316 = vpop.f32.mrf.mxu0
        %1317 = vmatprep.mubr.bf16.mxu0 0
        %1318 = vmatmul.mubr.bf16.gmra.mxu0 %v1266
        %v1319 = vpop.f32.mrf.mxu0
        %v1320 = vadd.f32 0.0, %v1319
        %v1321 = vpop.f32.mrf.mxu0
        %v1322 = vpop.f32.mrf.mxu0
        %v1323 = vadd.f32 0.0, %v1322
        %v1324 = vpop.f32.mrf.mxu0
        %1325 = vmatprep.mubr.bf16.mxu0 0
        %1326 = vmatmul.mubr.bf16.gmra.mxu0 %v1269
        %v1327 = vpop.f32.mrf.mxu0
        %v1328 = vadd.f32 0.0, %v1327
        %v1329 = vpop.f32.mrf.mxu0
        %v1330 = vpop.f32.mrf.mxu0
        %v1331 = vadd.f32 0.0, %v1330
        %v1332 = vpop.f32.mrf.mxu0
        %1333 = vmatprep.mubr.bf16.mxu0 0
        %1334 = vmatmul.mubr.bf16.gmra.mxu0 %v1272
        %v1335 = vpop.f32.mrf.mxu0
        %v1336 = vadd.f32 0.0, %v1335
        %v1337 = vpop.f32.mrf.mxu0
        %v1338 = vpop.f32.mrf.mxu0
        %v1339 = vadd.f32 0.0, %v1338
        %v1340 = vpop.f32.mrf.mxu0
        %1341 = vdwg.mxu0
        %v1342 = vadd.f32 %v1218, %v1312
        %v1343 = vadd.f32 %v1219, %v1315
        %v1344 = vadd.f32 %v1220, %v1320
        %v1345 = vadd.f32 %v1221, %v1323
        %v1346 = vadd.f32 %v1222, %v1328
        %v1347 = vadd.f32 %v1223, %v1331
        %v1348 = vadd.f32 %v1224, %v1336
        %v1349 = vadd.f32 %v1225, %v1339
        %s1350 = scalar_lea.vmem %s429, 4
        %v1351 = vld [vmem:[%s1350] sm:$0xf]
        %v1352 = vld [vmem:[%s1350 + $0x4] sm:$0xf]
        %v1353 = vld [vmem:[%s1350 + $0x8] sm:$0xf]
        %v1354 = vld [vmem:[%s1350 + $0xc] sm:$0xf]
        %v1355 = vld [vmem:[%s1350 + $0x10] sm:$0xf]
        %v1356 = vld [vmem:[%s1350 + $0x14] sm:$0xf]
        %v1357 = vld [vmem:[%s1350 + $0x18] sm:$0xf]
        %v1358 = vld [vmem:[%s1350 + $0x1c] sm:$0xf]
        %s1359 = scalar_lea.vmem %s3, 56
        %v1360 = vld [vmem:[%s1359] sm:$0xf]
        %v1361 = vld [vmem:[%s1359 + $0x4] sm:$0x3]
        %v1370 = vunpack.c.l.b16 %v1351
        %v1371 = vunpack.c.l.b16 %v1352
        %v1372 = vunpack.c.l.b16 %v1353
        %v1373 = vunpack.c.l.b16 %v1354
        %v1374 = vunpack.c.l.b16 %v1355
        %v1375 = vunpack.c.l.b16 %v1356
        %v1376 = vunpack.c.l.b16 %v1357
        %v1377 = vunpack.c.l.b16 %v1358
        %v1378 = vpack.c.b16 %v1371, %v1370
        %v1379 = vpack.c.b16 %v1373, %v1372
        %v1380 = vpack.c.b16 %v1375, %v1374
        %v1381 = vpack.c.b16 %v1377, %v1376
        %v1384 = vunpack.c.l.b16 %v1360
        %v1385 = vunpack.c.l.b16 %v1361
        %v1386 = vpack.c.b16 %v1385, %v1384
        %v1388 = vsel %vm539, %v1378, 0
        %v1391 = vsel %vm539, %v1379, 0
        %v1394 = vsel %vm539, %v1380, 0
        %v1397 = vsel %vm539, %v1381, 0
        %v1400 = vsel %vm552, %v1386, 0
        %1402 = vmatprep.subr.bf16.mxu0 0
        %1403 = vmatpush1.bf16.msra.mxu0 0
        %1404 = vmatprep.subr.bf16.mxu0 0
        %1405 = vmatpush1.bf16.msra.mxu0 0
        %1406 = vmatprep.subr.bf16.mxu0 0
        %1407 = vmatpush1.bf16.msra.mxu0 0
        %1408 = vmatprep.subr.bf16.mxu0 0
        %1409 = vmatpush1.bf16.msra.mxu0 0
        %1410 = vmatprep.subr.bf16.mxu0 0
        %1411 = vmatpush1.bf16.msra.mxu0 0
        %1412 = vmatprep.subr.bf16.mxu0 0
        %1413 = vmatpush1.bf16.msra.mxu0 0
        %1414 = vmatprep.subr.bf16.mxu0 0
        %1415 = vmatpush1.bf16.msra.mxu0 0
        %1416 = vmatprep.subr.bf16.mxu0 0
        %1417 = vmatpush1.bf16.msra.mxu0 %v1400
        %1418 = vmatprep.subr.bf16.mxu0 0
        %1419 = vmatpush2.bf16.msra.mxu0 0
        %1420 = vmatprep.subr.bf16.mxu0 0
        %1421 = vmatpush2.bf16.msra.mxu0 0
        %1422 = vmatprep.subr.bf16.mxu0 0
        %1423 = vmatpush2.bf16.msra.mxu0 0
        %1424 = vmatprep.subr.bf16.mxu0 0
        %1425 = vmatpush2.bf16.msra.mxu0 0
        %1426 = vmatprep.subr.bf16.mxu0 0
        %1427 = vmatpush2.bf16.msra.mxu0 0
        %1428 = vmatprep.subr.bf16.mxu0 0
        %1429 = vmatpush2.bf16.msra.mxu0 0
        %1430 = vmatprep.subr.bf16.mxu0 0
        %1431 = vmatpush2.bf16.msra.mxu0 0
        %1432 = vmatprep.subr.bf16.mxu0 0
        %1433 = vmatpush2.bf16.msra.mxu0 0
        %1434 = vmatprep.mubr.bf16.mxu0 0
        %1435 = vmatmul.mubr.bf16.gmra.mxu0 %v1388
        %v1436 = vpop.f32.mrf.mxu0
        %v1437 = vadd.f32 0.0, %v1436
        %v1438 = vpop.f32.mrf.mxu0
        %v1439 = vpop.f32.mrf.mxu0
        %v1440 = vadd.f32 0.0, %v1439
        %v1441 = vpop.f32.mrf.mxu0
        %1442 = vmatprep.mubr.bf16.mxu0 0
        %1443 = vmatmul.mubr.bf16.gmra.mxu0 %v1391
        %v1444 = vpop.f32.mrf.mxu0
        %v1445 = vadd.f32 0.0, %v1444
        %v1446 = vpop.f32.mrf.mxu0
        %v1447 = vpop.f32.mrf.mxu0
        %v1448 = vadd.f32 0.0, %v1447
        %v1449 = vpop.f32.mrf.mxu0
        %1450 = vmatprep.mubr.bf16.mxu0 0
        %1451 = vmatmul.mubr.bf16.gmra.mxu0 %v1394
        %v1452 = vpop.f32.mrf.mxu0
        %v1453 = vadd.f32 0.0, %v1452
        %v1454 = vpop.f32.mrf.mxu0
        %v1455 = vpop.f32.mrf.mxu0
        %v1456 = vadd.f32 0.0, %v1455
        %v1457 = vpop.f32.mrf.mxu0
        %1458 = vmatprep.mubr.bf16.mxu0 0
        %1459 = vmatmul.mubr.bf16.gmra.mxu0 %v1397
        %v1460 = vpop.f32.mrf.mxu0
        %v1461 = vadd.f32 0.0, %v1460
        %v1462 = vpop.f32.mrf.mxu0
        %v1463 = vpop.f32.mrf.mxu0
        %v1464 = vadd.f32 0.0, %v1463
        %v1465 = vpop.f32.mrf.mxu0
        %1466 = vdwg.mxu0
        %v1467 = vadd.f32 %v1342, %v1437
        %v1468 = vadd.f32 %v1343, %v1440
        %v1469 = vadd.f32 %v1344, %v1445
        %v1470 = vadd.f32 %v1345, %v1448
        %v1471 = vadd.f32 %v1346, %v1453
        %v1472 = vadd.f32 %v1347, %v1456
        %v1473 = vadd.f32 %v1348, %v1461
        %v1474 = vadd.f32 %v1349, %v1464
        %s1475 = scalar_lea.vmem %s429, 8
        %v1476 = vld [vmem:[%s1475] sm:$0xf]
        %v1477 = vld [vmem:[%s1475 + $0x4] sm:$0xf]
        %v1478 = vld [vmem:[%s1475 + $0x8] sm:$0xf]
        %v1479 = vld [vmem:[%s1475 + $0xc] sm:$0xf]
        %v1480 = vld [vmem:[%s1475 + $0x10] sm:$0xf]
        %v1481 = vld [vmem:[%s1475 + $0x14] sm:$0xf]
        %v1482 = vld [vmem:[%s1475 + $0x18] sm:$0xf]
        %v1483 = vld [vmem:[%s1475 + $0x1c] sm:$0xf]
        %s1484 = scalar_lea.vmem %s3, 64
        %v1485 = vld [vmem:[%s1484] sm:$0xf]
        %v1486 = vld [vmem:[%s1484 + $0x4] sm:$0x3]
        %v1495 = vunpack.c.l.b16 %v1476
        %v1496 = vunpack.c.l.b16 %v1477
        %v1497 = vunpack.c.l.b16 %v1478
        %v1498 = vunpack.c.l.b16 %v1479
        %v1499 = vunpack.c.l.b16 %v1480
        %v1500 = vunpack.c.l.b16 %v1481
        %v1501 = vunpack.c.l.b16 %v1482
        %v1502 = vunpack.c.l.b16 %v1483
        %v1503 = vpack.c.b16 %v1496, %v1495
        %v1504 = vpack.c.b16 %v1498, %v1497
        %v1505 = vpack.c.b16 %v1500, %v1499
        %v1506 = vpack.c.b16 %v1502, %v1501
        %v1509 = vunpack.c.l.b16 %v1485
        %v1510 = vunpack.c.l.b16 %v1486
        %v1511 = vpack.c.b16 %v1510, %v1509
        %v1513 = vsel %vm539, %v1503, 0
        %v1516 = vsel %vm539, %v1504, 0
        %v1519 = vsel %vm539, %v1505, 0
        %v1522 = vsel %vm539, %v1506, 0
        %v1525 = vsel %vm552, %v1511, 0
        %1527 = vmatprep.subr.bf16.mxu0 0
        %1528 = vmatpush1.bf16.msra.mxu0 0
        %1529 = vmatprep.subr.bf16.mxu0 0
        %1530 = vmatpush1.bf16.msra.mxu0 0
        %1531 = vmatprep.subr.bf16.mxu0 0
        %1532 = vmatpush1.bf16.msra.mxu0 0
        %1533 = vmatprep.subr.bf16.mxu0 0
        %1534 = vmatpush1.bf16.msra.mxu0 0
        %1535 = vmatprep.subr.bf16.mxu0 0
        %1536 = vmatpush1.bf16.msra.mxu0 0
        %1537 = vmatprep.subr.bf16.mxu0 0
        %1538 = vmatpush1.bf16.msra.mxu0 0
        %1539 = vmatprep.subr.bf16.mxu0 0
        %1540 = vmatpush1.bf16.msra.mxu0 0
        %1541 = vmatprep.subr.bf16.mxu0 0
        %1542 = vmatpush1.bf16.msra.mxu0 %v1525
        %1543 = vmatprep.subr.bf16.mxu0 0
        %1544 = vmatpush2.bf16.msra.mxu0 0
        %1545 = vmatprep.subr.bf16.mxu0 0
        %1546 = vmatpush2.bf16.msra.mxu0 0
        %1547 = vmatprep.subr.bf16.mxu0 0
        %1548 = vmatpush2.bf16.msra.mxu0 0
        %1549 = vmatprep.subr.bf16.mxu0 0
        %1550 = vmatpush2.bf16.msra.mxu0 0
        %1551 = vmatprep.subr.bf16.mxu0 0
        %1552 = vmatpush2.bf16.msra.mxu0 0
        %1553 = vmatprep.subr.bf16.mxu0 0
        %1554 = vmatpush2.bf16.msra.mxu0 0
        %1555 = vmatprep.subr.bf16.mxu0 0
        %1556 = vmatpush2.bf16.msra.mxu0 0
        %1557 = vmatprep.subr.bf16.mxu0 0
        %1558 = vmatpush2.bf16.msra.mxu0 0
        %1559 = vmatprep.mubr.bf16.mxu0 0
        %1560 = vmatmul.mubr.bf16.gmra.mxu0 %v1513
        %v1561 = vpop.f32.mrf.mxu0
        %v1562 = vadd.f32 0.0, %v1561
        %v1563 = vpop.f32.mrf.mxu0
        %v1564 = vpop.f32.mrf.mxu0
        %v1565 = vadd.f32 0.0, %v1564
        %v1566 = vpop.f32.mrf.mxu0
        %1567 = vmatprep.mubr.bf16.mxu0 0
        %1568 = vmatmul.mubr.bf16.gmra.mxu0 %v1516
        %v1569 = vpop.f32.mrf.mxu0
        %v1570 = vadd.f32 0.0, %v1569
        %v1571 = vpop.f32.mrf.mxu0
        %v1572 = vpop.f32.mrf.mxu0
        %v1573 = vadd.f32 0.0, %v1572
        %v1574 = vpop.f32.mrf.mxu0
        %1575 = vmatprep.mubr.bf16.mxu0 0
        %1576 = vmatmul.mubr.bf16.gmra.mxu0 %v1519
        %v1577 = vpop.f32.mrf.mxu0
        %v1578 = vadd.f32 0.0, %v1577
        %v1579 = vpop.f32.mrf.mxu0
        %v1580 = vpop.f32.mrf.mxu0
        %v1581 = vadd.f32 0.0, %v1580
        %v1582 = vpop.f32.mrf.mxu0
        %1583 = vmatprep.mubr.bf16.mxu0 0
        %1584 = vmatmul.mubr.bf16.gmra.mxu0 %v1522
        %v1585 = vpop.f32.mrf.mxu0
        %v1586 = vadd.f32 0.0, %v1585
        %v1587 = vpop.f32.mrf.mxu0
        %v1588 = vpop.f32.mrf.mxu0
        %v1589 = vadd.f32 0.0, %v1588
        %v1590 = vpop.f32.mrf.mxu0
        %1591 = vdwg.mxu0
        %v1592 = vadd.f32 %v1467, %v1562
        %v1593 = vadd.f32 %v1468, %v1565
        %v1594 = vadd.f32 %v1469, %v1570
        %v1595 = vadd.f32 %v1470, %v1573
        %v1596 = vadd.f32 %v1471, %v1578
        %v1597 = vadd.f32 %v1472, %v1581
        %v1598 = vadd.f32 %v1473, %v1586
        %v1599 = vadd.f32 %v1474, %v1589
        %v1601 = vlaneseq
        %v1602 = vshrl.u32 %v1601, 7
        %v1603 = vsub.s32 0, %v1602
        %v1604 = vrot.slane %v466, %v1603
        %v1606 = vadd.f32 %v1592, %v1604
        %v1607 = vadd.f32 %v1593, %v1604
        %v1608 = vadd.f32 %v1594, %v1604
        %v1609 = vadd.f32 %v1595, %v1604
        %v1610 = vadd.f32 %v1596, %v1604
        %v1611 = vadd.f32 %v1597, %v1604
        %v1612 = vadd.f32 %v1598, %v1604
        %v1613 = vadd.f32 %v1599, %v1604
        %v1614 = vmax.f32 %v1606, 0.0
        %v1615 = vmax.f32 %v1607, 0.0
        %v1616 = vmax.f32 %v1608, 0.0
        %v1617 = vmax.f32 %v1609, 0.0
        %v1618 = vmax.f32 %v1610, 0.0
        %v1619 = vmax.f32 %v1611, 0.0
        %v1620 = vmax.f32 %v1612, 0.0
        %v1621 = vmax.f32 %v1613, 0.0
        %v1622 = vpack.c.bf16 %v1615, %v1614
        %v1623 = vpack.c.bf16 %v1617, %v1616
        %v1624 = vpack.c.bf16 %v1619, %v1618
        %v1625 = vpack.c.bf16 %v1621, %v1620
        %v1630 = vunpack.c.l.b16 %v1622
        %v1631 = vunpack.c.h.b16 %v1622
        %v1632 = vunpack.c.l.b16 %v1623
        %v1633 = vunpack.c.h.b16 %v1623
        %v1634 = vunpack.c.l.b16 %v1624
        %v1635 = vunpack.c.h.b16 %v1624
        %v1636 = vunpack.c.l.b16 %v1625
        %v1637 = vunpack.c.h.b16 %v1625
        %v1638 = vpack.c.b16 %v1630, %v1630
        %v1639 = vpack.c.b16 %v1631, %v1631
        %v1640 = vpack.c.b16 %v1632, %v1632
        %v1641 = vpack.c.b16 %v1633, %v1633
        %v1642 = vpack.c.b16 %v1634, %v1634
        %v1643 = vpack.c.b16 %v1635, %v1635
        %v1644 = vpack.c.b16 %v1636, %v1636
        %v1645 = vpack.c.b16 %v1637, %v1637
        %v1647 = vshrl.u32 %v1638, 16
        %v1649 = vrot.slane %v1647, 7
        %v1650 = vshll.u32 %v1638, 16
        %v1652 = vor.u32 %v1649, %v1650
        %v1654 = vshrl.u32 %v1639, 16
        %v1656 = vrot.slane %v1654, 7
        %v1657 = vshll.u32 %v1639, 16
        %v1659 = vor.u32 %v1656, %v1657
        %v1661 = vshrl.u32 %v1640, 16
        %v1663 = vrot.slane %v1661, 7
        %v1664 = vshll.u32 %v1640, 16
        %v1666 = vor.u32 %v1663, %v1664
        %v1668 = vshrl.u32 %v1641, 16
        %v1670 = vrot.slane %v1668, 7
        %v1671 = vshll.u32 %v1641, 16
        %v1673 = vor.u32 %v1670, %v1671
        %v1675 = vshrl.u32 %v1642, 16
        %v1677 = vrot.slane %v1675, 7
        %v1678 = vshll.u32 %v1642, 16
        %v1680 = vor.u32 %v1677, %v1678
        %v1682 = vshrl.u32 %v1643, 16
        %v1684 = vrot.slane %v1682, 7
        %v1685 = vshll.u32 %v1643, 16
        %v1687 = vor.u32 %v1684, %v1685
        %v1689 = vshrl.u32 %v1644, 16
        %v1691 = vrot.slane %v1689, 7
        %v1692 = vshll.u32 %v1644, 16
        %v1694 = vor.u32 %v1691, %v1692
        %v1696 = vshrl.u32 %v1645, 16
        %v1698 = vrot.slane %v1696, 7
        %v1699 = vshll.u32 %v1645, 16
        %v1701 = vor.u32 %v1698, %v1699
        %vm1710 = vcmask 1040384
        %vm1711 = vsmask.f32 256
        %vm1712 = vmand %vm1710, %vm1711
        %v1713 = vsel %vm1712, 0, %v1652
        %v1714 = vsel %vm1712, 0, %v1659
        %v1715 = vsel %vm1712, 0, %v1666
        %v1716 = vsel %vm1712, 0, %v1673
        %v1717 = vsel %vm1712, 0, %v1680
        %v1718 = vsel %vm1712, 0, %v1687
        %v1719 = vsel %vm1712, 0, %v1694
        %v1720 = vsel %vm1712, 0, %v1701
        %vm1721 = vcmask 1044480
        %vm1722 = vsmask.f32 4352
        %vm1723 = vmand %vm1721, %vm1722
        %v1724 = vsel %vm1723, %v1713, 0
        %v1725 = vsel %vm1723, %v1714, 0
        %v1726 = vsel %vm1723, %v1715, 0
        %v1727 = vsel %vm1723, %v1716, 0
        %v1728 = vsel %vm1723, %v1717, 0
        %v1729 = vsel %vm1723, %v1718, 0
        %v1730 = vsel %vm1723, %v1719, 0
        %v1731 = vsel %vm1723, %v1720, 0
        %v1741 = vunpack.c.l.b16 0
        %v1742 = vunpack.c.h.b16 0
        %v1743 = vunpack.c.l.b16 %v1724
        %v1744 = vunpack.c.h.b16 %v1724
        %v1745 = vunpack.c.l.b16 %v1725
        %v1746 = vunpack.c.h.b16 %v1725
        %v1747 = vunpack.c.l.b16 %v1726
        %v1748 = vunpack.c.h.b16 %v1726
        %v1749 = vunpack.c.l.b16 %v1727
        %v1750 = vunpack.c.h.b16 %v1727
        %v1751 = vunpack.c.l.b16 %v1728
        %v1752 = vunpack.c.h.b16 %v1728
        %v1753 = vunpack.c.l.b16 %v1729
        %v1754 = vunpack.c.h.b16 %v1729
        %v1755 = vunpack.c.l.b16 %v1730
        %v1756 = vunpack.c.h.b16 %v1730
        %v1757 = vunpack.c.l.b16 %v1731
        %v1758 = vunpack.c.h.b16 %v1731
        %v1759 = vpack.c.b16 %v1741, %v1741
        %v1760 = vpack.c.b16 %v1742, %v1742
        %v1761 = vpack.c.b16 %v1743, %v1743
        %v1762 = vpack.c.b16 %v1744, %v1744
        %v1763 = vpack.c.b16 %v1745, %v1745
        %v1764 = vpack.c.b16 %v1746, %v1746
        %v1765 = vpack.c.b16 %v1747, %v1747
        %v1766 = vpack.c.b16 %v1748, %v1748
        %v1767 = vpack.c.b16 %v1749, %v1749
        %v1768 = vpack.c.b16 %v1750, %v1750
        %v1769 = vpack.c.b16 %v1751, %v1751
        %v1770 = vpack.c.b16 %v1752, %v1752
        %v1771 = vpack.c.b16 %v1753, %v1753
        %v1772 = vpack.c.b16 %v1754, %v1754
        %v1773 = vpack.c.b16 %v1755, %v1755
        %v1774 = vpack.c.b16 %v1756, %v1756
        %v1775 = vpack.c.b16 %v1757, %v1757
        %v1776 = vpack.c.b16 %v1758, %v1758
        %s1795 = scalar_lea.vmem [#allocation2], 80
        %1796 = vst [vmem:[%s1795] sm:$0xf] %v1759
        %1797 = vst [vmem:[%s1795 + $0x4] sm:$0x1] %v1760
        %1798 = vst [vmem:[%s1795 + $0x8] sm:$0xf] %v1761
        %1799 = vst [vmem:[%s1795 + $0xc] sm:$0x1] %v1762
        %1800 = vst [vmem:[%s1795 + $0x10] sm:$0xf] %v1763
        %1801 = vst [vmem:[%s1795 + $0x14] sm:$0x1] %v1764
        %1802 = vst [vmem:[%s1795 + $0x18] sm:$0xf] %v1765
        %1803 = vst [vmem:[%s1795 + $0x1c] sm:$0x1] %v1766
        %1804 = vst [vmem:[%s1795 + $0x20] sm:$0xf] %v1767
        %1805 = vst [vmem:[%s1795 + $0x24] sm:$0x1] %v1768
        %1806 = vst [vmem:[%s1795 + $0x28] sm:$0xf] %v1769
        %1807 = vst [vmem:[%s1795 + $0x2c] sm:$0x1] %v1770
        %1808 = vst [vmem:[%s1795 + $0x30] sm:$0xf] %v1771
        %1809 = vst [vmem:[%s1795 + $0x34] sm:$0x1] %v1772
        %1810 = vst [vmem:[%s1795 + $0x38] sm:$0xf] %v1773
        %1811 = vst [vmem:[%s1795 + $0x3c] sm:$0x1] %v1774
        %1812 = vst [vmem:[%s1795 + $0x40] sm:$0xf] %v1775
        %1813 = vst [vmem:[%s1795 + $0x44] sm:$0x1] %v1776
        %1814 = vst [vmem:[%s1795 + $0x48] sm:$0xf] %v1759
        %1815 = vst [vmem:[%s1795 + $0x4c] sm:$0x1] %v1760
      $region52: #{downconv_forward.1} parent=47 // pred_fallthru
        _
      %s1816 = scalar_lea.vmem %s417, 40
      %v1817 = vld [vmem:[%s1816] sm:$0xf]
      %v1818 = vld [vmem:[%s1816 + $0x4] sm:$0xf]
      %v1819 = vld [vmem:[%s1816 + $0x8] sm:$0xf]
      %v1820 = vld [vmem:[%s1816 + $0xc] sm:$0xf]
      %v1821 = vld [vmem:[%s1816 + $0x10] sm:$0xf]
      %v1822 = vld [vmem:[%s1816 + $0x14] sm:$0xf]
      %v1823 = vld [vmem:[%s1816 + $0x18] sm:$0xf]
      %v1824 = vld [vmem:[%s1816 + $0x1c] sm:$0xf]
      %v1825 = vld [vmem:[%s3] sm:$0xf]
      %v1826 = vld [vmem:[%s3 + $0x4] sm:$0x3]
      %s1827 = scalar_lea.vmem %s417, 44
      %v1828 = vld [vmem:[%s1827] sm:$0xf]
      %v1829 = vld [vmem:[%s1827 + $0x4] sm:$0xf]
      %v1830 = vld [vmem:[%s1827 + $0x8] sm:$0xf]
      %v1831 = vld [vmem:[%s1827 + $0xc] sm:$0xf]
      %v1832 = vld [vmem:[%s1827 + $0x10] sm:$0xf]
      %v1833 = vld [vmem:[%s1827 + $0x14] sm:$0xf]
      %v1834 = vld [vmem:[%s1827 + $0x18] sm:$0xf]
      %v1835 = vld [vmem:[%s1827 + $0x1c] sm:$0xf]
      %s1836 = scalar_lea.vmem %s3, 8
      %v1837 = vld [vmem:[%s1836] sm:$0xf]
      %v1838 = vld [vmem:[%s1836 + $0x4] sm:$0x3]
      %v1847 = vunpack.c.l.b16 %v1828
      %v1848 = vunpack.c.l.b16 %v1829
      %v1849 = vunpack.c.l.b16 %v1830
      %v1850 = vunpack.c.l.b16 %v1831
      %v1851 = vunpack.c.l.b16 %v1832
      %v1852 = vunpack.c.l.b16 %v1833
      %v1853 = vunpack.c.l.b16 %v1834
      %v1854 = vunpack.c.l.b16 %v1835
      %v1855 = vpack.c.b16 %v1848, %v1847
      %v1856 = vpack.c.b16 %v1850, %v1849
      %v1857 = vpack.c.b16 %v1852, %v1851
      %v1858 = vpack.c.b16 %v1854, %v1853
      %v1861 = vunpack.c.l.b16 %v1837
      %v1862 = vunpack.c.l.b16 %v1838
      %v1863 = vpack.c.b16 %v1862, %v1861
      %vm1864 = vcmask 97280
      %v1866 = vsel %vm1864, %v1855, 0
      %v1869 = vsel %vm1864, %v1856, 0
      %v1872 = vsel %vm1864, %v1857, 0
      %v1875 = vsel %vm1864, %v1858, 0
      %vm1877 = vcmask 1045504
      %v1879 = vsel %vm1877, %v1863, 0
      %1881 = vmatprep.subr.bf16.mxu0 0
      %1882 = vmatpush1.bf16.msra.mxu0 0
      %1883 = vmatprep.subr.bf16.mxu0 0
      %1884 = vmatpush1.bf16.msra.mxu0 0
      %1885 = vmatprep.subr.bf16.mxu0 0
      %1886 = vmatpush1.bf16.msra.mxu0 0
      %1887 = vmatprep.subr.bf16.mxu0 0
      %1888 = vmatpush1.bf16.msra.mxu0 0
      %1889 = vmatprep.subr.bf16.mxu0 0
      %1890 = vmatpush1.bf16.msra.mxu0 0
      %1891 = vmatprep.subr.bf16.mxu0 0
      %1892 = vmatpush1.bf16.msra.mxu0 0
      %1893 = vmatprep.subr.bf16.mxu0 0
      %1894 = vmatpush1.bf16.msra.mxu0 0
      %1895 = vmatprep.subr.bf16.mxu0 0
      %1896 = vmatpush1.bf16.msra.mxu0 %v1879
      %1897 = vmatprep.subr.bf16.mxu0 0
      %1898 = vmatpush2.bf16.msra.mxu0 0
      %1899 = vmatprep.subr.bf16.mxu0 0
      %1900 = vmatpush2.bf16.msra.mxu0 0
      %1901 = vmatprep.subr.bf16.mxu0 0
      %1902 = vmatpush2.bf16.msra.mxu0 0
      %1903 = vmatprep.subr.bf16.mxu0 0
      %1904 = vmatpush2.bf16.msra.mxu0 0
      %1905 = vmatprep.subr.bf16.mxu0 0
      %1906 = vmatpush2.bf16.msra.mxu0 0
      %1907 = vmatprep.subr.bf16.mxu0 0
      %1908 = vmatpush2.bf16.msra.mxu0 0
      %1909 = vmatprep.subr.bf16.mxu0 0
      %1910 = vmatpush2.bf16.msra.mxu0 0
      %1911 = vmatprep.subr.bf16.mxu0 0
      %1912 = vmatpush2.bf16.msra.mxu0 0
      %1913 = vmatprep.mubr.bf16.mxu0 0
      %1914 = vmatmul.mubr.bf16.gmra.mxu0 %v1866
      %v1915 = vpop.f32.mrf.mxu0
      %v1916 = vadd.f32 0.0, %v1915
      %v1917 = vpop.f32.mrf.mxu0
      %v1918 = vpop.f32.mrf.mxu0
      %v1919 = vadd.f32 0.0, %v1918
      %v1920 = vpop.f32.mrf.mxu0
      %1921 = vmatprep.mubr.bf16.mxu0 0
      %1922 = vmatmul.mubr.bf16.gmra.mxu0 %v1869
      %v1923 = vpop.f32.mrf.mxu0
      %v1924 = vadd.f32 0.0, %v1923
      %v1925 = vpop.f32.mrf.mxu0
      %v1926 = vpop.f32.mrf.mxu0
      %v1927 = vadd.f32 0.0, %v1926
      %v1928 = vpop.f32.mrf.mxu0
      %1929 = vmatprep.mubr.bf16.mxu0 0
      %1930 = vmatmul.mubr.bf16.gmra.mxu0 %v1872
      %v1931 = vpop.f32.mrf.mxu0
      %v1932 = vadd.f32 0.0, %v1931
      %v1933 = vpop.f32.mrf.mxu0
      %v1934 = vpop.f32.mrf.mxu0
      %v1935 = vadd.f32 0.0, %v1934
      %v1936 = vpop.f32.mrf.mxu0
      %1937 = vmatprep.mubr.bf16.mxu0 0
      %1938 = vmatmul.mubr.bf16.gmra.mxu0 %v1875
      %v1939 = vpop.f32.mrf.mxu0
      %v1940 = vadd.f32 0.0, %v1939
      %v1941 = vpop.f32.mrf.mxu0
      %v1942 = vpop.f32.mrf.mxu0
      %v1943 = vadd.f32 0.0, %v1942
      %v1944 = vpop.f32.mrf.mxu0
      %1945 = vdwg.mxu0
      %v1954 = vunpack.c.l.b16 %v1817
      %v1955 = vunpack.c.l.b16 %v1818
      %v1956 = vunpack.c.l.b16 %v1819
      %v1957 = vunpack.c.l.b16 %v1820
      %v1958 = vunpack.c.l.b16 %v1821
      %v1959 = vunpack.c.l.b16 %v1822
      %v1960 = vunpack.c.l.b16 %v1823
      %v1961 = vunpack.c.l.b16 %v1824
      %v1962 = vpack.c.b16 %v1955, %v1954
      %v1963 = vpack.c.b16 %v1957, %v1956
      %v1964 = vpack.c.b16 %v1959, %v1958
      %v1965 = vpack.c.b16 %v1961, %v1960
      %v1968 = vunpack.c.l.b16 %v1825
      %v1969 = vunpack.c.l.b16 %v1826
      %v1970 = vpack.c.b16 %v1969, %v1968
      %v1972 = vsel %vm1864, %v1962, 0
      %v1975 = vsel %vm1864, %v1963, 0
      %v1978 = vsel %vm1864, %v1964, 0
      %v1981 = vsel %vm1864, %v1965, 0
      %v1984 = vsel %vm1877, %v1970, 0
      %1986 = vmatprep.subr.bf16.mxu0 0
      %1987 = vmatpush1.bf16.msra.mxu0 0
      %1988 = vmatprep.subr.bf16.mxu0 0
      %1989 = vmatpush1.bf16.msra.mxu0 0
      %1990 = vmatprep.subr.bf16.mxu0 0
      %1991 = vmatpush1.bf16.msra.mxu0 0
      %1992 = vmatprep.subr.bf16.mxu0 0
      %1993 = vmatpush1.bf16.msra.mxu0 0
      %1994 = vmatprep.subr.bf16.mxu0 0
      %1995 = vmatpush1.bf16.msra.mxu0 0
      %1996 = vmatprep.subr.bf16.mxu0 0
      %1997 = vmatpush1.bf16.msra.mxu0 0
      %1998 = vmatprep.subr.bf16.mxu0 0
      %1999 = vmatpush1.bf16.msra.mxu0 0
      %2000 = vmatprep.subr.bf16.mxu0 0
      %2001 = vmatpush1.bf16.msra.mxu0 %v1984
      %2002 = vmatprep.subr.bf16.mxu0 0
      %2003 = vmatpush2.bf16.msra.mxu0 0
      %2004 = vmatprep.subr.bf16.mxu0 0
      %2005 = vmatpush2.bf16.msra.mxu0 0
      %2006 = vmatprep.subr.bf16.mxu0 0
      %2007 = vmatpush2.bf16.msra.mxu0 0
      %2008 = vmatprep.subr.bf16.mxu0 0
      %2009 = vmatpush2.bf16.msra.mxu0 0
      %2010 = vmatprep.subr.bf16.mxu0 0
      %2011 = vmatpush2.bf16.msra.mxu0 0
      %2012 = vmatprep.subr.bf16.mxu0 0
      %2013 = vmatpush2.bf16.msra.mxu0 0
      %2014 = vmatprep.subr.bf16.mxu0 0
      %2015 = vmatpush2.bf16.msra.mxu0 0
      %2016 = vmatprep.subr.bf16.mxu0 0
      %2017 = vmatpush2.bf16.msra.mxu0 0
      %2018 = vmatprep.mubr.bf16.mxu0 0
      %2019 = vmatmul.mubr.bf16.gmra.mxu0 %v1972
      %v2020 = vpop.f32.mrf.mxu0
      %v2021 = vadd.f32 %v1916, %v2020
      %v2022 = vpop.f32.mrf.mxu0
      %v2023 = vpop.f32.mrf.mxu0
      %v2024 = vadd.f32 %v1919, %v2023
      %v2025 = vpop.f32.mrf.mxu0
      %2026 = vmatprep.mubr.bf16.mxu0 0
      %2027 = vmatmul.mubr.bf16.gmra.mxu0 %v1975
      %v2028 = vpop.f32.mrf.mxu0
      %v2029 = vadd.f32 %v1924, %v2028
      %v2030 = vpop.f32.mrf.mxu0
      %v2031 = vpop.f32.mrf.mxu0
      %v2032 = vadd.f32 %v1927, %v2031
      %v2033 = vpop.f32.mrf.mxu0
      %2034 = vmatprep.mubr.bf16.mxu0 0
      %2035 = vmatmul.mubr.bf16.gmra.mxu0 %v1978
      %v2036 = vpop.f32.mrf.mxu0
      %v2037 = vadd.f32 %v1932, %v2036
      %v2038 = vpop.f32.mrf.mxu0
      %v2039 = vpop.f32.mrf.mxu0
      %v2040 = vadd.f32 %v1935, %v2039
      %v2041 = vpop.f32.mrf.mxu0
      %2042 = vmatprep.mubr.bf16.mxu0 0
      %2043 = vmatmul.mubr.bf16.gmra.mxu0 %v1981
      %v2044 = vpop.f32.mrf.mxu0
      %v2045 = vadd.f32 %v1940, %v2044
      %v2046 = vpop.f32.mrf.mxu0
      %v2047 = vpop.f32.mrf.mxu0
      %v2048 = vadd.f32 %v1943, %v2047
      %v2049 = vpop.f32.mrf.mxu0
      %2050 = vdwg.mxu0
      %s2051 = scalar_lea.vmem %s417, 48
      %v2052 = vld [vmem:[%s2051] sm:$0xf]
      %v2053 = vld [vmem:[%s2051 + $0x4] sm:$0xf]
      %v2054 = vld [vmem:[%s2051 + $0x8] sm:$0xf]
      %v2055 = vld [vmem:[%s2051 + $0xc] sm:$0xf]
      %v2056 = vld [vmem:[%s2051 + $0x10] sm:$0xf]
      %v2057 = vld [vmem:[%s2051 + $0x14] sm:$0xf]
      %v2058 = vld [vmem:[%s2051 + $0x18] sm:$0xf]
      %v2059 = vld [vmem:[%s2051 + $0x1c] sm:$0xf]
      %s2060 = scalar_lea.vmem %s3, 16
      %v2061 = vld [vmem:[%s2060] sm:$0xf]
      %v2062 = vld [vmem:[%s2060 + $0x4] sm:$0x3]
      %v2071 = vunpack.c.l.b16 %v2052
      %v2072 = vunpack.c.l.b16 %v2053
      %v2073 = vunpack.c.l.b16 %v2054
      %v2074 = vunpack.c.l.b16 %v2055
      %v2075 = vunpack.c.l.b16 %v2056
      %v2076 = vunpack.c.l.b16 %v2057
      %v2077 = vunpack.c.l.b16 %v2058
      %v2078 = vunpack.c.l.b16 %v2059
      %v2079 = vpack.c.b16 %v2072, %v2071
      %v2080 = vpack.c.b16 %v2074, %v2073
      %v2081 = vpack.c.b16 %v2076, %v2075
      %v2082 = vpack.c.b16 %v2078, %v2077
      %v2085 = vunpack.c.l.b16 %v2061
      %v2086 = vunpack.c.l.b16 %v2062
      %v2087 = vpack.c.b16 %v2086, %v2085
      %v2089 = vsel %vm1864, %v2079, 0
      %v2092 = vsel %vm1864, %v2080, 0
      %v2095 = vsel %vm1864, %v2081, 0
      %v2098 = vsel %vm1864, %v2082, 0
      %v2101 = vsel %vm1877, %v2087, 0
      %2103 = vmatprep.subr.bf16.mxu0 0
      %2104 = vmatpush1.bf16.msra.mxu0 0
      %2105 = vmatprep.subr.bf16.mxu0 0
      %2106 = vmatpush1.bf16.msra.mxu0 0
      %2107 = vmatprep.subr.bf16.mxu0 0
      %2108 = vmatpush1.bf16.msra.mxu0 0
      %2109 = vmatprep.subr.bf16.mxu0 0
      %2110 = vmatpush1.bf16.msra.mxu0 0
      %2111 = vmatprep.subr.bf16.mxu0 0
      %2112 = vmatpush1.bf16.msra.mxu0 0
      %2113 = vmatprep.subr.bf16.mxu0 0
      %2114 = vmatpush1.bf16.msra.mxu0 0
      %2115 = vmatprep.subr.bf16.mxu0 0
      %2116 = vmatpush1.bf16.msra.mxu0 0
      %2117 = vmatprep.subr.bf16.mxu0 0
      %2118 = vmatpush1.bf16.msra.mxu0 %v2101
      %2119 = vmatprep.subr.bf16.mxu0 0
      %2120 = vmatpush2.bf16.msra.mxu0 0
      %2121 = vmatprep.subr.bf16.mxu0 0
      %2122 = vmatpush2.bf16.msra.mxu0 0
      %2123 = vmatprep.subr.bf16.mxu0 0
      %2124 = vmatpush2.bf16.msra.mxu0 0
      %2125 = vmatprep.subr.bf16.mxu0 0
      %2126 = vmatpush2.bf16.msra.mxu0 0
      %2127 = vmatprep.subr.bf16.mxu0 0
      %2128 = vmatpush2.bf16.msra.mxu0 0
      %2129 = vmatprep.subr.bf16.mxu0 0
      %2130 = vmatpush2.bf16.msra.mxu0 0
      %2131 = vmatprep.subr.bf16.mxu0 0
      %2132 = vmatpush2.bf16.msra.mxu0 0
      %2133 = vmatprep.subr.bf16.mxu0 0
      %2134 = vmatpush2.bf16.msra.mxu0 0
      %2135 = vmatprep.mubr.bf16.mxu0 0
      %2136 = vmatmul.mubr.bf16.gmra.mxu0 %v2089
      %v2137 = vpop.f32.mrf.mxu0
      %v2138 = vadd.f32 0.0, %v2137
      %v2139 = vpop.f32.mrf.mxu0
      %v2140 = vpop.f32.mrf.mxu0
      %v2141 = vadd.f32 0.0, %v2140
      %v2142 = vpop.f32.mrf.mxu0
      %2143 = vmatprep.mubr.bf16.mxu0 0
      %2144 = vmatmul.mubr.bf16.gmra.mxu0 %v2092
      %v2145 = vpop.f32.mrf.mxu0
      %v2146 = vadd.f32 0.0, %v2145
      %v2147 = vpop.f32.mrf.mxu0
      %v2148 = vpop.f32.mrf.mxu0
      %v2149 = vadd.f32 0.0, %v2148
      %v2150 = vpop.f32.mrf.mxu0
      %2151 = vmatprep.mubr.bf16.mxu0 0
      %2152 = vmatmul.mubr.bf16.gmra.mxu0 %v2095
      %v2153 = vpop.f32.mrf.mxu0
      %v2154 = vadd.f32 0.0, %v2153
      %v2155 = vpop.f32.mrf.mxu0
      %v2156 = vpop.f32.mrf.mxu0
      %v2157 = vadd.f32 0.0, %v2156
      %v2158 = vpop.f32.mrf.mxu0
      %2159 = vmatprep.mubr.bf16.mxu0 0
      %2160 = vmatmul.mubr.bf16.gmra.mxu0 %v2098
      %v2161 = vpop.f32.mrf.mxu0
      %v2162 = vadd.f32 0.0, %v2161
      %v2163 = vpop.f32.mrf.mxu0
      %v2164 = vpop.f32.mrf.mxu0
      %v2165 = vadd.f32 0.0, %v2164
      %v2166 = vpop.f32.mrf.mxu0
      %2167 = vdwg.mxu0
      %v2168 = vadd.f32 %v2021, %v2138
      %v2169 = vadd.f32 %v2024, %v2141
      %v2170 = vadd.f32 %v2029, %v2146
      %v2171 = vadd.f32 %v2032, %v2149
      %v2172 = vadd.f32 %v2037, %v2154
      %v2173 = vadd.f32 %v2040, %v2157
      %v2174 = vadd.f32 %v2045, %v2162
      %v2175 = vadd.f32 %v2048, %v2165
      %v2176 = vld [vmem:[%s429] sm:$0xf]
      %v2177 = vld [vmem:[%s429 + $0x4] sm:$0xf]
      %v2178 = vld [vmem:[%s429 + $0x8] sm:$0xf]
      %v2179 = vld [vmem:[%s429 + $0xc] sm:$0xf]
      %v2180 = vld [vmem:[%s429 + $0x10] sm:$0xf]
      %v2181 = vld [vmem:[%s429 + $0x14] sm:$0xf]
      %v2182 = vld [vmem:[%s429 + $0x18] sm:$0xf]
      %v2183 = vld [vmem:[%s429 + $0x1c] sm:$0xf]
      %s2184 = scalar_lea.vmem %s3, 24
      %v2185 = vld [vmem:[%s2184] sm:$0xf]
      %v2186 = vld [vmem:[%s2184 + $0x4] sm:$0x3]
      %v2195 = vunpack.c.l.b16 %v2176
      %v2196 = vunpack.c.l.b16 %v2177
      %v2197 = vunpack.c.l.b16 %v2178
      %v2198 = vunpack.c.l.b16 %v2179
      %v2199 = vunpack.c.l.b16 %v2180
      %v2200 = vunpack.c.l.b16 %v2181
      %v2201 = vunpack.c.l.b16 %v2182
      %v2202 = vunpack.c.l.b16 %v2183
      %v2203 = vpack.c.b16 %v2196, %v2195
      %v2204 = vpack.c.b16 %v2198, %v2197
      %v2205 = vpack.c.b16 %v2200, %v2199
      %v2206 = vpack.c.b16 %v2202, %v2201
      %v2209 = vunpack.c.l.b16 %v2185
      %v2210 = vunpack.c.l.b16 %v2186
      %v2211 = vpack.c.b16 %v2210, %v2209
      %v2213 = vsel %vm1864, %v2203, 0
      %v2216 = vsel %vm1864, %v2204, 0
      %v2219 = vsel %vm1864, %v2205, 0
      %v2222 = vsel %vm1864, %v2206, 0
      %v2225 = vsel %vm1877, %v2211, 0
      %2227 = vmatprep.subr.bf16.mxu0 0
      %2228 = vmatpush1.bf16.msra.mxu0 0
      %2229 = vmatprep.subr.bf16.mxu0 0
      %2230 = vmatpush1.bf16.msra.mxu0 0
      %2231 = vmatprep.subr.bf16.mxu0 0
      %2232 = vmatpush1.bf16.msra.mxu0 0
      %2233 = vmatprep.subr.bf16.mxu0 0
      %2234 = vmatpush1.bf16.msra.mxu0 0
      %2235 = vmatprep.subr.bf16.mxu0 0
      %2236 = vmatpush1.bf16.msra.mxu0 0
      %2237 = vmatprep.subr.bf16.mxu0 0
      %2238 = vmatpush1.bf16.msra.mxu0 0
      %2239 = vmatprep.subr.bf16.mxu0 0
      %2240 = vmatpush1.bf16.msra.mxu0 0
      %2241 = vmatprep.subr.bf16.mxu0 0
      %2242 = vmatpush1.bf16.msra.mxu0 %v2225
      %2243 = vmatprep.subr.bf16.mxu0 0
      %2244 = vmatpush2.bf16.msra.mxu0 0
      %2245 = vmatprep.subr.bf16.mxu0 0
      %2246 = vmatpush2.bf16.msra.mxu0 0
      %2247 = vmatprep.subr.bf16.mxu0 0
      %2248 = vmatpush2.bf16.msra.mxu0 0
      %2249 = vmatprep.subr.bf16.mxu0 0
      %2250 = vmatpush2.bf16.msra.mxu0 0
      %2251 = vmatprep.subr.bf16.mxu0 0
      %2252 = vmatpush2.bf16.msra.mxu0 0
      %2253 = vmatprep.subr.bf16.mxu0 0
      %2254 = vmatpush2.bf16.msra.mxu0 0
      %2255 = vmatprep.subr.bf16.mxu0 0
      %2256 = vmatpush2.bf16.msra.mxu0 0
      %2257 = vmatprep.subr.bf16.mxu0 0
      %2258 = vmatpush2.bf16.msra.mxu0 0
      %2259 = vmatprep.mubr.bf16.mxu0 0
      %2260 = vmatmul.mubr.bf16.gmra.mxu0 %v2213
      %v2261 = vpop.f32.mrf.mxu0
      %v2262 = vadd.f32 0.0, %v2261
      %v2263 = vpop.f32.mrf.mxu0
      %v2264 = vpop.f32.mrf.mxu0
      %v2265 = vadd.f32 0.0, %v2264
      %v2266 = vpop.f32.mrf.mxu0
      %2267 = vmatprep.mubr.bf16.mxu0 0
      %2268 = vmatmul.mubr.bf16.gmra.mxu0 %v2216
      %v2269 = vpop.f32.mrf.mxu0
      %v2270 = vadd.f32 0.0, %v2269
      %v2271 = vpop.f32.mrf.mxu0
      %v2272 = vpop.f32.mrf.mxu0
      %v2273 = vadd.f32 0.0, %v2272
      %v2274 = vpop.f32.mrf.mxu0
      %2275 = vmatprep.mubr.bf16.mxu0 0
      %2276 = vmatmul.mubr.bf16.gmra.mxu0 %v2219
      %v2277 = vpop.f32.mrf.mxu0
      %v2278 = vadd.f32 0.0, %v2277
      %v2279 = vpop.f32.mrf.mxu0
      %v2280 = vpop.f32.mrf.mxu0
      %v2281 = vadd.f32 0.0, %v2280
      %v2282 = vpop.f32.mrf.mxu0
      %2283 = vmatprep.mubr.bf16.mxu0 0
      %2284 = vmatmul.mubr.bf16.gmra.mxu0 %v2222
      %v2285 = vpop.f32.mrf.mxu0
      %v2286 = vadd.f32 0.0, %v2285
      %v2287 = vpop.f32.mrf.mxu0
      %v2288 = vpop.f32.mrf.mxu0
      %v2289 = vadd.f32 0.0, %v2288
      %v2290 = vpop.f32.mrf.mxu0
      %2291 = vdwg.mxu0
      %v2292 = vadd.f32 %v2168, %v2262
      %v2293 = vadd.f32 %v2169, %v2265
      %v2294 = vadd.f32 %v2170, %v2270
      %v2295 = vadd.f32 %v2171, %v2273
      %v2296 = vadd.f32 %v2172, %v2278
      %v2297 = vadd.f32 %v2173, %v2281
      %v2298 = vadd.f32 %v2174, %v2286
      %v2299 = vadd.f32 %v2175, %v2289
      %s2300 = scalar_lea.vmem %s429, 4
      %v2301 = vld [vmem:[%s2300] sm:$0xf]
      %v2302 = vld [vmem:[%s2300 + $0x4] sm:$0xf]
      %v2303 = vld [vmem:[%s2300 + $0x8] sm:$0xf]
      %v2304 = vld [vmem:[%s2300 + $0xc] sm:$0xf]
      %v2305 = vld [vmem:[%s2300 + $0x10] sm:$0xf]
      %v2306 = vld [vmem:[%s2300 + $0x14] sm:$0xf]
      %v2307 = vld [vmem:[%s2300 + $0x18] sm:$0xf]
      %v2308 = vld [vmem:[%s2300 + $0x1c] sm:$0xf]
      %s2309 = scalar_lea.vmem %s3, 32
      %v2310 = vld [vmem:[%s2309] sm:$0xf]
      %v2311 = vld [vmem:[%s2309 + $0x4] sm:$0x3]
      %v2320 = vunpack.c.l.b16 %v2301
      %v2321 = vunpack.c.l.b16 %v2302
      %v2322 = vunpack.c.l.b16 %v2303
      %v2323 = vunpack.c.l.b16 %v2304
      %v2324 = vunpack.c.l.b16 %v2305
      %v2325 = vunpack.c.l.b16 %v2306
      %v2326 = vunpack.c.l.b16 %v2307
      %v2327 = vunpack.c.l.b16 %v2308
      %v2328 = vpack.c.b16 %v2321, %v2320
      %v2329 = vpack.c.b16 %v2323, %v2322
      %v2330 = vpack.c.b16 %v2325, %v2324
      %v2331 = vpack.c.b16 %v2327, %v2326
      %v2334 = vunpack.c.l.b16 %v2310
      %v2335 = vunpack.c.l.b16 %v2311
      %v2336 = vpack.c.b16 %v2335, %v2334
      %v2338 = vsel %vm1864, %v2328, 0
      %v2341 = vsel %vm1864, %v2329, 0
      %v2344 = vsel %vm1864, %v2330, 0
      %v2347 = vsel %vm1864, %v2331, 0
      %v2350 = vsel %vm1877, %v2336, 0
      %2352 = vmatprep.subr.bf16.mxu0 0
      %2353 = vmatpush1.bf16.msra.mxu0 0
      %2354 = vmatprep.subr.bf16.mxu0 0
      %2355 = vmatpush1.bf16.msra.mxu0 0
      %2356 = vmatprep.subr.bf16.mxu0 0
      %2357 = vmatpush1.bf16.msra.mxu0 0
      %2358 = vmatprep.subr.bf16.mxu0 0
      %2359 = vmatpush1.bf16.msra.mxu0 0
      %2360 = vmatprep.subr.bf16.mxu0 0
      %2361 = vmatpush1.bf16.msra.mxu0 0
      %2362 = vmatprep.subr.bf16.mxu0 0
      %2363 = vmatpush1.bf16.msra.mxu0 0
      %2364 = vmatprep.subr.bf16.mxu0 0
      %2365 = vmatpush1.bf16.msra.mxu0 0
      %2366 = vmatprep.subr.bf16.mxu0 0
      %2367 = vmatpush1.bf16.msra.mxu0 %v2350
      %2368 = vmatprep.subr.bf16.mxu0 0
      %2369 = vmatpush2.bf16.msra.mxu0 0
      %2370 = vmatprep.subr.bf16.mxu0 0
      %2371 = vmatpush2.bf16.msra.mxu0 0
      %2372 = vmatprep.subr.bf16.mxu0 0
      %2373 = vmatpush2.bf16.msra.mxu0 0
      %2374 = vmatprep.subr.bf16.mxu0 0
      %2375 = vmatpush2.bf16.msra.mxu0 0
      %2376 = vmatprep.subr.bf16.mxu0 0
      %2377 = vmatpush2.bf16.msra.mxu0 0
      %2378 = vmatprep.subr.bf16.mxu0 0
      %2379 = vmatpush2.bf16.msra.mxu0 0
      %2380 = vmatprep.subr.bf16.mxu0 0
      %2381 = vmatpush2.bf16.msra.mxu0 0
      %2382 = vmatprep.subr.bf16.mxu0 0
      %2383 = vmatpush2.bf16.msra.mxu0 0
      %2384 = vmatprep.mubr.bf16.mxu0 0
      %2385 = vmatmul.mubr.bf16.gmra.mxu0 %v2338
      %v2386 = vpop.f32.mrf.mxu0
      %v2387 = vadd.f32 0.0, %v2386
      %v2388 = vpop.f32.mrf.mxu0
      %v2389 = vpop.f32.mrf.mxu0
      %v2390 = vadd.f32 0.0, %v2389
      %v2391 = vpop.f32.mrf.mxu0
      %2392 = vmatprep.mubr.bf16.mxu0 0
      %2393 = vmatmul.mubr.bf16.gmra.mxu0 %v2341
      %v2394 = vpop.f32.mrf.mxu0
      %v2395 = vadd.f32 0.0, %v2394
      %v2396 = vpop.f32.mrf.mxu0
      %v2397 = vpop.f32.mrf.mxu0
      %v2398 = vadd.f32 0.0, %v2397
      %v2399 = vpop.f32.mrf.mxu0
      %2400 = vmatprep.mubr.bf16.mxu0 0
      %2401 = vmatmul.mubr.bf16.gmra.mxu0 %v2344
      %v2402 = vpop.f32.mrf.mxu0
      %v2403 = vadd.f32 0.0, %v2402
      %v2404 = vpop.f32.mrf.mxu0
      %v2405 = vpop.f32.mrf.mxu0
      %v2406 = vadd.f32 0.0, %v2405
      %v2407 = vpop.f32.mrf.mxu0
      %2408 = vmatprep.mubr.bf16.mxu0 0
      %2409 = vmatmul.mubr.bf16.gmra.mxu0 %v2347
      %v2410 = vpop.f32.mrf.mxu0
      %v2411 = vadd.f32 0.0, %v2410
      %v2412 = vpop.f32.mrf.mxu0
      %v2413 = vpop.f32.mrf.mxu0
      %v2414 = vadd.f32 0.0, %v2413
      %v2415 = vpop.f32.mrf.mxu0
      %2416 = vdwg.mxu0
      %v2417 = vadd.f32 %v2292, %v2387
      %v2418 = vadd.f32 %v2293, %v2390
      %v2419 = vadd.f32 %v2294, %v2395
      %v2420 = vadd.f32 %v2295, %v2398
      %v2421 = vadd.f32 %v2296, %v2403
      %v2422 = vadd.f32 %v2297, %v2406
      %v2423 = vadd.f32 %v2298, %v2411
      %v2424 = vadd.f32 %v2299, %v2414
      %2425 = vmatprep.subr.bf16.mxu0 0
      %2426 = vmatpush1.bf16.msra.mxu0 0
      %2427 = vmatprep.subr.bf16.mxu0 0
      %2428 = vmatpush1.bf16.msra.mxu0 0
      %2429 = vmatprep.subr.bf16.mxu0 0
      %2430 = vmatpush1.bf16.msra.mxu0 0
      %2431 = vmatprep.subr.bf16.mxu0 0
      %2432 = vmatpush1.bf16.msra.mxu0 0
      %2433 = vmatprep.subr.bf16.mxu0 0
      %2434 = vmatpush1.bf16.msra.mxu0 0
      %2435 = vmatprep.subr.bf16.mxu0 0
      %2436 = vmatpush1.bf16.msra.mxu0 0
      %2437 = vmatprep.subr.bf16.mxu0 0
      %2438 = vmatpush1.bf16.msra.mxu0 0
      %2439 = vmatprep.subr.bf16.mxu0 0
      %2440 = vmatpush1.bf16.msra.mxu0 %v1879
      %2441 = vmatprep.subr.bf16.mxu0 0
      %2442 = vmatpush2.bf16.msra.mxu0 0
      %2443 = vmatprep.subr.bf16.mxu0 0
      %2444 = vmatpush2.bf16.msra.mxu0 0
      %2445 = vmatprep.subr.bf16.mxu0 0
      %2446 = vmatpush2.bf16.msra.mxu0 0
      %2447 = vmatprep.subr.bf16.mxu0 0
      %2448 = vmatpush2.bf16.msra.mxu0 0
      %2449 = vmatprep.subr.bf16.mxu0 0
      %2450 = vmatpush2.bf16.msra.mxu0 0
      %2451 = vmatprep.subr.bf16.mxu0 0
      %2452 = vmatpush2.bf16.msra.mxu0 0
      %2453 = vmatprep.subr.bf16.mxu0 0
      %2454 = vmatpush2.bf16.msra.mxu0 0
      %2455 = vmatprep.subr.bf16.mxu0 0
      %2456 = vmatpush2.bf16.msra.mxu0 0
      %2457 = vmatprep.mubr.bf16.mxu0 0
      %2458 = vmatmul.mubr.bf16.gmra.mxu0 %v2338
      %v2459 = vpop.f32.mrf.mxu0
      %v2460 = vadd.f32 0.0, %v2459
      %v2461 = vpop.f32.mrf.mxu0
      %v2462 = vpop.f32.mrf.mxu0
      %v2463 = vadd.f32 0.0, %v2462
      %v2464 = vpop.f32.mrf.mxu0
      %2465 = vmatprep.mubr.bf16.mxu0 0
      %2466 = vmatmul.mubr.bf16.gmra.mxu0 %v2341
      %v2467 = vpop.f32.mrf.mxu0
      %v2468 = vadd.f32 0.0, %v2467
      %v2469 = vpop.f32.mrf.mxu0
      %v2470 = vpop.f32.mrf.mxu0
      %v2471 = vadd.f32 0.0, %v2470
      %v2472 = vpop.f32.mrf.mxu0
      %2473 = vmatprep.mubr.bf16.mxu0 0
      %2474 = vmatmul.mubr.bf16.gmra.mxu0 %v2344
      %v2475 = vpop.f32.mrf.mxu0
      %v2476 = vadd.f32 0.0, %v2475
      %v2477 = vpop.f32.mrf.mxu0
      %v2478 = vpop.f32.mrf.mxu0
      %v2479 = vadd.f32 0.0, %v2478
      %v2480 = vpop.f32.mrf.mxu0
      %2481 = vmatprep.mubr.bf16.mxu0 0
      %2482 = vmatmul.mubr.bf16.gmra.mxu0 %v2347
      %v2483 = vpop.f32.mrf.mxu0
      %v2484 = vadd.f32 0.0, %v2483
      %v2485 = vpop.f32.mrf.mxu0
      %v2486 = vpop.f32.mrf.mxu0
      %v2487 = vadd.f32 0.0, %v2486
      %v2488 = vpop.f32.mrf.mxu0
      %2489 = vdwg.mxu0
      %2490 = vmatprep.subr.bf16.mxu0 0
      %2491 = vmatpush1.bf16.msra.mxu0 0
      %2492 = vmatprep.subr.bf16.mxu0 0
      %2493 = vmatpush1.bf16.msra.mxu0 0
      %2494 = vmatprep.subr.bf16.mxu0 0
      %2495 = vmatpush1.bf16.msra.mxu0 0
      %2496 = vmatprep.subr.bf16.mxu0 0
      %2497 = vmatpush1.bf16.msra.mxu0 0
      %2498 = vmatprep.subr.bf16.mxu0 0
      %2499 = vmatpush1.bf16.msra.mxu0 0
      %2500 = vmatprep.subr.bf16.mxu0 0
      %2501 = vmatpush1.bf16.msra.mxu0 0
      %2502 = vmatprep.subr.bf16.mxu0 0
      %2503 = vmatpush1.bf16.msra.mxu0 0
      %2504 = vmatprep.subr.bf16.mxu0 0
      %2505 = vmatpush1.bf16.msra.mxu0 %v1984
      %2506 = vmatprep.subr.bf16.mxu0 0
      %2507 = vmatpush2.bf16.msra.mxu0 0
      %2508 = vmatprep.subr.bf16.mxu0 0
      %2509 = vmatpush2.bf16.msra.mxu0 0
      %2510 = vmatprep.subr.bf16.mxu0 0
      %2511 = vmatpush2.bf16.msra.mxu0 0
      %2512 = vmatprep.subr.bf16.mxu0 0
      %2513 = vmatpush2.bf16.msra.mxu0 0
      %2514 = vmatprep.subr.bf16.mxu0 0
      %2515 = vmatpush2.bf16.msra.mxu0 0
      %2516 = vmatprep.subr.bf16.mxu0 0
      %2517 = vmatpush2.bf16.msra.mxu0 0
      %2518 = vmatprep.subr.bf16.mxu0 0
      %2519 = vmatpush2.bf16.msra.mxu0 0
      %2520 = vmatprep.subr.bf16.mxu0 0
      %2521 = vmatpush2.bf16.msra.mxu0 0
      %2522 = vmatprep.mubr.bf16.mxu0 0
      %2523 = vmatmul.mubr.bf16.gmra.mxu0 %v2213
      %v2524 = vpop.f32.mrf.mxu0
      %v2525 = vadd.f32 %v2460, %v2524
      %v2526 = vpop.f32.mrf.mxu0
      %v2527 = vpop.f32.mrf.mxu0
      %v2528 = vadd.f32 %v2463, %v2527
      %v2529 = vpop.f32.mrf.mxu0
      %2530 = vmatprep.mubr.bf16.mxu0 0
      %2531 = vmatmul.mubr.bf16.gmra.mxu0 %v2216
      %v2532 = vpop.f32.mrf.mxu0
      %v2533 = vadd.f32 %v2468, %v2532
      %v2534 = vpop.f32.mrf.mxu0
      %v2535 = vpop.f32.mrf.mxu0
      %v2536 = vadd.f32 %v2471, %v2535
      %v2537 = vpop.f32.mrf.mxu0
      %2538 = vmatprep.mubr.bf16.mxu0 0
      %2539 = vmatmul.mubr.bf16.gmra.mxu0 %v2219
      %v2540 = vpop.f32.mrf.mxu0
      %v2541 = vadd.f32 %v2476, %v2540
      %v2542 = vpop.f32.mrf.mxu0
      %v2543 = vpop.f32.mrf.mxu0
      %v2544 = vadd.f32 %v2479, %v2543
      %v2545 = vpop.f32.mrf.mxu0
      %2546 = vmatprep.mubr.bf16.mxu0 0
      %2547 = vmatmul.mubr.bf16.gmra.mxu0 %v2222
      %v2548 = vpop.f32.mrf.mxu0
      %v2549 = vadd.f32 %v2484, %v2548
      %v2550 = vpop.f32.mrf.mxu0
      %v2551 = vpop.f32.mrf.mxu0
      %v2552 = vadd.f32 %v2487, %v2551
      %v2553 = vpop.f32.mrf.mxu0
      %2554 = vdwg.mxu0
      %s2555 = scalar_lea.vmem %s429, 8
      %v2556 = vld [vmem:[%s2555] sm:$0xf]
      %v2557 = vld [vmem:[%s2555 + $0x4] sm:$0xf]
      %v2558 = vld [vmem:[%s2555 + $0x8] sm:$0xf]
      %v2559 = vld [vmem:[%s2555 + $0xc] sm:$0xf]
      %v2560 = vld [vmem:[%s2555 + $0x10] sm:$0xf]
      %v2561 = vld [vmem:[%s2555 + $0x14] sm:$0xf]
      %v2562 = vld [vmem:[%s2555 + $0x18] sm:$0xf]
      %v2563 = vld [vmem:[%s2555 + $0x1c] sm:$0xf]
      %s2564 = scalar_lea.vmem %s3, 40
      %v2565 = vld [vmem:[%s2564] sm:$0xf]
      %v2566 = vld [vmem:[%s2564 + $0x4] sm:$0x3]
      %v2575 = vunpack.c.l.b16 %v2556
      %v2576 = vunpack.c.l.b16 %v2557
      %v2577 = vunpack.c.l.b16 %v2558
      %v2578 = vunpack.c.l.b16 %v2559
      %v2579 = vunpack.c.l.b16 %v2560
      %v2580 = vunpack.c.l.b16 %v2561
      %v2581 = vunpack.c.l.b16 %v2562
      %v2582 = vunpack.c.l.b16 %v2563
      %v2583 = vpack.c.b16 %v2576, %v2575
      %v2584 = vpack.c.b16 %v2578, %v2577
      %v2585 = vpack.c.b16 %v2580, %v2579
      %v2586 = vpack.c.b16 %v2582, %v2581
      %v2589 = vunpack.c.l.b16 %v2565
      %v2590 = vunpack.c.l.b16 %v2566
      %v2591 = vpack.c.b16 %v2590, %v2589
      %v2593 = vsel %vm1864, %v2583, 0
      %v2596 = vsel %vm1864, %v2584, 0
      %v2599 = vsel %vm1864, %v2585, 0
      %v2602 = vsel %vm1864, %v2586, 0
      %v2605 = vsel %vm1877, %v2591, 0
      %2607 = vmatprep.subr.bf16.mxu0 0
      %2608 = vmatpush1.bf16.msra.mxu0 0
      %2609 = vmatprep.subr.bf16.mxu0 0
      %2610 = vmatpush1.bf16.msra.mxu0 0
      %2611 = vmatprep.subr.bf16.mxu0 0
      %2612 = vmatpush1.bf16.msra.mxu0 0
      %2613 = vmatprep.subr.bf16.mxu0 0
      %2614 = vmatpush1.bf16.msra.mxu0 0
      %2615 = vmatprep.subr.bf16.mxu0 0
      %2616 = vmatpush1.bf16.msra.mxu0 0
      %2617 = vmatprep.subr.bf16.mxu0 0
      %2618 = vmatpush1.bf16.msra.mxu0 0
      %2619 = vmatprep.subr.bf16.mxu0 0
      %2620 = vmatpush1.bf16.msra.mxu0 0
      %2621 = vmatprep.subr.bf16.mxu0 0
      %2622 = vmatpush1.bf16.msra.mxu0 %v2605
      %2623 = vmatprep.subr.bf16.mxu0 0
      %2624 = vmatpush2.bf16.msra.mxu0 0
      %2625 = vmatprep.subr.bf16.mxu0 0
      %2626 = vmatpush2.bf16.msra.mxu0 0
      %2627 = vmatprep.subr.bf16.mxu0 0
      %2628 = vmatpush2.bf16.msra.mxu0 0
      %2629 = vmatprep.subr.bf16.mxu0 0
      %2630 = vmatpush2.bf16.msra.mxu0 0
      %2631 = vmatprep.subr.bf16.mxu0 0
      %2632 = vmatpush2.bf16.msra.mxu0 0
      %2633 = vmatprep.subr.bf16.mxu0 0
      %2634 = vmatpush2.bf16.msra.mxu0 0
      %2635 = vmatprep.subr.bf16.mxu0 0
      %2636 = vmatpush2.bf16.msra.mxu0 0
      %2637 = vmatprep.subr.bf16.mxu0 0
      %2638 = vmatpush2.bf16.msra.mxu0 0
      %2639 = vmatprep.mubr.bf16.mxu0 0
      %2640 = vmatmul.mubr.bf16.gmra.mxu0 %v2593
      %v2641 = vpop.f32.mrf.mxu0
      %v2642 = vadd.f32 0.0, %v2641
      %v2643 = vpop.f32.mrf.mxu0
      %v2644 = vpop.f32.mrf.mxu0
      %v2645 = vadd.f32 0.0, %v2644
      %v2646 = vpop.f32.mrf.mxu0
      %2647 = vmatprep.mubr.bf16.mxu0 0
      %2648 = vmatmul.mubr.bf16.gmra.mxu0 %v2596
      %v2649 = vpop.f32.mrf.mxu0
      %v2650 = vadd.f32 0.0, %v2649
      %v2651 = vpop.f32.mrf.mxu0
      %v2652 = vpop.f32.mrf.mxu0
      %v2653 = vadd.f32 0.0, %v2652
      %v2654 = vpop.f32.mrf.mxu0
      %2655 = vmatprep.mubr.bf16.mxu0 0
      %2656 = vmatmul.mubr.bf16.gmra.mxu0 %v2599
      %v2657 = vpop.f32.mrf.mxu0
      %v2658 = vadd.f32 0.0, %v2657
      %v2659 = vpop.f32.mrf.mxu0
      %v2660 = vpop.f32.mrf.mxu0
      %v2661 = vadd.f32 0.0, %v2660
      %v2662 = vpop.f32.mrf.mxu0
      %2663 = vmatprep.mubr.bf16.mxu0 0
      %2664 = vmatmul.mubr.bf16.gmra.mxu0 %v2602
      %v2665 = vpop.f32.mrf.mxu0
      %v2666 = vadd.f32 0.0, %v2665
      %v2667 = vpop.f32.mrf.mxu0
      %v2668 = vpop.f32.mrf.mxu0
      %v2669 = vadd.f32 0.0, %v2668
      %v2670 = vpop.f32.mrf.mxu0
      %2671 = vdwg.mxu0
      %v2672 = vadd.f32 %v2417, %v2642
      %v2673 = vadd.f32 %v2418, %v2645
      %v2674 = vadd.f32 %v2419, %v2650
      %v2675 = vadd.f32 %v2420, %v2653
      %v2676 = vadd.f32 %v2421, %v2658
      %v2677 = vadd.f32 %v2422, %v2661
      %v2678 = vadd.f32 %v2423, %v2666
      %v2679 = vadd.f32 %v2424, %v2669
      %2680 = vmatprep.subr.bf16.mxu0 0
      %2681 = vmatpush1.bf16.msra.mxu0 0
      %2682 = vmatprep.subr.bf16.mxu0 0
      %2683 = vmatpush1.bf16.msra.mxu0 0
      %2684 = vmatprep.subr.bf16.mxu0 0
      %2685 = vmatpush1.bf16.msra.mxu0 0
      %2686 = vmatprep.subr.bf16.mxu0 0
      %2687 = vmatpush1.bf16.msra.mxu0 0
      %2688 = vmatprep.subr.bf16.mxu0 0
      %2689 = vmatpush1.bf16.msra.mxu0 0
      %2690 = vmatprep.subr.bf16.mxu0 0
      %2691 = vmatpush1.bf16.msra.mxu0 0
      %2692 = vmatprep.subr.bf16.mxu0 0
      %2693 = vmatpush1.bf16.msra.mxu0 0
      %2694 = vmatprep.subr.bf16.mxu0 0
      %2695 = vmatpush1.bf16.msra.mxu0 %v2101
      %2696 = vmatprep.subr.bf16.mxu0 0
      %2697 = vmatpush2.bf16.msra.mxu0 0
      %2698 = vmatprep.subr.bf16.mxu0 0
      %2699 = vmatpush2.bf16.msra.mxu0 0
      %2700 = vmatprep.subr.bf16.mxu0 0
      %2701 = vmatpush2.bf16.msra.mxu0 0
      %2702 = vmatprep.subr.bf16.mxu0 0
      %2703 = vmatpush2.bf16.msra.mxu0 0
      %2704 = vmatprep.subr.bf16.mxu0 0
      %2705 = vmatpush2.bf16.msra.mxu0 0
      %2706 = vmatprep.subr.bf16.mxu0 0
      %2707 = vmatpush2.bf16.msra.mxu0 0
      %2708 = vmatprep.subr.bf16.mxu0 0
      %2709 = vmatpush2.bf16.msra.mxu0 0
      %2710 = vmatprep.subr.bf16.mxu0 0
      %2711 = vmatpush2.bf16.msra.mxu0 0
      %2712 = vmatprep.mubr.bf16.mxu0 0
      %2713 = vmatmul.mubr.bf16.gmra.mxu0 %v2593
      %v2714 = vpop.f32.mrf.mxu0
      %v2715 = vadd.f32 0.0, %v2714
      %v2716 = vpop.f32.mrf.mxu0
      %v2717 = vpop.f32.mrf.mxu0
      %v2718 = vadd.f32 0.0, %v2717
      %v2719 = vpop.f32.mrf.mxu0
      %2720 = vmatprep.mubr.bf16.mxu0 0
      %2721 = vmatmul.mubr.bf16.gmra.mxu0 %v2596
      %v2722 = vpop.f32.mrf.mxu0
      %v2723 = vadd.f32 0.0, %v2722
      %v2724 = vpop.f32.mrf.mxu0
      %v2725 = vpop.f32.mrf.mxu0
      %v2726 = vadd.f32 0.0, %v2725
      %v2727 = vpop.f32.mrf.mxu0
      %2728 = vmatprep.mubr.bf16.mxu0 0
      %2729 = vmatmul.mubr.bf16.gmra.mxu0 %v2599
      %v2730 = vpop.f32.mrf.mxu0
      %v2731 = vadd.f32 0.0, %v2730
      %v2732 = vpop.f32.mrf.mxu0
      %v2733 = vpop.f32.mrf.mxu0
      %v2734 = vadd.f32 0.0, %v2733
      %v2735 = vpop.f32.mrf.mxu0
      %2736 = vmatprep.mubr.bf16.mxu0 0
      %2737 = vmatmul.mubr.bf16.gmra.mxu0 %v2602
      %v2738 = vpop.f32.mrf.mxu0
      %v2739 = vadd.f32 0.0, %v2738
      %v2740 = vpop.f32.mrf.mxu0
      %v2741 = vpop.f32.mrf.mxu0
      %v2742 = vadd.f32 0.0, %v2741
      %v2743 = vpop.f32.mrf.mxu0
      %2744 = vdwg.mxu0
      %v2745 = vadd.f32 %v2525, %v2715
      %v2746 = vadd.f32 %v2528, %v2718
      %v2747 = vadd.f32 %v2533, %v2723
      %v2748 = vadd.f32 %v2536, %v2726
      %v2749 = vadd.f32 %v2541, %v2731
      %v2750 = vadd.f32 %v2544, %v2734
      %v2751 = vadd.f32 %v2549, %v2739
      %v2752 = vadd.f32 %v2552, %v2742
      %s2753 = scalar_lea.vmem %s429, 40
      %v2754 = vld [vmem:[%s2753] sm:$0xf]
      %v2755 = vld [vmem:[%s2753 + $0x4] sm:$0xf]
      %v2756 = vld [vmem:[%s2753 + $0x8] sm:$0xf]
      %v2757 = vld [vmem:[%s2753 + $0xc] sm:$0xf]
      %v2758 = vld [vmem:[%s2753 + $0x10] sm:$0xf]
      %v2759 = vld [vmem:[%s2753 + $0x14] sm:$0xf]
      %v2760 = vld [vmem:[%s2753 + $0x18] sm:$0xf]
      %v2761 = vld [vmem:[%s2753 + $0x1c] sm:$0xf]
      %s2762 = scalar_lea.vmem %s3, 48
      %v2763 = vld [vmem:[%s2762] sm:$0xf]
      %v2764 = vld [vmem:[%s2762 + $0x4] sm:$0x3]
      %v2773 = vunpack.c.l.b16 %v2754
      %v2774 = vunpack.c.l.b16 %v2755
      %v2775 = vunpack.c.l.b16 %v2756
      %v2776 = vunpack.c.l.b16 %v2757
      %v2777 = vunpack.c.l.b16 %v2758
      %v2778 = vunpack.c.l.b16 %v2759
      %v2779 = vunpack.c.l.b16 %v2760
      %v2780 = vunpack.c.l.b16 %v2761
      %v2781 = vpack.c.b16 %v2774, %v2773
      %v2782 = vpack.c.b16 %v2776, %v2775
      %v2783 = vpack.c.b16 %v2778, %v2777
      %v2784 = vpack.c.b16 %v2780, %v2779
      %v2787 = vunpack.c.l.b16 %v2763
      %v2788 = vunpack.c.l.b16 %v2764
      %v2789 = vpack.c.b16 %v2788, %v2787
      %v2791 = vsel %vm1864, %v2781, 0
      %v2794 = vsel %vm1864, %v2782, 0
      %v2797 = vsel %vm1864, %v2783, 0
      %v2800 = vsel %vm1864, %v2784, 0
      %v2803 = vsel %vm1877, %v2789, 0
      %2805 = vmatprep.subr.bf16.mxu0 0
      %2806 = vmatpush1.bf16.msra.mxu0 0
      %2807 = vmatprep.subr.bf16.mxu0 0
      %2808 = vmatpush1.bf16.msra.mxu0 0
      %2809 = vmatprep.subr.bf16.mxu0 0
      %2810 = vmatpush1.bf16.msra.mxu0 0
      %2811 = vmatprep.subr.bf16.mxu0 0
      %2812 = vmatpush1.bf16.msra.mxu0 0
      %2813 = vmatprep.subr.bf16.mxu0 0
      %2814 = vmatpush1.bf16.msra.mxu0 0
      %2815 = vmatprep.subr.bf16.mxu0 0
      %2816 = vmatpush1.bf16.msra.mxu0 0
      %2817 = vmatprep.subr.bf16.mxu0 0
      %2818 = vmatpush1.bf16.msra.mxu0 0
      %2819 = vmatprep.subr.bf16.mxu0 0
      %2820 = vmatpush1.bf16.msra.mxu0 %v2803
      %2821 = vmatprep.subr.bf16.mxu0 0
      %2822 = vmatpush2.bf16.msra.mxu0 0
      %2823 = vmatprep.subr.bf16.mxu0 0
      %2824 = vmatpush2.bf16.msra.mxu0 0
      %2825 = vmatprep.subr.bf16.mxu0 0
      %2826 = vmatpush2.bf16.msra.mxu0 0
      %2827 = vmatprep.subr.bf16.mxu0 0
      %2828 = vmatpush2.bf16.msra.mxu0 0
      %2829 = vmatprep.subr.bf16.mxu0 0
      %2830 = vmatpush2.bf16.msra.mxu0 0
      %2831 = vmatprep.subr.bf16.mxu0 0
      %2832 = vmatpush2.bf16.msra.mxu0 0
      %2833 = vmatprep.subr.bf16.mxu0 0
      %2834 = vmatpush2.bf16.msra.mxu0 0
      %2835 = vmatprep.subr.bf16.mxu0 0
      %2836 = vmatpush2.bf16.msra.mxu0 0
      %2837 = vmatprep.mubr.bf16.mxu0 0
      %2838 = vmatmul.mubr.bf16.gmra.mxu0 %v2791
      %v2839 = vpop.f32.mrf.mxu0
      %v2840 = vadd.f32 0.0, %v2839
      %v2841 = vpop.f32.mrf.mxu0
      %v2842 = vpop.f32.mrf.mxu0
      %v2843 = vadd.f32 0.0, %v2842
      %v2844 = vpop.f32.mrf.mxu0
      %2845 = vmatprep.mubr.bf16.mxu0 0
      %2846 = vmatmul.mubr.bf16.gmra.mxu0 %v2794
      %v2847 = vpop.f32.mrf.mxu0
      %v2848 = vadd.f32 0.0, %v2847
      %v2849 = vpop.f32.mrf.mxu0
      %v2850 = vpop.f32.mrf.mxu0
      %v2851 = vadd.f32 0.0, %v2850
      %v2852 = vpop.f32.mrf.mxu0
      %2853 = vmatprep.mubr.bf16.mxu0 0
      %2854 = vmatmul.mubr.bf16.gmra.mxu0 %v2797
      %v2855 = vpop.f32.mrf.mxu0
      %v2856 = vadd.f32 0.0, %v2855
      %v2857 = vpop.f32.mrf.mxu0
      %v2858 = vpop.f32.mrf.mxu0
      %v2859 = vadd.f32 0.0, %v2858
      %v2860 = vpop.f32.mrf.mxu0
      %2861 = vmatprep.mubr.bf16.mxu0 0
      %2862 = vmatmul.mubr.bf16.gmra.mxu0 %v2800
      %v2863 = vpop.f32.mrf.mxu0
      %v2864 = vadd.f32 0.0, %v2863
      %v2865 = vpop.f32.mrf.mxu0
      %v2866 = vpop.f32.mrf.mxu0
      %v2867 = vadd.f32 0.0, %v2866
      %v2868 = vpop.f32.mrf.mxu0
      %2869 = vdwg.mxu0
      %v2870 = vadd.f32 %v2672, %v2840
      %v2871 = vadd.f32 %v2673, %v2843
      %v2872 = vadd.f32 %v2674, %v2848
      %v2873 = vadd.f32 %v2675, %v2851
      %v2874 = vadd.f32 %v2676, %v2856
      %v2875 = vadd.f32 %v2677, %v2859
      %v2876 = vadd.f32 %v2678, %v2864
      %v2877 = vadd.f32 %v2679, %v2867
      %2878 = vmatprep.subr.bf16.mxu0 0
      %2879 = vmatpush1.bf16.msra.mxu0 0
      %2880 = vmatprep.subr.bf16.mxu0 0
      %2881 = vmatpush1.bf16.msra.mxu0 0
      %2882 = vmatprep.subr.bf16.mxu0 0
      %2883 = vmatpush1.bf16.msra.mxu0 0
      %2884 = vmatprep.subr.bf16.mxu0 0
      %2885 = vmatpush1.bf16.msra.mxu0 0
      %2886 = vmatprep.subr.bf16.mxu0 0
      %2887 = vmatpush1.bf16.msra.mxu0 0
      %2888 = vmatprep.subr.bf16.mxu0 0
      %2889 = vmatpush1.bf16.msra.mxu0 0
      %2890 = vmatprep.subr.bf16.mxu0 0
      %2891 = vmatpush1.bf16.msra.mxu0 0
      %2892 = vmatprep.subr.bf16.mxu0 0
      %2893 = vmatpush1.bf16.msra.mxu0 %v2225
      %2894 = vmatprep.subr.bf16.mxu0 0
      %2895 = vmatpush2.bf16.msra.mxu0 0
      %2896 = vmatprep.subr.bf16.mxu0 0
      %2897 = vmatpush2.bf16.msra.mxu0 0
      %2898 = vmatprep.subr.bf16.mxu0 0
      %2899 = vmatpush2.bf16.msra.mxu0 0
      %2900 = vmatprep.subr.bf16.mxu0 0
      %2901 = vmatpush2.bf16.msra.mxu0 0
      %2902 = vmatprep.subr.bf16.mxu0 0
      %2903 = vmatpush2.bf16.msra.mxu0 0
      %2904 = vmatprep.subr.bf16.mxu0 0
      %2905 = vmatpush2.bf16.msra.mxu0 0
      %2906 = vmatprep.subr.bf16.mxu0 0
      %2907 = vmatpush2.bf16.msra.mxu0 0
      %2908 = vmatprep.subr.bf16.mxu0 0
      %2909 = vmatpush2.bf16.msra.mxu0 0
      %2910 = vmatprep.mubr.bf16.mxu0 0
      %2911 = vmatmul.mubr.bf16.gmra.mxu0 %v2791
      %v2912 = vpop.f32.mrf.mxu0
      %v2913 = vadd.f32 0.0, %v2912
      %v2914 = vpop.f32.mrf.mxu0
      %v2915 = vpop.f32.mrf.mxu0
      %v2916 = vadd.f32 0.0, %v2915
      %v2917 = vpop.f32.mrf.mxu0
      %2918 = vmatprep.mubr.bf16.mxu0 0
      %2919 = vmatmul.mubr.bf16.gmra.mxu0 %v2794
      %v2920 = vpop.f32.mrf.mxu0
      %v2921 = vadd.f32 0.0, %v2920
      %v2922 = vpop.f32.mrf.mxu0
      %v2923 = vpop.f32.mrf.mxu0
      %v2924 = vadd.f32 0.0, %v2923
      %v2925 = vpop.f32.mrf.mxu0
      %2926 = vmatprep.mubr.bf16.mxu0 0
      %2927 = vmatmul.mubr.bf16.gmra.mxu0 %v2797
      %v2928 = vpop.f32.mrf.mxu0
      %v2929 = vadd.f32 0.0, %v2928
      %v2930 = vpop.f32.mrf.mxu0
      %v2931 = vpop.f32.mrf.mxu0
      %v2932 = vadd.f32 0.0, %v2931
      %v2933 = vpop.f32.mrf.mxu0
      %2934 = vmatprep.mubr.bf16.mxu0 0
      %2935 = vmatmul.mubr.bf16.gmra.mxu0 %v2800
      %v2936 = vpop.f32.mrf.mxu0
      %v2937 = vadd.f32 0.0, %v2936
      %v2938 = vpop.f32.mrf.mxu0
      %v2939 = vpop.f32.mrf.mxu0
      %v2940 = vadd.f32 0.0, %v2939
      %v2941 = vpop.f32.mrf.mxu0
      %2942 = vdwg.mxu0
      %v2943 = vadd.f32 %v2745, %v2913
      %v2944 = vadd.f32 %v2746, %v2916
      %v2945 = vadd.f32 %v2747, %v2921
      %v2946 = vadd.f32 %v2748, %v2924
      %v2947 = vadd.f32 %v2749, %v2929
      %v2948 = vadd.f32 %v2750, %v2932
      %v2949 = vadd.f32 %v2751, %v2937
      %v2950 = vadd.f32 %v2752, %v2940
      %s2951 = scalar_lea.vmem %s429, 44
      %v2952 = vld [vmem:[%s2951] sm:$0xf]
      %v2953 = vld [vmem:[%s2951 + $0x4] sm:$0xf]
      %v2954 = vld [vmem:[%s2951 + $0x8] sm:$0xf]
      %v2955 = vld [vmem:[%s2951 + $0xc] sm:$0xf]
      %v2956 = vld [vmem:[%s2951 + $0x10] sm:$0xf]
      %v2957 = vld [vmem:[%s2951 + $0x14] sm:$0xf]
      %v2958 = vld [vmem:[%s2951 + $0x18] sm:$0xf]
      %v2959 = vld [vmem:[%s2951 + $0x1c] sm:$0xf]
      %s2960 = scalar_lea.vmem %s3, 56
      %v2961 = vld [vmem:[%s2960] sm:$0xf]
      %v2962 = vld [vmem:[%s2960 + $0x4] sm:$0x3]
      %v2971 = vunpack.c.l.b16 %v2952
      %v2972 = vunpack.c.l.b16 %v2953
      %v2973 = vunpack.c.l.b16 %v2954
      %v2974 = vunpack.c.l.b16 %v2955
      %v2975 = vunpack.c.l.b16 %v2956
      %v2976 = vunpack.c.l.b16 %v2957
      %v2977 = vunpack.c.l.b16 %v2958
      %v2978 = vunpack.c.l.b16 %v2959
      %v2979 = vpack.c.b16 %v2972, %v2971
      %v2980 = vpack.c.b16 %v2974, %v2973
      %v2981 = vpack.c.b16 %v2976, %v2975
      %v2982 = vpack.c.b16 %v2978, %v2977
      %v2985 = vunpack.c.l.b16 %v2961
      %v2986 = vunpack.c.l.b16 %v2962
      %v2987 = vpack.c.b16 %v2986, %v2985
      %v2989 = vsel %vm1864, %v2979, 0
      %v2992 = vsel %vm1864, %v2980, 0
      %v2995 = vsel %vm1864, %v2981, 0
      %v2998 = vsel %vm1864, %v2982, 0
      %v3001 = vsel %vm1877, %v2987, 0
      %3003 = vmatprep.subr.bf16.mxu0 0
      %3004 = vmatpush1.bf16.msra.mxu0 0
      %3005 = vmatprep.subr.bf16.mxu0 0
      %3006 = vmatpush1.bf16.msra.mxu0 0
      %3007 = vmatprep.subr.bf16.mxu0 0
      %3008 = vmatpush1.bf16.msra.mxu0 0
      %3009 = vmatprep.subr.bf16.mxu0 0
      %3010 = vmatpush1.bf16.msra.mxu0 0
      %3011 = vmatprep.subr.bf16.mxu0 0
      %3012 = vmatpush1.bf16.msra.mxu0 0
      %3013 = vmatprep.subr.bf16.mxu0 0
      %3014 = vmatpush1.bf16.msra.mxu0 0
      %3015 = vmatprep.subr.bf16.mxu0 0
      %3016 = vmatpush1.bf16.msra.mxu0 0
      %3017 = vmatprep.subr.bf16.mxu0 0
      %3018 = vmatpush1.bf16.msra.mxu0 %v3001
      %3019 = vmatprep.subr.bf16.mxu0 0
      %3020 = vmatpush2.bf16.msra.mxu0 0
      %3021 = vmatprep.subr.bf16.mxu0 0
      %3022 = vmatpush2.bf16.msra.mxu0 0
      %3023 = vmatprep.subr.bf16.mxu0 0
      %3024 = vmatpush2.bf16.msra.mxu0 0
      %3025 = vmatprep.subr.bf16.mxu0 0
      %3026 = vmatpush2.bf16.msra.mxu0 0
      %3027 = vmatprep.subr.bf16.mxu0 0
      %3028 = vmatpush2.bf16.msra.mxu0 0
      %3029 = vmatprep.subr.bf16.mxu0 0
      %3030 = vmatpush2.bf16.msra.mxu0 0
      %3031 = vmatprep.subr.bf16.mxu0 0
      %3032 = vmatpush2.bf16.msra.mxu0 0
      %3033 = vmatprep.subr.bf16.mxu0 0
      %3034 = vmatpush2.bf16.msra.mxu0 0
      %3035 = vmatprep.mubr.bf16.mxu0 0
      %3036 = vmatmul.mubr.bf16.gmra.mxu0 %v2989
      %v3037 = vpop.f32.mrf.mxu0
      %v3038 = vadd.f32 0.0, %v3037
      %v3039 = vpop.f32.mrf.mxu0
      %v3040 = vpop.f32.mrf.mxu0
      %v3041 = vadd.f32 0.0, %v3040
      %v3042 = vpop.f32.mrf.mxu0
      %3043 = vmatprep.mubr.bf16.mxu0 0
      %3044 = vmatmul.mubr.bf16.gmra.mxu0 %v2992
      %v3045 = vpop.f32.mrf.mxu0
      %v3046 = vadd.f32 0.0, %v3045
      %v3047 = vpop.f32.mrf.mxu0
      %v3048 = vpop.f32.mrf.mxu0
      %v3049 = vadd.f32 0.0, %v3048
      %v3050 = vpop.f32.mrf.mxu0
      %3051 = vmatprep.mubr.bf16.mxu0 0
      %3052 = vmatmul.mubr.bf16.gmra.mxu0 %v2995
      %v3053 = vpop.f32.mrf.mxu0
      %v3054 = vadd.f32 0.0, %v3053
      %v3055 = vpop.f32.mrf.mxu0
      %v3056 = vpop.f32.mrf.mxu0
      %v3057 = vadd.f32 0.0, %v3056
      %v3058 = vpop.f32.mrf.mxu0
      %3059 = vmatprep.mubr.bf16.mxu0 0
      %3060 = vmatmul.mubr.bf16.gmra.mxu0 %v2998
      %v3061 = vpop.f32.mrf.mxu0
      %v3062 = vadd.f32 0.0, %v3061
      %v3063 = vpop.f32.mrf.mxu0
      %v3064 = vpop.f32.mrf.mxu0
      %v3065 = vadd.f32 0.0, %v3064
      %v3066 = vpop.f32.mrf.mxu0
      %3067 = vdwg.mxu0
      %v3068 = vadd.f32 %v2870, %v3038
      %v3069 = vadd.f32 %v2871, %v3041
      %v3070 = vadd.f32 %v2872, %v3046
      %v3071 = vadd.f32 %v2873, %v3049
      %v3072 = vadd.f32 %v2874, %v3054
      %v3073 = vadd.f32 %v2875, %v3057
      %v3074 = vadd.f32 %v2876, %v3062
      %v3075 = vadd.f32 %v2877, %v3065
      %3076 = vmatprep.subr.bf16.mxu0 0
      %3077 = vmatpush1.bf16.msra.mxu0 0
      %3078 = vmatprep.subr.bf16.mxu0 0
      %3079 = vmatpush1.bf16.msra.mxu0 0
      %3080 = vmatprep.subr.bf16.mxu0 0
      %3081 = vmatpush1.bf16.msra.mxu0 0
      %3082 = vmatprep.subr.bf16.mxu0 0
      %3083 = vmatpush1.bf16.msra.mxu0 0
      %3084 = vmatprep.subr.bf16.mxu0 0
      %3085 = vmatpush1.bf16.msra.mxu0 0
      %3086 = vmatprep.subr.bf16.mxu0 0
      %3087 = vmatpush1.bf16.msra.mxu0 0
      %3088 = vmatprep.subr.bf16.mxu0 0
      %3089 = vmatpush1.bf16.msra.mxu0 0
      %3090 = vmatprep.subr.bf16.mxu0 0
      %3091 = vmatpush1.bf16.msra.mxu0 %v2350
      %3092 = vmatprep.subr.bf16.mxu0 0
      %3093 = vmatpush2.bf16.msra.mxu0 0
      %3094 = vmatprep.subr.bf16.mxu0 0
      %3095 = vmatpush2.bf16.msra.mxu0 0
      %3096 = vmatprep.subr.bf16.mxu0 0
      %3097 = vmatpush2.bf16.msra.mxu0 0
      %3098 = vmatprep.subr.bf16.mxu0 0
      %3099 = vmatpush2.bf16.msra.mxu0 0
      %3100 = vmatprep.subr.bf16.mxu0 0
      %3101 = vmatpush2.bf16.msra.mxu0 0
      %3102 = vmatprep.subr.bf16.mxu0 0
      %3103 = vmatpush2.bf16.msra.mxu0 0
      %3104 = vmatprep.subr.bf16.mxu0 0
      %3105 = vmatpush2.bf16.msra.mxu0 0
      %3106 = vmatprep.subr.bf16.mxu0 0
      %3107 = vmatpush2.bf16.msra.mxu0 0
      %3108 = vmatprep.mubr.bf16.mxu0 0
      %3109 = vmatmul.mubr.bf16.gmra.mxu0 %v2989
      %v3110 = vpop.f32.mrf.mxu0
      %v3111 = vadd.f32 0.0, %v3110
      %v3112 = vpop.f32.mrf.mxu0
      %v3113 = vpop.f32.mrf.mxu0
      %v3114 = vadd.f32 0.0, %v3113
      %v3115 = vpop.f32.mrf.mxu0
      %3116 = vmatprep.mubr.bf16.mxu0 0
      %3117 = vmatmul.mubr.bf16.gmra.mxu0 %v2992
      %v3118 = vpop.f32.mrf.mxu0
      %v3119 = vadd.f32 0.0, %v3118
      %v3120 = vpop.f32.mrf.mxu0
      %v3121 = vpop.f32.mrf.mxu0
      %v3122 = vadd.f32 0.0, %v3121
      %v3123 = vpop.f32.mrf.mxu0
      %3124 = vmatprep.mubr.bf16.mxu0 0
      %3125 = vmatmul.mubr.bf16.gmra.mxu0 %v2995
      %v3126 = vpop.f32.mrf.mxu0
      %v3127 = vadd.f32 0.0, %v3126
      %v3128 = vpop.f32.mrf.mxu0
      %v3129 = vpop.f32.mrf.mxu0
      %v3130 = vadd.f32 0.0, %v3129
      %v3131 = vpop.f32.mrf.mxu0
      %3132 = vmatprep.mubr.bf16.mxu0 0
      %3133 = vmatmul.mubr.bf16.gmra.mxu0 %v2998
      %v3134 = vpop.f32.mrf.mxu0
      %v3135 = vadd.f32 0.0, %v3134
      %v3136 = vpop.f32.mrf.mxu0
      %v3137 = vpop.f32.mrf.mxu0
      %v3138 = vadd.f32 0.0, %v3137
      %v3139 = vpop.f32.mrf.mxu0
      %3140 = vdwg.mxu0
      %v3141 = vadd.f32 %v2943, %v3111
      %v3142 = vadd.f32 %v2944, %v3114
      %v3143 = vadd.f32 %v2945, %v3119
      %v3144 = vadd.f32 %v2946, %v3122
      %v3145 = vadd.f32 %v2947, %v3127
      %v3146 = vadd.f32 %v2948, %v3130
      %v3147 = vadd.f32 %v2949, %v3135
      %v3148 = vadd.f32 %v2950, %v3138
      %s3149 = scalar_lea.vmem %s429, 48
      %v3150 = vld [vmem:[%s3149] sm:$0xf]
      %v3151 = vld [vmem:[%s3149 + $0x4] sm:$0xf]
      %v3152 = vld [vmem:[%s3149 + $0x8] sm:$0xf]
      %v3153 = vld [vmem:[%s3149 + $0xc] sm:$0xf]
      %v3154 = vld [vmem:[%s3149 + $0x10] sm:$0xf]
      %v3155 = vld [vmem:[%s3149 + $0x14] sm:$0xf]
      %v3156 = vld [vmem:[%s3149 + $0x18] sm:$0xf]
      %v3157 = vld [vmem:[%s3149 + $0x1c] sm:$0xf]
      %s3158 = scalar_lea.vmem %s3, 64
      %v3159 = vld [vmem:[%s3158] sm:$0xf]
      %v3160 = vld [vmem:[%s3158 + $0x4] sm:$0x3]
      %v3169 = vunpack.c.l.b16 %v3150
      %v3170 = vunpack.c.l.b16 %v3151
      %v3171 = vunpack.c.l.b16 %v3152
      %v3172 = vunpack.c.l.b16 %v3153
      %v3173 = vunpack.c.l.b16 %v3154
      %v3174 = vunpack.c.l.b16 %v3155
      %v3175 = vunpack.c.l.b16 %v3156
      %v3176 = vunpack.c.l.b16 %v3157
      %v3177 = vpack.c.b16 %v3170, %v3169
      %v3178 = vpack.c.b16 %v3172, %v3171
      %v3179 = vpack.c.b16 %v3174, %v3173
      %v3180 = vpack.c.b16 %v3176, %v3175
      %v3183 = vunpack.c.l.b16 %v3159
      %v3184 = vunpack.c.l.b16 %v3160
      %v3185 = vpack.c.b16 %v3184, %v3183
      %v3187 = vsel %vm1864, %v3177, 0
      %v3190 = vsel %vm1864, %v3178, 0
      %v3193 = vsel %vm1864, %v3179, 0
      %v3196 = vsel %vm1864, %v3180, 0
      %v3199 = vsel %vm1877, %v3185, 0
      %3201 = vmatprep.subr.bf16.mxu0 0
      %3202 = vmatpush1.bf16.msra.mxu0 0
      %3203 = vmatprep.subr.bf16.mxu0 0
      %3204 = vmatpush1.bf16.msra.mxu0 0
      %3205 = vmatprep.subr.bf16.mxu0 0
      %3206 = vmatpush1.bf16.msra.mxu0 0
      %3207 = vmatprep.subr.bf16.mxu0 0
      %3208 = vmatpush1.bf16.msra.mxu0 0
      %3209 = vmatprep.subr.bf16.mxu0 0
      %3210 = vmatpush1.bf16.msra.mxu0 0
      %3211 = vmatprep.subr.bf16.mxu0 0
      %3212 = vmatpush1.bf16.msra.mxu0 0
      %3213 = vmatprep.subr.bf16.mxu0 0
      %3214 = vmatpush1.bf16.msra.mxu0 0
      %3215 = vmatprep.subr.bf16.mxu0 0
      %3216 = vmatpush1.bf16.msra.mxu0 %v3199
      %3217 = vmatprep.subr.bf16.mxu0 0
      %3218 = vmatpush2.bf16.msra.mxu0 0
      %3219 = vmatprep.subr.bf16.mxu0 0
      %3220 = vmatpush2.bf16.msra.mxu0 0
      %3221 = vmatprep.subr.bf16.mxu0 0
      %3222 = vmatpush2.bf16.msra.mxu0 0
      %3223 = vmatprep.subr.bf16.mxu0 0
      %3224 = vmatpush2.bf16.msra.mxu0 0
      %3225 = vmatprep.subr.bf16.mxu0 0
      %3226 = vmatpush2.bf16.msra.mxu0 0
      %3227 = vmatprep.subr.bf16.mxu0 0
      %3228 = vmatpush2.bf16.msra.mxu0 0
      %3229 = vmatprep.subr.bf16.mxu0 0
      %3230 = vmatpush2.bf16.msra.mxu0 0
      %3231 = vmatprep.subr.bf16.mxu0 0
      %3232 = vmatpush2.bf16.msra.mxu0 0
      %3233 = vmatprep.mubr.bf16.mxu0 0
      %3234 = vmatmul.mubr.bf16.gmra.mxu0 %v3187
      %v3235 = vpop.f32.mrf.mxu0
      %v3236 = vadd.f32 0.0, %v3235
      %v3237 = vpop.f32.mrf.mxu0
      %v3238 = vpop.f32.mrf.mxu0
      %v3239 = vadd.f32 0.0, %v3238
      %v3240 = vpop.f32.mrf.mxu0
      %3241 = vmatprep.mubr.bf16.mxu0 0
      %3242 = vmatmul.mubr.bf16.gmra.mxu0 %v3190
      %v3243 = vpop.f32.mrf.mxu0
      %v3244 = vadd.f32 0.0, %v3243
      %v3245 = vpop.f32.mrf.mxu0
      %v3246 = vpop.f32.mrf.mxu0
      %v3247 = vadd.f32 0.0, %v3246
      %v3248 = vpop.f32.mrf.mxu0
      %3249 = vmatprep.mubr.bf16.mxu0 0
      %3250 = vmatmul.mubr.bf16.gmra.mxu0 %v3193
      %v3251 = vpop.f32.mrf.mxu0
      %v3252 = vadd.f32 0.0, %v3251
      %v3253 = vpop.f32.mrf.mxu0
      %v3254 = vpop.f32.mrf.mxu0
      %v3255 = vadd.f32 0.0, %v3254
      %v3256 = vpop.f32.mrf.mxu0
      %3257 = vmatprep.mubr.bf16.mxu0 0
      %3258 = vmatmul.mubr.bf16.gmra.mxu0 %v3196
      %v3259 = vpop.f32.mrf.mxu0
      %v3260 = vadd.f32 0.0, %v3259
      %v3261 = vpop.f32.mrf.mxu0
      %v3262 = vpop.f32.mrf.mxu0
      %v3263 = vadd.f32 0.0, %v3262
      %v3264 = vpop.f32.mrf.mxu0
      %3265 = vdwg.mxu0
      %v3266 = vadd.f32 %v3068, %v3236
      %v3267 = vadd.f32 %v3069, %v3239
      %v3268 = vadd.f32 %v3070, %v3244
      %v3269 = vadd.f32 %v3071, %v3247
      %v3270 = vadd.f32 %v3072, %v3252
      %v3271 = vadd.f32 %v3073, %v3255
      %v3272 = vadd.f32 %v3074, %v3260
      %v3273 = vadd.f32 %v3075, %v3263
      %3274 = vmatprep.subr.bf16.mxu0 0
      %3275 = vmatpush1.bf16.msra.mxu0 0
      %3276 = vmatprep.subr.bf16.mxu0 0
      %3277 = vmatpush1.bf16.msra.mxu0 0
      %3278 = vmatprep.subr.bf16.mxu0 0
      %3279 = vmatpush1.bf16.msra.mxu0 0
      %3280 = vmatprep.subr.bf16.mxu0 0
      %3281 = vmatpush1.bf16.msra.mxu0 0
      %3282 = vmatprep.subr.bf16.mxu0 0
      %3283 = vmatpush1.bf16.msra.mxu0 0
      %3284 = vmatprep.subr.bf16.mxu0 0
      %3285 = vmatpush1.bf16.msra.mxu0 0
      %3286 = vmatprep.subr.bf16.mxu0 0
      %3287 = vmatpush1.bf16.msra.mxu0 0
      %3288 = vmatprep.subr.bf16.mxu0 0
      %3289 = vmatpush1.bf16.msra.mxu0 %v2605
      %3290 = vmatprep.subr.bf16.mxu0 0
      %3291 = vmatpush2.bf16.msra.mxu0 0
      %3292 = vmatprep.subr.bf16.mxu0 0
      %3293 = vmatpush2.bf16.msra.mxu0 0
      %3294 = vmatprep.subr.bf16.mxu0 0
      %3295 = vmatpush2.bf16.msra.mxu0 0
      %3296 = vmatprep.subr.bf16.mxu0 0
      %3297 = vmatpush2.bf16.msra.mxu0 0
      %3298 = vmatprep.subr.bf16.mxu0 0
      %3299 = vmatpush2.bf16.msra.mxu0 0
      %3300 = vmatprep.subr.bf16.mxu0 0
      %3301 = vmatpush2.bf16.msra.mxu0 0
      %3302 = vmatprep.subr.bf16.mxu0 0
      %3303 = vmatpush2.bf16.msra.mxu0 0
      %3304 = vmatprep.subr.bf16.mxu0 0
      %3305 = vmatpush2.bf16.msra.mxu0 0
      %3306 = vmatprep.mubr.bf16.mxu0 0
      %3307 = vmatmul.mubr.bf16.gmra.mxu0 %v3187
      %v3308 = vpop.f32.mrf.mxu0
      %v3309 = vadd.f32 0.0, %v3308
      %v3310 = vpop.f32.mrf.mxu0
      %v3311 = vpop.f32.mrf.mxu0
      %v3312 = vadd.f32 0.0, %v3311
      %v3313 = vpop.f32.mrf.mxu0
      %3314 = vmatprep.mubr.bf16.mxu0 0
      %3315 = vmatmul.mubr.bf16.gmra.mxu0 %v3190
      %v3316 = vpop.f32.mrf.mxu0
      %v3317 = vadd.f32 0.0, %v3316
      %v3318 = vpop.f32.mrf.mxu0
      %v3319 = vpop.f32.mrf.mxu0
      %v3320 = vadd.f32 0.0, %v3319
      %v3321 = vpop.f32.mrf.mxu0
      %3322 = vmatprep.mubr.bf16.mxu0 0
      %3323 = vmatmul.mubr.bf16.gmra.mxu0 %v3193
      %v3324 = vpop.f32.mrf.mxu0
      %v3325 = vadd.f32 0.0, %v3324
      %v3326 = vpop.f32.mrf.mxu0
      %v3327 = vpop.f32.mrf.mxu0
      %v3328 = vadd.f32 0.0, %v3327
      %v3329 = vpop.f32.mrf.mxu0
      %3330 = vmatprep.mubr.bf16.mxu0 0
      %3331 = vmatmul.mubr.bf16.gmra.mxu0 %v3196
      %v3332 = vpop.f32.mrf.mxu0
      %v3333 = vadd.f32 0.0, %v3332
      %v3334 = vpop.f32.mrf.mxu0
      %v3335 = vpop.f32.mrf.mxu0
      %v3336 = vadd.f32 0.0, %v3335
      %v3337 = vpop.f32.mrf.mxu0
      %3338 = vdwg.mxu0
      %v3339 = vadd.f32 %v3141, %v3309
      %v3340 = vadd.f32 %v3142, %v3312
      %v3341 = vadd.f32 %v3143, %v3317
      %v3342 = vadd.f32 %v3144, %v3320
      %v3343 = vadd.f32 %v3145, %v3325
      %v3344 = vadd.f32 %v3146, %v3328
      %v3345 = vadd.f32 %v3147, %v3333
      %v3346 = vadd.f32 %v3148, %v3336
      %v3347 = vld [vmem:[%s442] sm:$0xf]
      %v3348 = vld [vmem:[%s442 + $0x4] sm:$0xf]
      %v3349 = vld [vmem:[%s442 + $0x8] sm:$0xf]
      %v3350 = vld [vmem:[%s442 + $0xc] sm:$0xf]
      %v3351 = vld [vmem:[%s442 + $0x10] sm:$0xf]
      %v3352 = vld [vmem:[%s442 + $0x14] sm:$0xf]
      %v3353 = vld [vmem:[%s442 + $0x18] sm:$0xf]
      %v3354 = vld [vmem:[%s442 + $0x1c] sm:$0xf]
      %v3363 = vunpack.c.l.b16 %v3347
      %v3364 = vunpack.c.l.b16 %v3348
      %v3365 = vunpack.c.l.b16 %v3349
      %v3366 = vunpack.c.l.b16 %v3350
      %v3367 = vunpack.c.l.b16 %v3351
      %v3368 = vunpack.c.l.b16 %v3352
      %v3369 = vunpack.c.l.b16 %v3353
      %v3370 = vunpack.c.l.b16 %v3354
      %v3371 = vpack.c.b16 %v3364, %v3363
      %v3372 = vpack.c.b16 %v3366, %v3365
      %v3373 = vpack.c.b16 %v3368, %v3367
      %v3374 = vpack.c.b16 %v3370, %v3369
      %v3376 = vsel %vm1864, %v3371, 0
      %v3379 = vsel %vm1864, %v3372, 0
      %v3382 = vsel %vm1864, %v3373, 0
      %v3385 = vsel %vm1864, %v3374, 0
      %3387 = vmatprep.subr.bf16.mxu0 0
      %3388 = vmatpush1.bf16.msra.mxu0 0
      %3389 = vmatprep.subr.bf16.mxu0 0
      %3390 = vmatpush1.bf16.msra.mxu0 0
      %3391 = vmatprep.subr.bf16.mxu0 0
      %3392 = vmatpush1.bf16.msra.mxu0 0
      %3393 = vmatprep.subr.bf16.mxu0 0
      %3394 = vmatpush1.bf16.msra.mxu0 0
      %3395 = vmatprep.subr.bf16.mxu0 0
      %3396 = vmatpush1.bf16.msra.mxu0 0
      %3397 = vmatprep.subr.bf16.mxu0 0
      %3398 = vmatpush1.bf16.msra.mxu0 0
      %3399 = vmatprep.subr.bf16.mxu0 0
      %3400 = vmatpush1.bf16.msra.mxu0 0
      %3401 = vmatprep.subr.bf16.mxu0 0
      %3402 = vmatpush1.bf16.msra.mxu0 %v2803
      %3403 = vmatprep.subr.bf16.mxu0 0
      %3404 = vmatpush2.bf16.msra.mxu0 0
      %3405 = vmatprep.subr.bf16.mxu0 0
      %3406 = vmatpush2.bf16.msra.mxu0 0
      %3407 = vmatprep.subr.bf16.mxu0 0
      %3408 = vmatpush2.bf16.msra.mxu0 0
      %3409 = vmatprep.subr.bf16.mxu0 0
      %3410 = vmatpush2.bf16.msra.mxu0 0
      %3411 = vmatprep.subr.bf16.mxu0 0
      %3412 = vmatpush2.bf16.msra.mxu0 0
      %3413 = vmatprep.subr.bf16.mxu0 0
      %3414 = vmatpush2.bf16.msra.mxu0 0
      %3415 = vmatprep.subr.bf16.mxu0 0
      %3416 = vmatpush2.bf16.msra.mxu0 0
      %3417 = vmatprep.subr.bf16.mxu0 0
      %3418 = vmatpush2.bf16.msra.mxu0 0
      %3419 = vmatprep.mubr.bf16.mxu0 0
      %3420 = vmatmul.mubr.bf16.gmra.mxu0 %v3376
      %v3421 = vpop.f32.mrf.mxu0
      %v3422 = vadd.f32 0.0, %v3421
      %v3423 = vpop.f32.mrf.mxu0
      %v3424 = vpop.f32.mrf.mxu0
      %v3425 = vadd.f32 0.0, %v3424
      %v3426 = vpop.f32.mrf.mxu0
      %3427 = vmatprep.mubr.bf16.mxu0 0
      %3428 = vmatmul.mubr.bf16.gmra.mxu0 %v3379
      %v3429 = vpop.f32.mrf.mxu0
      %v3430 = vadd.f32 0.0, %v3429
      %v3431 = vpop.f32.mrf.mxu0
      %v3432 = vpop.f32.mrf.mxu0
      %v3433 = vadd.f32 0.0, %v3432
      %v3434 = vpop.f32.mrf.mxu0
      %3435 = vmatprep.mubr.bf16.mxu0 0
      %3436 = vmatmul.mubr.bf16.gmra.mxu0 %v3382
      %v3437 = vpop.f32.mrf.mxu0
      %v3438 = vadd.f32 0.0, %v3437
      %v3439 = vpop.f32.mrf.mxu0
      %v3440 = vpop.f32.mrf.mxu0
      %v3441 = vadd.f32 0.0, %v3440
      %v3442 = vpop.f32.mrf.mxu0
      %3443 = vmatprep.mubr.bf16.mxu0 0
      %3444 = vmatmul.mubr.bf16.gmra.mxu0 %v3385
      %v3445 = vpop.f32.mrf.mxu0
      %v3446 = vadd.f32 0.0, %v3445
      %v3447 = vpop.f32.mrf.mxu0
      %v3448 = vpop.f32.mrf.mxu0
      %v3449 = vadd.f32 0.0, %v3448
      %v3450 = vpop.f32.mrf.mxu0
      %3451 = vdwg.mxu0
      %v3452 = vadd.f32 %v3339, %v3422
      %v3453 = vadd.f32 %v3340, %v3425
      %v3454 = vadd.f32 %v3341, %v3430
      %v3455 = vadd.f32 %v3342, %v3433
      %v3456 = vadd.f32 %v3343, %v3438
      %v3457 = vadd.f32 %v3344, %v3441
      %v3458 = vadd.f32 %v3345, %v3446
      %v3459 = vadd.f32 %v3346, %v3449
      %s3460 = scalar_lea.vmem %s442, 4
      %v3461 = vld [vmem:[%s3460] sm:$0xf]
      %v3462 = vld [vmem:[%s3460 + $0x4] sm:$0xf]
      %v3463 = vld [vmem:[%s3460 + $0x8] sm:$0xf]
      %v3464 = vld [vmem:[%s3460 + $0xc] sm:$0xf]
      %v3465 = vld [vmem:[%s3460 + $0x10] sm:$0xf]
      %v3466 = vld [vmem:[%s3460 + $0x14] sm:$0xf]
      %v3467 = vld [vmem:[%s3460 + $0x18] sm:$0xf]
      %v3468 = vld [vmem:[%s3460 + $0x1c] sm:$0xf]
      %v3477 = vunpack.c.l.b16 %v3461
      %v3478 = vunpack.c.l.b16 %v3462
      %v3479 = vunpack.c.l.b16 %v3463
      %v3480 = vunpack.c.l.b16 %v3464
      %v3481 = vunpack.c.l.b16 %v3465
      %v3482 = vunpack.c.l.b16 %v3466
      %v3483 = vunpack.c.l.b16 %v3467
      %v3484 = vunpack.c.l.b16 %v3468
      %v3485 = vpack.c.b16 %v3478, %v3477
      %v3486 = vpack.c.b16 %v3480, %v3479
      %v3487 = vpack.c.b16 %v3482, %v3481
      %v3488 = vpack.c.b16 %v3484, %v3483
      %v3490 = vsel %vm1864, %v3485, 0
      %v3493 = vsel %vm1864, %v3486, 0
      %v3496 = vsel %vm1864, %v3487, 0
      %v3499 = vsel %vm1864, %v3488, 0
      %3501 = vmatprep.subr.bf16.mxu0 0
      %3502 = vmatpush1.bf16.msra.mxu0 0
      %3503 = vmatprep.subr.bf16.mxu0 0
      %3504 = vmatpush1.bf16.msra.mxu0 0
      %3505 = vmatprep.subr.bf16.mxu0 0
      %3506 = vmatpush1.bf16.msra.mxu0 0
      %3507 = vmatprep.subr.bf16.mxu0 0
      %3508 = vmatpush1.bf16.msra.mxu0 0
      %3509 = vmatprep.subr.bf16.mxu0 0
      %3510 = vmatpush1.bf16.msra.mxu0 0
      %3511 = vmatprep.subr.bf16.mxu0 0
      %3512 = vmatpush1.bf16.msra.mxu0 0
      %3513 = vmatprep.subr.bf16.mxu0 0
      %3514 = vmatpush1.bf16.msra.mxu0 0
      %3515 = vmatprep.subr.bf16.mxu0 0
      %3516 = vmatpush1.bf16.msra.mxu0 %v3001
      %3517 = vmatprep.subr.bf16.mxu0 0
      %3518 = vmatpush2.bf16.msra.mxu0 0
      %3519 = vmatprep.subr.bf16.mxu0 0
      %3520 = vmatpush2.bf16.msra.mxu0 0
      %3521 = vmatprep.subr.bf16.mxu0 0
      %3522 = vmatpush2.bf16.msra.mxu0 0
      %3523 = vmatprep.subr.bf16.mxu0 0
      %3524 = vmatpush2.bf16.msra.mxu0 0
      %3525 = vmatprep.subr.bf16.mxu0 0
      %3526 = vmatpush2.bf16.msra.mxu0 0
      %3527 = vmatprep.subr.bf16.mxu0 0
      %3528 = vmatpush2.bf16.msra.mxu0 0
      %3529 = vmatprep.subr.bf16.mxu0 0
      %3530 = vmatpush2.bf16.msra.mxu0 0
      %3531 = vmatprep.subr.bf16.mxu0 0
      %3532 = vmatpush2.bf16.msra.mxu0 0
      %3533 = vmatprep.mubr.bf16.mxu0 0
      %3534 = vmatmul.mubr.bf16.gmra.mxu0 %v3490
      %v3535 = vpop.f32.mrf.mxu0
      %v3536 = vadd.f32 0.0, %v3535
      %v3537 = vpop.f32.mrf.mxu0
      %v3538 = vpop.f32.mrf.mxu0
      %v3539 = vadd.f32 0.0, %v3538
      %v3540 = vpop.f32.mrf.mxu0
      %3541 = vmatprep.mubr.bf16.mxu0 0
      %3542 = vmatmul.mubr.bf16.gmra.mxu0 %v3493
      %v3543 = vpop.f32.mrf.mxu0
      %v3544 = vadd.f32 0.0, %v3543
      %v3545 = vpop.f32.mrf.mxu0
      %v3546 = vpop.f32.mrf.mxu0
      %v3547 = vadd.f32 0.0, %v3546
      %v3548 = vpop.f32.mrf.mxu0
      %3549 = vmatprep.mubr.bf16.mxu0 0
      %3550 = vmatmul.mubr.bf16.gmra.mxu0 %v3496
      %v3551 = vpop.f32.mrf.mxu0
      %v3552 = vadd.f32 0.0, %v3551
      %v3553 = vpop.f32.mrf.mxu0
      %v3554 = vpop.f32.mrf.mxu0
      %v3555 = vadd.f32 0.0, %v3554
      %v3556 = vpop.f32.mrf.mxu0
      %3557 = vmatprep.mubr.bf16.mxu0 0
      %3558 = vmatmul.mubr.bf16.gmra.mxu0 %v3499
      %v3559 = vpop.f32.mrf.mxu0
      %v3560 = vadd.f32 0.0, %v3559
      %v3561 = vpop.f32.mrf.mxu0
      %v3562 = vpop.f32.mrf.mxu0
      %v3563 = vadd.f32 0.0, %v3562
      %v3564 = vpop.f32.mrf.mxu0
      %3565 = vdwg.mxu0
      %v3566 = vadd.f32 %v3452, %v3536
      %v3567 = vadd.f32 %v3453, %v3539
      %v3568 = vadd.f32 %v3454, %v3544
      %v3569 = vadd.f32 %v3455, %v3547
      %v3570 = vadd.f32 %v3456, %v3552
      %v3571 = vadd.f32 %v3457, %v3555
      %v3572 = vadd.f32 %v3458, %v3560
      %v3573 = vadd.f32 %v3459, %v3563
      %s3574 = scalar_lea.vmem %s442, 8
      %v3575 = vld [vmem:[%s3574] sm:$0xf]
      %v3576 = vld [vmem:[%s3574 + $0x4] sm:$0xf]
      %v3577 = vld [vmem:[%s3574 + $0x8] sm:$0xf]
      %v3578 = vld [vmem:[%s3574 + $0xc] sm:$0xf]
      %v3579 = vld [vmem:[%s3574 + $0x10] sm:$0xf]
      %v3580 = vld [vmem:[%s3574 + $0x14] sm:$0xf]
      %v3581 = vld [vmem:[%s3574 + $0x18] sm:$0xf]
      %v3582 = vld [vmem:[%s3574 + $0x1c] sm:$0xf]
      %v3591 = vunpack.c.l.b16 %v3575
      %v3592 = vunpack.c.l.b16 %v3576
      %v3593 = vunpack.c.l.b16 %v3577
      %v3594 = vunpack.c.l.b16 %v3578
      %v3595 = vunpack.c.l.b16 %v3579
      %v3596 = vunpack.c.l.b16 %v3580
      %v3597 = vunpack.c.l.b16 %v3581
      %v3598 = vunpack.c.l.b16 %v3582
      %v3599 = vpack.c.b16 %v3592, %v3591
      %v3600 = vpack.c.b16 %v3594, %v3593
      %v3601 = vpack.c.b16 %v3596, %v3595
      %v3602 = vpack.c.b16 %v3598, %v3597
      %v3604 = vsel %vm1864, %v3599, 0
      %v3607 = vsel %vm1864, %v3600, 0
      %v3610 = vsel %vm1864, %v3601, 0
      %v3613 = vsel %vm1864, %v3602, 0
      %3615 = vmatprep.subr.bf16.mxu0 0
      %3616 = vmatpush1.bf16.msra.mxu0 0
      %3617 = vmatprep.subr.bf16.mxu0 0
      %3618 = vmatpush1.bf16.msra.mxu0 0
      %3619 = vmatprep.subr.bf16.mxu0 0
      %3620 = vmatpush1.bf16.msra.mxu0 0
      %3621 = vmatprep.subr.bf16.mxu0 0
      %3622 = vmatpush1.bf16.msra.mxu0 0
      %3623 = vmatprep.subr.bf16.mxu0 0
      %3624 = vmatpush1.bf16.msra.mxu0 0
      %3625 = vmatprep.subr.bf16.mxu0 0
      %3626 = vmatpush1.bf16.msra.mxu0 0
      %3627 = vmatprep.subr.bf16.mxu0 0
      %3628 = vmatpush1.bf16.msra.mxu0 0
      %3629 = vmatprep.subr.bf16.mxu0 0
      %3630 = vmatpush1.bf16.msra.mxu0 %v3199
      %3631 = vmatprep.subr.bf16.mxu0 0
      %3632 = vmatpush2.bf16.msra.mxu0 0
      %3633 = vmatprep.subr.bf16.mxu0 0
      %3634 = vmatpush2.bf16.msra.mxu0 0
      %3635 = vmatprep.subr.bf16.mxu0 0
      %3636 = vmatpush2.bf16.msra.mxu0 0
      %3637 = vmatprep.subr.bf16.mxu0 0
      %3638 = vmatpush2.bf16.msra.mxu0 0
      %3639 = vmatprep.subr.bf16.mxu0 0
      %3640 = vmatpush2.bf16.msra.mxu0 0
      %3641 = vmatprep.subr.bf16.mxu0 0
      %3642 = vmatpush2.bf16.msra.mxu0 0
      %3643 = vmatprep.subr.bf16.mxu0 0
      %3644 = vmatpush2.bf16.msra.mxu0 0
      %3645 = vmatprep.subr.bf16.mxu0 0
      %3646 = vmatpush2.bf16.msra.mxu0 0
      %3647 = vmatprep.mubr.bf16.mxu0 0
      %3648 = vmatmul.mubr.bf16.gmra.mxu0 %v3604
      %v3649 = vpop.f32.mrf.mxu0
      %v3650 = vadd.f32 0.0, %v3649
      %v3651 = vpop.f32.mrf.mxu0
      %v3652 = vpop.f32.mrf.mxu0
      %v3653 = vadd.f32 0.0, %v3652
      %v3654 = vpop.f32.mrf.mxu0
      %3655 = vmatprep.mubr.bf16.mxu0 0
      %3656 = vmatmul.mubr.bf16.gmra.mxu0 %v3607
      %v3657 = vpop.f32.mrf.mxu0
      %v3658 = vadd.f32 0.0, %v3657
      %v3659 = vpop.f32.mrf.mxu0
      %v3660 = vpop.f32.mrf.mxu0
      %v3661 = vadd.f32 0.0, %v3660
      %v3662 = vpop.f32.mrf.mxu0
      %3663 = vmatprep.mubr.bf16.mxu0 0
      %3664 = vmatmul.mubr.bf16.gmra.mxu0 %v3610
      %v3665 = vpop.f32.mrf.mxu0
      %v3666 = vadd.f32 0.0, %v3665
      %v3667 = vpop.f32.mrf.mxu0
      %v3668 = vpop.f32.mrf.mxu0
      %v3669 = vadd.f32 0.0, %v3668
      %v3670 = vpop.f32.mrf.mxu0
      %3671 = vmatprep.mubr.bf16.mxu0 0
      %3672 = vmatmul.mubr.bf16.gmra.mxu0 %v3613
      %v3673 = vpop.f32.mrf.mxu0
      %v3674 = vadd.f32 0.0, %v3673
      %v3675 = vpop.f32.mrf.mxu0
      %v3676 = vpop.f32.mrf.mxu0
      %v3677 = vadd.f32 0.0, %v3676
      %v3678 = vpop.f32.mrf.mxu0
      %3679 = vdwg.mxu0
      %v3680 = vadd.f32 %v3566, %v3650
      %v3681 = vadd.f32 %v3567, %v3653
      %v3682 = vadd.f32 %v3568, %v3658
      %v3683 = vadd.f32 %v3569, %v3661
      %v3684 = vadd.f32 %v3570, %v3666
      %v3685 = vadd.f32 %v3571, %v3669
      %v3686 = vadd.f32 %v3572, %v3674
      %v3687 = vadd.f32 %v3573, %v3677
      %v3689 = vlaneseq
      %v3690 = vshrl.u32 %v3689, 7
      %v3691 = vsub.s32 0, %v3690
      %v3692 = vrot.slane %v466, %v3691
      %v3694 = vadd.f32 %v3266, %v3692
      %v3695 = vadd.f32 %v3267, %v3692
      %v3696 = vadd.f32 %v3268, %v3692
      %v3697 = vadd.f32 %v3269, %v3692
      %v3698 = vadd.f32 %v3270, %v3692
      %v3699 = vadd.f32 %v3271, %v3692
      %v3700 = vadd.f32 %v3272, %v3692
      %v3701 = vadd.f32 %v3273, %v3692
      %v3702 = vmax.f32 %v3694, 0.0
      %v3703 = vmax.f32 %v3695, 0.0
      %v3704 = vmax.f32 %v3696, 0.0
      %v3705 = vmax.f32 %v3697, 0.0
      %v3706 = vmax.f32 %v3698, 0.0
      %v3707 = vmax.f32 %v3699, 0.0
      %v3708 = vmax.f32 %v3700, 0.0
      %v3709 = vmax.f32 %v3701, 0.0
      %v3710 = vadd.f32 %v3680, %v3692
      %v3711 = vadd.f32 %v3681, %v3692
      %v3712 = vadd.f32 %v3682, %v3692
      %v3713 = vadd.f32 %v3683, %v3692
      %v3714 = vadd.f32 %v3684, %v3692
      %v3715 = vadd.f32 %v3685, %v3692
      %v3716 = vadd.f32 %v3686, %v3692
      %v3717 = vadd.f32 %v3687, %v3692
      %v3718 = vmax.f32 %v3710, 0.0
      %v3719 = vmax.f32 %v3711, 0.0
      %v3720 = vmax.f32 %v3712, 0.0
      %v3721 = vmax.f32 %v3713, 0.0
      %v3722 = vmax.f32 %v3714, 0.0
      %v3723 = vmax.f32 %v3715, 0.0
      %v3724 = vmax.f32 %v3716, 0.0
      %v3725 = vmax.f32 %v3717, 0.0
      %p3726 = scmp.lt.s32.totalorder %s25, 3
      %s3727 = scalar_select %p3726, 1, 0
      %s3728 = scvt.s32.f32 %s3727
      %v3729 = vstv %s3728
      %v3730 = vmul.f32 %v3718, %v3729
      %v3731 = vmul.f32 %v3719, %v3729
      %v3732 = vmul.f32 %v3720, %v3729
      %v3733 = vmul.f32 %v3721, %v3729
      %v3734 = vmul.f32 %v3722, %v3729
      %v3735 = vmul.f32 %v3723, %v3729
      %v3736 = vmul.f32 %v3724, %v3729
      %v3737 = vmul.f32 %v3725, %v3729
      %v3738 = vpack.c.bf16 %v3703, %v3702
      %v3739 = vpack.c.bf16 %v3705, %v3704
      %v3740 = vpack.c.bf16 %v3707, %v3706
      %v3741 = vpack.c.bf16 %v3709, %v3708
      %v3746 = vunpack.c.l.b16 %v3738
      %v3747 = vunpack.c.h.b16 %v3738
      %v3748 = vunpack.c.l.b16 %v3739
      %v3749 = vunpack.c.h.b16 %v3739
      %v3750 = vunpack.c.l.b16 %v3740
      %v3751 = vunpack.c.h.b16 %v3740
      %v3752 = vunpack.c.l.b16 %v3741
      %v3753 = vunpack.c.h.b16 %v3741
      %v3754 = vpack.c.b16 %v3746, %v3746
      %v3755 = vpack.c.b16 %v3747, %v3747
      %v3756 = vpack.c.b16 %v3748, %v3748
      %v3757 = vpack.c.b16 %v3749, %v3749
      %v3758 = vpack.c.b16 %v3750, %v3750
      %v3759 = vpack.c.b16 %v3751, %v3751
      %v3760 = vpack.c.b16 %v3752, %v3752
      %v3761 = vpack.c.b16 %v3753, %v3753
      %v3763 = vshrl.u32 %v3754, 16
      %v3765 = vrot.slane %v3763, 7
      %v3766 = vshll.u32 %v3754, 16
      %v3768 = vor.u32 %v3765, %v3766
      %v3770 = vshrl.u32 %v3755, 16
      %v3772 = vrot.slane %v3770, 7
      %v3773 = vshll.u32 %v3755, 16
      %v3775 = vor.u32 %v3772, %v3773
      %v3777 = vshrl.u32 %v3756, 16
      %v3779 = vrot.slane %v3777, 7
      %v3780 = vshll.u32 %v3756, 16
      %v3782 = vor.u32 %v3779, %v3780
      %v3784 = vshrl.u32 %v3757, 16
      %v3786 = vrot.slane %v3784, 7
      %v3787 = vshll.u32 %v3757, 16
      %v3789 = vor.u32 %v3786, %v3787
      %v3791 = vshrl.u32 %v3758, 16
      %v3793 = vrot.slane %v3791, 7
      %v3794 = vshll.u32 %v3758, 16
      %v3796 = vor.u32 %v3793, %v3794
      %v3798 = vshrl.u32 %v3759, 16
      %v3800 = vrot.slane %v3798, 7
      %v3801 = vshll.u32 %v3759, 16
      %v3803 = vor.u32 %v3800, %v3801
      %v3805 = vshrl.u32 %v3760, 16
      %v3807 = vrot.slane %v3805, 7
      %v3808 = vshll.u32 %v3760, 16
      %v3810 = vor.u32 %v3807, %v3808
      %v3812 = vshrl.u32 %v3761, 16
      %v3814 = vrot.slane %v3812, 7
      %v3815 = vshll.u32 %v3761, 16
      %v3817 = vor.u32 %v3814, %v3815
      %vm3826 = vcmask 1040384
      %vm3827 = vsmask.f32 256
      %vm3828 = vmand %vm3826, %vm3827
      %v3829 = vsel %vm3828, 0, %v3768
      %v3830 = vsel %vm3828, 0, %v3775
      %v3831 = vsel %vm3828, 0, %v3782
      %v3832 = vsel %vm3828, 0, %v3789
      %v3833 = vsel %vm3828, 0, %v3796
      %v3834 = vsel %vm3828, 0, %v3803
      %v3835 = vsel %vm3828, 0, %v3810
      %v3836 = vsel %vm3828, 0, %v3817
      %vm3837 = vcmask 1044480
      %vm3838 = vsmask.f32 4352
      %vm3839 = vmand %vm3837, %vm3838
      %v3840 = vsel %vm3839, %v3829, 0
      %v3841 = vsel %vm3839, %v3830, 0
      %v3842 = vsel %vm3839, %v3831, 0
      %v3843 = vsel %vm3839, %v3832, 0
      %v3844 = vsel %vm3839, %v3833, 0
      %v3845 = vsel %vm3839, %v3834, 0
      %v3846 = vsel %vm3839, %v3835, 0
      %v3847 = vsel %vm3839, %v3836, 0
      %v3848 = vpack.c.bf16 %v3731, %v3730
      %v3849 = vpack.c.bf16 %v3733, %v3732
      %v3850 = vpack.c.bf16 %v3735, %v3734
      %v3851 = vpack.c.bf16 %v3737, %v3736
      %v3856 = vunpack.c.l.b16 %v3848
      %v3857 = vunpack.c.h.b16 %v3848
      %v3858 = vunpack.c.l.b16 %v3849
      %v3859 = vunpack.c.h.b16 %v3849
      %v3860 = vunpack.c.l.b16 %v3850
      %v3861 = vunpack.c.h.b16 %v3850
      %v3862 = vunpack.c.l.b16 %v3851
      %v3863 = vunpack.c.h.b16 %v3851
      %v3864 = vpack.c.b16 %v3856, %v3856
      %v3865 = vpack.c.b16 %v3857, %v3857
      %v3866 = vpack.c.b16 %v3858, %v3858
      %v3867 = vpack.c.b16 %v3859, %v3859
      %v3868 = vpack.c.b16 %v3860, %v3860
      %v3869 = vpack.c.b16 %v3861, %v3861
      %v3870 = vpack.c.b16 %v3862, %v3862
      %v3871 = vpack.c.b16 %v3863, %v3863
      %v3873 = vshrl.u32 %v3864, 16
      %v3875 = vrot.slane %v3873, 7
      %v3876 = vshll.u32 %v3864, 16
      %v3878 = vor.u32 %v3875, %v3876
      %v3880 = vshrl.u32 %v3865, 16
      %v3882 = vrot.slane %v3880, 7
      %v3883 = vshll.u32 %v3865, 16
      %v3885 = vor.u32 %v3882, %v3883
      %v3887 = vshrl.u32 %v3866, 16
      %v3889 = vrot.slane %v3887, 7
      %v3890 = vshll.u32 %v3866, 16
      %v3892 = vor.u32 %v3889, %v3890
      %v3894 = vshrl.u32 %v3867, 16
      %v3896 = vrot.slane %v3894, 7
      %v3897 = vshll.u32 %v3867, 16
      %v3899 = vor.u32 %v3896, %v3897
      %v3901 = vshrl.u32 %v3868, 16
      %v3903 = vrot.slane %v3901, 7
      %v3904 = vshll.u32 %v3868, 16
      %v3906 = vor.u32 %v3903, %v3904
      %v3908 = vshrl.u32 %v3869, 16
      %v3910 = vrot.slane %v3908, 7
      %v3911 = vshll.u32 %v3869, 16
      %v3913 = vor.u32 %v3910, %v3911
      %v3915 = vshrl.u32 %v3870, 16
      %v3917 = vrot.slane %v3915, 7
      %v3918 = vshll.u32 %v3870, 16
      %v3920 = vor.u32 %v3917, %v3918
      %v3922 = vshrl.u32 %v3871, 16
      %v3924 = vrot.slane %v3922, 7
      %v3925 = vshll.u32 %v3871, 16
      %v3927 = vor.u32 %v3924, %v3925
      %v3936 = vsel %vm3828, 0, %v3878
      %v3937 = vsel %vm3828, 0, %v3885
      %v3938 = vsel %vm3828, 0, %v3892
      %v3939 = vsel %vm3828, 0, %v3899
      %v3940 = vsel %vm3828, 0, %v3906
      %v3941 = vsel %vm3828, 0, %v3913
      %v3942 = vsel %vm3828, 0, %v3920
      %v3943 = vsel %vm3828, 0, %v3927
      %v3944 = vsel %vm3839, %v3936, 0
      %v3945 = vsel %vm3839, %v3937, 0
      %v3946 = vsel %vm3839, %v3938, 0
      %v3947 = vsel %vm3839, %v3939, 0
      %v3948 = vsel %vm3839, %v3940, 0
      %v3949 = vsel %vm3839, %v3941, 0
      %v3950 = vsel %vm3839, %v3942, 0
      %v3951 = vsel %vm3839, %v3943, 0
      %p3952 = scmp.lt.s32.totalorder %s25, 0
      %s3953 = ssub.s32 0, %s25
      %s3954 = scalar_select %p3952, %s3953, %s25
      %s3955 = sand.u32 %s3954, 1
      %s3956 = ssub.s32 0, %s3955
      %s3957 = scalar_select %p3952, %s3956, %s3955
      %p3958 = scmp.ne.s32.totalorder %s3957, 0
      %p3959 = scmp.lt.s32.totalorder %s3957, 0
      %p3960 = pnand %p3959, %p3958
      %p3961 = pneg %p3960
      %s3962 = sadd.s32 %s3957, 2
      %s3963 = scalar_select %p3961, %s3962, %s3957
      %p3964 = scmp.eq.s32.totalorder %s3963, 0
      // Predicated region
      $region53: #{downconv_forward.1} parent=47 // pred_check
        %p3965 = pneg %p3964
      $region54: #{downconv_forward.1} parent=47 // pred_check_branch
        %3967 = sbr.rel (%p3965) target = $region56
      $region55: #{downconv_forward.1} parent=47 // pred_region
        %v3977 = vunpack.c.l.b16 0
        %v3978 = vunpack.c.h.b16 0
        %v3979 = vunpack.c.l.b16 %v3840
        %v3980 = vunpack.c.h.b16 %v3840
        %v3981 = vunpack.c.l.b16 %v3841
        %v3982 = vunpack.c.h.b16 %v3841
        %v3983 = vunpack.c.l.b16 %v3842
        %v3984 = vunpack.c.h.b16 %v3842
        %v3985 = vunpack.c.l.b16 %v3843
        %v3986 = vunpack.c.h.b16 %v3843
        %v3987 = vunpack.c.l.b16 %v3844
        %v3988 = vunpack.c.h.b16 %v3844
        %v3989 = vunpack.c.l.b16 %v3845
        %v3990 = vunpack.c.h.b16 %v3845
        %v3991 = vunpack.c.l.b16 %v3846
        %v3992 = vunpack.c.h.b16 %v3846
        %v3993 = vunpack.c.l.b16 %v3847
        %v3994 = vunpack.c.h.b16 %v3847
        %v3995 = vpack.c.b16 %v3977, %v3977
        %v3996 = vpack.c.b16 %v3978, %v3978
        %v3997 = vpack.c.b16 %v3979, %v3979
        %v3998 = vpack.c.b16 %v3980, %v3980
        %v3999 = vpack.c.b16 %v3981, %v3981
        %v4000 = vpack.c.b16 %v3982, %v3982
        %v4001 = vpack.c.b16 %v3983, %v3983
        %v4002 = vpack.c.b16 %v3984, %v3984
        %v4003 = vpack.c.b16 %v3985, %v3985
        %v4004 = vpack.c.b16 %v3986, %v3986
        %v4005 = vpack.c.b16 %v3987, %v3987
        %v4006 = vpack.c.b16 %v3988, %v3988
        %v4007 = vpack.c.b16 %v3989, %v3989
        %v4008 = vpack.c.b16 %v3990, %v3990
        %v4009 = vpack.c.b16 %v3991, %v3991
        %v4010 = vpack.c.b16 %v3992, %v3992
        %v4011 = vpack.c.b16 %v3993, %v3993
        %v4012 = vpack.c.b16 %v3994, %v3994
        %s4031 = scalar_lea.vmem [#allocation2], 160
        %4032 = vst [vmem:[%s4031] sm:$0xf] %v3995
        %4033 = vst [vmem:[%s4031 + $0x4] sm:$0x1] %v3996
        %4034 = vst [vmem:[%s4031 + $0x8] sm:$0xf] %v3997
        %4035 = vst [vmem:[%s4031 + $0xc] sm:$0x1] %v3998
        %4036 = vst [vmem:[%s4031 + $0x10] sm:$0xf] %v3999
        %4037 = vst [vmem:[%s4031 + $0x14] sm:$0x1] %v4000
        %4038 = vst [vmem:[%s4031 + $0x18] sm:$0xf] %v4001
        %4039 = vst [vmem:[%s4031 + $0x1c] sm:$0x1] %v4002
        %4040 = vst [vmem:[%s4031 + $0x20] sm:$0xf] %v4003
        %4041 = vst [vmem:[%s4031 + $0x24] sm:$0x1] %v4004
        %4042 = vst [vmem:[%s4031 + $0x28] sm:$0xf] %v4005
        %4043 = vst [vmem:[%s4031 + $0x2c] sm:$0x1] %v4006
        %4044 = vst [vmem:[%s4031 + $0x30] sm:$0xf] %v4007
        %4045 = vst [vmem:[%s4031 + $0x34] sm:$0x1] %v4008
        %4046 = vst [vmem:[%s4031 + $0x38] sm:$0xf] %v4009
        %4047 = vst [vmem:[%s4031 + $0x3c] sm:$0x1] %v4010
        %4048 = vst [vmem:[%s4031 + $0x40] sm:$0xf] %v4011
        %4049 = vst [vmem:[%s4031 + $0x44] sm:$0x1] %v4012
        %4050 = vst [vmem:[%s4031 + $0x48] sm:$0xf] %v3995
        %4051 = vst [vmem:[%s4031 + $0x4c] sm:$0x1] %v3996
        %v4060 = vunpack.c.l.b16 %v3944
        %v4061 = vunpack.c.h.b16 %v3944
        %v4062 = vunpack.c.l.b16 %v3945
        %v4063 = vunpack.c.h.b16 %v3945
        %v4064 = vunpack.c.l.b16 %v3946
        %v4065 = vunpack.c.h.b16 %v3946
        %v4066 = vunpack.c.l.b16 %v3947
        %v4067 = vunpack.c.h.b16 %v3947
        %v4068 = vunpack.c.l.b16 %v3948
        %v4069 = vunpack.c.h.b16 %v3948
        %v4070 = vunpack.c.l.b16 %v3949
        %v4071 = vunpack.c.h.b16 %v3949
        %v4072 = vunpack.c.l.b16 %v3950
        %v4073 = vunpack.c.h.b16 %v3950
        %v4074 = vunpack.c.l.b16 %v3951
        %v4075 = vunpack.c.h.b16 %v3951
        %v4076 = vpack.c.b16 %v4060, %v4060
        %v4077 = vpack.c.b16 %v4061, %v4061
        %v4078 = vpack.c.b16 %v4062, %v4062
        %v4079 = vpack.c.b16 %v4063, %v4063
        %v4080 = vpack.c.b16 %v4064, %v4064
        %v4081 = vpack.c.b16 %v4065, %v4065
        %v4082 = vpack.c.b16 %v4066, %v4066
        %v4083 = vpack.c.b16 %v4067, %v4067
        %v4084 = vpack.c.b16 %v4068, %v4068
        %v4085 = vpack.c.b16 %v4069, %v4069
        %v4086 = vpack.c.b16 %v4070, %v4070
        %v4087 = vpack.c.b16 %v4071, %v4071
        %v4088 = vpack.c.b16 %v4072, %v4072
        %v4089 = vpack.c.b16 %v4073, %v4073
        %v4090 = vpack.c.b16 %v4074, %v4074
        %v4091 = vpack.c.b16 %v4075, %v4075
        %s4108 = scalar_lea.vmem [#allocation2], 240
        %4109 = vst [vmem:[%s4108] sm:$0xf] %v3995
        %4110 = vst [vmem:[%s4108 + $0x4] sm:$0x1] %v3996
        %4111 = vst [vmem:[%s4108 + $0x8] sm:$0xf] %v4076
        %4112 = vst [vmem:[%s4108 + $0xc] sm:$0x1] %v4077
        %4113 = vst [vmem:[%s4108 + $0x10] sm:$0xf] %v4078
        %4114 = vst [vmem:[%s4108 + $0x14] sm:$0x1] %v4079
        %4115 = vst [vmem:[%s4108 + $0x18] sm:$0xf] %v4080
        %4116 = vst [vmem:[%s4108 + $0x1c] sm:$0x1] %v4081
        %4117 = vst [vmem:[%s4108 + $0x20] sm:$0xf] %v4082
        %4118 = vst [vmem:[%s4108 + $0x24] sm:$0x1] %v4083
        %4119 = vst [vmem:[%s4108 + $0x28] sm:$0xf] %v4084
        %4120 = vst [vmem:[%s4108 + $0x2c] sm:$0x1] %v4085
        %4121 = vst [vmem:[%s4108 + $0x30] sm:$0xf] %v4086
        %4122 = vst [vmem:[%s4108 + $0x34] sm:$0x1] %v4087
        %4123 = vst [vmem:[%s4108 + $0x38] sm:$0xf] %v4088
        %4124 = vst [vmem:[%s4108 + $0x3c] sm:$0x1] %v4089
        %4125 = vst [vmem:[%s4108 + $0x40] sm:$0xf] %v4090
        %4126 = vst [vmem:[%s4108 + $0x44] sm:$0x1] %v4091
        %4127 = vst [vmem:[%s4108 + $0x48] sm:$0xf] %v3995
        %4128 = vst [vmem:[%s4108 + $0x4c] sm:$0x1] %v3996
      $region56: #{downconv_forward.1} parent=47 // pred_fallthru
        _
      %p4129 = scmp.eq.s32.totalorder %s3963, 1
      // Predicated region
      $region57: #{downconv_forward.1} parent=47 // pred_check
        %p4130 = pneg %p4129
      $region58: #{downconv_forward.1} parent=47 // pred_check_branch
        %4132 = sbr.rel (%p4130) target = $region60
      $region59: #{downconv_forward.1} parent=47 // pred_region
        %v4142 = vunpack.c.l.b16 0
        %v4143 = vunpack.c.h.b16 0
        %v4144 = vunpack.c.l.b16 %v3840
        %v4145 = vunpack.c.h.b16 %v3840
        %v4146 = vunpack.c.l.b16 %v3841
        %v4147 = vunpack.c.h.b16 %v3841
        %v4148 = vunpack.c.l.b16 %v3842
        %v4149 = vunpack.c.h.b16 %v3842
        %v4150 = vunpack.c.l.b16 %v3843
        %v4151 = vunpack.c.h.b16 %v3843
        %v4152 = vunpack.c.l.b16 %v3844
        %v4153 = vunpack.c.h.b16 %v3844
        %v4154 = vunpack.c.l.b16 %v3845
        %v4155 = vunpack.c.h.b16 %v3845
        %v4156 = vunpack.c.l.b16 %v3846
        %v4157 = vunpack.c.h.b16 %v3846
        %v4158 = vunpack.c.l.b16 %v3847
        %v4159 = vunpack.c.h.b16 %v3847
        %v4160 = vpack.c.b16 %v4142, %v4142
        %v4161 = vpack.c.b16 %v4143, %v4143
        %v4162 = vpack.c.b16 %v4144, %v4144
        %v4163 = vpack.c.b16 %v4145, %v4145
        %v4164 = vpack.c.b16 %v4146, %v4146
        %v4165 = vpack.c.b16 %v4147, %v4147
        %v4166 = vpack.c.b16 %v4148, %v4148
        %v4167 = vpack.c.b16 %v4149, %v4149
        %v4168 = vpack.c.b16 %v4150, %v4150
        %v4169 = vpack.c.b16 %v4151, %v4151
        %v4170 = vpack.c.b16 %v4152, %v4152
        %v4171 = vpack.c.b16 %v4153, %v4153
        %v4172 = vpack.c.b16 %v4154, %v4154
        %v4173 = vpack.c.b16 %v4155, %v4155
        %v4174 = vpack.c.b16 %v4156, %v4156
        %v4175 = vpack.c.b16 %v4157, %v4157
        %v4176 = vpack.c.b16 %v4158, %v4158
        %v4177 = vpack.c.b16 %v4159, %v4159
        %4196 = vst [vmem:[#allocation2] sm:$0xf] %v4160
        %4197 = vst [vmem:[#allocation2 + $0x4] sm:$0x1] %v4161
        %4198 = vst [vmem:[#allocation2 + $0x8] sm:$0xf] %v4162
        %4199 = vst [vmem:[#allocation2 + $0xc] sm:$0x1] %v4163
        %4200 = vst [vmem:[#allocation2 + $0x10] sm:$0xf] %v4164
        %4201 = vst [vmem:[#allocation2 + $0x14] sm:$0x1] %v4165
        %4202 = vst [vmem:[#allocation2 + $0x18] sm:$0xf] %v4166
        %4203 = vst [vmem:[#allocation2 + $0x1c] sm:$0x1] %v4167
        %4204 = vst [vmem:[#allocation2 + $0x20] sm:$0xf] %v4168
        %4205 = vst [vmem:[#allocation2 + $0x24] sm:$0x1] %v4169
        %4206 = vst [vmem:[#allocation2 + $0x28] sm:$0xf] %v4170
        %4207 = vst [vmem:[#allocation2 + $0x2c] sm:$0x1] %v4171
        %4208 = vst [vmem:[#allocation2 + $0x30] sm:$0xf] %v4172
        %4209 = vst [vmem:[#allocation2 + $0x34] sm:$0x1] %v4173
        %4210 = vst [vmem:[#allocation2 + $0x38] sm:$0xf] %v4174
        %4211 = vst [vmem:[#allocation2 + $0x3c] sm:$0x1] %v4175
        %4212 = vst [vmem:[#allocation2 + $0x40] sm:$0xf] %v4176
        %4213 = vst [vmem:[#allocation2 + $0x44] sm:$0x1] %v4177
        %4214 = vst [vmem:[#allocation2 + $0x48] sm:$0xf] %v4160
        %4215 = vst [vmem:[#allocation2 + $0x4c] sm:$0x1] %v4161
        %v4224 = vunpack.c.l.b16 %v3944
        %v4225 = vunpack.c.h.b16 %v3944
        %v4226 = vunpack.c.l.b16 %v3945
        %v4227 = vunpack.c.h.b16 %v3945
        %v4228 = vunpack.c.l.b16 %v3946
        %v4229 = vunpack.c.h.b16 %v3946
        %v4230 = vunpack.c.l.b16 %v3947
        %v4231 = vunpack.c.h.b16 %v3947
        %v4232 = vunpack.c.l.b16 %v3948
        %v4233 = vunpack.c.h.b16 %v3948
        %v4234 = vunpack.c.l.b16 %v3949
        %v4235 = vunpack.c.h.b16 %v3949
        %v4236 = vunpack.c.l.b16 %v3950
        %v4237 = vunpack.c.h.b16 %v3950
        %v4238 = vunpack.c.l.b16 %v3951
        %v4239 = vunpack.c.h.b16 %v3951
        %v4240 = vpack.c.b16 %v4224, %v4224
        %v4241 = vpack.c.b16 %v4225, %v4225
        %v4242 = vpack.c.b16 %v4226, %v4226
        %v4243 = vpack.c.b16 %v4227, %v4227
        %v4244 = vpack.c.b16 %v4228, %v4228
        %v4245 = vpack.c.b16 %v4229, %v4229
        %v4246 = vpack.c.b16 %v4230, %v4230
        %v4247 = vpack.c.b16 %v4231, %v4231
        %v4248 = vpack.c.b16 %v4232, %v4232
        %v4249 = vpack.c.b16 %v4233, %v4233
        %v4250 = vpack.c.b16 %v4234, %v4234
        %v4251 = vpack.c.b16 %v4235, %v4235
        %v4252 = vpack.c.b16 %v4236, %v4236
        %v4253 = vpack.c.b16 %v4237, %v4237
        %v4254 = vpack.c.b16 %v4238, %v4238
        %v4255 = vpack.c.b16 %v4239, %v4239
        %s4272 = scalar_lea.vmem [#allocation2], 80
        %4273 = vst [vmem:[%s4272] sm:$0xf] %v4160
        %4274 = vst [vmem:[%s4272 + $0x4] sm:$0x1] %v4161
        %4275 = vst [vmem:[%s4272 + $0x8] sm:$0xf] %v4240
        %4276 = vst [vmem:[%s4272 + $0xc] sm:$0x1] %v4241
        %4277 = vst [vmem:[%s4272 + $0x10] sm:$0xf] %v4242
        %4278 = vst [vmem:[%s4272 + $0x14] sm:$0x1] %v4243
        %4279 = vst [vmem:[%s4272 + $0x18] sm:$0xf] %v4244
        %4280 = vst [vmem:[%s4272 + $0x1c] sm:$0x1] %v4245
        %4281 = vst [vmem:[%s4272 + $0x20] sm:$0xf] %v4246
        %4282 = vst [vmem:[%s4272 + $0x24] sm:$0x1] %v4247
        %4283 = vst [vmem:[%s4272 + $0x28] sm:$0xf] %v4248
        %4284 = vst [vmem:[%s4272 + $0x2c] sm:$0x1] %v4249
        %4285 = vst [vmem:[%s4272 + $0x30] sm:$0xf] %v4250
        %4286 = vst [vmem:[%s4272 + $0x34] sm:$0x1] %v4251
        %4287 = vst [vmem:[%s4272 + $0x38] sm:$0xf] %v4252
        %4288 = vst [vmem:[%s4272 + $0x3c] sm:$0x1] %v4253
        %4289 = vst [vmem:[%s4272 + $0x40] sm:$0xf] %v4254
        %4290 = vst [vmem:[%s4272 + $0x44] sm:$0x1] %v4255
        %4291 = vst [vmem:[%s4272 + $0x48] sm:$0xf] %v4160
        %4292 = vst [vmem:[%s4272 + $0x4c] sm:$0x1] %v4161
      $region60: #{downconv_forward.1} parent=47 // pred_fallthru
        _
      %s4293 = smul.u32 %s25, 2
      %p4294 = scmp.lt.s32.totalorder %s4293, 0
      %s4295 = ssub.s32 0, %s4293
      %s4296 = scalar_select %p4294, %s4295, %s4293
      %s4297 = sand.u32 %s4296, 3
      %s4298 = ssub.s32 0, %s4297
      %s4299 = scalar_select %p4294, %s4298, %s4297
      %p4300 = scmp.ne.s32.totalorder %s4299, 0
      %p4301 = scmp.lt.s32.totalorder %s4299, 0
      %p4302 = pnand %p4301, %p4300
      %p4303 = pneg %p4302
      %s4304 = sadd.s32 %s4299, 4
      %s4305 = scalar_select %p4303, %s4304, %s4299
      %s4306 = smul.u32 %s4305, 20
      %s4307 = smul.addr %s4306, 4
      %s4308 = scalar_lea.vmem [#allocation2], %s4307
      %v4309 = vld [vmem:[%s4308] sm:$0xf]
      %v4310 = vld [vmem:[%s4308 + $0x4] sm:$0x1]
      %v4311 = vld [vmem:[%s4308 + $0x8] sm:$0xf]
      %v4312 = vld [vmem:[%s4308 + $0xc] sm:$0x1]
      %v4313 = vld [vmem:[%s4308 + $0x10] sm:$0xf]
      %v4314 = vld [vmem:[%s4308 + $0x14] sm:$0x1]
      %v4315 = vld [vmem:[%s4308 + $0x18] sm:$0xf]
      %v4316 = vld [vmem:[%s4308 + $0x1c] sm:$0x1]
      %v4317 = vld [vmem:[%s4308 + $0x20] sm:$0xf]
      %v4318 = vld [vmem:[%s4308 + $0x24] sm:$0x1]
      %v4319 = vld [vmem:[%s4308 + $0x28] sm:$0xf]
      %v4320 = vld [vmem:[%s4308 + $0x2c] sm:$0x1]
      %v4321 = vld [vmem:[%s4308 + $0x30] sm:$0xf]
      %v4322 = vld [vmem:[%s4308 + $0x34] sm:$0x1]
      %v4323 = vld [vmem:[%s4308 + $0x38] sm:$0xf]
      %v4324 = vld [vmem:[%s4308 + $0x3c] sm:$0x1]
      %v4325 = vld [vmem:[%s4308 + $0x40] sm:$0xf]
      %v4326 = vld [vmem:[%s4308 + $0x44] sm:$0x1]
      %v4327 = vld [vmem:[%s4308 + $0x48] sm:$0xf]
      %v4328 = vld [vmem:[%s4308 + $0x4c] sm:$0x1]
      %v4345 = vunpack.c.l.b16 %v4309
      %v4346 = vunpack.c.l.b16 %v4310
      %v4347 = vunpack.c.l.b16 %v4311
      %v4348 = vunpack.c.l.b16 %v4312
      %v4349 = vunpack.c.l.b16 %v4313
      %v4350 = vunpack.c.l.b16 %v4314
      %v4351 = vunpack.c.l.b16 %v4315
      %v4352 = vunpack.c.l.b16 %v4316
      %v4353 = vunpack.c.l.b16 %v4317
      %v4354 = vunpack.c.l.b16 %v4318
      %v4355 = vunpack.c.l.b16 %v4319
      %v4356 = vunpack.c.l.b16 %v4320
      %v4357 = vunpack.c.l.b16 %v4321
      %v4358 = vunpack.c.l.b16 %v4322
      %v4359 = vunpack.c.l.b16 %v4323
      %v4360 = vunpack.c.l.b16 %v4324
      %v4361 = vpack.c.b16 %v4346, %v4345
      %v4362 = vpack.c.b16 %v4348, %v4347
      %v4363 = vpack.c.b16 %v4350, %v4349
      %v4364 = vpack.c.b16 %v4352, %v4351
      %v4365 = vpack.c.b16 %v4354, %v4353
      %v4366 = vpack.c.b16 %v4356, %v4355
      %v4367 = vpack.c.b16 %v4358, %v4357
      %v4368 = vpack.c.b16 %v4360, %v4359
      %v4370 = vshrl.u32 %v4361, 16
      %v4372 = vshll.u32 %v4361, 16
      %v4374 = vrot.slane %v4372, 1
      %v4375 = vor.u32 %v4370, %v4374
      %v4377 = vshrl.u32 %v4362, 16
      %v4379 = vshll.u32 %v4362, 16
      %v4381 = vrot.slane %v4379, 1
      %v4382 = vor.u32 %v4377, %v4381
      %v4384 = vshrl.u32 %v4363, 16
      %v4386 = vshll.u32 %v4363, 16
      %v4388 = vrot.slane %v4386, 1
      %v4389 = vor.u32 %v4384, %v4388
      %v4391 = vshrl.u32 %v4364, 16
      %v4393 = vshll.u32 %v4364, 16
      %v4395 = vrot.slane %v4393, 1
      %v4396 = vor.u32 %v4391, %v4395
      %v4398 = vshrl.u32 %v4365, 16
      %v4400 = vshll.u32 %v4365, 16
      %v4402 = vrot.slane %v4400, 1
      %v4403 = vor.u32 %v4398, %v4402
      %v4405 = vshrl.u32 %v4366, 16
      %v4407 = vshll.u32 %v4366, 16
      %v4409 = vrot.slane %v4407, 1
      %v4410 = vor.u32 %v4405, %v4409
      %v4412 = vshrl.u32 %v4367, 16
      %v4414 = vshll.u32 %v4367, 16
      %v4416 = vrot.slane %v4414, 1
      %v4417 = vor.u32 %v4412, %v4416
      %v4419 = vshrl.u32 %v4368, 16
      %v4421 = vshll.u32 %v4368, 16
      %v4423 = vrot.slane %v4421, 1
      %v4424 = vor.u32 %v4419, %v4423
      %v4425 = vrot.slane %v4361, 1
      %v4426 = vrot.slane %v4362, 1
      %v4427 = vrot.slane %v4363, 1
      %v4428 = vrot.slane %v4364, 1
      %v4429 = vrot.slane %v4365, 1
      %v4430 = vrot.slane %v4366, 1
      %v4431 = vrot.slane %v4367, 1
      %v4432 = vrot.slane %v4368, 1
      %v4433 = vunpack.c.l.b16 %v4375
      %v4434 = vunpack.c.l.b16 %v4425
      %v4435 = vunpack.c.l.b16 %v4382
      %v4436 = vunpack.c.l.b16 %v4426
      %v4437 = vunpack.c.l.b16 %v4389
      %v4438 = vunpack.c.l.b16 %v4427
      %v4439 = vunpack.c.l.b16 %v4396
      %v4440 = vunpack.c.l.b16 %v4428
      %v4441 = vunpack.c.l.b16 %v4403
      %v4442 = vunpack.c.l.b16 %v4429
      %v4443 = vunpack.c.l.b16 %v4410
      %v4444 = vunpack.c.l.b16 %v4430
      %v4445 = vunpack.c.l.b16 %v4417
      %v4446 = vunpack.c.l.b16 %v4431
      %v4447 = vunpack.c.l.b16 %v4424
      %v4448 = vunpack.c.l.b16 %v4432
      %v4449 = vld [vmem:[%s5] sm:$0xf]
      %v4450 = vld [vmem:[%s5 + $0x4] sm:$0xf]
      %v4451 = vld [vmem:[%s5 + $0x8] sm:$0xf]
      %v4452 = vld [vmem:[%s5 + $0xc] sm:$0xf]
      %v4453 = vld [vmem:[%s5 + $0x10] sm:$0xf]
      %v4454 = vld [vmem:[%s5 + $0x14] sm:$0xf]
      %v4455 = vld [vmem:[%s5 + $0x18] sm:$0xf]
      %v4456 = vld [vmem:[%s5 + $0x1c] sm:$0xf]
      %v4457 = vld [vmem:[%s5 + $0x20] sm:$0xf]
      %v4458 = vld [vmem:[%s5 + $0x24] sm:$0xf]
      %v4459 = vld [vmem:[%s5 + $0x28] sm:$0xf]
      %v4460 = vld [vmem:[%s5 + $0x2c] sm:$0xf]
      %v4461 = vld [vmem:[%s5 + $0x30] sm:$0xf]
      %v4462 = vld [vmem:[%s5 + $0x34] sm:$0xf]
      %v4463 = vld [vmem:[%s5 + $0x38] sm:$0xf]
      %v4464 = vld [vmem:[%s5 + $0x3c] sm:$0xf]
      %v4465 = vld [vmem:[%s5 + $0x40] sm:$0xf]
      %v4466 = vld [vmem:[%s5 + $0x44] sm:$0xf]
      %v4467 = vld [vmem:[%s5 + $0x48] sm:$0xf]
      %v4468 = vld [vmem:[%s5 + $0x4c] sm:$0xf]
      %v4469 = vld [vmem:[%s5 + $0x50] sm:$0xf]
      %v4470 = vld [vmem:[%s5 + $0x54] sm:$0xf]
      %v4471 = vld [vmem:[%s5 + $0x58] sm:$0xf]
      %v4472 = vld [vmem:[%s5 + $0x5c] sm:$0xf]
      %v4473 = vld [vmem:[%s5 + $0x60] sm:$0xf]
      %v4474 = vld [vmem:[%s5 + $0x64] sm:$0xf]
      %v4475 = vld [vmem:[%s5 + $0x68] sm:$0xf]
      %v4476 = vld [vmem:[%s5 + $0x6c] sm:$0xf]
      %v4477 = vld [vmem:[%s5 + $0x70] sm:$0xf]
      %v4478 = vld [vmem:[%s5 + $0x74] sm:$0xf]
      %v4479 = vld [vmem:[%s5 + $0x78] sm:$0xf]
      %v4480 = vld [vmem:[%s5 + $0x7c] sm:$0xf]
      %v4481 = vld [vmem:[%s5 + $0x80] sm:$0xf]
      %v4482 = vld [vmem:[%s5 + $0x84] sm:$0xf]
      %v4483 = vld [vmem:[%s5 + $0x88] sm:$0xf]
      %v4484 = vld [vmem:[%s5 + $0x8c] sm:$0xf]
      %v4485 = vld [vmem:[%s5 + $0x90] sm:$0xf]
      %v4486 = vld [vmem:[%s5 + $0x94] sm:$0xf]
      %v4487 = vld [vmem:[%s5 + $0x98] sm:$0xf]
      %v4488 = vld [vmem:[%s5 + $0x9c] sm:$0xf]
      %v4489 = vld [vmem:[%s5 + $0xa0] sm:$0xf]
      %v4490 = vld [vmem:[%s5 + $0xa4] sm:$0xf]
      %v4491 = vld [vmem:[%s5 + $0xa8] sm:$0xf]
      %v4492 = vld [vmem:[%s5 + $0xac] sm:$0xf]
      %v4493 = vld [vmem:[%s5 + $0xb0] sm:$0xf]
      %v4494 = vld [vmem:[%s5 + $0xb4] sm:$0xf]
      %v4495 = vld [vmem:[%s5 + $0xb8] sm:$0xf]
      %v4496 = vld [vmem:[%s5 + $0xbc] sm:$0xf]
      %v4499 = vunpack.c.l.b16 %v4325
      %v4500 = vunpack.c.l.b16 %v4326
      %v4501 = vpack.c.b16 %v4500, %v4499
      %v4503 = vshrl.u32 %v4501, 16
      %v4505 = vshll.u32 %v4501, 16
      %v4507 = vrot.slane %v4505, 1
      %v4508 = vor.u32 %v4503, %v4507
      %v4509 = vrot.slane %v4501, 1
      %v4510 = vunpack.c.l.b16 %v4508
      %v4511 = vunpack.c.l.b16 %v4509
      %s4512 = scalar_lea.vmem %s5, 192
      %v4513 = vld [vmem:[%s4512] sm:$0xf]
      %v4514 = vld [vmem:[%s4512 + $0x4] sm:$0xf]
      %v4515 = vld [vmem:[%s4512 + $0x8] sm:$0xf]
      %v4516 = vld [vmem:[%s4512 + $0xc] sm:$0xf]
      %v4517 = vld [vmem:[%s4512 + $0x10] sm:$0xf]
      %v4518 = vld [vmem:[%s4512 + $0x14] sm:$0xf]
      %v4519 = vld [vmem:[%s4512 + $0x18] sm:$0xf]
      %v4520 = vld [vmem:[%s4512 + $0x1c] sm:$0xf]
      %v4521 = vld [vmem:[%s4512 + $0x20] sm:$0xf]
      %v4522 = vld [vmem:[%s4512 + $0x24] sm:$0xf]
      %v4523 = vld [vmem:[%s4512 + $0x28] sm:$0xf]
      %v4524 = vld [vmem:[%s4512 + $0x2c] sm:$0xf]
      %v4525 = vld [vmem:[%s4512 + $0x30] sm:$0xf]
      %v4526 = vld [vmem:[%s4512 + $0x34] sm:$0xf]
      %v4527 = vld [vmem:[%s4512 + $0x38] sm:$0xf]
      %v4528 = vld [vmem:[%s4512 + $0x3c] sm:$0xf]
      %v4529 = vld [vmem:[%s4512 + $0x40] sm:$0xf]
      %v4530 = vld [vmem:[%s4512 + $0x44] sm:$0xf]
      %v4531 = vld [vmem:[%s4512 + $0x48] sm:$0xf]
      %v4532 = vld [vmem:[%s4512 + $0x4c] sm:$0xf]
      %v4533 = vld [vmem:[%s4512 + $0x50] sm:$0xf]
      %v4534 = vld [vmem:[%s4512 + $0x54] sm:$0xf]
      %v4535 = vld [vmem:[%s4512 + $0x58] sm:$0xf]
      %v4536 = vld [vmem:[%s4512 + $0x5c] sm:$0xf]
      %v4537 = vld [vmem:[%s4512 + $0x60] sm:$0xf]
      %v4538 = vld [vmem:[%s4512 + $0x64] sm:$0xf]
      %v4539 = vld [vmem:[%s4512 + $0x68] sm:$0xf]
      %v4540 = vld [vmem:[%s4512 + $0x6c] sm:$0xf]
      %v4541 = vld [vmem:[%s4512 + $0x70] sm:$0xf]
      %v4542 = vld [vmem:[%s4512 + $0x74] sm:$0xf]
      %v4543 = vld [vmem:[%s4512 + $0x78] sm:$0xf]
      %v4544 = vld [vmem:[%s4512 + $0x7c] sm:$0xf]
      %v4545 = vld [vmem:[%s4512 + $0x80] sm:$0xf]
      %v4546 = vld [vmem:[%s4512 + $0x84] sm:$0xf]
      %v4547 = vld [vmem:[%s4512 + $0x88] sm:$0xf]
      %v4548 = vld [vmem:[%s4512 + $0x8c] sm:$0xf]
      %v4549 = vld [vmem:[%s4512 + $0x90] sm:$0xf]
      %v4550 = vld [vmem:[%s4512 + $0x94] sm:$0xf]
      %v4551 = vld [vmem:[%s4512 + $0x98] sm:$0xf]
      %v4552 = vld [vmem:[%s4512 + $0x9c] sm:$0xf]
      %v4553 = vld [vmem:[%s4512 + $0xa0] sm:$0xf]
      %v4554 = vld [vmem:[%s4512 + $0xa4] sm:$0xf]
      %v4555 = vld [vmem:[%s4512 + $0xa8] sm:$0xf]
      %v4556 = vld [vmem:[%s4512 + $0xac] sm:$0xf]
      %v4557 = vld [vmem:[%s4512 + $0xb0] sm:$0xf]
      %v4558 = vld [vmem:[%s4512 + $0xb4] sm:$0xf]
      %v4559 = vld [vmem:[%s4512 + $0xb8] sm:$0xf]
      %v4560 = vld [vmem:[%s4512 + $0xbc] sm:$0xf]
      %v4561 = vpack.c.b16 %v4349, %v4347
      %v4562 = vpack.c.b16 %v4437, %v4435
      %v4563 = vpack.c.b16 %v4438, %v4436
      %v4564 = vpack.c.b16 %v4353, %v4351
      %v4565 = vpack.c.b16 %v4441, %v4439
      %v4566 = vpack.c.b16 %v4442, %v4440
      %v4567 = vpack.c.b16 %v4357, %v4355
      %v4568 = vpack.c.b16 %v4445, %v4443
      %v4569 = vpack.c.b16 %v4446, %v4444
      %v4570 = vpack.c.b16 %v4499, %v4359
      %v4571 = vpack.c.b16 %v4510, %v4447
      %v4572 = vpack.c.b16 %v4511, %v4448
      %v4633 = vunpack.c.l.b16 %v4513
      %v4634 = vunpack.c.l.b16 %v4514
      %v4635 = vunpack.c.l.b16 %v4515
      %v4636 = vunpack.c.l.b16 %v4516
      %v4637 = vunpack.c.l.b16 %v4517
      %v4638 = vunpack.c.l.b16 %v4518
      %v4639 = vunpack.c.l.b16 %v4519
      %v4640 = vunpack.c.l.b16 %v4520
      %v4641 = vunpack.c.l.b16 %v4521
      %v4642 = vunpack.c.l.b16 %v4522
      %v4643 = vunpack.c.l.b16 %v4523
      %v4644 = vunpack.c.l.b16 %v4524
      %v4645 = vunpack.c.l.b16 %v4525
      %v4646 = vunpack.c.l.b16 %v4526
      %v4647 = vunpack.c.l.b16 %v4527
      %v4648 = vunpack.c.l.b16 %v4528
      %v4649 = vunpack.c.l.b16 %v4529
      %v4650 = vunpack.c.l.b16 %v4530
      %v4651 = vunpack.c.l.b16 %v4531
      %v4652 = vunpack.c.l.b16 %v4532
      %v4653 = vunpack.c.l.b16 %v4533
      %v4654 = vunpack.c.l.b16 %v4534
      %v4655 = vunpack.c.l.b16 %v4535
      %v4656 = vunpack.c.l.b16 %v4536
      %v4657 = vunpack.c.l.b16 %v4537
      %v4658 = vunpack.c.l.b16 %v4538
      %v4659 = vunpack.c.l.b16 %v4539
      %v4660 = vunpack.c.l.b16 %v4540
      %v4661 = vunpack.c.l.b16 %v4541
      %v4662 = vunpack.c.l.b16 %v4542
      %v4663 = vunpack.c.l.b16 %v4543
      %v4664 = vunpack.c.l.b16 %v4544
      %v4665 = vunpack.c.l.b16 %v4545
      %v4666 = vunpack.c.l.b16 %v4546
      %v4667 = vunpack.c.l.b16 %v4547
      %v4668 = vunpack.c.l.b16 %v4548
      %v4669 = vunpack.c.l.b16 %v4549
      %v4670 = vunpack.c.l.b16 %v4550
      %v4671 = vunpack.c.l.b16 %v4551
      %v4672 = vunpack.c.l.b16 %v4552
      %v4673 = vunpack.c.l.b16 %v4553
      %v4674 = vunpack.c.l.b16 %v4554
      %v4675 = vunpack.c.l.b16 %v4555
      %v4676 = vunpack.c.l.b16 %v4556
      %v4677 = vunpack.c.l.b16 %v4557
      %v4678 = vunpack.c.l.b16 %v4558
      %v4679 = vunpack.c.l.b16 %v4559
      %v4680 = vunpack.c.l.b16 %v4560
      %v4681 = vpack.c.b16 %v4634, %v4633
      %v4682 = vpack.c.b16 %v4636, %v4635
      %v4683 = vpack.c.b16 %v4638, %v4637
      %v4684 = vpack.c.b16 %v4640, %v4639
      %v4685 = vpack.c.b16 %v4642, %v4641
      %v4686 = vpack.c.b16 %v4644, %v4643
      %v4687 = vpack.c.b16 %v4646, %v4645
      %v4688 = vpack.c.b16 %v4648, %v4647
      %v4689 = vpack.c.b16 %v4650, %v4649
      %v4690 = vpack.c.b16 %v4652, %v4651
      %v4691 = vpack.c.b16 %v4654, %v4653
      %v4692 = vpack.c.b16 %v4656, %v4655
      %v4693 = vpack.c.b16 %v4658, %v4657
      %v4694 = vpack.c.b16 %v4660, %v4659
      %v4695 = vpack.c.b16 %v4662, %v4661
      %v4696 = vpack.c.b16 %v4664, %v4663
      %v4697 = vpack.c.b16 %v4666, %v4665
      %v4698 = vpack.c.b16 %v4668, %v4667
      %v4699 = vpack.c.b16 %v4670, %v4669
      %v4700 = vpack.c.b16 %v4672, %v4671
      %v4701 = vpack.c.b16 %v4674, %v4673
      %v4702 = vpack.c.b16 %v4676, %v4675
      %v4703 = vpack.c.b16 %v4678, %v4677
      %v4704 = vpack.c.b16 %v4680, %v4679
      %4729 = vmatprep.subr.bf16.mxu0 0
      %4730 = vmatpush1.bf16.msra.mxu0 %v4688
      %4731 = vmatprep.subr.bf16.mxu0 0
      %4732 = vmatpush1.bf16.msra.mxu0 %v4687
      %4733 = vmatprep.subr.bf16.mxu0 0
      %4734 = vmatpush1.bf16.msra.mxu0 %v4686
      %4735 = vmatprep.subr.bf16.mxu0 0
      %4736 = vmatpush1.bf16.msra.mxu0 %v4685
      %4737 = vmatprep.subr.bf16.mxu0 0
      %4738 = vmatpush1.bf16.msra.mxu0 %v4684
      %4739 = vmatprep.subr.bf16.mxu0 0
      %4740 = vmatpush1.bf16.msra.mxu0 %v4683
      %4741 = vmatprep.subr.bf16.mxu0 0
      %4742 = vmatpush1.bf16.msra.mxu0 %v4682
      %4743 = vmatprep.subr.bf16.mxu0 0
      %4744 = vmatpush1.bf16.msra.mxu0 %v4681
      %4745 = vmatprep.subr.bf16.mxu0 0
      %4746 = vmatpush2.bf16.msra.mxu0 %v4696
      %4747 = vmatprep.subr.bf16.mxu0 0
      %4748 = vmatpush2.bf16.msra.mxu0 %v4695
      %4749 = vmatprep.subr.bf16.mxu0 0
      %4750 = vmatpush2.bf16.msra.mxu0 %v4694
      %4751 = vmatprep.subr.bf16.mxu0 0
      %4752 = vmatpush2.bf16.msra.mxu0 %v4693
      %4753 = vmatprep.subr.bf16.mxu0 0
      %4754 = vmatpush2.bf16.msra.mxu0 %v4692
      %4755 = vmatprep.subr.bf16.mxu0 0
      %4756 = vmatpush2.bf16.msra.mxu0 %v4691
      %4757 = vmatprep.subr.bf16.mxu0 0
      %4758 = vmatpush2.bf16.msra.mxu0 %v4690
      %4759 = vmatprep.subr.bf16.mxu0 0
      %4760 = vmatpush2.bf16.msra.mxu0 %v4689
      %4761 = vmatprep.mubr.bf16.mxu0 %v4562
      %4762 = vmatmul.mubr.bf16.gmra.mxu0 %v4561
      %v4763 = vpop.f32.mrf.mxu0
      %v4764 = vadd.f32 0.0, %v4763
      %v4765 = vpop.f32.mrf.mxu0
      %v4766 = vpop.f32.mrf.mxu0
      %v4767 = vadd.f32 0.0, %v4766
      %v4768 = vpop.f32.mrf.mxu0
      %4769 = vmatprep.mubr.bf16.mxu0 %v4565
      %4770 = vmatmul.mubr.bf16.gmra.mxu0 %v4564
      %v4771 = vpop.f32.mrf.mxu0
      %v4772 = vadd.f32 0.0, %v4771
      %v4773 = vpop.f32.mrf.mxu0
      %v4774 = vpop.f32.mrf.mxu0
      %v4775 = vadd.f32 0.0, %v4774
      %v4776 = vpop.f32.mrf.mxu0
      %4777 = vmatprep.mubr.bf16.mxu0 %v4568
      %4778 = vmatmul.mubr.bf16.gmra.mxu0 %v4567
      %v4779 = vpop.f32.mrf.mxu0
      %v4780 = vadd.f32 0.0, %v4779
      %v4781 = vpop.f32.mrf.mxu0
      %v4782 = vpop.f32.mrf.mxu0
      %v4783 = vadd.f32 0.0, %v4782
      %v4784 = vpop.f32.mrf.mxu0
      %4785 = vmatprep.mubr.bf16.mxu0 %v4571
      %4786 = vmatmul.mubr.bf16.gmra.mxu0 %v4570
      %v4787 = vpop.f32.mrf.mxu0
      %v4788 = vadd.f32 0.0, %v4787
      %v4789 = vpop.f32.mrf.mxu0
      %v4790 = vpop.f32.mrf.mxu0
      %v4791 = vadd.f32 0.0, %v4790
      %v4792 = vpop.f32.mrf.mxu0
      %4793 = vdwg.mxu0
      %4794 = vmatprep.subr.bf16.mxu0 0
      %4795 = vmatpush1.bf16.msra.mxu0 %v4704
      %4796 = vmatprep.subr.bf16.mxu0 0
      %4797 = vmatpush1.bf16.msra.mxu0 %v4703
      %4798 = vmatprep.subr.bf16.mxu0 0
      %4799 = vmatpush1.bf16.msra.mxu0 %v4702
      %4800 = vmatprep.subr.bf16.mxu0 0
      %4801 = vmatpush1.bf16.msra.mxu0 %v4701
      %4802 = vmatprep.subr.bf16.mxu0 0
      %4803 = vmatpush1.bf16.msra.mxu0 %v4700
      %4804 = vmatprep.subr.bf16.mxu0 0
      %4805 = vmatpush1.bf16.msra.mxu0 %v4699
      %4806 = vmatprep.subr.bf16.mxu0 0
      %4807 = vmatpush1.bf16.msra.mxu0 %v4698
      %4808 = vmatprep.subr.bf16.mxu0 0
      %4809 = vmatpush1.bf16.msra.mxu0 %v4697
      %4810 = vmatprep.subr.bf16.mxu0 0
      %4811 = vmatpush2.bf16.msra.mxu0 0
      %4812 = vmatprep.subr.bf16.mxu0 0
      %4813 = vmatpush2.bf16.msra.mxu0 0
      %4814 = vmatprep.subr.bf16.mxu0 0
      %4815 = vmatpush2.bf16.msra.mxu0 0
      %4816 = vmatprep.subr.bf16.mxu0 0
      %4817 = vmatpush2.bf16.msra.mxu0 0
      %4818 = vmatprep.subr.bf16.mxu0 0
      %4819 = vmatpush2.bf16.msra.mxu0 0
      %4820 = vmatprep.subr.bf16.mxu0 0
      %4821 = vmatpush2.bf16.msra.mxu0 0
      %4822 = vmatprep.subr.bf16.mxu0 0
      %4823 = vmatpush2.bf16.msra.mxu0 0
      %4824 = vmatprep.subr.bf16.mxu0 0
      %4825 = vmatpush2.bf16.msra.mxu0 0
      %4826 = vmatprep.mubr.bf16.mxu0 0
      %4827 = vmatmul.mubr.bf16.gmra.mxu0 %v4563
      %v4828 = vpop.f32.mrf.mxu0
      %v4829 = vadd.f32 %v4764, %v4828
      %v4830 = vpop.f32.mrf.mxu0
      %v4831 = vpop.f32.mrf.mxu0
      %v4832 = vadd.f32 %v4767, %v4831
      %v4833 = vpop.f32.mrf.mxu0
      %4834 = vmatprep.mubr.bf16.mxu0 0
      %4835 = vmatmul.mubr.bf16.gmra.mxu0 %v4566
      %v4836 = vpop.f32.mrf.mxu0
      %v4837 = vadd.f32 %v4772, %v4836
      %v4838 = vpop.f32.mrf.mxu0
      %v4839 = vpop.f32.mrf.mxu0
      %v4840 = vadd.f32 %v4775, %v4839
      %v4841 = vpop.f32.mrf.mxu0
      %4842 = vmatprep.mubr.bf16.mxu0 0
      %4843 = vmatmul.mubr.bf16.gmra.mxu0 %v4569
      %v4844 = vpop.f32.mrf.mxu0
      %v4845 = vadd.f32 %v4780, %v4844
      %v4846 = vpop.f32.mrf.mxu0
      %v4847 = vpop.f32.mrf.mxu0
      %v4848 = vadd.f32 %v4783, %v4847
      %v4849 = vpop.f32.mrf.mxu0
      %4850 = vmatprep.mubr.bf16.mxu0 0
      %4851 = vmatmul.mubr.bf16.gmra.mxu0 %v4572
      %v4852 = vpop.f32.mrf.mxu0
      %v4853 = vadd.f32 %v4788, %v4852
      %v4854 = vpop.f32.mrf.mxu0
      %v4855 = vpop.f32.mrf.mxu0
      %v4856 = vadd.f32 %v4791, %v4855
      %v4857 = vpop.f32.mrf.mxu0
      %4858 = vdwg.mxu0
      %v4859 = vpack.c.b16 %v4347, %v4345
      %v4860 = vpack.c.b16 %v4435, %v4433
      %v4861 = vpack.c.b16 %v4436, %v4434
      %v4862 = vpack.c.b16 %v4351, %v4349
      %v4863 = vpack.c.b16 %v4439, %v4437
      %v4864 = vpack.c.b16 %v4440, %v4438
      %v4865 = vpack.c.b16 %v4355, %v4353
      %v4866 = vpack.c.b16 %v4443, %v4441
      %v4867 = vpack.c.b16 %v4444, %v4442
      %v4868 = vpack.c.b16 %v4359, %v4357
      %v4869 = vpack.c.b16 %v4447, %v4445
      %v4870 = vpack.c.b16 %v4448, %v4446
      %v4931 = vunpack.c.l.b16 %v4449
      %v4932 = vunpack.c.l.b16 %v4450
      %v4933 = vunpack.c.l.b16 %v4451
      %v4934 = vunpack.c.l.b16 %v4452
      %v4935 = vunpack.c.l.b16 %v4453
      %v4936 = vunpack.c.l.b16 %v4454
      %v4937 = vunpack.c.l.b16 %v4455
      %v4938 = vunpack.c.l.b16 %v4456
      %v4939 = vunpack.c.l.b16 %v4457
      %v4940 = vunpack.c.l.b16 %v4458
      %v4941 = vunpack.c.l.b16 %v4459
      %v4942 = vunpack.c.l.b16 %v4460
      %v4943 = vunpack.c.l.b16 %v4461
      %v4944 = vunpack.c.l.b16 %v4462
      %v4945 = vunpack.c.l.b16 %v4463
      %v4946 = vunpack.c.l.b16 %v4464
      %v4947 = vunpack.c.l.b16 %v4465
      %v4948 = vunpack.c.l.b16 %v4466
      %v4949 = vunpack.c.l.b16 %v4467
      %v4950 = vunpack.c.l.b16 %v4468
      %v4951 = vunpack.c.l.b16 %v4469
      %v4952 = vunpack.c.l.b16 %v4470
      %v4953 = vunpack.c.l.b16 %v4471
      %v4954 = vunpack.c.l.b16 %v4472
      %v4955 = vunpack.c.l.b16 %v4473
      %v4956 = vunpack.c.l.b16 %v4474
      %v4957 = vunpack.c.l.b16 %v4475
      %v4958 = vunpack.c.l.b16 %v4476
      %v4959 = vunpack.c.l.b16 %v4477
      %v4960 = vunpack.c.l.b16 %v4478
      %v4961 = vunpack.c.l.b16 %v4479
      %v4962 = vunpack.c.l.b16 %v4480
      %v4963 = vunpack.c.l.b16 %v4481
      %v4964 = vunpack.c.l.b16 %v4482
      %v4965 = vunpack.c.l.b16 %v4483
      %v4966 = vunpack.c.l.b16 %v4484
      %v4967 = vunpack.c.l.b16 %v4485
      %v4968 = vunpack.c.l.b16 %v4486
      %v4969 = vunpack.c.l.b16 %v4487
      %v4970 = vunpack.c.l.b16 %v4488
      %v4971 = vunpack.c.l.b16 %v4489
      %v4972 = vunpack.c.l.b16 %v4490
      %v4973 = vunpack.c.l.b16 %v4491
      %v4974 = vunpack.c.l.b16 %v4492
      %v4975 = vunpack.c.l.b16 %v4493
      %v4976 = vunpack.c.l.b16 %v4494
      %v4977 = vunpack.c.l.b16 %v4495
      %v4978 = vunpack.c.l.b16 %v4496
      %v4979 = vpack.c.b16 %v4932, %v4931
      %v4980 = vpack.c.b16 %v4934, %v4933
      %v4981 = vpack.c.b16 %v4936, %v4935
      %v4982 = vpack.c.b16 %v4938, %v4937
      %v4983 = vpack.c.b16 %v4940, %v4939
      %v4984 = vpack.c.b16 %v4942, %v4941
      %v4985 = vpack.c.b16 %v4944, %v4943
      %v4986 = vpack.c.b16 %v4946, %v4945
      %v4987 = vpack.c.b16 %v4948, %v4947
      %v4988 = vpack.c.b16 %v4950, %v4949
      %v4989 = vpack.c.b16 %v4952, %v4951
      %v4990 = vpack.c.b16 %v4954, %v4953
      %v4991 = vpack.c.b16 %v4956, %v4955
      %v4992 = vpack.c.b16 %v4958, %v4957
      %v4993 = vpack.c.b16 %v4960, %v4959
      %v4994 = vpack.c.b16 %v4962, %v4961
      %v4995 = vpack.c.b16 %v4964, %v4963
      %v4996 = vpack.c.b16 %v4966, %v4965
      %v4997 = vpack.c.b16 %v4968, %v4967
      %v4998 = vpack.c.b16 %v4970, %v4969
      %v4999 = vpack.c.b16 %v4972, %v4971
      %v5000 = vpack.c.b16 %v4974, %v4973
      %v5001 = vpack.c.b16 %v4976, %v4975
      %v5002 = vpack.c.b16 %v4978, %v4977
      %5027 = vmatprep.subr.bf16.mxu0 0
      %5028 = vmatpush1.bf16.msra.mxu0 %v4986
      %5029 = vmatprep.subr.bf16.mxu0 0
      %5030 = vmatpush1.bf16.msra.mxu0 %v4985
      %5031 = vmatprep.subr.bf16.mxu0 0
      %5032 = vmatpush1.bf16.msra.mxu0 %v4984
      %5033 = vmatprep.subr.bf16.mxu0 0
      %5034 = vmatpush1.bf16.msra.mxu0 %v4983
      %5035 = vmatprep.subr.bf16.mxu0 0
      %5036 = vmatpush1.bf16.msra.mxu0 %v4982
      %5037 = vmatprep.subr.bf16.mxu0 0
      %5038 = vmatpush1.bf16.msra.mxu0 %v4981
      %5039 = vmatprep.subr.bf16.mxu0 0
      %5040 = vmatpush1.bf16.msra.mxu0 %v4980
      %5041 = vmatprep.subr.bf16.mxu0 0
      %5042 = vmatpush1.bf16.msra.mxu0 %v4979
      %5043 = vmatprep.subr.bf16.mxu0 0
      %5044 = vmatpush2.bf16.msra.mxu0 %v4994
      %5045 = vmatprep.subr.bf16.mxu0 0
      %5046 = vmatpush2.bf16.msra.mxu0 %v4993
      %5047 = vmatprep.subr.bf16.mxu0 0
      %5048 = vmatpush2.bf16.msra.mxu0 %v4992
      %5049 = vmatprep.subr.bf16.mxu0 0
      %5050 = vmatpush2.bf16.msra.mxu0 %v4991
      %5051 = vmatprep.subr.bf16.mxu0 0
      %5052 = vmatpush2.bf16.msra.mxu0 %v4990
      %5053 = vmatprep.subr.bf16.mxu0 0
      %5054 = vmatpush2.bf16.msra.mxu0 %v4989
      %5055 = vmatprep.subr.bf16.mxu0 0
      %5056 = vmatpush2.bf16.msra.mxu0 %v4988
      %5057 = vmatprep.subr.bf16.mxu0 0
      %5058 = vmatpush2.bf16.msra.mxu0 %v4987
      %5059 = vmatprep.mubr.bf16.mxu0 %v4860
      %5060 = vmatmul.mubr.bf16.gmra.mxu0 %v4859
      %v5061 = vpop.f32.mrf.mxu0
      %v5062 = vadd.f32 %v4829, %v5061
      %v5063 = vpop.f32.mrf.mxu0
      %v5064 = vpop.f32.mrf.mxu0
      %v5065 = vadd.f32 %v4832, %v5064
      %v5066 = vpop.f32.mrf.mxu0
      %5067 = vmatprep.mubr.bf16.mxu0 %v4863
      %5068 = vmatmul.mubr.bf16.gmra.mxu0 %v4862
      %v5069 = vpop.f32.mrf.mxu0
      %v5070 = vadd.f32 %v4837, %v5069
      %v5071 = vpop.f32.mrf.mxu0
      %v5072 = vpop.f32.mrf.mxu0
      %v5073 = vadd.f32 %v4840, %v5072
      %v5074 = vpop.f32.mrf.mxu0
      %5075 = vmatprep.mubr.bf16.mxu0 %v4866
      %5076 = vmatmul.mubr.bf16.gmra.mxu0 %v4865
      %v5077 = vpop.f32.mrf.mxu0
      %v5078 = vadd.f32 %v4845, %v5077
      %v5079 = vpop.f32.mrf.mxu0
      %v5080 = vpop.f32.mrf.mxu0
      %v5081 = vadd.f32 %v4848, %v5080
      %v5082 = vpop.f32.mrf.mxu0
      %5083 = vmatprep.mubr.bf16.mxu0 %v4869
      %5084 = vmatmul.mubr.bf16.gmra.mxu0 %v4868
      %v5085 = vpop.f32.mrf.mxu0
      %v5086 = vadd.f32 %v4853, %v5085
      %v5087 = vpop.f32.mrf.mxu0
      %v5088 = vpop.f32.mrf.mxu0
      %v5089 = vadd.f32 %v4856, %v5088
      %v5090 = vpop.f32.mrf.mxu0
      %5091 = vdwg.mxu0
      %5092 = vmatprep.subr.bf16.mxu0 0
      %5093 = vmatpush1.bf16.msra.mxu0 %v5002
      %5094 = vmatprep.subr.bf16.mxu0 0
      %5095 = vmatpush1.bf16.msra.mxu0 %v5001
      %5096 = vmatprep.subr.bf16.mxu0 0
      %5097 = vmatpush1.bf16.msra.mxu0 %v5000
      %5098 = vmatprep.subr.bf16.mxu0 0
      %5099 = vmatpush1.bf16.msra.mxu0 %v4999
      %5100 = vmatprep.subr.bf16.mxu0 0
      %5101 = vmatpush1.bf16.msra.mxu0 %v4998
      %5102 = vmatprep.subr.bf16.mxu0 0
      %5103 = vmatpush1.bf16.msra.mxu0 %v4997
      %5104 = vmatprep.subr.bf16.mxu0 0
      %5105 = vmatpush1.bf16.msra.mxu0 %v4996
      %5106 = vmatprep.subr.bf16.mxu0 0
      %5107 = vmatpush1.bf16.msra.mxu0 %v4995
      %5108 = vmatprep.subr.bf16.mxu0 0
      %5109 = vmatpush2.bf16.msra.mxu0 0
      %5110 = vmatprep.subr.bf16.mxu0 0
      %5111 = vmatpush2.bf16.msra.mxu0 0
      %5112 = vmatprep.subr.bf16.mxu0 0
      %5113 = vmatpush2.bf16.msra.mxu0 0
      %5114 = vmatprep.subr.bf16.mxu0 0
      %5115 = vmatpush2.bf16.msra.mxu0 0
      %5116 = vmatprep.subr.bf16.mxu0 0
      %5117 = vmatpush2.bf16.msra.mxu0 0
      %5118 = vmatprep.subr.bf16.mxu0 0
      %5119 = vmatpush2.bf16.msra.mxu0 0
      %5120 = vmatprep.subr.bf16.mxu0 0
      %5121 = vmatpush2.bf16.msra.mxu0 0
      %5122 = vmatprep.subr.bf16.mxu0 0
      %5123 = vmatpush2.bf16.msra.mxu0 0
      %5124 = vmatprep.mubr.bf16.mxu0 0
      %5125 = vmatmul.mubr.bf16.gmra.mxu0 %v4861
      %v5126 = vpop.f32.mrf.mxu0
      %v5127 = vadd.f32 %v5062, %v5126
      %v5128 = vpop.f32.mrf.mxu0
      %v5129 = vpop.f32.mrf.mxu0
      %v5130 = vadd.f32 %v5065, %v5129
      %v5131 = vpop.f32.mrf.mxu0
      %5132 = vmatprep.mubr.bf16.mxu0 0
      %5133 = vmatmul.mubr.bf16.gmra.mxu0 %v4864
      %v5134 = vpop.f32.mrf.mxu0
      %v5135 = vadd.f32 %v5070, %v5134
      %v5136 = vpop.f32.mrf.mxu0
      %v5137 = vpop.f32.mrf.mxu0
      %v5138 = vadd.f32 %v5073, %v5137
      %v5139 = vpop.f32.mrf.mxu0
      %5140 = vmatprep.mubr.bf16.mxu0 0
      %5141 = vmatmul.mubr.bf16.gmra.mxu0 %v4867
      %v5142 = vpop.f32.mrf.mxu0
      %v5143 = vadd.f32 %v5078, %v5142
      %v5144 = vpop.f32.mrf.mxu0
      %v5145 = vpop.f32.mrf.mxu0
      %v5146 = vadd.f32 %v5081, %v5145
      %v5147 = vpop.f32.mrf.mxu0
      %5148 = vmatprep.mubr.bf16.mxu0 0
      %5149 = vmatmul.mubr.bf16.gmra.mxu0 %v4870
      %v5150 = vpop.f32.mrf.mxu0
      %v5151 = vadd.f32 %v5086, %v5150
      %v5152 = vpop.f32.mrf.mxu0
      %v5153 = vpop.f32.mrf.mxu0
      %v5154 = vadd.f32 %v5089, %v5153
      %v5155 = vpop.f32.mrf.mxu0
      %5156 = vdwg.mxu0
      %v5159 = vunpack.c.l.b16 %v4327
      %v5160 = vunpack.c.l.b16 %v4328
      %v5161 = vpack.c.b16 %v5160, %v5159
      %v5163 = vshrl.u32 %v5161, 16
      %v5165 = vshll.u32 %v5161, 16
      %v5167 = vrot.slane %v5165, 1
      %v5168 = vor.u32 %v5163, %v5167
      %v5169 = vrot.slane %v5161, 1
      %v5170 = vunpack.c.l.b16 %v5168
      %v5171 = vunpack.c.l.b16 %v5169
      %s5172 = scalar_lea.vmem %s5, 384
      %v5173 = vld [vmem:[%s5172] sm:$0xf]
      %v5174 = vld [vmem:[%s5172 + $0x4] sm:$0xf]
      %v5175 = vld [vmem:[%s5172 + $0x8] sm:$0xf]
      %v5176 = vld [vmem:[%s5172 + $0xc] sm:$0xf]
      %v5177 = vld [vmem:[%s5172 + $0x10] sm:$0xf]
      %v5178 = vld [vmem:[%s5172 + $0x14] sm:$0xf]
      %v5179 = vld [vmem:[%s5172 + $0x18] sm:$0xf]
      %v5180 = vld [vmem:[%s5172 + $0x1c] sm:$0xf]
      %v5181 = vld [vmem:[%s5172 + $0x20] sm:$0xf]
      %v5182 = vld [vmem:[%s5172 + $0x24] sm:$0xf]
      %v5183 = vld [vmem:[%s5172 + $0x28] sm:$0xf]
      %v5184 = vld [vmem:[%s5172 + $0x2c] sm:$0xf]
      %v5185 = vld [vmem:[%s5172 + $0x30] sm:$0xf]
      %v5186 = vld [vmem:[%s5172 + $0x34] sm:$0xf]
      %v5187 = vld [vmem:[%s5172 + $0x38] sm:$0xf]
      %v5188 = vld [vmem:[%s5172 + $0x3c] sm:$0xf]
      %v5189 = vld [vmem:[%s5172 + $0x40] sm:$0xf]
      %v5190 = vld [vmem:[%s5172 + $0x44] sm:$0xf]
      %v5191 = vld [vmem:[%s5172 + $0x48] sm:$0xf]
      %v5192 = vld [vmem:[%s5172 + $0x4c] sm:$0xf]
      %v5193 = vld [vmem:[%s5172 + $0x50] sm:$0xf]
      %v5194 = vld [vmem:[%s5172 + $0x54] sm:$0xf]
      %v5195 = vld [vmem:[%s5172 + $0x58] sm:$0xf]
      %v5196 = vld [vmem:[%s5172 + $0x5c] sm:$0xf]
      %v5197 = vld [vmem:[%s5172 + $0x60] sm:$0xf]
      %v5198 = vld [vmem:[%s5172 + $0x64] sm:$0xf]
      %v5199 = vld [vmem:[%s5172 + $0x68] sm:$0xf]
      %v5200 = vld [vmem:[%s5172 + $0x6c] sm:$0xf]
      %v5201 = vld [vmem:[%s5172 + $0x70] sm:$0xf]
      %v5202 = vld [vmem:[%s5172 + $0x74] sm:$0xf]
      %v5203 = vld [vmem:[%s5172 + $0x78] sm:$0xf]
      %v5204 = vld [vmem:[%s5172 + $0x7c] sm:$0xf]
      %v5205 = vld [vmem:[%s5172 + $0x80] sm:$0xf]
      %v5206 = vld [vmem:[%s5172 + $0x84] sm:$0xf]
      %v5207 = vld [vmem:[%s5172 + $0x88] sm:$0xf]
      %v5208 = vld [vmem:[%s5172 + $0x8c] sm:$0xf]
      %v5209 = vld [vmem:[%s5172 + $0x90] sm:$0xf]
      %v5210 = vld [vmem:[%s5172 + $0x94] sm:$0xf]
      %v5211 = vld [vmem:[%s5172 + $0x98] sm:$0xf]
      %v5212 = vld [vmem:[%s5172 + $0x9c] sm:$0xf]
      %v5213 = vld [vmem:[%s5172 + $0xa0] sm:$0xf]
      %v5214 = vld [vmem:[%s5172 + $0xa4] sm:$0xf]
      %v5215 = vld [vmem:[%s5172 + $0xa8] sm:$0xf]
      %v5216 = vld [vmem:[%s5172 + $0xac] sm:$0xf]
      %v5217 = vld [vmem:[%s5172 + $0xb0] sm:$0xf]
      %v5218 = vld [vmem:[%s5172 + $0xb4] sm:$0xf]
      %v5219 = vld [vmem:[%s5172 + $0xb8] sm:$0xf]
      %v5220 = vld [vmem:[%s5172 + $0xbc] sm:$0xf]
      %v5221 = vpack.c.b16 %v5159, %v4499
      %v5222 = vpack.c.b16 %v5170, %v4510
      %v5223 = vpack.c.b16 %v5171, %v4511
      %v5275 = vunpack.c.l.b16 %v5173
      %v5276 = vunpack.c.l.b16 %v5174
      %v5277 = vunpack.c.l.b16 %v5175
      %v5278 = vunpack.c.l.b16 %v5176
      %v5279 = vunpack.c.l.b16 %v5177
      %v5280 = vunpack.c.l.b16 %v5178
      %v5281 = vunpack.c.l.b16 %v5179
      %v5282 = vunpack.c.l.b16 %v5180
      %v5283 = vunpack.c.l.b16 %v5181
      %v5284 = vunpack.c.l.b16 %v5182
      %v5285 = vunpack.c.l.b16 %v5183
      %v5286 = vunpack.c.l.b16 %v5184
      %v5287 = vunpack.c.l.b16 %v5185
      %v5288 = vunpack.c.l.b16 %v5186
      %v5289 = vunpack.c.l.b16 %v5187
      %v5290 = vunpack.c.l.b16 %v5188
      %v5291 = vunpack.c.l.b16 %v5189
      %v5292 = vunpack.c.l.b16 %v5190
      %v5293 = vunpack.c.l.b16 %v5191
      %v5294 = vunpack.c.l.b16 %v5192
      %v5295 = vunpack.c.l.b16 %v5193
      %v5296 = vunpack.c.l.b16 %v5194
      %v5297 = vunpack.c.l.b16 %v5195
      %v5298 = vunpack.c.l.b16 %v5196
      %v5299 = vunpack.c.l.b16 %v5197
      %v5300 = vunpack.c.l.b16 %v5198
      %v5301 = vunpack.c.l.b16 %v5199
      %v5302 = vunpack.c.l.b16 %v5200
      %v5303 = vunpack.c.l.b16 %v5201
      %v5304 = vunpack.c.l.b16 %v5202
      %v5305 = vunpack.c.l.b16 %v5203
      %v5306 = vunpack.c.l.b16 %v5204
      %v5307 = vunpack.c.l.b16 %v5205
      %v5308 = vunpack.c.l.b16 %v5206
      %v5309 = vunpack.c.l.b16 %v5207
      %v5310 = vunpack.c.l.b16 %v5208
      %v5311 = vunpack.c.l.b16 %v5209
      %v5312 = vunpack.c.l.b16 %v5210
      %v5313 = vunpack.c.l.b16 %v5211
      %v5314 = vunpack.c.l.b16 %v5212
      %v5315 = vunpack.c.l.b16 %v5213
      %v5316 = vunpack.c.l.b16 %v5214
      %v5317 = vunpack.c.l.b16 %v5215
      %v5318 = vunpack.c.l.b16 %v5216
      %v5319 = vunpack.c.l.b16 %v5217
      %v5320 = vunpack.c.l.b16 %v5218
      %v5321 = vunpack.c.l.b16 %v5219
      %v5322 = vunpack.c.l.b16 %v5220
      %v5323 = vpack.c.b16 %v5276, %v5275
      %v5324 = vpack.c.b16 %v5278, %v5277
      %v5325 = vpack.c.b16 %v5280, %v5279
      %v5326 = vpack.c.b16 %v5282, %v5281
      %v5327 = vpack.c.b16 %v5284, %v5283
      %v5328 = vpack.c.b16 %v5286, %v5285
      %v5329 = vpack.c.b16 %v5288, %v5287
      %v5330 = vpack.c.b16 %v5290, %v5289
      %v5331 = vpack.c.b16 %v5292, %v5291
      %v5332 = vpack.c.b16 %v5294, %v5293
      %v5333 = vpack.c.b16 %v5296, %v5295
      %v5334 = vpack.c.b16 %v5298, %v5297
      %v5335 = vpack.c.b16 %v5300, %v5299
      %v5336 = vpack.c.b16 %v5302, %v5301
      %v5337 = vpack.c.b16 %v5304, %v5303
      %v5338 = vpack.c.b16 %v5306, %v5305
      %v5339 = vpack.c.b16 %v5308, %v5307
      %v5340 = vpack.c.b16 %v5310, %v5309
      %v5341 = vpack.c.b16 %v5312, %v5311
      %v5342 = vpack.c.b16 %v5314, %v5313
      %v5343 = vpack.c.b16 %v5316, %v5315
      %v5344 = vpack.c.b16 %v5318, %v5317
      %v5345 = vpack.c.b16 %v5320, %v5319
      %v5346 = vpack.c.b16 %v5322, %v5321
      %5371 = vmatprep.subr.bf16.mxu0 0
      %5372 = vmatpush1.bf16.msra.mxu0 %v5330
      %5373 = vmatprep.subr.bf16.mxu0 0
      %5374 = vmatpush1.bf16.msra.mxu0 %v5329
      %5375 = vmatprep.subr.bf16.mxu0 0
      %5376 = vmatpush1.bf16.msra.mxu0 %v5328
      %5377 = vmatprep.subr.bf16.mxu0 0
      %5378 = vmatpush1.bf16.msra.mxu0 %v5327
      %5379 = vmatprep.subr.bf16.mxu0 0
      %5380 = vmatpush1.bf16.msra.mxu0 %v5326
      %5381 = vmatprep.subr.bf16.mxu0 0
      %5382 = vmatpush1.bf16.msra.mxu0 %v5325
      %5383 = vmatprep.subr.bf16.mxu0 0
      %5384 = vmatpush1.bf16.msra.mxu0 %v5324
      %5385 = vmatprep.subr.bf16.mxu0 0
      %5386 = vmatpush1.bf16.msra.mxu0 %v5323
      %5387 = vmatprep.subr.bf16.mxu0 0
      %5388 = vmatpush2.bf16.msra.mxu0 %v5338
      %5389 = vmatprep.subr.bf16.mxu0 0
      %5390 = vmatpush2.bf16.msra.mxu0 %v5337
      %5391 = vmatprep.subr.bf16.mxu0 0
      %5392 = vmatpush2.bf16.msra.mxu0 %v5336
      %5393 = vmatprep.subr.bf16.mxu0 0
      %5394 = vmatpush2.bf16.msra.mxu0 %v5335
      %5395 = vmatprep.subr.bf16.mxu0 0
      %5396 = vmatpush2.bf16.msra.mxu0 %v5334
      %5397 = vmatprep.subr.bf16.mxu0 0
      %5398 = vmatpush2.bf16.msra.mxu0 %v5333
      %5399 = vmatprep.subr.bf16.mxu0 0
      %5400 = vmatpush2.bf16.msra.mxu0 %v5332
      %5401 = vmatprep.subr.bf16.mxu0 0
      %5402 = vmatpush2.bf16.msra.mxu0 %v5331
      %5403 = vmatprep.mubr.bf16.mxu0 %v4863
      %5404 = vmatmul.mubr.bf16.gmra.mxu0 %v4862
      %v5405 = vpop.f32.mrf.mxu0
      %v5406 = vadd.f32 0.0, %v5405
      %v5407 = vpop.f32.mrf.mxu0
      %v5408 = vpop.f32.mrf.mxu0
      %v5409 = vadd.f32 0.0, %v5408
      %v5410 = vpop.f32.mrf.mxu0
      %5411 = vmatprep.mubr.bf16.mxu0 %v4866
      %5412 = vmatmul.mubr.bf16.gmra.mxu0 %v4865
      %v5413 = vpop.f32.mrf.mxu0
      %v5414 = vadd.f32 0.0, %v5413
      %v5415 = vpop.f32.mrf.mxu0
      %v5416 = vpop.f32.mrf.mxu0
      %v5417 = vadd.f32 0.0, %v5416
      %v5418 = vpop.f32.mrf.mxu0
      %5419 = vmatprep.mubr.bf16.mxu0 %v4869
      %5420 = vmatmul.mubr.bf16.gmra.mxu0 %v4868
      %v5421 = vpop.f32.mrf.mxu0
      %v5422 = vadd.f32 0.0, %v5421
      %v5423 = vpop.f32.mrf.mxu0
      %v5424 = vpop.f32.mrf.mxu0
      %v5425 = vadd.f32 0.0, %v5424
      %v5426 = vpop.f32.mrf.mxu0
      %5427 = vmatprep.mubr.bf16.mxu0 %v5222
      %5428 = vmatmul.mubr.bf16.gmra.mxu0 %v5221
      %v5429 = vpop.f32.mrf.mxu0
      %v5430 = vadd.f32 0.0, %v5429
      %v5431 = vpop.f32.mrf.mxu0
      %v5432 = vpop.f32.mrf.mxu0
      %v5433 = vadd.f32 0.0, %v5432
      %v5434 = vpop.f32.mrf.mxu0
      %5435 = vdwg.mxu0
      %5436 = vmatprep.subr.bf16.mxu0 0
      %5437 = vmatpush1.bf16.msra.mxu0 %v5346
      %5438 = vmatprep.subr.bf16.mxu0 0
      %5439 = vmatpush1.bf16.msra.mxu0 %v5345
      %5440 = vmatprep.subr.bf16.mxu0 0
      %5441 = vmatpush1.bf16.msra.mxu0 %v5344
      %5442 = vmatprep.subr.bf16.mxu0 0
      %5443 = vmatpush1.bf16.msra.mxu0 %v5343
      %5444 = vmatprep.subr.bf16.mxu0 0
      %5445 = vmatpush1.bf16.msra.mxu0 %v5342
      %5446 = vmatprep.subr.bf16.mxu0 0
      %5447 = vmatpush1.bf16.msra.mxu0 %v5341
      %5448 = vmatprep.subr.bf16.mxu0 0
      %5449 = vmatpush1.bf16.msra.mxu0 %v5340
      %5450 = vmatprep.subr.bf16.mxu0 0
      %5451 = vmatpush1.bf16.msra.mxu0 %v5339
      %5452 = vmatprep.subr.bf16.mxu0 0
      %5453 = vmatpush2.bf16.msra.mxu0 0
      %5454 = vmatprep.subr.bf16.mxu0 0
      %5455 = vmatpush2.bf16.msra.mxu0 0
      %5456 = vmatprep.subr.bf16.mxu0 0
      %5457 = vmatpush2.bf16.msra.mxu0 0
      %5458 = vmatprep.subr.bf16.mxu0 0
      %5459 = vmatpush2.bf16.msra.mxu0 0
      %5460 = vmatprep.subr.bf16.mxu0 0
      %5461 = vmatpush2.bf16.msra.mxu0 0
      %5462 = vmatprep.subr.bf16.mxu0 0
      %5463 = vmatpush2.bf16.msra.mxu0 0
      %5464 = vmatprep.subr.bf16.mxu0 0
      %5465 = vmatpush2.bf16.msra.mxu0 0
      %5466 = vmatprep.subr.bf16.mxu0 0
      %5467 = vmatpush2.bf16.msra.mxu0 0
      %5468 = vmatprep.mubr.bf16.mxu0 0
      %5469 = vmatmul.mubr.bf16.gmra.mxu0 %v4864
      %v5470 = vpop.f32.mrf.mxu0
      %v5471 = vadd.f32 %v5406, %v5470
      %v5472 = vpop.f32.mrf.mxu0
      %v5473 = vpop.f32.mrf.mxu0
      %v5474 = vadd.f32 %v5409, %v5473
      %v5475 = vpop.f32.mrf.mxu0
      %5476 = vmatprep.mubr.bf16.mxu0 0
      %5477 = vmatmul.mubr.bf16.gmra.mxu0 %v4867
      %v5478 = vpop.f32.mrf.mxu0
      %v5479 = vadd.f32 %v5414, %v5478
      %v5480 = vpop.f32.mrf.mxu0
      %v5481 = vpop.f32.mrf.mxu0
      %v5482 = vadd.f32 %v5417, %v5481
      %v5483 = vpop.f32.mrf.mxu0
      %5484 = vmatprep.mubr.bf16.mxu0 0
      %5485 = vmatmul.mubr.bf16.gmra.mxu0 %v4870
      %v5486 = vpop.f32.mrf.mxu0
      %v5487 = vadd.f32 %v5422, %v5486
      %v5488 = vpop.f32.mrf.mxu0
      %v5489 = vpop.f32.mrf.mxu0
      %v5490 = vadd.f32 %v5425, %v5489
      %v5491 = vpop.f32.mrf.mxu0
      %5492 = vmatprep.mubr.bf16.mxu0 0
      %5493 = vmatmul.mubr.bf16.gmra.mxu0 %v5223
      %v5494 = vpop.f32.mrf.mxu0
      %v5495 = vadd.f32 %v5430, %v5494
      %v5496 = vpop.f32.mrf.mxu0
      %v5497 = vpop.f32.mrf.mxu0
      %v5498 = vadd.f32 %v5433, %v5497
      %v5499 = vpop.f32.mrf.mxu0
      %5500 = vdwg.mxu0
      %v5501 = vadd.f32 %v5127, %v5471
      %v5502 = vadd.f32 %v5130, %v5474
      %v5503 = vadd.f32 %v5135, %v5479
      %v5504 = vadd.f32 %v5138, %v5482
      %v5505 = vadd.f32 %v5143, %v5487
      %v5506 = vadd.f32 %v5146, %v5490
      %v5507 = vadd.f32 %v5151, %v5495
      %v5508 = vadd.f32 %v5154, %v5498
      %s5509 = sadd.s32 %s4293, 1
      %p5510 = scmp.lt.s32.totalorder %s5509, 0
      %s5511 = ssub.s32 0, %s5509
      %s5512 = scalar_select %p5510, %s5511, %s5509
      %s5513 = sand.u32 %s5512, 3
      %s5514 = ssub.s32 0, %s5513
      %s5515 = scalar_select %p5510, %s5514, %s5513
      %p5516 = scmp.ne.s32.totalorder %s5515, 0
      %p5517 = scmp.lt.s32.totalorder %s5515, 0
      %p5518 = pnand %p5517, %p5516
      %p5519 = pneg %p5518
      %s5520 = sadd.s32 %s5515, 4
      %s5521 = scalar_select %p5519, %s5520, %s5515
      %s5522 = smul.u32 %s5521, 20
      %s5523 = smul.addr %s5522, 4
      %s5524 = scalar_lea.vmem [#allocation2], %s5523
      %v5525 = vld [vmem:[%s5524] sm:$0xf]
      %v5526 = vld [vmem:[%s5524 + $0x4] sm:$0x1]
      %v5527 = vld [vmem:[%s5524 + $0x8] sm:$0xf]
      %v5528 = vld [vmem:[%s5524 + $0xc] sm:$0x1]
      %v5529 = vld [vmem:[%s5524 + $0x10] sm:$0xf]
      %v5530 = vld [vmem:[%s5524 + $0x14] sm:$0x1]
      %v5531 = vld [vmem:[%s5524 + $0x18] sm:$0xf]
      %v5532 = vld [vmem:[%s5524 + $0x1c] sm:$0x1]
      %v5533 = vld [vmem:[%s5524 + $0x20] sm:$0xf]
      %v5534 = vld [vmem:[%s5524 + $0x24] sm:$0x1]
      %v5535 = vld [vmem:[%s5524 + $0x28] sm:$0xf]
      %v5536 = vld [vmem:[%s5524 + $0x2c] sm:$0x1]
      %v5537 = vld [vmem:[%s5524 + $0x30] sm:$0xf]
      %v5538 = vld [vmem:[%s5524 + $0x34] sm:$0x1]
      %v5539 = vld [vmem:[%s5524 + $0x38] sm:$0xf]
      %v5540 = vld [vmem:[%s5524 + $0x3c] sm:$0x1]
      %v5541 = vld [vmem:[%s5524 + $0x40] sm:$0xf]
      %v5542 = vld [vmem:[%s5524 + $0x44] sm:$0x1]
      %v5543 = vld [vmem:[%s5524 + $0x48] sm:$0xf]
      %v5544 = vld [vmem:[%s5524 + $0x4c] sm:$0x1]
      %v5561 = vunpack.c.l.b16 %v5525
      %v5562 = vunpack.c.l.b16 %v5526
      %v5563 = vunpack.c.l.b16 %v5527
      %v5564 = vunpack.c.l.b16 %v5528
      %v5565 = vunpack.c.l.b16 %v5529
      %v5566 = vunpack.c.l.b16 %v5530
      %v5567 = vunpack.c.l.b16 %v5531
      %v5568 = vunpack.c.l.b16 %v5532
      %v5569 = vunpack.c.l.b16 %v5533
      %v5570 = vunpack.c.l.b16 %v5534
      %v5571 = vunpack.c.l.b16 %v5535
      %v5572 = vunpack.c.l.b16 %v5536
      %v5573 = vunpack.c.l.b16 %v5537
      %v5574 = vunpack.c.l.b16 %v5538
      %v5575 = vunpack.c.l.b16 %v5539
      %v5576 = vunpack.c.l.b16 %v5540
      %v5577 = vpack.c.b16 %v5562, %v5561
      %v5578 = vpack.c.b16 %v5564, %v5563
      %v5579 = vpack.c.b16 %v5566, %v5565
      %v5580 = vpack.c.b16 %v5568, %v5567
      %v5581 = vpack.c.b16 %v5570, %v5569
      %v5582 = vpack.c.b16 %v5572, %v5571
      %v5583 = vpack.c.b16 %v5574, %v5573
      %v5584 = vpack.c.b16 %v5576, %v5575
      %v5586 = vshrl.u32 %v5577, 16
      %v5588 = vshll.u32 %v5577, 16
      %v5590 = vrot.slane %v5588, 1
      %v5591 = vor.u32 %v5586, %v5590
      %v5593 = vshrl.u32 %v5578, 16
      %v5595 = vshll.u32 %v5578, 16
      %v5597 = vrot.slane %v5595, 1
      %v5598 = vor.u32 %v5593, %v5597
      %v5600 = vshrl.u32 %v5579, 16
      %v5602 = vshll.u32 %v5579, 16
      %v5604 = vrot.slane %v5602, 1
      %v5605 = vor.u32 %v5600, %v5604
      %v5607 = vshrl.u32 %v5580, 16
      %v5609 = vshll.u32 %v5580, 16
      %v5611 = vrot.slane %v5609, 1
      %v5612 = vor.u32 %v5607, %v5611
      %v5614 = vshrl.u32 %v5581, 16
      %v5616 = vshll.u32 %v5581, 16
      %v5618 = vrot.slane %v5616, 1
      %v5619 = vor.u32 %v5614, %v5618
      %v5621 = vshrl.u32 %v5582, 16
      %v5623 = vshll.u32 %v5582, 16
      %v5625 = vrot.slane %v5623, 1
      %v5626 = vor.u32 %v5621, %v5625
      %v5628 = vshrl.u32 %v5583, 16
      %v5630 = vshll.u32 %v5583, 16
      %v5632 = vrot.slane %v5630, 1
      %v5633 = vor.u32 %v5628, %v5632
      %v5635 = vshrl.u32 %v5584, 16
      %v5637 = vshll.u32 %v5584, 16
      %v5639 = vrot.slane %v5637, 1
      %v5640 = vor.u32 %v5635, %v5639
      %v5641 = vrot.slane %v5577, 1
      %v5642 = vrot.slane %v5578, 1
      %v5643 = vrot.slane %v5579, 1
      %v5644 = vrot.slane %v5580, 1
      %v5645 = vrot.slane %v5581, 1
      %v5646 = vrot.slane %v5582, 1
      %v5647 = vrot.slane %v5583, 1
      %v5648 = vrot.slane %v5584, 1
      %v5649 = vunpack.c.l.b16 %v5591
      %v5650 = vunpack.c.l.b16 %v5641
      %v5651 = vunpack.c.l.b16 %v5598
      %v5652 = vunpack.c.l.b16 %v5642
      %v5653 = vunpack.c.l.b16 %v5605
      %v5654 = vunpack.c.l.b16 %v5643
      %v5655 = vunpack.c.l.b16 %v5612
      %v5656 = vunpack.c.l.b16 %v5644
      %v5657 = vunpack.c.l.b16 %v5619
      %v5658 = vunpack.c.l.b16 %v5645
      %v5659 = vunpack.c.l.b16 %v5626
      %v5660 = vunpack.c.l.b16 %v5646
      %v5661 = vunpack.c.l.b16 %v5633
      %v5662 = vunpack.c.l.b16 %v5647
      %v5663 = vunpack.c.l.b16 %v5640
      %v5664 = vunpack.c.l.b16 %v5648
      %s5665 = scalar_lea.vmem %s5, 576
      %v5666 = vld [vmem:[%s5665] sm:$0xf]
      %v5667 = vld [vmem:[%s5665 + $0x4] sm:$0xf]
      %v5668 = vld [vmem:[%s5665 + $0x8] sm:$0xf]
      %v5669 = vld [vmem:[%s5665 + $0xc] sm:$0xf]
      %v5670 = vld [vmem:[%s5665 + $0x10] sm:$0xf]
      %v5671 = vld [vmem:[%s5665 + $0x14] sm:$0xf]
      %v5672 = vld [vmem:[%s5665 + $0x18] sm:$0xf]
      %v5673 = vld [vmem:[%s5665 + $0x1c] sm:$0xf]
      %v5674 = vld [vmem:[%s5665 + $0x20] sm:$0xf]
      %v5675 = vld [vmem:[%s5665 + $0x24] sm:$0xf]
      %v5676 = vld [vmem:[%s5665 + $0x28] sm:$0xf]
      %v5677 = vld [vmem:[%s5665 + $0x2c] sm:$0xf]
      %v5678 = vld [vmem:[%s5665 + $0x30] sm:$0xf]
      %v5679 = vld [vmem:[%s5665 + $0x34] sm:$0xf]
      %v5680 = vld [vmem:[%s5665 + $0x38] sm:$0xf]
      %v5681 = vld [vmem:[%s5665 + $0x3c] sm:$0xf]
      %v5682 = vld [vmem:[%s5665 + $0x40] sm:$0xf]
      %v5683 = vld [vmem:[%s5665 + $0x44] sm:$0xf]
      %v5684 = vld [vmem:[%s5665 + $0x48] sm:$0xf]
      %v5685 = vld [vmem:[%s5665 + $0x4c] sm:$0xf]
      %v5686 = vld [vmem:[%s5665 + $0x50] sm:$0xf]
      %v5687 = vld [vmem:[%s5665 + $0x54] sm:$0xf]
      %v5688 = vld [vmem:[%s5665 + $0x58] sm:$0xf]
      %v5689 = vld [vmem:[%s5665 + $0x5c] sm:$0xf]
      %v5690 = vld [vmem:[%s5665 + $0x60] sm:$0xf]
      %v5691 = vld [vmem:[%s5665 + $0x64] sm:$0xf]
      %v5692 = vld [vmem:[%s5665 + $0x68] sm:$0xf]
      %v5693 = vld [vmem:[%s5665 + $0x6c] sm:$0xf]
      %v5694 = vld [vmem:[%s5665 + $0x70] sm:$0xf]
      %v5695 = vld [vmem:[%s5665 + $0x74] sm:$0xf]
      %v5696 = vld [vmem:[%s5665 + $0x78] sm:$0xf]
      %v5697 = vld [vmem:[%s5665 + $0x7c] sm:$0xf]
      %v5698 = vld [vmem:[%s5665 + $0x80] sm:$0xf]
      %v5699 = vld [vmem:[%s5665 + $0x84] sm:$0xf]
      %v5700 = vld [vmem:[%s5665 + $0x88] sm:$0xf]
      %v5701 = vld [vmem:[%s5665 + $0x8c] sm:$0xf]
      %v5702 = vld [vmem:[%s5665 + $0x90] sm:$0xf]
      %v5703 = vld [vmem:[%s5665 + $0x94] sm:$0xf]
      %v5704 = vld [vmem:[%s5665 + $0x98] sm:$0xf]
      %v5705 = vld [vmem:[%s5665 + $0x9c] sm:$0xf]
      %v5706 = vld [vmem:[%s5665 + $0xa0] sm:$0xf]
      %v5707 = vld [vmem:[%s5665 + $0xa4] sm:$0xf]
      %v5708 = vld [vmem:[%s5665 + $0xa8] sm:$0xf]
      %v5709 = vld [vmem:[%s5665 + $0xac] sm:$0xf]
      %v5710 = vld [vmem:[%s5665 + $0xb0] sm:$0xf]
      %v5711 = vld [vmem:[%s5665 + $0xb4] sm:$0xf]
      %v5712 = vld [vmem:[%s5665 + $0xb8] sm:$0xf]
      %v5713 = vld [vmem:[%s5665 + $0xbc] sm:$0xf]
      %v5714 = vpack.c.b16 %v5563, %v5561
      %v5715 = vpack.c.b16 %v5651, %v5649
      %v5716 = vpack.c.b16 %v5652, %v5650
      %v5717 = vpack.c.b16 %v5567, %v5565
      %v5718 = vpack.c.b16 %v5655, %v5653
      %v5719 = vpack.c.b16 %v5656, %v5654
      %v5720 = vpack.c.b16 %v5571, %v5569
      %v5721 = vpack.c.b16 %v5659, %v5657
      %v5722 = vpack.c.b16 %v5660, %v5658
      %v5723 = vpack.c.b16 %v5575, %v5573
      %v5724 = vpack.c.b16 %v5663, %v5661
      %v5725 = vpack.c.b16 %v5664, %v5662
      %v5786 = vunpack.c.l.b16 %v5666
      %v5787 = vunpack.c.l.b16 %v5667
      %v5788 = vunpack.c.l.b16 %v5668
      %v5789 = vunpack.c.l.b16 %v5669
      %v5790 = vunpack.c.l.b16 %v5670
      %v5791 = vunpack.c.l.b16 %v5671
      %v5792 = vunpack.c.l.b16 %v5672
      %v5793 = vunpack.c.l.b16 %v5673
      %v5794 = vunpack.c.l.b16 %v5674
      %v5795 = vunpack.c.l.b16 %v5675
      %v5796 = vunpack.c.l.b16 %v5676
      %v5797 = vunpack.c.l.b16 %v5677
      %v5798 = vunpack.c.l.b16 %v5678
      %v5799 = vunpack.c.l.b16 %v5679
      %v5800 = vunpack.c.l.b16 %v5680
      %v5801 = vunpack.c.l.b16 %v5681
      %v5802 = vunpack.c.l.b16 %v5682
      %v5803 = vunpack.c.l.b16 %v5683
      %v5804 = vunpack.c.l.b16 %v5684
      %v5805 = vunpack.c.l.b16 %v5685
      %v5806 = vunpack.c.l.b16 %v5686
      %v5807 = vunpack.c.l.b16 %v5687
      %v5808 = vunpack.c.l.b16 %v5688
      %v5809 = vunpack.c.l.b16 %v5689
      %v5810 = vunpack.c.l.b16 %v5690
      %v5811 = vunpack.c.l.b16 %v5691
      %v5812 = vunpack.c.l.b16 %v5692
      %v5813 = vunpack.c.l.b16 %v5693
      %v5814 = vunpack.c.l.b16 %v5694
      %v5815 = vunpack.c.l.b16 %v5695
      %v5816 = vunpack.c.l.b16 %v5696
      %v5817 = vunpack.c.l.b16 %v5697
      %v5818 = vunpack.c.l.b16 %v5698
      %v5819 = vunpack.c.l.b16 %v5699
      %v5820 = vunpack.c.l.b16 %v5700
      %v5821 = vunpack.c.l.b16 %v5701
      %v5822 = vunpack.c.l.b16 %v5702
      %v5823 = vunpack.c.l.b16 %v5703
      %v5824 = vunpack.c.l.b16 %v5704
      %v5825 = vunpack.c.l.b16 %v5705
      %v5826 = vunpack.c.l.b16 %v5706
      %v5827 = vunpack.c.l.b16 %v5707
      %v5828 = vunpack.c.l.b16 %v5708
      %v5829 = vunpack.c.l.b16 %v5709
      %v5830 = vunpack.c.l.b16 %v5710
      %v5831 = vunpack.c.l.b16 %v5711
      %v5832 = vunpack.c.l.b16 %v5712
      %v5833 = vunpack.c.l.b16 %v5713
      %v5834 = vpack.c.b16 %v5787, %v5786
      %v5835 = vpack.c.b16 %v5789, %v5788
      %v5836 = vpack.c.b16 %v5791, %v5790
      %v5837 = vpack.c.b16 %v5793, %v5792
      %v5838 = vpack.c.b16 %v5795, %v5794
      %v5839 = vpack.c.b16 %v5797, %v5796
      %v5840 = vpack.c.b16 %v5799, %v5798
      %v5841 = vpack.c.b16 %v5801, %v5800
      %v5842 = vpack.c.b16 %v5803, %v5802
      %v5843 = vpack.c.b16 %v5805, %v5804
      %v5844 = vpack.c.b16 %v5807, %v5806
      %v5845 = vpack.c.b16 %v5809, %v5808
      %v5846 = vpack.c.b16 %v5811, %v5810
      %v5847 = vpack.c.b16 %v5813, %v5812
      %v5848 = vpack.c.b16 %v5815, %v5814
      %v5849 = vpack.c.b16 %v5817, %v5816
      %v5850 = vpack.c.b16 %v5819, %v5818
      %v5851 = vpack.c.b16 %v5821, %v5820
      %v5852 = vpack.c.b16 %v5823, %v5822
      %v5853 = vpack.c.b16 %v5825, %v5824
      %v5854 = vpack.c.b16 %v5827, %v5826
      %v5855 = vpack.c.b16 %v5829, %v5828
      %v5856 = vpack.c.b16 %v5831, %v5830
      %v5857 = vpack.c.b16 %v5833, %v5832
      %5882 = vmatprep.subr.bf16.mxu0 0
      %5883 = vmatpush1.bf16.msra.mxu0 %v5841
      %5884 = vmatprep.subr.bf16.mxu0 0
      %5885 = vmatpush1.bf16.msra.mxu0 %v5840
      %5886 = vmatprep.subr.bf16.mxu0 0
      %5887 = vmatpush1.bf16.msra.mxu0 %v5839
      %5888 = vmatprep.subr.bf16.mxu0 0
      %5889 = vmatpush1.bf16.msra.mxu0 %v5838
      %5890 = vmatprep.subr.bf16.mxu0 0
      %5891 = vmatpush1.bf16.msra.mxu0 %v5837
      %5892 = vmatprep.subr.bf16.mxu0 0
      %5893 = vmatpush1.bf16.msra.mxu0 %v5836
      %5894 = vmatprep.subr.bf16.mxu0 0
      %5895 = vmatpush1.bf16.msra.mxu0 %v5835
      %5896 = vmatprep.subr.bf16.mxu0 0
      %5897 = vmatpush1.bf16.msra.mxu0 %v5834
      %5898 = vmatprep.subr.bf16.mxu0 0
      %5899 = vmatpush2.bf16.msra.mxu0 %v5849
      %5900 = vmatprep.subr.bf16.mxu0 0
      %5901 = vmatpush2.bf16.msra.mxu0 %v5848
      %5902 = vmatprep.subr.bf16.mxu0 0
      %5903 = vmatpush2.bf16.msra.mxu0 %v5847
      %5904 = vmatprep.subr.bf16.mxu0 0
      %5905 = vmatpush2.bf16.msra.mxu0 %v5846
      %5906 = vmatprep.subr.bf16.mxu0 0
      %5907 = vmatpush2.bf16.msra.mxu0 %v5845
      %5908 = vmatprep.subr.bf16.mxu0 0
      %5909 = vmatpush2.bf16.msra.mxu0 %v5844
      %5910 = vmatprep.subr.bf16.mxu0 0
      %5911 = vmatpush2.bf16.msra.mxu0 %v5843
      %5912 = vmatprep.subr.bf16.mxu0 0
      %5913 = vmatpush2.bf16.msra.mxu0 %v5842
      %5914 = vmatprep.mubr.bf16.mxu0 %v5715
      %5915 = vmatmul.mubr.bf16.gmra.mxu0 %v5714
      %v5916 = vpop.f32.mrf.mxu0
      %v5917 = vadd.f32 0.0, %v5916
      %v5918 = vpop.f32.mrf.mxu0
      %v5919 = vpop.f32.mrf.mxu0
      %v5920 = vadd.f32 0.0, %v5919
      %v5921 = vpop.f32.mrf.mxu0
      %5922 = vmatprep.mubr.bf16.mxu0 %v5718
      %5923 = vmatmul.mubr.bf16.gmra.mxu0 %v5717
      %v5924 = vpop.f32.mrf.mxu0
      %v5925 = vadd.f32 0.0, %v5924
      %v5926 = vpop.f32.mrf.mxu0
      %v5927 = vpop.f32.mrf.mxu0
      %v5928 = vadd.f32 0.0, %v5927
      %v5929 = vpop.f32.mrf.mxu0
      %5930 = vmatprep.mubr.bf16.mxu0 %v5721
      %5931 = vmatmul.mubr.bf16.gmra.mxu0 %v5720
      %v5932 = vpop.f32.mrf.mxu0
      %v5933 = vadd.f32 0.0, %v5932
      %v5934 = vpop.f32.mrf.mxu0
      %v5935 = vpop.f32.mrf.mxu0
      %v5936 = vadd.f32 0.0, %v5935
      %v5937 = vpop.f32.mrf.mxu0
      %5938 = vmatprep.mubr.bf16.mxu0 %v5724
      %5939 = vmatmul.mubr.bf16.gmra.mxu0 %v5723
      %v5940 = vpop.f32.mrf.mxu0
      %v5941 = vadd.f32 0.0, %v5940
      %v5942 = vpop.f32.mrf.mxu0
      %v5943 = vpop.f32.mrf.mxu0
      %v5944 = vadd.f32 0.0, %v5943
      %v5945 = vpop.f32.mrf.mxu0
      %5946 = vdwg.mxu0
      %5947 = vmatprep.subr.bf16.mxu0 0
      %5948 = vmatpush1.bf16.msra.mxu0 %v5857
      %5949 = vmatprep.subr.bf16.mxu0 0
      %5950 = vmatpush1.bf16.msra.mxu0 %v5856
      %5951 = vmatprep.subr.bf16.mxu0 0
      %5952 = vmatpush1.bf16.msra.mxu0 %v5855
      %5953 = vmatprep.subr.bf16.mxu0 0
      %5954 = vmatpush1.bf16.msra.mxu0 %v5854
      %5955 = vmatprep.subr.bf16.mxu0 0
      %5956 = vmatpush1.bf16.msra.mxu0 %v5853
      %5957 = vmatprep.subr.bf16.mxu0 0
      %5958 = vmatpush1.bf16.msra.mxu0 %v5852
      %5959 = vmatprep.subr.bf16.mxu0 0
      %5960 = vmatpush1.bf16.msra.mxu0 %v5851
      %5961 = vmatprep.subr.bf16.mxu0 0
      %5962 = vmatpush1.bf16.msra.mxu0 %v5850
      %5963 = vmatprep.subr.bf16.mxu0 0
      %5964 = vmatpush2.bf16.msra.mxu0 0
      %5965 = vmatprep.subr.bf16.mxu0 0
      %5966 = vmatpush2.bf16.msra.mxu0 0
      %5967 = vmatprep.subr.bf16.mxu0 0
      %5968 = vmatpush2.bf16.msra.mxu0 0
      %5969 = vmatprep.subr.bf16.mxu0 0
      %5970 = vmatpush2.bf16.msra.mxu0 0
      %5971 = vmatprep.subr.bf16.mxu0 0
      %5972 = vmatpush2.bf16.msra.mxu0 0
      %5973 = vmatprep.subr.bf16.mxu0 0
      %5974 = vmatpush2.bf16.msra.mxu0 0
      %5975 = vmatprep.subr.bf16.mxu0 0
      %5976 = vmatpush2.bf16.msra.mxu0 0
      %5977 = vmatprep.subr.bf16.mxu0 0
      %5978 = vmatpush2.bf16.msra.mxu0 0
      %5979 = vmatprep.mubr.bf16.mxu0 0
      %5980 = vmatmul.mubr.bf16.gmra.mxu0 %v5716
      %v5981 = vpop.f32.mrf.mxu0
      %v5982 = vadd.f32 %v5917, %v5981
      %v5983 = vpop.f32.mrf.mxu0
      %v5984 = vpop.f32.mrf.mxu0
      %v5985 = vadd.f32 %v5920, %v5984
      %v5986 = vpop.f32.mrf.mxu0
      %5987 = vmatprep.mubr.bf16.mxu0 0
      %5988 = vmatmul.mubr.bf16.gmra.mxu0 %v5719
      %v5989 = vpop.f32.mrf.mxu0
      %v5990 = vadd.f32 %v5925, %v5989
      %v5991 = vpop.f32.mrf.mxu0
      %v5992 = vpop.f32.mrf.mxu0
      %v5993 = vadd.f32 %v5928, %v5992
      %v5994 = vpop.f32.mrf.mxu0
      %5995 = vmatprep.mubr.bf16.mxu0 0
      %5996 = vmatmul.mubr.bf16.gmra.mxu0 %v5722
      %v5997 = vpop.f32.mrf.mxu0
      %v5998 = vadd.f32 %v5933, %v5997
      %v5999 = vpop.f32.mrf.mxu0
      %v6000 = vpop.f32.mrf.mxu0
      %v6001 = vadd.f32 %v5936, %v6000
      %v6002 = vpop.f32.mrf.mxu0
      %6003 = vmatprep.mubr.bf16.mxu0 0
      %6004 = vmatmul.mubr.bf16.gmra.mxu0 %v5725
      %v6005 = vpop.f32.mrf.mxu0
      %v6006 = vadd.f32 %v5941, %v6005
      %v6007 = vpop.f32.mrf.mxu0
      %v6008 = vpop.f32.mrf.mxu0
      %v6009 = vadd.f32 %v5944, %v6008
      %v6010 = vpop.f32.mrf.mxu0
      %6011 = vdwg.mxu0
      %v6012 = vadd.f32 %v5501, %v5982
      %v6013 = vadd.f32 %v5502, %v5985
      %v6014 = vadd.f32 %v5503, %v5990
      %v6015 = vadd.f32 %v5504, %v5993
      %v6016 = vadd.f32 %v5505, %v5998
      %v6017 = vadd.f32 %v5506, %v6001
      %v6018 = vadd.f32 %v5507, %v6006
      %v6019 = vadd.f32 %v5508, %v6009
      %v6022 = vunpack.c.l.b16 %v5541
      %v6023 = vunpack.c.l.b16 %v5542
      %v6024 = vpack.c.b16 %v6023, %v6022
      %v6026 = vshrl.u32 %v6024, 16
      %v6028 = vshll.u32 %v6024, 16
      %v6030 = vrot.slane %v6028, 1
      %v6031 = vor.u32 %v6026, %v6030
      %v6032 = vrot.slane %v6024, 1
      %v6033 = vunpack.c.l.b16 %v6031
      %v6034 = vunpack.c.l.b16 %v6032
      %s6035 = scalar_lea.vmem %s5, 768
      %v6036 = vld [vmem:[%s6035] sm:$0xf]
      %v6037 = vld [vmem:[%s6035 + $0x4] sm:$0xf]
      %v6038 = vld [vmem:[%s6035 + $0x8] sm:$0xf]
      %v6039 = vld [vmem:[%s6035 + $0xc] sm:$0xf]
      %v6040 = vld [vmem:[%s6035 + $0x10] sm:$0xf]
      %v6041 = vld [vmem:[%s6035 + $0x14] sm:$0xf]
      %v6042 = vld [vmem:[%s6035 + $0x18] sm:$0xf]
      %v6043 = vld [vmem:[%s6035 + $0x1c] sm:$0xf]
      %v6044 = vld [vmem:[%s6035 + $0x20] sm:$0xf]
      %v6045 = vld [vmem:[%s6035 + $0x24] sm:$0xf]
      %v6046 = vld [vmem:[%s6035 + $0x28] sm:$0xf]
      %v6047 = vld [vmem:[%s6035 + $0x2c] sm:$0xf]
      %v6048 = vld [vmem:[%s6035 + $0x30] sm:$0xf]
      %v6049 = vld [vmem:[%s6035 + $0x34] sm:$0xf]
      %v6050 = vld [vmem:[%s6035 + $0x38] sm:$0xf]
      %v6051 = vld [vmem:[%s6035 + $0x3c] sm:$0xf]
      %v6052 = vld [vmem:[%s6035 + $0x40] sm:$0xf]
      %v6053 = vld [vmem:[%s6035 + $0x44] sm:$0xf]
      %v6054 = vld [vmem:[%s6035 + $0x48] sm:$0xf]
      %v6055 = vld [vmem:[%s6035 + $0x4c] sm:$0xf]
      %v6056 = vld [vmem:[%s6035 + $0x50] sm:$0xf]
      %v6057 = vld [vmem:[%s6035 + $0x54] sm:$0xf]
      %v6058 = vld [vmem:[%s6035 + $0x58] sm:$0xf]
      %v6059 = vld [vmem:[%s6035 + $0x5c] sm:$0xf]
      %v6060 = vld [vmem:[%s6035 + $0x60] sm:$0xf]
      %v6061 = vld [vmem:[%s6035 + $0x64] sm:$0xf]
      %v6062 = vld [vmem:[%s6035 + $0x68] sm:$0xf]
      %v6063 = vld [vmem:[%s6035 + $0x6c] sm:$0xf]
      %v6064 = vld [vmem:[%s6035 + $0x70] sm:$0xf]
      %v6065 = vld [vmem:[%s6035 + $0x74] sm:$0xf]
      %v6066 = vld [vmem:[%s6035 + $0x78] sm:$0xf]
      %v6067 = vld [vmem:[%s6035 + $0x7c] sm:$0xf]
      %v6068 = vld [vmem:[%s6035 + $0x80] sm:$0xf]
      %v6069 = vld [vmem:[%s6035 + $0x84] sm:$0xf]
      %v6070 = vld [vmem:[%s6035 + $0x88] sm:$0xf]
      %v6071 = vld [vmem:[%s6035 + $0x8c] sm:$0xf]
      %v6072 = vld [vmem:[%s6035 + $0x90] sm:$0xf]
      %v6073 = vld [vmem:[%s6035 + $0x94] sm:$0xf]
      %v6074 = vld [vmem:[%s6035 + $0x98] sm:$0xf]
      %v6075 = vld [vmem:[%s6035 + $0x9c] sm:$0xf]
      %v6076 = vld [vmem:[%s6035 + $0xa0] sm:$0xf]
      %v6077 = vld [vmem:[%s6035 + $0xa4] sm:$0xf]
      %v6078 = vld [vmem:[%s6035 + $0xa8] sm:$0xf]
      %v6079 = vld [vmem:[%s6035 + $0xac] sm:$0xf]
      %v6080 = vld [vmem:[%s6035 + $0xb0] sm:$0xf]
      %v6081 = vld [vmem:[%s6035 + $0xb4] sm:$0xf]
      %v6082 = vld [vmem:[%s6035 + $0xb8] sm:$0xf]
      %v6083 = vld [vmem:[%s6035 + $0xbc] sm:$0xf]
      %v6084 = vpack.c.b16 %v5565, %v5563
      %v6085 = vpack.c.b16 %v5653, %v5651
      %v6086 = vpack.c.b16 %v5654, %v5652
      %v6087 = vpack.c.b16 %v5569, %v5567
      %v6088 = vpack.c.b16 %v5657, %v5655
      %v6089 = vpack.c.b16 %v5658, %v5656
      %v6090 = vpack.c.b16 %v5573, %v5571
      %v6091 = vpack.c.b16 %v5661, %v5659
      %v6092 = vpack.c.b16 %v5662, %v5660
      %v6093 = vpack.c.b16 %v6022, %v5575
      %v6094 = vpack.c.b16 %v6033, %v5663
      %v6095 = vpack.c.b16 %v6034, %v5664
      %v6156 = vunpack.c.l.b16 %v6036
      %v6157 = vunpack.c.l.b16 %v6037
      %v6158 = vunpack.c.l.b16 %v6038
      %v6159 = vunpack.c.l.b16 %v6039
      %v6160 = vunpack.c.l.b16 %v6040
      %v6161 = vunpack.c.l.b16 %v6041
      %v6162 = vunpack.c.l.b16 %v6042
      %v6163 = vunpack.c.l.b16 %v6043
      %v6164 = vunpack.c.l.b16 %v6044
      %v6165 = vunpack.c.l.b16 %v6045
      %v6166 = vunpack.c.l.b16 %v6046
      %v6167 = vunpack.c.l.b16 %v6047
      %v6168 = vunpack.c.l.b16 %v6048
      %v6169 = vunpack.c.l.b16 %v6049
      %v6170 = vunpack.c.l.b16 %v6050
      %v6171 = vunpack.c.l.b16 %v6051
      %v6172 = vunpack.c.l.b16 %v6052
      %v6173 = vunpack.c.l.b16 %v6053
      %v6174 = vunpack.c.l.b16 %v6054
      %v6175 = vunpack.c.l.b16 %v6055
      %v6176 = vunpack.c.l.b16 %v6056
      %v6177 = vunpack.c.l.b16 %v6057
      %v6178 = vunpack.c.l.b16 %v6058
      %v6179 = vunpack.c.l.b16 %v6059
      %v6180 = vunpack.c.l.b16 %v6060
      %v6181 = vunpack.c.l.b16 %v6061
      %v6182 = vunpack.c.l.b16 %v6062
      %v6183 = vunpack.c.l.b16 %v6063
      %v6184 = vunpack.c.l.b16 %v6064
      %v6185 = vunpack.c.l.b16 %v6065
      %v6186 = vunpack.c.l.b16 %v6066
      %v6187 = vunpack.c.l.b16 %v6067
      %v6188 = vunpack.c.l.b16 %v6068
      %v6189 = vunpack.c.l.b16 %v6069
      %v6190 = vunpack.c.l.b16 %v6070
      %v6191 = vunpack.c.l.b16 %v6071
      %v6192 = vunpack.c.l.b16 %v6072
      %v6193 = vunpack.c.l.b16 %v6073
      %v6194 = vunpack.c.l.b16 %v6074
      %v6195 = vunpack.c.l.b16 %v6075
      %v6196 = vunpack.c.l.b16 %v6076
      %v6197 = vunpack.c.l.b16 %v6077
      %v6198 = vunpack.c.l.b16 %v6078
      %v6199 = vunpack.c.l.b16 %v6079
      %v6200 = vunpack.c.l.b16 %v6080
      %v6201 = vunpack.c.l.b16 %v6081
      %v6202 = vunpack.c.l.b16 %v6082
      %v6203 = vunpack.c.l.b16 %v6083
      %v6204 = vpack.c.b16 %v6157, %v6156
      %v6205 = vpack.c.b16 %v6159, %v6158
      %v6206 = vpack.c.b16 %v6161, %v6160
      %v6207 = vpack.c.b16 %v6163, %v6162
      %v6208 = vpack.c.b16 %v6165, %v6164
      %v6209 = vpack.c.b16 %v6167, %v6166
      %v6210 = vpack.c.b16 %v6169, %v6168
      %v6211 = vpack.c.b16 %v6171, %v6170
      %v6212 = vpack.c.b16 %v6173, %v6172
      %v6213 = vpack.c.b16 %v6175, %v6174
      %v6214 = vpack.c.b16 %v6177, %v6176
      %v6215 = vpack.c.b16 %v6179, %v6178
      %v6216 = vpack.c.b16 %v6181, %v6180
      %v6217 = vpack.c.b16 %v6183, %v6182
      %v6218 = vpack.c.b16 %v6185, %v6184
      %v6219 = vpack.c.b16 %v6187, %v6186
      %v6220 = vpack.c.b16 %v6189, %v6188
      %v6221 = vpack.c.b16 %v6191, %v6190
      %v6222 = vpack.c.b16 %v6193, %v6192
      %v6223 = vpack.c.b16 %v6195, %v6194
      %v6224 = vpack.c.b16 %v6197, %v6196
      %v6225 = vpack.c.b16 %v6199, %v6198
      %v6226 = vpack.c.b16 %v6201, %v6200
      %v6227 = vpack.c.b16 %v6203, %v6202
      %6252 = vmatprep.subr.bf16.mxu0 0
      %6253 = vmatpush1.bf16.msra.mxu0 %v6211
      %6254 = vmatprep.subr.bf16.mxu0 0
      %6255 = vmatpush1.bf16.msra.mxu0 %v6210
      %6256 = vmatprep.subr.bf16.mxu0 0
      %6257 = vmatpush1.bf16.msra.mxu0 %v6209
      %6258 = vmatprep.subr.bf16.mxu0 0
      %6259 = vmatpush1.bf16.msra.mxu0 %v6208
      %6260 = vmatprep.subr.bf16.mxu0 0
      %6261 = vmatpush1.bf16.msra.mxu0 %v6207
      %6262 = vmatprep.subr.bf16.mxu0 0
      %6263 = vmatpush1.bf16.msra.mxu0 %v6206
      %6264 = vmatprep.subr.bf16.mxu0 0
      %6265 = vmatpush1.bf16.msra.mxu0 %v6205
      %6266 = vmatprep.subr.bf16.mxu0 0
      %6267 = vmatpush1.bf16.msra.mxu0 %v6204
      %6268 = vmatprep.subr.bf16.mxu0 0
      %6269 = vmatpush2.bf16.msra.mxu0 %v6219
      %6270 = vmatprep.subr.bf16.mxu0 0
      %6271 = vmatpush2.bf16.msra.mxu0 %v6218
      %6272 = vmatprep.subr.bf16.mxu0 0
      %6273 = vmatpush2.bf16.msra.mxu0 %v6217
      %6274 = vmatprep.subr.bf16.mxu0 0
      %6275 = vmatpush2.bf16.msra.mxu0 %v6216
      %6276 = vmatprep.subr.bf16.mxu0 0
      %6277 = vmatpush2.bf16.msra.mxu0 %v6215
      %6278 = vmatprep.subr.bf16.mxu0 0
      %6279 = vmatpush2.bf16.msra.mxu0 %v6214
      %6280 = vmatprep.subr.bf16.mxu0 0
      %6281 = vmatpush2.bf16.msra.mxu0 %v6213
      %6282 = vmatprep.subr.bf16.mxu0 0
      %6283 = vmatpush2.bf16.msra.mxu0 %v6212
      %6284 = vmatprep.mubr.bf16.mxu0 %v6085
      %6285 = vmatmul.mubr.bf16.gmra.mxu0 %v6084
      %v6286 = vpop.f32.mrf.mxu0
      %v6287 = vadd.f32 0.0, %v6286
      %v6288 = vpop.f32.mrf.mxu0
      %v6289 = vpop.f32.mrf.mxu0
      %v6290 = vadd.f32 0.0, %v6289
      %v6291 = vpop.f32.mrf.mxu0
      %6292 = vmatprep.mubr.bf16.mxu0 %v6088
      %6293 = vmatmul.mubr.bf16.gmra.mxu0 %v6087
      %v6294 = vpop.f32.mrf.mxu0
      %v6295 = vadd.f32 0.0, %v6294
      %v6296 = vpop.f32.mrf.mxu0
      %v6297 = vpop.f32.mrf.mxu0
      %v6298 = vadd.f32 0.0, %v6297
      %v6299 = vpop.f32.mrf.mxu0
      %6300 = vmatprep.mubr.bf16.mxu0 %v6091
      %6301 = vmatmul.mubr.bf16.gmra.mxu0 %v6090
      %v6302 = vpop.f32.mrf.mxu0
      %v6303 = vadd.f32 0.0, %v6302
      %v6304 = vpop.f32.mrf.mxu0
      %v6305 = vpop.f32.mrf.mxu0
      %v6306 = vadd.f32 0.0, %v6305
      %v6307 = vpop.f32.mrf.mxu0
      %6308 = vmatprep.mubr.bf16.mxu0 %v6094
      %6309 = vmatmul.mubr.bf16.gmra.mxu0 %v6093
      %v6310 = vpop.f32.mrf.mxu0
      %v6311 = vadd.f32 0.0, %v6310
      %v6312 = vpop.f32.mrf.mxu0
      %v6313 = vpop.f32.mrf.mxu0
      %v6314 = vadd.f32 0.0, %v6313
      %v6315 = vpop.f32.mrf.mxu0
      %6316 = vdwg.mxu0
      %6317 = vmatprep.subr.bf16.mxu0 0
      %6318 = vmatpush1.bf16.msra.mxu0 %v6227
      %6319 = vmatprep.subr.bf16.mxu0 0
      %6320 = vmatpush1.bf16.msra.mxu0 %v6226
      %6321 = vmatprep.subr.bf16.mxu0 0
      %6322 = vmatpush1.bf16.msra.mxu0 %v6225
      %6323 = vmatprep.subr.bf16.mxu0 0
      %6324 = vmatpush1.bf16.msra.mxu0 %v6224
      %6325 = vmatprep.subr.bf16.mxu0 0
      %6326 = vmatpush1.bf16.msra.mxu0 %v6223
      %6327 = vmatprep.subr.bf16.mxu0 0
      %6328 = vmatpush1.bf16.msra.mxu0 %v6222
      %6329 = vmatprep.subr.bf16.mxu0 0
      %6330 = vmatpush1.bf16.msra.mxu0 %v6221
      %6331 = vmatprep.subr.bf16.mxu0 0
      %6332 = vmatpush1.bf16.msra.mxu0 %v6220
      %6333 = vmatprep.subr.bf16.mxu0 0
      %6334 = vmatpush2.bf16.msra.mxu0 0
      %6335 = vmatprep.subr.bf16.mxu0 0
      %6336 = vmatpush2.bf16.msra.mxu0 0
      %6337 = vmatprep.subr.bf16.mxu0 0
      %6338 = vmatpush2.bf16.msra.mxu0 0
      %6339 = vmatprep.subr.bf16.mxu0 0
      %6340 = vmatpush2.bf16.msra.mxu0 0
      %6341 = vmatprep.subr.bf16.mxu0 0
      %6342 = vmatpush2.bf16.msra.mxu0 0
      %6343 = vmatprep.subr.bf16.mxu0 0
      %6344 = vmatpush2.bf16.msra.mxu0 0
      %6345 = vmatprep.subr.bf16.mxu0 0
      %6346 = vmatpush2.bf16.msra.mxu0 0
      %6347 = vmatprep.subr.bf16.mxu0 0
      %6348 = vmatpush2.bf16.msra.mxu0 0
      %6349 = vmatprep.mubr.bf16.mxu0 0
      %6350 = vmatmul.mubr.bf16.gmra.mxu0 %v6086
      %v6351 = vpop.f32.mrf.mxu0
      %v6352 = vadd.f32 %v6287, %v6351
      %v6353 = vpop.f32.mrf.mxu0
      %v6354 = vpop.f32.mrf.mxu0
      %v6355 = vadd.f32 %v6290, %v6354
      %v6356 = vpop.f32.mrf.mxu0
      %6357 = vmatprep.mubr.bf16.mxu0 0
      %6358 = vmatmul.mubr.bf16.gmra.mxu0 %v6089
      %v6359 = vpop.f32.mrf.mxu0
      %v6360 = vadd.f32 %v6295, %v6359
      %v6361 = vpop.f32.mrf.mxu0
      %v6362 = vpop.f32.mrf.mxu0
      %v6363 = vadd.f32 %v6298, %v6362
      %v6364 = vpop.f32.mrf.mxu0
      %6365 = vmatprep.mubr.bf16.mxu0 0
      %6366 = vmatmul.mubr.bf16.gmra.mxu0 %v6092
      %v6367 = vpop.f32.mrf.mxu0
      %v6368 = vadd.f32 %v6303, %v6367
      %v6369 = vpop.f32.mrf.mxu0
      %v6370 = vpop.f32.mrf.mxu0
      %v6371 = vadd.f32 %v6306, %v6370
      %v6372 = vpop.f32.mrf.mxu0
      %6373 = vmatprep.mubr.bf16.mxu0 0
      %6374 = vmatmul.mubr.bf16.gmra.mxu0 %v6095
      %v6375 = vpop.f32.mrf.mxu0
      %v6376 = vadd.f32 %v6311, %v6375
      %v6377 = vpop.f32.mrf.mxu0
      %v6378 = vpop.f32.mrf.mxu0
      %v6379 = vadd.f32 %v6314, %v6378
      %v6380 = vpop.f32.mrf.mxu0
      %6381 = vdwg.mxu0
      %v6382 = vadd.f32 %v6012, %v6352
      %v6383 = vadd.f32 %v6013, %v6355
      %v6384 = vadd.f32 %v6014, %v6360
      %v6385 = vadd.f32 %v6015, %v6363
      %v6386 = vadd.f32 %v6016, %v6368
      %v6387 = vadd.f32 %v6017, %v6371
      %v6388 = vadd.f32 %v6018, %v6376
      %v6389 = vadd.f32 %v6019, %v6379
      %6390 = vmatprep.subr.bf16.mxu0 0
      %6391 = vmatpush1.bf16.msra.mxu0 %v4688
      %6392 = vmatprep.subr.bf16.mxu0 0
      %6393 = vmatpush1.bf16.msra.mxu0 %v4687
      %6394 = vmatprep.subr.bf16.mxu0 0
      %6395 = vmatpush1.bf16.msra.mxu0 %v4686
      %6396 = vmatprep.subr.bf16.mxu0 0
      %6397 = vmatpush1.bf16.msra.mxu0 %v4685
      %6398 = vmatprep.subr.bf16.mxu0 0
      %6399 = vmatpush1.bf16.msra.mxu0 %v4684
      %6400 = vmatprep.subr.bf16.mxu0 0
      %6401 = vmatpush1.bf16.msra.mxu0 %v4683
      %6402 = vmatprep.subr.bf16.mxu0 0
      %6403 = vmatpush1.bf16.msra.mxu0 %v4682
      %6404 = vmatprep.subr.bf16.mxu0 0
      %6405 = vmatpush1.bf16.msra.mxu0 %v4681
      %6406 = vmatprep.subr.bf16.mxu0 0
      %6407 = vmatpush2.bf16.msra.mxu0 %v4696
      %6408 = vmatprep.subr.bf16.mxu0 0
      %6409 = vmatpush2.bf16.msra.mxu0 %v4695
      %6410 = vmatprep.subr.bf16.mxu0 0
      %6411 = vmatpush2.bf16.msra.mxu0 %v4694
      %6412 = vmatprep.subr.bf16.mxu0 0
      %6413 = vmatpush2.bf16.msra.mxu0 %v4693
      %6414 = vmatprep.subr.bf16.mxu0 0
      %6415 = vmatpush2.bf16.msra.mxu0 %v4692
      %6416 = vmatprep.subr.bf16.mxu0 0
      %6417 = vmatpush2.bf16.msra.mxu0 %v4691
      %6418 = vmatprep.subr.bf16.mxu0 0
      %6419 = vmatpush2.bf16.msra.mxu0 %v4690
      %6420 = vmatprep.subr.bf16.mxu0 0
      %6421 = vmatpush2.bf16.msra.mxu0 %v4689
      %6422 = vmatprep.mubr.bf16.mxu0 %v6085
      %6423 = vmatmul.mubr.bf16.gmra.mxu0 %v6084
      %v6424 = vpop.f32.mrf.mxu0
      %v6425 = vadd.f32 0.0, %v6424
      %v6426 = vpop.f32.mrf.mxu0
      %v6427 = vpop.f32.mrf.mxu0
      %v6428 = vadd.f32 0.0, %v6427
      %v6429 = vpop.f32.mrf.mxu0
      %6430 = vmatprep.mubr.bf16.mxu0 %v6088
      %6431 = vmatmul.mubr.bf16.gmra.mxu0 %v6087
      %v6432 = vpop.f32.mrf.mxu0
      %v6433 = vadd.f32 0.0, %v6432
      %v6434 = vpop.f32.mrf.mxu0
      %v6435 = vpop.f32.mrf.mxu0
      %v6436 = vadd.f32 0.0, %v6435
      %v6437 = vpop.f32.mrf.mxu0
      %6438 = vmatprep.mubr.bf16.mxu0 %v6091
      %6439 = vmatmul.mubr.bf16.gmra.mxu0 %v6090
      %v6440 = vpop.f32.mrf.mxu0
      %v6441 = vadd.f32 0.0, %v6440
      %v6442 = vpop.f32.mrf.mxu0
      %v6443 = vpop.f32.mrf.mxu0
      %v6444 = vadd.f32 0.0, %v6443
      %v6445 = vpop.f32.mrf.mxu0
      %6446 = vmatprep.mubr.bf16.mxu0 %v6094
      %6447 = vmatmul.mubr.bf16.gmra.mxu0 %v6093
      %v6448 = vpop.f32.mrf.mxu0
      %v6449 = vadd.f32 0.0, %v6448
      %v6450 = vpop.f32.mrf.mxu0
      %v6451 = vpop.f32.mrf.mxu0
      %v6452 = vadd.f32 0.0, %v6451
      %v6453 = vpop.f32.mrf.mxu0
      %6454 = vdwg.mxu0
      %6455 = vmatprep.subr.bf16.mxu0 0
      %6456 = vmatpush1.bf16.msra.mxu0 %v4704
      %6457 = vmatprep.subr.bf16.mxu0 0
      %6458 = vmatpush1.bf16.msra.mxu0 %v4703
      %6459 = vmatprep.subr.bf16.mxu0 0
      %6460 = vmatpush1.bf16.msra.mxu0 %v4702
      %6461 = vmatprep.subr.bf16.mxu0 0
      %6462 = vmatpush1.bf16.msra.mxu0 %v4701
      %6463 = vmatprep.subr.bf16.mxu0 0
      %6464 = vmatpush1.bf16.msra.mxu0 %v4700
      %6465 = vmatprep.subr.bf16.mxu0 0
      %6466 = vmatpush1.bf16.msra.mxu0 %v4699
      %6467 = vmatprep.subr.bf16.mxu0 0
      %6468 = vmatpush1.bf16.msra.mxu0 %v4698
      %6469 = vmatprep.subr.bf16.mxu0 0
      %6470 = vmatpush1.bf16.msra.mxu0 %v4697
      %6471 = vmatprep.subr.bf16.mxu0 0
      %6472 = vmatpush2.bf16.msra.mxu0 0
      %6473 = vmatprep.subr.bf16.mxu0 0
      %6474 = vmatpush2.bf16.msra.mxu0 0
      %6475 = vmatprep.subr.bf16.mxu0 0
      %6476 = vmatpush2.bf16.msra.mxu0 0
      %6477 = vmatprep.subr.bf16.mxu0 0
      %6478 = vmatpush2.bf16.msra.mxu0 0
      %6479 = vmatprep.subr.bf16.mxu0 0
      %6480 = vmatpush2.bf16.msra.mxu0 0
      %6481 = vmatprep.subr.bf16.mxu0 0
      %6482 = vmatpush2.bf16.msra.mxu0 0
      %6483 = vmatprep.subr.bf16.mxu0 0
      %6484 = vmatpush2.bf16.msra.mxu0 0
      %6485 = vmatprep.subr.bf16.mxu0 0
      %6486 = vmatpush2.bf16.msra.mxu0 0
      %6487 = vmatprep.mubr.bf16.mxu0 0
      %6488 = vmatmul.mubr.bf16.gmra.mxu0 %v6086
      %v6489 = vpop.f32.mrf.mxu0
      %v6490 = vadd.f32 %v6425, %v6489
      %v6491 = vpop.f32.mrf.mxu0
      %v6492 = vpop.f32.mrf.mxu0
      %v6493 = vadd.f32 %v6428, %v6492
      %v6494 = vpop.f32.mrf.mxu0
      %6495 = vmatprep.mubr.bf16.mxu0 0
      %6496 = vmatmul.mubr.bf16.gmra.mxu0 %v6089
      %v6497 = vpop.f32.mrf.mxu0
      %v6498 = vadd.f32 %v6433, %v6497
      %v6499 = vpop.f32.mrf.mxu0
      %v6500 = vpop.f32.mrf.mxu0
      %v6501 = vadd.f32 %v6436, %v6500
      %v6502 = vpop.f32.mrf.mxu0
      %6503 = vmatprep.mubr.bf16.mxu0 0
      %6504 = vmatmul.mubr.bf16.gmra.mxu0 %v6092
      %v6505 = vpop.f32.mrf.mxu0
      %v6506 = vadd.f32 %v6441, %v6505
      %v6507 = vpop.f32.mrf.mxu0
      %v6508 = vpop.f32.mrf.mxu0
      %v6509 = vadd.f32 %v6444, %v6508
      %v6510 = vpop.f32.mrf.mxu0
      %6511 = vmatprep.mubr.bf16.mxu0 0
      %6512 = vmatmul.mubr.bf16.gmra.mxu0 %v6095
      %v6513 = vpop.f32.mrf.mxu0
      %v6514 = vadd.f32 %v6449, %v6513
      %v6515 = vpop.f32.mrf.mxu0
      %v6516 = vpop.f32.mrf.mxu0
      %v6517 = vadd.f32 %v6452, %v6516
      %v6518 = vpop.f32.mrf.mxu0
      %6519 = vdwg.mxu0
      %6520 = vmatprep.subr.bf16.mxu0 0
      %6521 = vmatpush1.bf16.msra.mxu0 %v4986
      %6522 = vmatprep.subr.bf16.mxu0 0
      %6523 = vmatpush1.bf16.msra.mxu0 %v4985
      %6524 = vmatprep.subr.bf16.mxu0 0
      %6525 = vmatpush1.bf16.msra.mxu0 %v4984
      %6526 = vmatprep.subr.bf16.mxu0 0
      %6527 = vmatpush1.bf16.msra.mxu0 %v4983
      %6528 = vmatprep.subr.bf16.mxu0 0
      %6529 = vmatpush1.bf16.msra.mxu0 %v4982
      %6530 = vmatprep.subr.bf16.mxu0 0
      %6531 = vmatpush1.bf16.msra.mxu0 %v4981
      %6532 = vmatprep.subr.bf16.mxu0 0
      %6533 = vmatpush1.bf16.msra.mxu0 %v4980
      %6534 = vmatprep.subr.bf16.mxu0 0
      %6535 = vmatpush1.bf16.msra.mxu0 %v4979
      %6536 = vmatprep.subr.bf16.mxu0 0
      %6537 = vmatpush2.bf16.msra.mxu0 %v4994
      %6538 = vmatprep.subr.bf16.mxu0 0
      %6539 = vmatpush2.bf16.msra.mxu0 %v4993
      %6540 = vmatprep.subr.bf16.mxu0 0
      %6541 = vmatpush2.bf16.msra.mxu0 %v4992
      %6542 = vmatprep.subr.bf16.mxu0 0
      %6543 = vmatpush2.bf16.msra.mxu0 %v4991
      %6544 = vmatprep.subr.bf16.mxu0 0
      %6545 = vmatpush2.bf16.msra.mxu0 %v4990
      %6546 = vmatprep.subr.bf16.mxu0 0
      %6547 = vmatpush2.bf16.msra.mxu0 %v4989
      %6548 = vmatprep.subr.bf16.mxu0 0
      %6549 = vmatpush2.bf16.msra.mxu0 %v4988
      %6550 = vmatprep.subr.bf16.mxu0 0
      %6551 = vmatpush2.bf16.msra.mxu0 %v4987
      %6552 = vmatprep.mubr.bf16.mxu0 %v5715
      %6553 = vmatmul.mubr.bf16.gmra.mxu0 %v5714
      %v6554 = vpop.f32.mrf.mxu0
      %v6555 = vadd.f32 %v6490, %v6554
      %v6556 = vpop.f32.mrf.mxu0
      %v6557 = vpop.f32.mrf.mxu0
      %v6558 = vadd.f32 %v6493, %v6557
      %v6559 = vpop.f32.mrf.mxu0
      %6560 = vmatprep.mubr.bf16.mxu0 %v5718
      %6561 = vmatmul.mubr.bf16.gmra.mxu0 %v5717
      %v6562 = vpop.f32.mrf.mxu0
      %v6563 = vadd.f32 %v6498, %v6562
      %v6564 = vpop.f32.mrf.mxu0
      %v6565 = vpop.f32.mrf.mxu0
      %v6566 = vadd.f32 %v6501, %v6565
      %v6567 = vpop.f32.mrf.mxu0
      %6568 = vmatprep.mubr.bf16.mxu0 %v5721
      %6569 = vmatmul.mubr.bf16.gmra.mxu0 %v5720
      %v6570 = vpop.f32.mrf.mxu0
      %v6571 = vadd.f32 %v6506, %v6570
      %v6572 = vpop.f32.mrf.mxu0
      %v6573 = vpop.f32.mrf.mxu0
      %v6574 = vadd.f32 %v6509, %v6573
      %v6575 = vpop.f32.mrf.mxu0
      %6576 = vmatprep.mubr.bf16.mxu0 %v5724
      %6577 = vmatmul.mubr.bf16.gmra.mxu0 %v5723
      %v6578 = vpop.f32.mrf.mxu0
      %v6579 = vadd.f32 %v6514, %v6578
      %v6580 = vpop.f32.mrf.mxu0
      %v6581 = vpop.f32.mrf.mxu0
      %v6582 = vadd.f32 %v6517, %v6581
      %v6583 = vpop.f32.mrf.mxu0
      %6584 = vdwg.mxu0
      %6585 = vmatprep.subr.bf16.mxu0 0
      %6586 = vmatpush1.bf16.msra.mxu0 %v5002
      %6587 = vmatprep.subr.bf16.mxu0 0
      %6588 = vmatpush1.bf16.msra.mxu0 %v5001
      %6589 = vmatprep.subr.bf16.mxu0 0
      %6590 = vmatpush1.bf16.msra.mxu0 %v5000
      %6591 = vmatprep.subr.bf16.mxu0 0
      %6592 = vmatpush1.bf16.msra.mxu0 %v4999
      %6593 = vmatprep.subr.bf16.mxu0 0
      %6594 = vmatpush1.bf16.msra.mxu0 %v4998
      %6595 = vmatprep.subr.bf16.mxu0 0
      %6596 = vmatpush1.bf16.msra.mxu0 %v4997
      %6597 = vmatprep.subr.bf16.mxu0 0
      %6598 = vmatpush1.bf16.msra.mxu0 %v4996
      %6599 = vmatprep.subr.bf16.mxu0 0
      %6600 = vmatpush1.bf16.msra.mxu0 %v4995
      %6601 = vmatprep.subr.bf16.mxu0 0
      %6602 = vmatpush2.bf16.msra.mxu0 0
      %6603 = vmatprep.subr.bf16.mxu0 0
      %6604 = vmatpush2.bf16.msra.mxu0 0
      %6605 = vmatprep.subr.bf16.mxu0 0
      %6606 = vmatpush2.bf16.msra.mxu0 0
      %6607 = vmatprep.subr.bf16.mxu0 0
      %6608 = vmatpush2.bf16.msra.mxu0 0
      %6609 = vmatprep.subr.bf16.mxu0 0
      %6610 = vmatpush2.bf16.msra.mxu0 0
      %6611 = vmatprep.subr.bf16.mxu0 0
      %6612 = vmatpush2.bf16.msra.mxu0 0
      %6613 = vmatprep.subr.bf16.mxu0 0
      %6614 = vmatpush2.bf16.msra.mxu0 0
      %6615 = vmatprep.subr.bf16.mxu0 0
      %6616 = vmatpush2.bf16.msra.mxu0 0
      %6617 = vmatprep.mubr.bf16.mxu0 0
      %6618 = vmatmul.mubr.bf16.gmra.mxu0 %v5716
      %v6619 = vpop.f32.mrf.mxu0
      %v6620 = vadd.f32 %v6555, %v6619
      %v6621 = vpop.f32.mrf.mxu0
      %v6622 = vpop.f32.mrf.mxu0
      %v6623 = vadd.f32 %v6558, %v6622
      %v6624 = vpop.f32.mrf.mxu0
      %6625 = vmatprep.mubr.bf16.mxu0 0
      %6626 = vmatmul.mubr.bf16.gmra.mxu0 %v5719
      %v6627 = vpop.f32.mrf.mxu0
      %v6628 = vadd.f32 %v6563, %v6627
      %v6629 = vpop.f32.mrf.mxu0
      %v6630 = vpop.f32.mrf.mxu0
      %v6631 = vadd.f32 %v6566, %v6630
      %v6632 = vpop.f32.mrf.mxu0
      %6633 = vmatprep.mubr.bf16.mxu0 0
      %6634 = vmatmul.mubr.bf16.gmra.mxu0 %v5722
      %v6635 = vpop.f32.mrf.mxu0
      %v6636 = vadd.f32 %v6571, %v6635
      %v6637 = vpop.f32.mrf.mxu0
      %v6638 = vpop.f32.mrf.mxu0
      %v6639 = vadd.f32 %v6574, %v6638
      %v6640 = vpop.f32.mrf.mxu0
      %6641 = vmatprep.mubr.bf16.mxu0 0
      %6642 = vmatmul.mubr.bf16.gmra.mxu0 %v5725
      %v6643 = vpop.f32.mrf.mxu0
      %v6644 = vadd.f32 %v6579, %v6643
      %v6645 = vpop.f32.mrf.mxu0
      %v6646 = vpop.f32.mrf.mxu0
      %v6647 = vadd.f32 %v6582, %v6646
      %v6648 = vpop.f32.mrf.mxu0
      %6649 = vdwg.mxu0
      %v6652 = vunpack.c.l.b16 %v5543
      %v6653 = vunpack.c.l.b16 %v5544
      %v6654 = vpack.c.b16 %v6653, %v6652
      %v6656 = vshrl.u32 %v6654, 16
      %v6658 = vshll.u32 %v6654, 16
      %v6660 = vrot.slane %v6658, 1
      %v6661 = vor.u32 %v6656, %v6660
      %v6662 = vrot.slane %v6654, 1
      %v6663 = vunpack.c.l.b16 %v6661
      %v6664 = vunpack.c.l.b16 %v6662
      %s6665 = scalar_lea.vmem %s5, 960
      %v6666 = vld [vmem:[%s6665] sm:$0xf]
      %v6667 = vld [vmem:[%s6665 + $0x4] sm:$0xf]
      %v6668 = vld [vmem:[%s6665 + $0x8] sm:$0xf]
      %v6669 = vld [vmem:[%s6665 + $0xc] sm:$0xf]
      %v6670 = vld [vmem:[%s6665 + $0x10] sm:$0xf]
      %v6671 = vld [vmem:[%s6665 + $0x14] sm:$0xf]
      %v6672 = vld [vmem:[%s6665 + $0x18] sm:$0xf]
      %v6673 = vld [vmem:[%s6665 + $0x1c] sm:$0xf]
      %v6674 = vld [vmem:[%s6665 + $0x20] sm:$0xf]
      %v6675 = vld [vmem:[%s6665 + $0x24] sm:$0xf]
      %v6676 = vld [vmem:[%s6665 + $0x28] sm:$0xf]
      %v6677 = vld [vmem:[%s6665 + $0x2c] sm:$0xf]
      %v6678 = vld [vmem:[%s6665 + $0x30] sm:$0xf]
      %v6679 = vld [vmem:[%s6665 + $0x34] sm:$0xf]
      %v6680 = vld [vmem:[%s6665 + $0x38] sm:$0xf]
      %v6681 = vld [vmem:[%s6665 + $0x3c] sm:$0xf]
      %v6682 = vld [vmem:[%s6665 + $0x40] sm:$0xf]
      %v6683 = vld [vmem:[%s6665 + $0x44] sm:$0xf]
      %v6684 = vld [vmem:[%s6665 + $0x48] sm:$0xf]
      %v6685 = vld [vmem:[%s6665 + $0x4c] sm:$0xf]
      %v6686 = vld [vmem:[%s6665 + $0x50] sm:$0xf]
      %v6687 = vld [vmem:[%s6665 + $0x54] sm:$0xf]
      %v6688 = vld [vmem:[%s6665 + $0x58] sm:$0xf]
      %v6689 = vld [vmem:[%s6665 + $0x5c] sm:$0xf]
      %v6690 = vld [vmem:[%s6665 + $0x60] sm:$0xf]
      %v6691 = vld [vmem:[%s6665 + $0x64] sm:$0xf]
      %v6692 = vld [vmem:[%s6665 + $0x68] sm:$0xf]
      %v6693 = vld [vmem:[%s6665 + $0x6c] sm:$0xf]
      %v6694 = vld [vmem:[%s6665 + $0x70] sm:$0xf]
      %v6695 = vld [vmem:[%s6665 + $0x74] sm:$0xf]
      %v6696 = vld [vmem:[%s6665 + $0x78] sm:$0xf]
      %v6697 = vld [vmem:[%s6665 + $0x7c] sm:$0xf]
      %v6698 = vld [vmem:[%s6665 + $0x80] sm:$0xf]
      %v6699 = vld [vmem:[%s6665 + $0x84] sm:$0xf]
      %v6700 = vld [vmem:[%s6665 + $0x88] sm:$0xf]
      %v6701 = vld [vmem:[%s6665 + $0x8c] sm:$0xf]
      %v6702 = vld [vmem:[%s6665 + $0x90] sm:$0xf]
      %v6703 = vld [vmem:[%s6665 + $0x94] sm:$0xf]
      %v6704 = vld [vmem:[%s6665 + $0x98] sm:$0xf]
      %v6705 = vld [vmem:[%s6665 + $0x9c] sm:$0xf]
      %v6706 = vld [vmem:[%s6665 + $0xa0] sm:$0xf]
      %v6707 = vld [vmem:[%s6665 + $0xa4] sm:$0xf]
      %v6708 = vld [vmem:[%s6665 + $0xa8] sm:$0xf]
      %v6709 = vld [vmem:[%s6665 + $0xac] sm:$0xf]
      %v6710 = vld [vmem:[%s6665 + $0xb0] sm:$0xf]
      %v6711 = vld [vmem:[%s6665 + $0xb4] sm:$0xf]
      %v6712 = vld [vmem:[%s6665 + $0xb8] sm:$0xf]
      %v6713 = vld [vmem:[%s6665 + $0xbc] sm:$0xf]
      %v6714 = vpack.c.b16 %v6652, %v6022
      %v6715 = vpack.c.b16 %v6663, %v6033
      %v6716 = vpack.c.b16 %v6664, %v6034
      %v6768 = vunpack.c.l.b16 %v6666
      %v6769 = vunpack.c.l.b16 %v6667
      %v6770 = vunpack.c.l.b16 %v6668
      %v6771 = vunpack.c.l.b16 %v6669
      %v6772 = vunpack.c.l.b16 %v6670
      %v6773 = vunpack.c.l.b16 %v6671
      %v6774 = vunpack.c.l.b16 %v6672
      %v6775 = vunpack.c.l.b16 %v6673
      %v6776 = vunpack.c.l.b16 %v6674
      %v6777 = vunpack.c.l.b16 %v6675
      %v6778 = vunpack.c.l.b16 %v6676
      %v6779 = vunpack.c.l.b16 %v6677
      %v6780 = vunpack.c.l.b16 %v6678
      %v6781 = vunpack.c.l.b16 %v6679
      %v6782 = vunpack.c.l.b16 %v6680
      %v6783 = vunpack.c.l.b16 %v6681
      %v6784 = vunpack.c.l.b16 %v6682
      %v6785 = vunpack.c.l.b16 %v6683
      %v6786 = vunpack.c.l.b16 %v6684
      %v6787 = vunpack.c.l.b16 %v6685
      %v6788 = vunpack.c.l.b16 %v6686
      %v6789 = vunpack.c.l.b16 %v6687
      %v6790 = vunpack.c.l.b16 %v6688
      %v6791 = vunpack.c.l.b16 %v6689
      %v6792 = vunpack.c.l.b16 %v6690
      %v6793 = vunpack.c.l.b16 %v6691
      %v6794 = vunpack.c.l.b16 %v6692
      %v6795 = vunpack.c.l.b16 %v6693
      %v6796 = vunpack.c.l.b16 %v6694
      %v6797 = vunpack.c.l.b16 %v6695
      %v6798 = vunpack.c.l.b16 %v6696
      %v6799 = vunpack.c.l.b16 %v6697
      %v6800 = vunpack.c.l.b16 %v6698
      %v6801 = vunpack.c.l.b16 %v6699
      %v6802 = vunpack.c.l.b16 %v6700
      %v6803 = vunpack.c.l.b16 %v6701
      %v6804 = vunpack.c.l.b16 %v6702
      %v6805 = vunpack.c.l.b16 %v6703
      %v6806 = vunpack.c.l.b16 %v6704
      %v6807 = vunpack.c.l.b16 %v6705
      %v6808 = vunpack.c.l.b16 %v6706
      %v6809 = vunpack.c.l.b16 %v6707
      %v6810 = vunpack.c.l.b16 %v6708
      %v6811 = vunpack.c.l.b16 %v6709
      %v6812 = vunpack.c.l.b16 %v6710
      %v6813 = vunpack.c.l.b16 %v6711
      %v6814 = vunpack.c.l.b16 %v6712
      %v6815 = vunpack.c.l.b16 %v6713
      %v6816 = vpack.c.b16 %v6769, %v6768
      %v6817 = vpack.c.b16 %v6771, %v6770
      %v6818 = vpack.c.b16 %v6773, %v6772
      %v6819 = vpack.c.b16 %v6775, %v6774
      %v6820 = vpack.c.b16 %v6777, %v6776
      %v6821 = vpack.c.b16 %v6779, %v6778
      %v6822 = vpack.c.b16 %v6781, %v6780
      %v6823 = vpack.c.b16 %v6783, %v6782
      %v6824 = vpack.c.b16 %v6785, %v6784
      %v6825 = vpack.c.b16 %v6787, %v6786
      %v6826 = vpack.c.b16 %v6789, %v6788
      %v6827 = vpack.c.b16 %v6791, %v6790
      %v6828 = vpack.c.b16 %v6793, %v6792
      %v6829 = vpack.c.b16 %v6795, %v6794
      %v6830 = vpack.c.b16 %v6797, %v6796
      %v6831 = vpack.c.b16 %v6799, %v6798
      %v6832 = vpack.c.b16 %v6801, %v6800
      %v6833 = vpack.c.b16 %v6803, %v6802
      %v6834 = vpack.c.b16 %v6805, %v6804
      %v6835 = vpack.c.b16 %v6807, %v6806
      %v6836 = vpack.c.b16 %v6809, %v6808
      %v6837 = vpack.c.b16 %v6811, %v6810
      %v6838 = vpack.c.b16 %v6813, %v6812
      %v6839 = vpack.c.b16 %v6815, %v6814
      %6864 = vmatprep.subr.bf16.mxu0 0
      %6865 = vmatpush1.bf16.msra.mxu0 %v6823
      %6866 = vmatprep.subr.bf16.mxu0 0
      %6867 = vmatpush1.bf16.msra.mxu0 %v6822
      %6868 = vmatprep.subr.bf16.mxu0 0
      %6869 = vmatpush1.bf16.msra.mxu0 %v6821
      %6870 = vmatprep.subr.bf16.mxu0 0
      %6871 = vmatpush1.bf16.msra.mxu0 %v6820
      %6872 = vmatprep.subr.bf16.mxu0 0
      %6873 = vmatpush1.bf16.msra.mxu0 %v6819
      %6874 = vmatprep.subr.bf16.mxu0 0
      %6875 = vmatpush1.bf16.msra.mxu0 %v6818
      %6876 = vmatprep.subr.bf16.mxu0 0
      %6877 = vmatpush1.bf16.msra.mxu0 %v6817
      %6878 = vmatprep.subr.bf16.mxu0 0
      %6879 = vmatpush1.bf16.msra.mxu0 %v6816
      %6880 = vmatprep.subr.bf16.mxu0 0
      %6881 = vmatpush2.bf16.msra.mxu0 %v6831
      %6882 = vmatprep.subr.bf16.mxu0 0
      %6883 = vmatpush2.bf16.msra.mxu0 %v6830
      %6884 = vmatprep.subr.bf16.mxu0 0
      %6885 = vmatpush2.bf16.msra.mxu0 %v6829
      %6886 = vmatprep.subr.bf16.mxu0 0
      %6887 = vmatpush2.bf16.msra.mxu0 %v6828
      %6888 = vmatprep.subr.bf16.mxu0 0
      %6889 = vmatpush2.bf16.msra.mxu0 %v6827
      %6890 = vmatprep.subr.bf16.mxu0 0
      %6891 = vmatpush2.bf16.msra.mxu0 %v6826
      %6892 = vmatprep.subr.bf16.mxu0 0
      %6893 = vmatpush2.bf16.msra.mxu0 %v6825
      %6894 = vmatprep.subr.bf16.mxu0 0
      %6895 = vmatpush2.bf16.msra.mxu0 %v6824
      %6896 = vmatprep.mubr.bf16.mxu0 %v5718
      %6897 = vmatmul.mubr.bf16.gmra.mxu0 %v5717
      %v6898 = vpop.f32.mrf.mxu0
      %v6899 = vadd.f32 0.0, %v6898
      %v6900 = vpop.f32.mrf.mxu0
      %v6901 = vpop.f32.mrf.mxu0
      %v6902 = vadd.f32 0.0, %v6901
      %v6903 = vpop.f32.mrf.mxu0
      %6904 = vmatprep.mubr.bf16.mxu0 %v5721
      %6905 = vmatmul.mubr.bf16.gmra.mxu0 %v5720
      %v6906 = vpop.f32.mrf.mxu0
      %v6907 = vadd.f32 0.0, %v6906
      %v6908 = vpop.f32.mrf.mxu0
      %v6909 = vpop.f32.mrf.mxu0
      %v6910 = vadd.f32 0.0, %v6909
      %v6911 = vpop.f32.mrf.mxu0
      %6912 = vmatprep.mubr.bf16.mxu0 %v5724
      %6913 = vmatmul.mubr.bf16.gmra.mxu0 %v5723
      %v6914 = vpop.f32.mrf.mxu0
      %v6915 = vadd.f32 0.0, %v6914
      %v6916 = vpop.f32.mrf.mxu0
      %v6917 = vpop.f32.mrf.mxu0
      %v6918 = vadd.f32 0.0, %v6917
      %v6919 = vpop.f32.mrf.mxu0
      %6920 = vmatprep.mubr.bf16.mxu0 %v6715
      %6921 = vmatmul.mubr.bf16.gmra.mxu0 %v6714
      %v6922 = vpop.f32.mrf.mxu0
      %v6923 = vadd.f32 0.0, %v6922
      %v6924 = vpop.f32.mrf.mxu0
      %v6925 = vpop.f32.mrf.mxu0
      %v6926 = vadd.f32 0.0, %v6925
      %v6927 = vpop.f32.mrf.mxu0
      %6928 = vdwg.mxu0
      %6929 = vmatprep.subr.bf16.mxu0 0
      %6930 = vmatpush1.bf16.msra.mxu0 %v6839
      %6931 = vmatprep.subr.bf16.mxu0 0
      %6932 = vmatpush1.bf16.msra.mxu0 %v6838
      %6933 = vmatprep.subr.bf16.mxu0 0
      %6934 = vmatpush1.bf16.msra.mxu0 %v6837
      %6935 = vmatprep.subr.bf16.mxu0 0
      %6936 = vmatpush1.bf16.msra.mxu0 %v6836
      %6937 = vmatprep.subr.bf16.mxu0 0
      %6938 = vmatpush1.bf16.msra.mxu0 %v6835
      %6939 = vmatprep.subr.bf16.mxu0 0
      %6940 = vmatpush1.bf16.msra.mxu0 %v6834
      %6941 = vmatprep.subr.bf16.mxu0 0
      %6942 = vmatpush1.bf16.msra.mxu0 %v6833
      %6943 = vmatprep.subr.bf16.mxu0 0
      %6944 = vmatpush1.bf16.msra.mxu0 %v6832
      %6945 = vmatprep.subr.bf16.mxu0 0
      %6946 = vmatpush2.bf16.msra.mxu0 0
      %6947 = vmatprep.subr.bf16.mxu0 0
      %6948 = vmatpush2.bf16.msra.mxu0 0
      %6949 = vmatprep.subr.bf16.mxu0 0
      %6950 = vmatpush2.bf16.msra.mxu0 0
      %6951 = vmatprep.subr.bf16.mxu0 0
      %6952 = vmatpush2.bf16.msra.mxu0 0
      %6953 = vmatprep.subr.bf16.mxu0 0
      %6954 = vmatpush2.bf16.msra.mxu0 0
      %6955 = vmatprep.subr.bf16.mxu0 0
      %6956 = vmatpush2.bf16.msra.mxu0 0
      %6957 = vmatprep.subr.bf16.mxu0 0
      %6958 = vmatpush2.bf16.msra.mxu0 0
      %6959 = vmatprep.subr.bf16.mxu0 0
      %6960 = vmatpush2.bf16.msra.mxu0 0
      %6961 = vmatprep.mubr.bf16.mxu0 0
      %6962 = vmatmul.mubr.bf16.gmra.mxu0 %v5719
      %v6963 = vpop.f32.mrf.mxu0
      %v6964 = vadd.f32 %v6899, %v6963
      %v6965 = vpop.f32.mrf.mxu0
      %v6966 = vpop.f32.mrf.mxu0
      %v6967 = vadd.f32 %v6902, %v6966
      %v6968 = vpop.f32.mrf.mxu0
      %6969 = vmatprep.mubr.bf16.mxu0 0
      %6970 = vmatmul.mubr.bf16.gmra.mxu0 %v5722
      %v6971 = vpop.f32.mrf.mxu0
      %v6972 = vadd.f32 %v6907, %v6971
      %v6973 = vpop.f32.mrf.mxu0
      %v6974 = vpop.f32.mrf.mxu0
      %v6975 = vadd.f32 %v6910, %v6974
      %v6976 = vpop.f32.mrf.mxu0
      %6977 = vmatprep.mubr.bf16.mxu0 0
      %6978 = vmatmul.mubr.bf16.gmra.mxu0 %v5725
      %v6979 = vpop.f32.mrf.mxu0
      %v6980 = vadd.f32 %v6915, %v6979
      %v6981 = vpop.f32.mrf.mxu0
      %v6982 = vpop.f32.mrf.mxu0
      %v6983 = vadd.f32 %v6918, %v6982
      %v6984 = vpop.f32.mrf.mxu0
      %6985 = vmatprep.mubr.bf16.mxu0 0
      %6986 = vmatmul.mubr.bf16.gmra.mxu0 %v6716
      %v6987 = vpop.f32.mrf.mxu0
      %v6988 = vadd.f32 %v6923, %v6987
      %v6989 = vpop.f32.mrf.mxu0
      %v6990 = vpop.f32.mrf.mxu0
      %v6991 = vadd.f32 %v6926, %v6990
      %v6992 = vpop.f32.mrf.mxu0
      %6993 = vdwg.mxu0
      %v6994 = vadd.f32 %v6382, %v6964
      %v6995 = vadd.f32 %v6383, %v6967
      %v6996 = vadd.f32 %v6384, %v6972
      %v6997 = vadd.f32 %v6385, %v6975
      %v6998 = vadd.f32 %v6386, %v6980
      %v6999 = vadd.f32 %v6387, %v6983
      %v7000 = vadd.f32 %v6388, %v6988
      %v7001 = vadd.f32 %v6389, %v6991
      %7002 = vmatprep.subr.bf16.mxu0 0
      %7003 = vmatpush1.bf16.msra.mxu0 %v5330
      %7004 = vmatprep.subr.bf16.mxu0 0
      %7005 = vmatpush1.bf16.msra.mxu0 %v5329
      %7006 = vmatprep.subr.bf16.mxu0 0
      %7007 = vmatpush1.bf16.msra.mxu0 %v5328
      %7008 = vmatprep.subr.bf16.mxu0 0
      %7009 = vmatpush1.bf16.msra.mxu0 %v5327
      %7010 = vmatprep.subr.bf16.mxu0 0
      %7011 = vmatpush1.bf16.msra.mxu0 %v5326
      %7012 = vmatprep.subr.bf16.mxu0 0
      %7013 = vmatpush1.bf16.msra.mxu0 %v5325
      %7014 = vmatprep.subr.bf16.mxu0 0
      %7015 = vmatpush1.bf16.msra.mxu0 %v5324
      %7016 = vmatprep.subr.bf16.mxu0 0
      %7017 = vmatpush1.bf16.msra.mxu0 %v5323
      %7018 = vmatprep.subr.bf16.mxu0 0
      %7019 = vmatpush2.bf16.msra.mxu0 %v5338
      %7020 = vmatprep.subr.bf16.mxu0 0
      %7021 = vmatpush2.bf16.msra.mxu0 %v5337
      %7022 = vmatprep.subr.bf16.mxu0 0
      %7023 = vmatpush2.bf16.msra.mxu0 %v5336
      %7024 = vmatprep.subr.bf16.mxu0 0
      %7025 = vmatpush2.bf16.msra.mxu0 %v5335
      %7026 = vmatprep.subr.bf16.mxu0 0
      %7027 = vmatpush2.bf16.msra.mxu0 %v5334
      %7028 = vmatprep.subr.bf16.mxu0 0
      %7029 = vmatpush2.bf16.msra.mxu0 %v5333
      %7030 = vmatprep.subr.bf16.mxu0 0
      %7031 = vmatpush2.bf16.msra.mxu0 %v5332
      %7032 = vmatprep.subr.bf16.mxu0 0
      %7033 = vmatpush2.bf16.msra.mxu0 %v5331
      %7034 = vmatprep.mubr.bf16.mxu0 %v5718
      %7035 = vmatmul.mubr.bf16.gmra.mxu0 %v5717
      %v7036 = vpop.f32.mrf.mxu0
      %v7037 = vadd.f32 0.0, %v7036
      %v7038 = vpop.f32.mrf.mxu0
      %v7039 = vpop.f32.mrf.mxu0
      %v7040 = vadd.f32 0.0, %v7039
      %v7041 = vpop.f32.mrf.mxu0
      %7042 = vmatprep.mubr.bf16.mxu0 %v5721
      %7043 = vmatmul.mubr.bf16.gmra.mxu0 %v5720
      %v7044 = vpop.f32.mrf.mxu0
      %v7045 = vadd.f32 0.0, %v7044
      %v7046 = vpop.f32.mrf.mxu0
      %v7047 = vpop.f32.mrf.mxu0
      %v7048 = vadd.f32 0.0, %v7047
      %v7049 = vpop.f32.mrf.mxu0
      %7050 = vmatprep.mubr.bf16.mxu0 %v5724
      %7051 = vmatmul.mubr.bf16.gmra.mxu0 %v5723
      %v7052 = vpop.f32.mrf.mxu0
      %v7053 = vadd.f32 0.0, %v7052
      %v7054 = vpop.f32.mrf.mxu0
      %v7055 = vpop.f32.mrf.mxu0
      %v7056 = vadd.f32 0.0, %v7055
      %v7057 = vpop.f32.mrf.mxu0
      %7058 = vmatprep.mubr.bf16.mxu0 %v6715
      %7059 = vmatmul.mubr.bf16.gmra.mxu0 %v6714
      %v7060 = vpop.f32.mrf.mxu0
      %v7061 = vadd.f32 0.0, %v7060
      %v7062 = vpop.f32.mrf.mxu0
      %v7063 = vpop.f32.mrf.mxu0
      %v7064 = vadd.f32 0.0, %v7063
      %v7065 = vpop.f32.mrf.mxu0
      %7066 = vdwg.mxu0
      %7067 = vmatprep.subr.bf16.mxu0 0
      %7068 = vmatpush1.bf16.msra.mxu0 %v5346
      %7069 = vmatprep.subr.bf16.mxu0 0
      %7070 = vmatpush1.bf16.msra.mxu0 %v5345
      %7071 = vmatprep.subr.bf16.mxu0 0
      %7072 = vmatpush1.bf16.msra.mxu0 %v5344
      %7073 = vmatprep.subr.bf16.mxu0 0
      %7074 = vmatpush1.bf16.msra.mxu0 %v5343
      %7075 = vmatprep.subr.bf16.mxu0 0
      %7076 = vmatpush1.bf16.msra.mxu0 %v5342
      %7077 = vmatprep.subr.bf16.mxu0 0
      %7078 = vmatpush1.bf16.msra.mxu0 %v5341
      %7079 = vmatprep.subr.bf16.mxu0 0
      %7080 = vmatpush1.bf16.msra.mxu0 %v5340
      %7081 = vmatprep.subr.bf16.mxu0 0
      %7082 = vmatpush1.bf16.msra.mxu0 %v5339
      %7083 = vmatprep.subr.bf16.mxu0 0
      %7084 = vmatpush2.bf16.msra.mxu0 0
      %7085 = vmatprep.subr.bf16.mxu0 0
      %7086 = vmatpush2.bf16.msra.mxu0 0
      %7087 = vmatprep.subr.bf16.mxu0 0
      %7088 = vmatpush2.bf16.msra.mxu0 0
      %7089 = vmatprep.subr.bf16.mxu0 0
      %7090 = vmatpush2.bf16.msra.mxu0 0
      %7091 = vmatprep.subr.bf16.mxu0 0
      %7092 = vmatpush2.bf16.msra.mxu0 0
      %7093 = vmatprep.subr.bf16.mxu0 0
      %7094 = vmatpush2.bf16.msra.mxu0 0
      %7095 = vmatprep.subr.bf16.mxu0 0
      %7096 = vmatpush2.bf16.msra.mxu0 0
      %7097 = vmatprep.subr.bf16.mxu0 0
      %7098 = vmatpush2.bf16.msra.mxu0 0
      %7099 = vmatprep.mubr.bf16.mxu0 0
      %7100 = vmatmul.mubr.bf16.gmra.mxu0 %v5719
      %v7101 = vpop.f32.mrf.mxu0
      %v7102 = vadd.f32 %v7037, %v7101
      %v7103 = vpop.f32.mrf.mxu0
      %v7104 = vpop.f32.mrf.mxu0
      %v7105 = vadd.f32 %v7040, %v7104
      %v7106 = vpop.f32.mrf.mxu0
      %7107 = vmatprep.mubr.bf16.mxu0 0
      %7108 = vmatmul.mubr.bf16.gmra.mxu0 %v5722
      %v7109 = vpop.f32.mrf.mxu0
      %v7110 = vadd.f32 %v7045, %v7109
      %v7111 = vpop.f32.mrf.mxu0
      %v7112 = vpop.f32.mrf.mxu0
      %v7113 = vadd.f32 %v7048, %v7112
      %v7114 = vpop.f32.mrf.mxu0
      %7115 = vmatprep.mubr.bf16.mxu0 0
      %7116 = vmatmul.mubr.bf16.gmra.mxu0 %v5725
      %v7117 = vpop.f32.mrf.mxu0
      %v7118 = vadd.f32 %v7053, %v7117
      %v7119 = vpop.f32.mrf.mxu0
      %v7120 = vpop.f32.mrf.mxu0
      %v7121 = vadd.f32 %v7056, %v7120
      %v7122 = vpop.f32.mrf.mxu0
      %7123 = vmatprep.mubr.bf16.mxu0 0
      %7124 = vmatmul.mubr.bf16.gmra.mxu0 %v6716
      %v7125 = vpop.f32.mrf.mxu0
      %v7126 = vadd.f32 %v7061, %v7125
      %v7127 = vpop.f32.mrf.mxu0
      %v7128 = vpop.f32.mrf.mxu0
      %v7129 = vadd.f32 %v7064, %v7128
      %v7130 = vpop.f32.mrf.mxu0
      %7131 = vdwg.mxu0
      %v7132 = vadd.f32 %v6620, %v7102
      %v7133 = vadd.f32 %v6623, %v7105
      %v7134 = vadd.f32 %v6628, %v7110
      %v7135 = vadd.f32 %v6631, %v7113
      %v7136 = vadd.f32 %v6636, %v7118
      %v7137 = vadd.f32 %v6639, %v7121
      %v7138 = vadd.f32 %v6644, %v7126
      %v7139 = vadd.f32 %v6647, %v7129
      %s7140 = sadd.s32 %s4293, 2
      %p7141 = scmp.lt.s32.totalorder %s7140, 0
      %s7142 = ssub.s32 0, %s7140
      %s7143 = scalar_select %p7141, %s7142, %s7140
      %s7144 = sand.u32 %s7143, 3
      %s7145 = ssub.s32 0, %s7144
      %s7146 = scalar_select %p7141, %s7145, %s7144
      %p7147 = scmp.ne.s32.totalorder %s7146, 0
      %p7148 = scmp.lt.s32.totalorder %s7146, 0
      %p7149 = pnand %p7148, %p7147
      %p7150 = pneg %p7149
      %s7151 = sadd.s32 %s7146, 4
      %s7152 = scalar_select %p7150, %s7151, %s7146
      %s7153 = smul.u32 %s7152, 20
      %s7154 = smul.addr %s7153, 4
      %s7155 = scalar_lea.vmem [#allocation2], %s7154
      %v7156 = vld [vmem:[%s7155] sm:$0xf]
      %v7157 = vld [vmem:[%s7155 + $0x4] sm:$0x1]
      %v7158 = vld [vmem:[%s7155 + $0x8] sm:$0xf]
      %v7159 = vld [vmem:[%s7155 + $0xc] sm:$0x1]
      %v7160 = vld [vmem:[%s7155 + $0x10] sm:$0xf]
      %v7161 = vld [vmem:[%s7155 + $0x14] sm:$0x1]
      %v7162 = vld [vmem:[%s7155 + $0x18] sm:$0xf]
      %v7163 = vld [vmem:[%s7155 + $0x1c] sm:$0x1]
      %v7164 = vld [vmem:[%s7155 + $0x20] sm:$0xf]
      %v7165 = vld [vmem:[%s7155 + $0x24] sm:$0x1]
      %v7166 = vld [vmem:[%s7155 + $0x28] sm:$0xf]
      %v7167 = vld [vmem:[%s7155 + $0x2c] sm:$0x1]
      %v7168 = vld [vmem:[%s7155 + $0x30] sm:$0xf]
      %v7169 = vld [vmem:[%s7155 + $0x34] sm:$0x1]
      %v7170 = vld [vmem:[%s7155 + $0x38] sm:$0xf]
      %v7171 = vld [vmem:[%s7155 + $0x3c] sm:$0x1]
      %v7172 = vld [vmem:[%s7155 + $0x40] sm:$0xf]
      %v7173 = vld [vmem:[%s7155 + $0x44] sm:$0x1]
      %v7174 = vld [vmem:[%s7155 + $0x48] sm:$0xf]
      %v7175 = vld [vmem:[%s7155 + $0x4c] sm:$0x1]
      %v7192 = vunpack.c.l.b16 %v7156
      %v7193 = vunpack.c.l.b16 %v7157
      %v7194 = vunpack.c.l.b16 %v7158
      %v7195 = vunpack.c.l.b16 %v7159
      %v7196 = vunpack.c.l.b16 %v7160
      %v7197 = vunpack.c.l.b16 %v7161
      %v7198 = vunpack.c.l.b16 %v7162
      %v7199 = vunpack.c.l.b16 %v7163
      %v7200 = vunpack.c.l.b16 %v7164
      %v7201 = vunpack.c.l.b16 %v7165
      %v7202 = vunpack.c.l.b16 %v7166
      %v7203 = vunpack.c.l.b16 %v7167
      %v7204 = vunpack.c.l.b16 %v7168
      %v7205 = vunpack.c.l.b16 %v7169
      %v7206 = vunpack.c.l.b16 %v7170
      %v7207 = vunpack.c.l.b16 %v7171
      %v7208 = vpack.c.b16 %v7193, %v7192
      %v7209 = vpack.c.b16 %v7195, %v7194
      %v7210 = vpack.c.b16 %v7197, %v7196
      %v7211 = vpack.c.b16 %v7199, %v7198
      %v7212 = vpack.c.b16 %v7201, %v7200
      %v7213 = vpack.c.b16 %v7203, %v7202
      %v7214 = vpack.c.b16 %v7205, %v7204
      %v7215 = vpack.c.b16 %v7207, %v7206
      %v7217 = vshrl.u32 %v7208, 16
      %v7219 = vshll.u32 %v7208, 16
      %v7221 = vrot.slane %v7219, 1
      %v7222 = vor.u32 %v7217, %v7221
      %v7224 = vshrl.u32 %v7209, 16
      %v7226 = vshll.u32 %v7209, 16
      %v7228 = vrot.slane %v7226, 1
      %v7229 = vor.u32 %v7224, %v7228
      %v7231 = vshrl.u32 %v7210, 16
      %v7233 = vshll.u32 %v7210, 16
      %v7235 = vrot.slane %v7233, 1
      %v7236 = vor.u32 %v7231, %v7235
      %v7238 = vshrl.u32 %v7211, 16
      %v7240 = vshll.u32 %v7211, 16
      %v7242 = vrot.slane %v7240, 1
      %v7243 = vor.u32 %v7238, %v7242
      %v7245 = vshrl.u32 %v7212, 16
      %v7247 = vshll.u32 %v7212, 16
      %v7249 = vrot.slane %v7247, 1
      %v7250 = vor.u32 %v7245, %v7249
      %v7252 = vshrl.u32 %v7213, 16
      %v7254 = vshll.u32 %v7213, 16
      %v7256 = vrot.slane %v7254, 1
      %v7257 = vor.u32 %v7252, %v7256
      %v7259 = vshrl.u32 %v7214, 16
      %v7261 = vshll.u32 %v7214, 16
      %v7263 = vrot.slane %v7261, 1
      %v7264 = vor.u32 %v7259, %v7263
      %v7266 = vshrl.u32 %v7215, 16
      %v7268 = vshll.u32 %v7215, 16
      %v7270 = vrot.slane %v7268, 1
      %v7271 = vor.u32 %v7266, %v7270
      %v7272 = vrot.slane %v7208, 1
      %v7273 = vrot.slane %v7209, 1
      %v7274 = vrot.slane %v7210, 1
      %v7275 = vrot.slane %v7211, 1
      %v7276 = vrot.slane %v7212, 1
      %v7277 = vrot.slane %v7213, 1
      %v7278 = vrot.slane %v7214, 1
      %v7279 = vrot.slane %v7215, 1
      %v7280 = vunpack.c.l.b16 %v7222
      %v7281 = vunpack.c.l.b16 %v7272
      %v7282 = vunpack.c.l.b16 %v7229
      %v7283 = vunpack.c.l.b16 %v7273
      %v7284 = vunpack.c.l.b16 %v7236
      %v7285 = vunpack.c.l.b16 %v7274
      %v7286 = vunpack.c.l.b16 %v7243
      %v7287 = vunpack.c.l.b16 %v7275
      %v7288 = vunpack.c.l.b16 %v7250
      %v7289 = vunpack.c.l.b16 %v7276
      %v7290 = vunpack.c.l.b16 %v7257
      %v7291 = vunpack.c.l.b16 %v7277
      %v7292 = vunpack.c.l.b16 %v7264
      %v7293 = vunpack.c.l.b16 %v7278
      %v7294 = vunpack.c.l.b16 %v7271
      %v7295 = vunpack.c.l.b16 %v7279
      %s7296 = scalar_lea.vmem %s5, 1152
      %v7297 = vld [vmem:[%s7296] sm:$0xf]
      %v7298 = vld [vmem:[%s7296 + $0x4] sm:$0xf]
      %v7299 = vld [vmem:[%s7296 + $0x8] sm:$0xf]
      %v7300 = vld [vmem:[%s7296 + $0xc] sm:$0xf]
      %v7301 = vld [vmem:[%s7296 + $0x10] sm:$0xf]
      %v7302 = vld [vmem:[%s7296 + $0x14] sm:$0xf]
      %v7303 = vld [vmem:[%s7296 + $0x18] sm:$0xf]
      %v7304 = vld [vmem:[%s7296 + $0x1c] sm:$0xf]
      %v7305 = vld [vmem:[%s7296 + $0x20] sm:$0xf]
      %v7306 = vld [vmem:[%s7296 + $0x24] sm:$0xf]
      %v7307 = vld [vmem:[%s7296 + $0x28] sm:$0xf]
      %v7308 = vld [vmem:[%s7296 + $0x2c] sm:$0xf]
      %v7309 = vld [vmem:[%s7296 + $0x30] sm:$0xf]
      %v7310 = vld [vmem:[%s7296 + $0x34] sm:$0xf]
      %v7311 = vld [vmem:[%s7296 + $0x38] sm:$0xf]
      %v7312 = vld [vmem:[%s7296 + $0x3c] sm:$0xf]
      %v7313 = vld [vmem:[%s7296 + $0x40] sm:$0xf]
      %v7314 = vld [vmem:[%s7296 + $0x44] sm:$0xf]
      %v7315 = vld [vmem:[%s7296 + $0x48] sm:$0xf]
      %v7316 = vld [vmem:[%s7296 + $0x4c] sm:$0xf]
      %v7317 = vld [vmem:[%s7296 + $0x50] sm:$0xf]
      %v7318 = vld [vmem:[%s7296 + $0x54] sm:$0xf]
      %v7319 = vld [vmem:[%s7296 + $0x58] sm:$0xf]
      %v7320 = vld [vmem:[%s7296 + $0x5c] sm:$0xf]
      %v7321 = vld [vmem:[%s7296 + $0x60] sm:$0xf]
      %v7322 = vld [vmem:[%s7296 + $0x64] sm:$0xf]
      %v7323 = vld [vmem:[%s7296 + $0x68] sm:$0xf]
      %v7324 = vld [vmem:[%s7296 + $0x6c] sm:$0xf]
      %v7325 = vld [vmem:[%s7296 + $0x70] sm:$0xf]
      %v7326 = vld [vmem:[%s7296 + $0x74] sm:$0xf]
      %v7327 = vld [vmem:[%s7296 + $0x78] sm:$0xf]
      %v7328 = vld [vmem:[%s7296 + $0x7c] sm:$0xf]
      %v7329 = vld [vmem:[%s7296 + $0x80] sm:$0xf]
      %v7330 = vld [vmem:[%s7296 + $0x84] sm:$0xf]
      %v7331 = vld [vmem:[%s7296 + $0x88] sm:$0xf]
      %v7332 = vld [vmem:[%s7296 + $0x8c] sm:$0xf]
      %v7333 = vld [vmem:[%s7296 + $0x90] sm:$0xf]
      %v7334 = vld [vmem:[%s7296 + $0x94] sm:$0xf]
      %v7335 = vld [vmem:[%s7296 + $0x98] sm:$0xf]
      %v7336 = vld [vmem:[%s7296 + $0x9c] sm:$0xf]
      %v7337 = vld [vmem:[%s7296 + $0xa0] sm:$0xf]
      %v7338 = vld [vmem:[%s7296 + $0xa4] sm:$0xf]
      %v7339 = vld [vmem:[%s7296 + $0xa8] sm:$0xf]
      %v7340 = vld [vmem:[%s7296 + $0xac] sm:$0xf]
      %v7341 = vld [vmem:[%s7296 + $0xb0] sm:$0xf]
      %v7342 = vld [vmem:[%s7296 + $0xb4] sm:$0xf]
      %v7343 = vld [vmem:[%s7296 + $0xb8] sm:$0xf]
      %v7344 = vld [vmem:[%s7296 + $0xbc] sm:$0xf]
      %v7345 = vpack.c.b16 %v7194, %v7192
      %v7346 = vpack.c.b16 %v7282, %v7280
      %v7347 = vpack.c.b16 %v7283, %v7281
      %v7348 = vpack.c.b16 %v7198, %v7196
      %v7349 = vpack.c.b16 %v7286, %v7284
      %v7350 = vpack.c.b16 %v7287, %v7285
      %v7351 = vpack.c.b16 %v7202, %v7200
      %v7352 = vpack.c.b16 %v7290, %v7288
      %v7353 = vpack.c.b16 %v7291, %v7289
      %v7354 = vpack.c.b16 %v7206, %v7204
      %v7355 = vpack.c.b16 %v7294, %v7292
      %v7356 = vpack.c.b16 %v7295, %v7293
      %v7417 = vunpack.c.l.b16 %v7297
      %v7418 = vunpack.c.l.b16 %v7298
      %v7419 = vunpack.c.l.b16 %v7299
      %v7420 = vunpack.c.l.b16 %v7300
      %v7421 = vunpack.c.l.b16 %v7301
      %v7422 = vunpack.c.l.b16 %v7302
      %v7423 = vunpack.c.l.b16 %v7303
      %v7424 = vunpack.c.l.b16 %v7304
      %v7425 = vunpack.c.l.b16 %v7305
      %v7426 = vunpack.c.l.b16 %v7306
      %v7427 = vunpack.c.l.b16 %v7307
      %v7428 = vunpack.c.l.b16 %v7308
      %v7429 = vunpack.c.l.b16 %v7309
      %v7430 = vunpack.c.l.b16 %v7310
      %v7431 = vunpack.c.l.b16 %v7311
      %v7432 = vunpack.c.l.b16 %v7312
      %v7433 = vunpack.c.l.b16 %v7313
      %v7434 = vunpack.c.l.b16 %v7314
      %v7435 = vunpack.c.l.b16 %v7315
      %v7436 = vunpack.c.l.b16 %v7316
      %v7437 = vunpack.c.l.b16 %v7317
      %v7438 = vunpack.c.l.b16 %v7318
      %v7439 = vunpack.c.l.b16 %v7319
      %v7440 = vunpack.c.l.b16 %v7320
      %v7441 = vunpack.c.l.b16 %v7321
      %v7442 = vunpack.c.l.b16 %v7322
      %v7443 = vunpack.c.l.b16 %v7323
      %v7444 = vunpack.c.l.b16 %v7324
      %v7445 = vunpack.c.l.b16 %v7325
      %v7446 = vunpack.c.l.b16 %v7326
      %v7447 = vunpack.c.l.b16 %v7327
      %v7448 = vunpack.c.l.b16 %v7328
      %v7449 = vunpack.c.l.b16 %v7329
      %v7450 = vunpack.c.l.b16 %v7330
      %v7451 = vunpack.c.l.b16 %v7331
      %v7452 = vunpack.c.l.b16 %v7332
      %v7453 = vunpack.c.l.b16 %v7333
      %v7454 = vunpack.c.l.b16 %v7334
      %v7455 = vunpack.c.l.b16 %v7335
      %v7456 = vunpack.c.l.b16 %v7336
      %v7457 = vunpack.c.l.b16 %v7337
      %v7458 = vunpack.c.l.b16 %v7338
      %v7459 = vunpack.c.l.b16 %v7339
      %v7460 = vunpack.c.l.b16 %v7340
      %v7461 = vunpack.c.l.b16 %v7341
      %v7462 = vunpack.c.l.b16 %v7342
      %v7463 = vunpack.c.l.b16 %v7343
      %v7464 = vunpack.c.l.b16 %v7344
      %v7465 = vpack.c.b16 %v7418, %v7417
      %v7466 = vpack.c.b16 %v7420, %v7419
      %v7467 = vpack.c.b16 %v7422, %v7421
      %v7468 = vpack.c.b16 %v7424, %v7423
      %v7469 = vpack.c.b16 %v7426, %v7425
      %v7470 = vpack.c.b16 %v7428, %v7427
      %v7471 = vpack.c.b16 %v7430, %v7429
      %v7472 = vpack.c.b16 %v7432, %v7431
      %v7473 = vpack.c.b16 %v7434, %v7433
      %v7474 = vpack.c.b16 %v7436, %v7435
      %v7475 = vpack.c.b16 %v7438, %v7437
      %v7476 = vpack.c.b16 %v7440, %v7439
      %v7477 = vpack.c.b16 %v7442, %v7441
      %v7478 = vpack.c.b16 %v7444, %v7443
      %v7479 = vpack.c.b16 %v7446, %v7445
      %v7480 = vpack.c.b16 %v7448, %v7447
      %v7481 = vpack.c.b16 %v7450, %v7449
      %v7482 = vpack.c.b16 %v7452, %v7451
      %v7483 = vpack.c.b16 %v7454, %v7453
      %v7484 = vpack.c.b16 %v7456, %v7455
      %v7485 = vpack.c.b16 %v7458, %v7457
      %v7486 = vpack.c.b16 %v7460, %v7459
      %v7487 = vpack.c.b16 %v7462, %v7461
      %v7488 = vpack.c.b16 %v7464, %v7463
      %7513 = vmatprep.subr.bf16.mxu0 0
      %7514 = vmatpush1.bf16.msra.mxu0 %v7472
      %7515 = vmatprep.subr.bf16.mxu0 0
      %7516 = vmatpush1.bf16.msra.mxu0 %v7471
      %7517 = vmatprep.subr.bf16.mxu0 0
      %7518 = vmatpush1.bf16.msra.mxu0 %v7470
      %7519 = vmatprep.subr.bf16.mxu0 0
      %7520 = vmatpush1.bf16.msra.mxu0 %v7469
      %7521 = vmatprep.subr.bf16.mxu0 0
      %7522 = vmatpush1.bf16.msra.mxu0 %v7468
      %7523 = vmatprep.subr.bf16.mxu0 0
      %7524 = vmatpush1.bf16.msra.mxu0 %v7467
      %7525 = vmatprep.subr.bf16.mxu0 0
      %7526 = vmatpush1.bf16.msra.mxu0 %v7466
      %7527 = vmatprep.subr.bf16.mxu0 0
      %7528 = vmatpush1.bf16.msra.mxu0 %v7465
      %7529 = vmatprep.subr.bf16.mxu0 0
      %7530 = vmatpush2.bf16.msra.mxu0 %v7480
      %7531 = vmatprep.subr.bf16.mxu0 0
      %7532 = vmatpush2.bf16.msra.mxu0 %v7479
      %7533 = vmatprep.subr.bf16.mxu0 0
      %7534 = vmatpush2.bf16.msra.mxu0 %v7478
      %7535 = vmatprep.subr.bf16.mxu0 0
      %7536 = vmatpush2.bf16.msra.mxu0 %v7477
      %7537 = vmatprep.subr.bf16.mxu0 0
      %7538 = vmatpush2.bf16.msra.mxu0 %v7476
      %7539 = vmatprep.subr.bf16.mxu0 0
      %7540 = vmatpush2.bf16.msra.mxu0 %v7475
      %7541 = vmatprep.subr.bf16.mxu0 0
      %7542 = vmatpush2.bf16.msra.mxu0 %v7474
      %7543 = vmatprep.subr.bf16.mxu0 0
      %7544 = vmatpush2.bf16.msra.mxu0 %v7473
      %7545 = vmatprep.mubr.bf16.mxu0 %v7346
      %7546 = vmatmul.mubr.bf16.gmra.mxu0 %v7345
      %v7547 = vpop.f32.mrf.mxu0
      %v7548 = vadd.f32 0.0, %v7547
      %v7549 = vpop.f32.mrf.mxu0
      %v7550 = vpop.f32.mrf.mxu0
      %v7551 = vadd.f32 0.0, %v7550
      %v7552 = vpop.f32.mrf.mxu0
      %7553 = vmatprep.mubr.bf16.mxu0 %v7349
      %7554 = vmatmul.mubr.bf16.gmra.mxu0 %v7348
      %v7555 = vpop.f32.mrf.mxu0
      %v7556 = vadd.f32 0.0, %v7555
      %v7557 = vpop.f32.mrf.mxu0
      %v7558 = vpop.f32.mrf.mxu0
      %v7559 = vadd.f32 0.0, %v7558
      %v7560 = vpop.f32.mrf.mxu0
      %7561 = vmatprep.mubr.bf16.mxu0 %v7352
      %7562 = vmatmul.mubr.bf16.gmra.mxu0 %v7351
      %v7563 = vpop.f32.mrf.mxu0
      %v7564 = vadd.f32 0.0, %v7563
      %v7565 = vpop.f32.mrf.mxu0
      %v7566 = vpop.f32.mrf.mxu0
      %v7567 = vadd.f32 0.0, %v7566
      %v7568 = vpop.f32.mrf.mxu0
      %7569 = vmatprep.mubr.bf16.mxu0 %v7355
      %7570 = vmatmul.mubr.bf16.gmra.mxu0 %v7354
      %v7571 = vpop.f32.mrf.mxu0
      %v7572 = vadd.f32 0.0, %v7571
      %v7573 = vpop.f32.mrf.mxu0
      %v7574 = vpop.f32.mrf.mxu0
      %v7575 = vadd.f32 0.0, %v7574
      %v7576 = vpop.f32.mrf.mxu0
      %7577 = vdwg.mxu0
      %7578 = vmatprep.subr.bf16.mxu0 0
      %7579 = vmatpush1.bf16.msra.mxu0 %v7488
      %7580 = vmatprep.subr.bf16.mxu0 0
      %7581 = vmatpush1.bf16.msra.mxu0 %v7487
      %7582 = vmatprep.subr.bf16.mxu0 0
      %7583 = vmatpush1.bf16.msra.mxu0 %v7486
      %7584 = vmatprep.subr.bf16.mxu0 0
      %7585 = vmatpush1.bf16.msra.mxu0 %v7485
      %7586 = vmatprep.subr.bf16.mxu0 0
      %7587 = vmatpush1.bf16.msra.mxu0 %v7484
      %7588 = vmatprep.subr.bf16.mxu0 0
      %7589 = vmatpush1.bf16.msra.mxu0 %v7483
      %7590 = vmatprep.subr.bf16.mxu0 0
      %7591 = vmatpush1.bf16.msra.mxu0 %v7482
      %7592 = vmatprep.subr.bf16.mxu0 0
      %7593 = vmatpush1.bf16.msra.mxu0 %v7481
      %7594 = vmatprep.subr.bf16.mxu0 0
      %7595 = vmatpush2.bf16.msra.mxu0 0
      %7596 = vmatprep.subr.bf16.mxu0 0
      %7597 = vmatpush2.bf16.msra.mxu0 0
      %7598 = vmatprep.subr.bf16.mxu0 0
      %7599 = vmatpush2.bf16.msra.mxu0 0
      %7600 = vmatprep.subr.bf16.mxu0 0
      %7601 = vmatpush2.bf16.msra.mxu0 0
      %7602 = vmatprep.subr.bf16.mxu0 0
      %7603 = vmatpush2.bf16.msra.mxu0 0
      %7604 = vmatprep.subr.bf16.mxu0 0
      %7605 = vmatpush2.bf16.msra.mxu0 0
      %7606 = vmatprep.subr.bf16.mxu0 0
      %7607 = vmatpush2.bf16.msra.mxu0 0
      %7608 = vmatprep.subr.bf16.mxu0 0
      %7609 = vmatpush2.bf16.msra.mxu0 0
      %7610 = vmatprep.mubr.bf16.mxu0 0
      %7611 = vmatmul.mubr.bf16.gmra.mxu0 %v7347
      %v7612 = vpop.f32.mrf.mxu0
      %v7613 = vadd.f32 %v7548, %v7612
      %v7614 = vpop.f32.mrf.mxu0
      %v7615 = vpop.f32.mrf.mxu0
      %v7616 = vadd.f32 %v7551, %v7615
      %v7617 = vpop.f32.mrf.mxu0
      %7618 = vmatprep.mubr.bf16.mxu0 0
      %7619 = vmatmul.mubr.bf16.gmra.mxu0 %v7350
      %v7620 = vpop.f32.mrf.mxu0
      %v7621 = vadd.f32 %v7556, %v7620
      %v7622 = vpop.f32.mrf.mxu0
      %v7623 = vpop.f32.mrf.mxu0
      %v7624 = vadd.f32 %v7559, %v7623
      %v7625 = vpop.f32.mrf.mxu0
      %7626 = vmatprep.mubr.bf16.mxu0 0
      %7627 = vmatmul.mubr.bf16.gmra.mxu0 %v7353
      %v7628 = vpop.f32.mrf.mxu0
      %v7629 = vadd.f32 %v7564, %v7628
      %v7630 = vpop.f32.mrf.mxu0
      %v7631 = vpop.f32.mrf.mxu0
      %v7632 = vadd.f32 %v7567, %v7631
      %v7633 = vpop.f32.mrf.mxu0
      %7634 = vmatprep.mubr.bf16.mxu0 0
      %7635 = vmatmul.mubr.bf16.gmra.mxu0 %v7356
      %v7636 = vpop.f32.mrf.mxu0
      %v7637 = vadd.f32 %v7572, %v7636
      %v7638 = vpop.f32.mrf.mxu0
      %v7639 = vpop.f32.mrf.mxu0
      %v7640 = vadd.f32 %v7575, %v7639
      %v7641 = vpop.f32.mrf.mxu0
      %7642 = vdwg.mxu0
      %v7643 = vadd.f32 %v6994, %v7613
      %v7644 = vadd.f32 %v6995, %v7616
      %v7645 = vadd.f32 %v6996, %v7621
      %v7646 = vadd.f32 %v6997, %v7624
      %v7647 = vadd.f32 %v6998, %v7629
      %v7648 = vadd.f32 %v6999, %v7632
      %v7649 = vadd.f32 %v7000, %v7637
      %v7650 = vadd.f32 %v7001, %v7640
      %7651 = vmatprep.subr.bf16.mxu0 0
      %7652 = vmatpush1.bf16.msra.mxu0 %v5841
      %7653 = vmatprep.subr.bf16.mxu0 0
      %7654 = vmatpush1.bf16.msra.mxu0 %v5840
      %7655 = vmatprep.subr.bf16.mxu0 0
      %7656 = vmatpush1.bf16.msra.mxu0 %v5839
      %7657 = vmatprep.subr.bf16.mxu0 0
      %7658 = vmatpush1.bf16.msra.mxu0 %v5838
      %7659 = vmatprep.subr.bf16.mxu0 0
      %7660 = vmatpush1.bf16.msra.mxu0 %v5837
      %7661 = vmatprep.subr.bf16.mxu0 0
      %7662 = vmatpush1.bf16.msra.mxu0 %v5836
      %7663 = vmatprep.subr.bf16.mxu0 0
      %7664 = vmatpush1.bf16.msra.mxu0 %v5835
      %7665 = vmatprep.subr.bf16.mxu0 0
      %7666 = vmatpush1.bf16.msra.mxu0 %v5834
      %7667 = vmatprep.subr.bf16.mxu0 0
      %7668 = vmatpush2.bf16.msra.mxu0 %v5849
      %7669 = vmatprep.subr.bf16.mxu0 0
      %7670 = vmatpush2.bf16.msra.mxu0 %v5848
      %7671 = vmatprep.subr.bf16.mxu0 0
      %7672 = vmatpush2.bf16.msra.mxu0 %v5847
      %7673 = vmatprep.subr.bf16.mxu0 0
      %7674 = vmatpush2.bf16.msra.mxu0 %v5846
      %7675 = vmatprep.subr.bf16.mxu0 0
      %7676 = vmatpush2.bf16.msra.mxu0 %v5845
      %7677 = vmatprep.subr.bf16.mxu0 0
      %7678 = vmatpush2.bf16.msra.mxu0 %v5844
      %7679 = vmatprep.subr.bf16.mxu0 0
      %7680 = vmatpush2.bf16.msra.mxu0 %v5843
      %7681 = vmatprep.subr.bf16.mxu0 0
      %7682 = vmatpush2.bf16.msra.mxu0 %v5842
      %7683 = vmatprep.mubr.bf16.mxu0 %v7346
      %7684 = vmatmul.mubr.bf16.gmra.mxu0 %v7345
      %v7685 = vpop.f32.mrf.mxu0
      %v7686 = vadd.f32 0.0, %v7685
      %v7687 = vpop.f32.mrf.mxu0
      %v7688 = vpop.f32.mrf.mxu0
      %v7689 = vadd.f32 0.0, %v7688
      %v7690 = vpop.f32.mrf.mxu0
      %7691 = vmatprep.mubr.bf16.mxu0 %v7349
      %7692 = vmatmul.mubr.bf16.gmra.mxu0 %v7348
      %v7693 = vpop.f32.mrf.mxu0
      %v7694 = vadd.f32 0.0, %v7693
      %v7695 = vpop.f32.mrf.mxu0
      %v7696 = vpop.f32.mrf.mxu0
      %v7697 = vadd.f32 0.0, %v7696
      %v7698 = vpop.f32.mrf.mxu0
      %7699 = vmatprep.mubr.bf16.mxu0 %v7352
      %7700 = vmatmul.mubr.bf16.gmra.mxu0 %v7351
      %v7701 = vpop.f32.mrf.mxu0
      %v7702 = vadd.f32 0.0, %v7701
      %v7703 = vpop.f32.mrf.mxu0
      %v7704 = vpop.f32.mrf.mxu0
      %v7705 = vadd.f32 0.0, %v7704
      %v7706 = vpop.f32.mrf.mxu0
      %7707 = vmatprep.mubr.bf16.mxu0 %v7355
      %7708 = vmatmul.mubr.bf16.gmra.mxu0 %v7354
      %v7709 = vpop.f32.mrf.mxu0
      %v7710 = vadd.f32 0.0, %v7709
      %v7711 = vpop.f32.mrf.mxu0
      %v7712 = vpop.f32.mrf.mxu0
      %v7713 = vadd.f32 0.0, %v7712
      %v7714 = vpop.f32.mrf.mxu0
      %7715 = vdwg.mxu0
      %7716 = vmatprep.subr.bf16.mxu0 0
      %7717 = vmatpush1.bf16.msra.mxu0 %v5857
      %7718 = vmatprep.subr.bf16.mxu0 0
      %7719 = vmatpush1.bf16.msra.mxu0 %v5856
      %7720 = vmatprep.subr.bf16.mxu0 0
      %7721 = vmatpush1.bf16.msra.mxu0 %v5855
      %7722 = vmatprep.subr.bf16.mxu0 0
      %7723 = vmatpush1.bf16.msra.mxu0 %v5854
      %7724 = vmatprep.subr.bf16.mxu0 0
      %7725 = vmatpush1.bf16.msra.mxu0 %v5853
      %7726 = vmatprep.subr.bf16.mxu0 0
      %7727 = vmatpush1.bf16.msra.mxu0 %v5852
      %7728 = vmatprep.subr.bf16.mxu0 0
      %7729 = vmatpush1.bf16.msra.mxu0 %v5851
      %7730 = vmatprep.subr.bf16.mxu0 0
      %7731 = vmatpush1.bf16.msra.mxu0 %v5850
      %7732 = vmatprep.subr.bf16.mxu0 0
      %7733 = vmatpush2.bf16.msra.mxu0 0
      %7734 = vmatprep.subr.bf16.mxu0 0
      %7735 = vmatpush2.bf16.msra.mxu0 0
      %7736 = vmatprep.subr.bf16.mxu0 0
      %7737 = vmatpush2.bf16.msra.mxu0 0
      %7738 = vmatprep.subr.bf16.mxu0 0
      %7739 = vmatpush2.bf16.msra.mxu0 0
      %7740 = vmatprep.subr.bf16.mxu0 0
      %7741 = vmatpush2.bf16.msra.mxu0 0
      %7742 = vmatprep.subr.bf16.mxu0 0
      %7743 = vmatpush2.bf16.msra.mxu0 0
      %7744 = vmatprep.subr.bf16.mxu0 0
      %7745 = vmatpush2.bf16.msra.mxu0 0
      %7746 = vmatprep.subr.bf16.mxu0 0
      %7747 = vmatpush2.bf16.msra.mxu0 0
      %7748 = vmatprep.mubr.bf16.mxu0 0
      %7749 = vmatmul.mubr.bf16.gmra.mxu0 %v7347
      %v7750 = vpop.f32.mrf.mxu0
      %v7751 = vadd.f32 %v7686, %v7750
      %v7752 = vpop.f32.mrf.mxu0
      %v7753 = vpop.f32.mrf.mxu0
      %v7754 = vadd.f32 %v7689, %v7753
      %v7755 = vpop.f32.mrf.mxu0
      %7756 = vmatprep.mubr.bf16.mxu0 0
      %7757 = vmatmul.mubr.bf16.gmra.mxu0 %v7350
      %v7758 = vpop.f32.mrf.mxu0
      %v7759 = vadd.f32 %v7694, %v7758
      %v7760 = vpop.f32.mrf.mxu0
      %v7761 = vpop.f32.mrf.mxu0
      %v7762 = vadd.f32 %v7697, %v7761
      %v7763 = vpop.f32.mrf.mxu0
      %7764 = vmatprep.mubr.bf16.mxu0 0
      %7765 = vmatmul.mubr.bf16.gmra.mxu0 %v7353
      %v7766 = vpop.f32.mrf.mxu0
      %v7767 = vadd.f32 %v7702, %v7766
      %v7768 = vpop.f32.mrf.mxu0
      %v7769 = vpop.f32.mrf.mxu0
      %v7770 = vadd.f32 %v7705, %v7769
      %v7771 = vpop.f32.mrf.mxu0
      %7772 = vmatprep.mubr.bf16.mxu0 0
      %7773 = vmatmul.mubr.bf16.gmra.mxu0 %v7356
      %v7774 = vpop.f32.mrf.mxu0
      %v7775 = vadd.f32 %v7710, %v7774
      %v7776 = vpop.f32.mrf.mxu0
      %v7777 = vpop.f32.mrf.mxu0
      %v7778 = vadd.f32 %v7713, %v7777
      %v7779 = vpop.f32.mrf.mxu0
      %7780 = vdwg.mxu0
      %v7781 = vadd.f32 %v7132, %v7751
      %v7782 = vadd.f32 %v7133, %v7754
      %v7783 = vadd.f32 %v7134, %v7759
      %v7784 = vadd.f32 %v7135, %v7762
      %v7785 = vadd.f32 %v7136, %v7767
      %v7786 = vadd.f32 %v7137, %v7770
      %v7787 = vadd.f32 %v7138, %v7775
      %v7788 = vadd.f32 %v7139, %v7778
      %v7791 = vunpack.c.l.b16 %v7172
      %v7792 = vunpack.c.l.b16 %v7173
      %v7793 = vpack.c.b16 %v7792, %v7791
      %v7795 = vshrl.u32 %v7793, 16
      %v7797 = vshll.u32 %v7793, 16
      %v7799 = vrot.slane %v7797, 1
      %v7800 = vor.u32 %v7795, %v7799
      %v7801 = vrot.slane %v7793, 1
      %v7802 = vunpack.c.l.b16 %v7800
      %v7803 = vunpack.c.l.b16 %v7801
      %s7804 = scalar_lea.vmem %s5, 1344
      %v7805 = vld [vmem:[%s7804] sm:$0xf]
      %v7806 = vld [vmem:[%s7804 + $0x4] sm:$0xf]
      %v7807 = vld [vmem:[%s7804 + $0x8] sm:$0xf]
      %v7808 = vld [vmem:[%s7804 + $0xc] sm:$0xf]
      %v7809 = vld [vmem:[%s7804 + $0x10] sm:$0xf]
      %v7810 = vld [vmem:[%s7804 + $0x14] sm:$0xf]
      %v7811 = vld [vmem:[%s7804 + $0x18] sm:$0xf]
      %v7812 = vld [vmem:[%s7804 + $0x1c] sm:$0xf]
      %v7813 = vld [vmem:[%s7804 + $0x20] sm:$0xf]
      %v7814 = vld [vmem:[%s7804 + $0x24] sm:$0xf]
      %v7815 = vld [vmem:[%s7804 + $0x28] sm:$0xf]
      %v7816 = vld [vmem:[%s7804 + $0x2c] sm:$0xf]
      %v7817 = vld [vmem:[%s7804 + $0x30] sm:$0xf]
      %v7818 = vld [vmem:[%s7804 + $0x34] sm:$0xf]
      %v7819 = vld [vmem:[%s7804 + $0x38] sm:$0xf]
      %v7820 = vld [vmem:[%s7804 + $0x3c] sm:$0xf]
      %v7821 = vld [vmem:[%s7804 + $0x40] sm:$0xf]
      %v7822 = vld [vmem:[%s7804 + $0x44] sm:$0xf]
      %v7823 = vld [vmem:[%s7804 + $0x48] sm:$0xf]
      %v7824 = vld [vmem:[%s7804 + $0x4c] sm:$0xf]
      %v7825 = vld [vmem:[%s7804 + $0x50] sm:$0xf]
      %v7826 = vld [vmem:[%s7804 + $0x54] sm:$0xf]
      %v7827 = vld [vmem:[%s7804 + $0x58] sm:$0xf]
      %v7828 = vld [vmem:[%s7804 + $0x5c] sm:$0xf]
      %v7829 = vld [vmem:[%s7804 + $0x60] sm:$0xf]
      %v7830 = vld [vmem:[%s7804 + $0x64] sm:$0xf]
      %v7831 = vld [vmem:[%s7804 + $0x68] sm:$0xf]
      %v7832 = vld [vmem:[%s7804 + $0x6c] sm:$0xf]
      %v7833 = vld [vmem:[%s7804 + $0x70] sm:$0xf]
      %v7834 = vld [vmem:[%s7804 + $0x74] sm:$0xf]
      %v7835 = vld [vmem:[%s7804 + $0x78] sm:$0xf]
      %v7836 = vld [vmem:[%s7804 + $0x7c] sm:$0xf]
      %v7837 = vld [vmem:[%s7804 + $0x80] sm:$0xf]
      %v7838 = vld [vmem:[%s7804 + $0x84] sm:$0xf]
      %v7839 = vld [vmem:[%s7804 + $0x88] sm:$0xf]
      %v7840 = vld [vmem:[%s7804 + $0x8c] sm:$0xf]
      %v7841 = vld [vmem:[%s7804 + $0x90] sm:$0xf]
      %v7842 = vld [vmem:[%s7804 + $0x94] sm:$0xf]
      %v7843 = vld [vmem:[%s7804 + $0x98] sm:$0xf]
      %v7844 = vld [vmem:[%s7804 + $0x9c] sm:$0xf]
      %v7845 = vld [vmem:[%s7804 + $0xa0] sm:$0xf]
      %v7846 = vld [vmem:[%s7804 + $0xa4] sm:$0xf]
      %v7847 = vld [vmem:[%s7804 + $0xa8] sm:$0xf]
      %v7848 = vld [vmem:[%s7804 + $0xac] sm:$0xf]
      %v7849 = vld [vmem:[%s7804 + $0xb0] sm:$0xf]
      %v7850 = vld [vmem:[%s7804 + $0xb4] sm:$0xf]
      %v7851 = vld [vmem:[%s7804 + $0xb8] sm:$0xf]
      %v7852 = vld [vmem:[%s7804 + $0xbc] sm:$0xf]
      %v7853 = vpack.c.b16 %v7196, %v7194
      %v7854 = vpack.c.b16 %v7284, %v7282
      %v7855 = vpack.c.b16 %v7285, %v7283
      %v7856 = vpack.c.b16 %v7200, %v7198
      %v7857 = vpack.c.b16 %v7288, %v7286
      %v7858 = vpack.c.b16 %v7289, %v7287
      %v7859 = vpack.c.b16 %v7204, %v7202
      %v7860 = vpack.c.b16 %v7292, %v7290
      %v7861 = vpack.c.b16 %v7293, %v7291
      %v7862 = vpack.c.b16 %v7791, %v7206
      %v7863 = vpack.c.b16 %v7802, %v7294
      %v7864 = vpack.c.b16 %v7803, %v7295
      %v7925 = vunpack.c.l.b16 %v7805
      %v7926 = vunpack.c.l.b16 %v7806
      %v7927 = vunpack.c.l.b16 %v7807
      %v7928 = vunpack.c.l.b16 %v7808
      %v7929 = vunpack.c.l.b16 %v7809
      %v7930 = vunpack.c.l.b16 %v7810
      %v7931 = vunpack.c.l.b16 %v7811
      %v7932 = vunpack.c.l.b16 %v7812
      %v7933 = vunpack.c.l.b16 %v7813
      %v7934 = vunpack.c.l.b16 %v7814
      %v7935 = vunpack.c.l.b16 %v7815
      %v7936 = vunpack.c.l.b16 %v7816
      %v7937 = vunpack.c.l.b16 %v7817
      %v7938 = vunpack.c.l.b16 %v7818
      %v7939 = vunpack.c.l.b16 %v7819
      %v7940 = vunpack.c.l.b16 %v7820
      %v7941 = vunpack.c.l.b16 %v7821
      %v7942 = vunpack.c.l.b16 %v7822
      %v7943 = vunpack.c.l.b16 %v7823
      %v7944 = vunpack.c.l.b16 %v7824
      %v7945 = vunpack.c.l.b16 %v7825
      %v7946 = vunpack.c.l.b16 %v7826
      %v7947 = vunpack.c.l.b16 %v7827
      %v7948 = vunpack.c.l.b16 %v7828
      %v7949 = vunpack.c.l.b16 %v7829
      %v7950 = vunpack.c.l.b16 %v7830
      %v7951 = vunpack.c.l.b16 %v7831
      %v7952 = vunpack.c.l.b16 %v7832
      %v7953 = vunpack.c.l.b16 %v7833
      %v7954 = vunpack.c.l.b16 %v7834
      %v7955 = vunpack.c.l.b16 %v7835
      %v7956 = vunpack.c.l.b16 %v7836
      %v7957 = vunpack.c.l.b16 %v7837
      %v7958 = vunpack.c.l.b16 %v7838
      %v7959 = vunpack.c.l.b16 %v7839
      %v7960 = vunpack.c.l.b16 %v7840
      %v7961 = vunpack.c.l.b16 %v7841
      %v7962 = vunpack.c.l.b16 %v7842
      %v7963 = vunpack.c.l.b16 %v7843
      %v7964 = vunpack.c.l.b16 %v7844
      %v7965 = vunpack.c.l.b16 %v7845
      %v7966 = vunpack.c.l.b16 %v7846
      %v7967 = vunpack.c.l.b16 %v7847
      %v7968 = vunpack.c.l.b16 %v7848
      %v7969 = vunpack.c.l.b16 %v7849
      %v7970 = vunpack.c.l.b16 %v7850
      %v7971 = vunpack.c.l.b16 %v7851
      %v7972 = vunpack.c.l.b16 %v7852
      %v7973 = vpack.c.b16 %v7926, %v7925
      %v7974 = vpack.c.b16 %v7928, %v7927
      %v7975 = vpack.c.b16 %v7930, %v7929
      %v7976 = vpack.c.b16 %v7932, %v7931
      %v7977 = vpack.c.b16 %v7934, %v7933
      %v7978 = vpack.c.b16 %v7936, %v7935
      %v7979 = vpack.c.b16 %v7938, %v7937
      %v7980 = vpack.c.b16 %v7940, %v7939
      %v7981 = vpack.c.b16 %v7942, %v7941
      %v7982 = vpack.c.b16 %v7944, %v7943
      %v7983 = vpack.c.b16 %v7946, %v7945
      %v7984 = vpack.c.b16 %v7948, %v7947
      %v7985 = vpack.c.b16 %v7950, %v7949
      %v7986 = vpack.c.b16 %v7952, %v7951
      %v7987 = vpack.c.b16 %v7954, %v7953
      %v7988 = vpack.c.b16 %v7956, %v7955
      %v7989 = vpack.c.b16 %v7958, %v7957
      %v7990 = vpack.c.b16 %v7960, %v7959
      %v7991 = vpack.c.b16 %v7962, %v7961
      %v7992 = vpack.c.b16 %v7964, %v7963
      %v7993 = vpack.c.b16 %v7966, %v7965
      %v7994 = vpack.c.b16 %v7968, %v7967
      %v7995 = vpack.c.b16 %v7970, %v7969
      %v7996 = vpack.c.b16 %v7972, %v7971
      %8021 = vmatprep.subr.bf16.mxu0 0
      %8022 = vmatpush1.bf16.msra.mxu0 %v7980
      %8023 = vmatprep.subr.bf16.mxu0 0
      %8024 = vmatpush1.bf16.msra.mxu0 %v7979
      %8025 = vmatprep.subr.bf16.mxu0 0
      %8026 = vmatpush1.bf16.msra.mxu0 %v7978
      %8027 = vmatprep.subr.bf16.mxu0 0
      %8028 = vmatpush1.bf16.msra.mxu0 %v7977
      %8029 = vmatprep.subr.bf16.mxu0 0
      %8030 = vmatpush1.bf16.msra.mxu0 %v7976
      %8031 = vmatprep.subr.bf16.mxu0 0
      %8032 = vmatpush1.bf16.msra.mxu0 %v7975
      %8033 = vmatprep.subr.bf16.mxu0 0
      %8034 = vmatpush1.bf16.msra.mxu0 %v7974
      %8035 = vmatprep.subr.bf16.mxu0 0
      %8036 = vmatpush1.bf16.msra.mxu0 %v7973
      %8037 = vmatprep.subr.bf16.mxu0 0
      %8038 = vmatpush2.bf16.msra.mxu0 %v7988
      %8039 = vmatprep.subr.bf16.mxu0 0
      %8040 = vmatpush2.bf16.msra.mxu0 %v7987
      %8041 = vmatprep.subr.bf16.mxu0 0
      %8042 = vmatpush2.bf16.msra.mxu0 %v7986
      %8043 = vmatprep.subr.bf16.mxu0 0
      %8044 = vmatpush2.bf16.msra.mxu0 %v7985
      %8045 = vmatprep.subr.bf16.mxu0 0
      %8046 = vmatpush2.bf16.msra.mxu0 %v7984
      %8047 = vmatprep.subr.bf16.mxu0 0
      %8048 = vmatpush2.bf16.msra.mxu0 %v7983
      %8049 = vmatprep.subr.bf16.mxu0 0
      %8050 = vmatpush2.bf16.msra.mxu0 %v7982
      %8051 = vmatprep.subr.bf16.mxu0 0
      %8052 = vmatpush2.bf16.msra.mxu0 %v7981
      %8053 = vmatprep.mubr.bf16.mxu0 %v7854
      %8054 = vmatmul.mubr.bf16.gmra.mxu0 %v7853
      %v8055 = vpop.f32.mrf.mxu0
      %v8056 = vadd.f32 0.0, %v8055
      %v8057 = vpop.f32.mrf.mxu0
      %v8058 = vpop.f32.mrf.mxu0
      %v8059 = vadd.f32 0.0, %v8058
      %v8060 = vpop.f32.mrf.mxu0
      %8061 = vmatprep.mubr.bf16.mxu0 %v7857
      %8062 = vmatmul.mubr.bf16.gmra.mxu0 %v7856
      %v8063 = vpop.f32.mrf.mxu0
      %v8064 = vadd.f32 0.0, %v8063
      %v8065 = vpop.f32.mrf.mxu0
      %v8066 = vpop.f32.mrf.mxu0
      %v8067 = vadd.f32 0.0, %v8066
      %v8068 = vpop.f32.mrf.mxu0
      %8069 = vmatprep.mubr.bf16.mxu0 %v7860
      %8070 = vmatmul.mubr.bf16.gmra.mxu0 %v7859
      %v8071 = vpop.f32.mrf.mxu0
      %v8072 = vadd.f32 0.0, %v8071
      %v8073 = vpop.f32.mrf.mxu0
      %v8074 = vpop.f32.mrf.mxu0
      %v8075 = vadd.f32 0.0, %v8074
      %v8076 = vpop.f32.mrf.mxu0
      %8077 = vmatprep.mubr.bf16.mxu0 %v7863
      %8078 = vmatmul.mubr.bf16.gmra.mxu0 %v7862
      %v8079 = vpop.f32.mrf.mxu0
      %v8080 = vadd.f32 0.0, %v8079
      %v8081 = vpop.f32.mrf.mxu0
      %v8082 = vpop.f32.mrf.mxu0
      %v8083 = vadd.f32 0.0, %v8082
      %v8084 = vpop.f32.mrf.mxu0
      %8085 = vdwg.mxu0
      %8086 = vmatprep.subr.bf16.mxu0 0
      %8087 = vmatpush1.bf16.msra.mxu0 %v7996
      %8088 = vmatprep.subr.bf16.mxu0 0
      %8089 = vmatpush1.bf16.msra.mxu0 %v7995
      %8090 = vmatprep.subr.bf16.mxu0 0
      %8091 = vmatpush1.bf16.msra.mxu0 %v7994
      %8092 = vmatprep.subr.bf16.mxu0 0
      %8093 = vmatpush1.bf16.msra.mxu0 %v7993
      %8094 = vmatprep.subr.bf16.mxu0 0
      %8095 = vmatpush1.bf16.msra.mxu0 %v7992
      %8096 = vmatprep.subr.bf16.mxu0 0
      %8097 = vmatpush1.bf16.msra.mxu0 %v7991
      %8098 = vmatprep.subr.bf16.mxu0 0
      %8099 = vmatpush1.bf16.msra.mxu0 %v7990
      %8100 = vmatprep.subr.bf16.mxu0 0
      %8101 = vmatpush1.bf16.msra.mxu0 %v7989
      %8102 = vmatprep.subr.bf16.mxu0 0
      %8103 = vmatpush2.bf16.msra.mxu0 0
      %8104 = vmatprep.subr.bf16.mxu0 0
      %8105 = vmatpush2.bf16.msra.mxu0 0
      %8106 = vmatprep.subr.bf16.mxu0 0
      %8107 = vmatpush2.bf16.msra.mxu0 0
      %8108 = vmatprep.subr.bf16.mxu0 0
      %8109 = vmatpush2.bf16.msra.mxu0 0
      %8110 = vmatprep.subr.bf16.mxu0 0
      %8111 = vmatpush2.bf16.msra.mxu0 0
      %8112 = vmatprep.subr.bf16.mxu0 0
      %8113 = vmatpush2.bf16.msra.mxu0 0
      %8114 = vmatprep.subr.bf16.mxu0 0
      %8115 = vmatpush2.bf16.msra.mxu0 0
      %8116 = vmatprep.subr.bf16.mxu0 0
      %8117 = vmatpush2.bf16.msra.mxu0 0
      %8118 = vmatprep.mubr.bf16.mxu0 0
      %8119 = vmatmul.mubr.bf16.gmra.mxu0 %v7855
      %v8120 = vpop.f32.mrf.mxu0
      %v8121 = vadd.f32 %v8056, %v8120
      %v8122 = vpop.f32.mrf.mxu0
      %v8123 = vpop.f32.mrf.mxu0
      %v8124 = vadd.f32 %v8059, %v8123
      %v8125 = vpop.f32.mrf.mxu0
      %8126 = vmatprep.mubr.bf16.mxu0 0
      %8127 = vmatmul.mubr.bf16.gmra.mxu0 %v7858
      %v8128 = vpop.f32.mrf.mxu0
      %v8129 = vadd.f32 %v8064, %v8128
      %v8130 = vpop.f32.mrf.mxu0
      %v8131 = vpop.f32.mrf.mxu0
      %v8132 = vadd.f32 %v8067, %v8131
      %v8133 = vpop.f32.mrf.mxu0
      %8134 = vmatprep.mubr.bf16.mxu0 0
      %8135 = vmatmul.mubr.bf16.gmra.mxu0 %v7861
      %v8136 = vpop.f32.mrf.mxu0
      %v8137 = vadd.f32 %v8072, %v8136
      %v8138 = vpop.f32.mrf.mxu0
      %v8139 = vpop.f32.mrf.mxu0
      %v8140 = vadd.f32 %v8075, %v8139
      %v8141 = vpop.f32.mrf.mxu0
      %8142 = vmatprep.mubr.bf16.mxu0 0
      %8143 = vmatmul.mubr.bf16.gmra.mxu0 %v7864
      %v8144 = vpop.f32.mrf.mxu0
      %v8145 = vadd.f32 %v8080, %v8144
      %v8146 = vpop.f32.mrf.mxu0
      %v8147 = vpop.f32.mrf.mxu0
      %v8148 = vadd.f32 %v8083, %v8147
      %v8149 = vpop.f32.mrf.mxu0
      %8150 = vdwg.mxu0
      %v8151 = vadd.f32 %v7643, %v8121
      %v8152 = vadd.f32 %v7644, %v8124
      %v8153 = vadd.f32 %v7645, %v8129
      %v8154 = vadd.f32 %v7646, %v8132
      %v8155 = vadd.f32 %v7647, %v8137
      %v8156 = vadd.f32 %v7648, %v8140
      %v8157 = vadd.f32 %v7649, %v8145
      %v8158 = vadd.f32 %v7650, %v8148
      %8159 = vmatprep.subr.bf16.mxu0 0
      %8160 = vmatpush1.bf16.msra.mxu0 %v6211
      %8161 = vmatprep.subr.bf16.mxu0 0
      %8162 = vmatpush1.bf16.msra.mxu0 %v6210
      %8163 = vmatprep.subr.bf16.mxu0 0
      %8164 = vmatpush1.bf16.msra.mxu0 %v6209
      %8165 = vmatprep.subr.bf16.mxu0 0
      %8166 = vmatpush1.bf16.msra.mxu0 %v6208
      %8167 = vmatprep.subr.bf16.mxu0 0
      %8168 = vmatpush1.bf16.msra.mxu0 %v6207
      %8169 = vmatprep.subr.bf16.mxu0 0
      %8170 = vmatpush1.bf16.msra.mxu0 %v6206
      %8171 = vmatprep.subr.bf16.mxu0 0
      %8172 = vmatpush1.bf16.msra.mxu0 %v6205
      %8173 = vmatprep.subr.bf16.mxu0 0
      %8174 = vmatpush1.bf16.msra.mxu0 %v6204
      %8175 = vmatprep.subr.bf16.mxu0 0
      %8176 = vmatpush2.bf16.msra.mxu0 %v6219
      %8177 = vmatprep.subr.bf16.mxu0 0
      %8178 = vmatpush2.bf16.msra.mxu0 %v6218
      %8179 = vmatprep.subr.bf16.mxu0 0
      %8180 = vmatpush2.bf16.msra.mxu0 %v6217
      %8181 = vmatprep.subr.bf16.mxu0 0
      %8182 = vmatpush2.bf16.msra.mxu0 %v6216
      %8183 = vmatprep.subr.bf16.mxu0 0
      %8184 = vmatpush2.bf16.msra.mxu0 %v6215
      %8185 = vmatprep.subr.bf16.mxu0 0
      %8186 = vmatpush2.bf16.msra.mxu0 %v6214
      %8187 = vmatprep.subr.bf16.mxu0 0
      %8188 = vmatpush2.bf16.msra.mxu0 %v6213
      %8189 = vmatprep.subr.bf16.mxu0 0
      %8190 = vmatpush2.bf16.msra.mxu0 %v6212
      %8191 = vmatprep.mubr.bf16.mxu0 %v7854
      %8192 = vmatmul.mubr.bf16.gmra.mxu0 %v7853
      %v8193 = vpop.f32.mrf.mxu0
      %v8194 = vadd.f32 0.0, %v8193
      %v8195 = vpop.f32.mrf.mxu0
      %v8196 = vpop.f32.mrf.mxu0
      %v8197 = vadd.f32 0.0, %v8196
      %v8198 = vpop.f32.mrf.mxu0
      %8199 = vmatprep.mubr.bf16.mxu0 %v7857
      %8200 = vmatmul.mubr.bf16.gmra.mxu0 %v7856
      %v8201 = vpop.f32.mrf.mxu0
      %v8202 = vadd.f32 0.0, %v8201
      %v8203 = vpop.f32.mrf.mxu0
      %v8204 = vpop.f32.mrf.mxu0
      %v8205 = vadd.f32 0.0, %v8204
      %v8206 = vpop.f32.mrf.mxu0
      %8207 = vmatprep.mubr.bf16.mxu0 %v7860
      %8208 = vmatmul.mubr.bf16.gmra.mxu0 %v7859
      %v8209 = vpop.f32.mrf.mxu0
      %v8210 = vadd.f32 0.0, %v8209
      %v8211 = vpop.f32.mrf.mxu0
      %v8212 = vpop.f32.mrf.mxu0
      %v8213 = vadd.f32 0.0, %v8212
      %v8214 = vpop.f32.mrf.mxu0
      %8215 = vmatprep.mubr.bf16.mxu0 %v7863
      %8216 = vmatmul.mubr.bf16.gmra.mxu0 %v7862
      %v8217 = vpop.f32.mrf.mxu0
      %v8218 = vadd.f32 0.0, %v8217
      %v8219 = vpop.f32.mrf.mxu0
      %v8220 = vpop.f32.mrf.mxu0
      %v8221 = vadd.f32 0.0, %v8220
      %v8222 = vpop.f32.mrf.mxu0
      %8223 = vdwg.mxu0
      %8224 = vmatprep.subr.bf16.mxu0 0
      %8225 = vmatpush1.bf16.msra.mxu0 %v6227
      %8226 = vmatprep.subr.bf16.mxu0 0
      %8227 = vmatpush1.bf16.msra.mxu0 %v6226
      %8228 = vmatprep.subr.bf16.mxu0 0
      %8229 = vmatpush1.bf16.msra.mxu0 %v6225
      %8230 = vmatprep.subr.bf16.mxu0 0
      %8231 = vmatpush1.bf16.msra.mxu0 %v6224
      %8232 = vmatprep.subr.bf16.mxu0 0
      %8233 = vmatpush1.bf16.msra.mxu0 %v6223
      %8234 = vmatprep.subr.bf16.mxu0 0
      %8235 = vmatpush1.bf16.msra.mxu0 %v6222
      %8236 = vmatprep.subr.bf16.mxu0 0
      %8237 = vmatpush1.bf16.msra.mxu0 %v6221
      %8238 = vmatprep.subr.bf16.mxu0 0
      %8239 = vmatpush1.bf16.msra.mxu0 %v6220
      %8240 = vmatprep.subr.bf16.mxu0 0
      %8241 = vmatpush2.bf16.msra.mxu0 0
      %8242 = vmatprep.subr.bf16.mxu0 0
      %8243 = vmatpush2.bf16.msra.mxu0 0
      %8244 = vmatprep.subr.bf16.mxu0 0
      %8245 = vmatpush2.bf16.msra.mxu0 0
      %8246 = vmatprep.subr.bf16.mxu0 0
      %8247 = vmatpush2.bf16.msra.mxu0 0
      %8248 = vmatprep.subr.bf16.mxu0 0
      %8249 = vmatpush2.bf16.msra.mxu0 0
      %8250 = vmatprep.subr.bf16.mxu0 0
      %8251 = vmatpush2.bf16.msra.mxu0 0
      %8252 = vmatprep.subr.bf16.mxu0 0
      %8253 = vmatpush2.bf16.msra.mxu0 0
      %8254 = vmatprep.subr.bf16.mxu0 0
      %8255 = vmatpush2.bf16.msra.mxu0 0
      %8256 = vmatprep.mubr.bf16.mxu0 0
      %8257 = vmatmul.mubr.bf16.gmra.mxu0 %v7855
      %v8258 = vpop.f32.mrf.mxu0
      %v8259 = vadd.f32 %v8194, %v8258
      %v8260 = vpop.f32.mrf.mxu0
      %v8261 = vpop.f32.mrf.mxu0
      %v8262 = vadd.f32 %v8197, %v8261
      %v8263 = vpop.f32.mrf.mxu0
      %8264 = vmatprep.mubr.bf16.mxu0 0
      %8265 = vmatmul.mubr.bf16.gmra.mxu0 %v7858
      %v8266 = vpop.f32.mrf.mxu0
      %v8267 = vadd.f32 %v8202, %v8266
      %v8268 = vpop.f32.mrf.mxu0
      %v8269 = vpop.f32.mrf.mxu0
      %v8270 = vadd.f32 %v8205, %v8269
      %v8271 = vpop.f32.mrf.mxu0
      %8272 = vmatprep.mubr.bf16.mxu0 0
      %8273 = vmatmul.mubr.bf16.gmra.mxu0 %v7861
      %v8274 = vpop.f32.mrf.mxu0
      %v8275 = vadd.f32 %v8210, %v8274
      %v8276 = vpop.f32.mrf.mxu0
      %v8277 = vpop.f32.mrf.mxu0
      %v8278 = vadd.f32 %v8213, %v8277
      %v8279 = vpop.f32.mrf.mxu0
      %8280 = vmatprep.mubr.bf16.mxu0 0
      %8281 = vmatmul.mubr.bf16.gmra.mxu0 %v7864
      %v8282 = vpop.f32.mrf.mxu0
      %v8283 = vadd.f32 %v8218, %v8282
      %v8284 = vpop.f32.mrf.mxu0
      %v8285 = vpop.f32.mrf.mxu0
      %v8286 = vadd.f32 %v8221, %v8285
      %v8287 = vpop.f32.mrf.mxu0
      %8288 = vdwg.mxu0
      %v8289 = vadd.f32 %v7781, %v8259
      %v8290 = vadd.f32 %v7782, %v8262
      %v8291 = vadd.f32 %v7783, %v8267
      %v8292 = vadd.f32 %v7784, %v8270
      %v8293 = vadd.f32 %v7785, %v8275
      %v8294 = vadd.f32 %v7786, %v8278
      %v8295 = vadd.f32 %v7787, %v8283
      %v8296 = vadd.f32 %v7788, %v8286
      %v8299 = vunpack.c.l.b16 %v7174
      %v8300 = vunpack.c.l.b16 %v7175
      %v8301 = vpack.c.b16 %v8300, %v8299
      %v8303 = vshrl.u32 %v8301, 16
      %v8305 = vshll.u32 %v8301, 16
      %v8307 = vrot.slane %v8305, 1
      %v8308 = vor.u32 %v8303, %v8307
      %v8309 = vrot.slane %v8301, 1
      %v8310 = vunpack.c.l.b16 %v8308
      %v8311 = vunpack.c.l.b16 %v8309
      %s8312 = scalar_lea.vmem %s5, 1536
      %v8313 = vld [vmem:[%s8312] sm:$0xf]
      %v8314 = vld [vmem:[%s8312 + $0x4] sm:$0xf]
      %v8315 = vld [vmem:[%s8312 + $0x8] sm:$0xf]
      %v8316 = vld [vmem:[%s8312 + $0xc] sm:$0xf]
      %v8317 = vld [vmem:[%s8312 + $0x10] sm:$0xf]
      %v8318 = vld [vmem:[%s8312 + $0x14] sm:$0xf]
      %v8319 = vld [vmem:[%s8312 + $0x18] sm:$0xf]
      %v8320 = vld [vmem:[%s8312 + $0x1c] sm:$0xf]
      %v8321 = vld [vmem:[%s8312 + $0x20] sm:$0xf]
      %v8322 = vld [vmem:[%s8312 + $0x24] sm:$0xf]
      %v8323 = vld [vmem:[%s8312 + $0x28] sm:$0xf]
      %v8324 = vld [vmem:[%s8312 + $0x2c] sm:$0xf]
      %v8325 = vld [vmem:[%s8312 + $0x30] sm:$0xf]
      %v8326 = vld [vmem:[%s8312 + $0x34] sm:$0xf]
      %v8327 = vld [vmem:[%s8312 + $0x38] sm:$0xf]
      %v8328 = vld [vmem:[%s8312 + $0x3c] sm:$0xf]
      %v8329 = vld [vmem:[%s8312 + $0x40] sm:$0xf]
      %v8330 = vld [vmem:[%s8312 + $0x44] sm:$0xf]
      %v8331 = vld [vmem:[%s8312 + $0x48] sm:$0xf]
      %v8332 = vld [vmem:[%s8312 + $0x4c] sm:$0xf]
      %v8333 = vld [vmem:[%s8312 + $0x50] sm:$0xf]
      %v8334 = vld [vmem:[%s8312 + $0x54] sm:$0xf]
      %v8335 = vld [vmem:[%s8312 + $0x58] sm:$0xf]
      %v8336 = vld [vmem:[%s8312 + $0x5c] sm:$0xf]
      %v8337 = vld [vmem:[%s8312 + $0x60] sm:$0xf]
      %v8338 = vld [vmem:[%s8312 + $0x64] sm:$0xf]
      %v8339 = vld [vmem:[%s8312 + $0x68] sm:$0xf]
      %v8340 = vld [vmem:[%s8312 + $0x6c] sm:$0xf]
      %v8341 = vld [vmem:[%s8312 + $0x70] sm:$0xf]
      %v8342 = vld [vmem:[%s8312 + $0x74] sm:$0xf]
      %v8343 = vld [vmem:[%s8312 + $0x78] sm:$0xf]
      %v8344 = vld [vmem:[%s8312 + $0x7c] sm:$0xf]
      %v8345 = vld [vmem:[%s8312 + $0x80] sm:$0xf]
      %v8346 = vld [vmem:[%s8312 + $0x84] sm:$0xf]
      %v8347 = vld [vmem:[%s8312 + $0x88] sm:$0xf]
      %v8348 = vld [vmem:[%s8312 + $0x8c] sm:$0xf]
      %v8349 = vld [vmem:[%s8312 + $0x90] sm:$0xf]
      %v8350 = vld [vmem:[%s8312 + $0x94] sm:$0xf]
      %v8351 = vld [vmem:[%s8312 + $0x98] sm:$0xf]
      %v8352 = vld [vmem:[%s8312 + $0x9c] sm:$0xf]
      %v8353 = vld [vmem:[%s8312 + $0xa0] sm:$0xf]
      %v8354 = vld [vmem:[%s8312 + $0xa4] sm:$0xf]
      %v8355 = vld [vmem:[%s8312 + $0xa8] sm:$0xf]
      %v8356 = vld [vmem:[%s8312 + $0xac] sm:$0xf]
      %v8357 = vld [vmem:[%s8312 + $0xb0] sm:$0xf]
      %v8358 = vld [vmem:[%s8312 + $0xb4] sm:$0xf]
      %v8359 = vld [vmem:[%s8312 + $0xb8] sm:$0xf]
      %v8360 = vld [vmem:[%s8312 + $0xbc] sm:$0xf]
      %v8361 = vpack.c.b16 %v8299, %v7791
      %v8362 = vpack.c.b16 %v8310, %v7802
      %v8363 = vpack.c.b16 %v8311, %v7803
      %v8415 = vunpack.c.l.b16 %v8313
      %v8416 = vunpack.c.l.b16 %v8314
      %v8417 = vunpack.c.l.b16 %v8315
      %v8418 = vunpack.c.l.b16 %v8316
      %v8419 = vunpack.c.l.b16 %v8317
      %v8420 = vunpack.c.l.b16 %v8318
      %v8421 = vunpack.c.l.b16 %v8319
      %v8422 = vunpack.c.l.b16 %v8320
      %v8423 = vunpack.c.l.b16 %v8321
      %v8424 = vunpack.c.l.b16 %v8322
      %v8425 = vunpack.c.l.b16 %v8323
      %v8426 = vunpack.c.l.b16 %v8324
      %v8427 = vunpack.c.l.b16 %v8325
      %v8428 = vunpack.c.l.b16 %v8326
      %v8429 = vunpack.c.l.b16 %v8327
      %v8430 = vunpack.c.l.b16 %v8328
      %v8431 = vunpack.c.l.b16 %v8329
      %v8432 = vunpack.c.l.b16 %v8330
      %v8433 = vunpack.c.l.b16 %v8331
      %v8434 = vunpack.c.l.b16 %v8332
      %v8435 = vunpack.c.l.b16 %v8333
      %v8436 = vunpack.c.l.b16 %v8334
      %v8437 = vunpack.c.l.b16 %v8335
      %v8438 = vunpack.c.l.b16 %v8336
      %v8439 = vunpack.c.l.b16 %v8337
      %v8440 = vunpack.c.l.b16 %v8338
      %v8441 = vunpack.c.l.b16 %v8339
      %v8442 = vunpack.c.l.b16 %v8340
      %v8443 = vunpack.c.l.b16 %v8341
      %v8444 = vunpack.c.l.b16 %v8342
      %v8445 = vunpack.c.l.b16 %v8343
      %v8446 = vunpack.c.l.b16 %v8344
      %v8447 = vunpack.c.l.b16 %v8345
      %v8448 = vunpack.c.l.b16 %v8346
      %v8449 = vunpack.c.l.b16 %v8347
      %v8450 = vunpack.c.l.b16 %v8348
      %v8451 = vunpack.c.l.b16 %v8349
      %v8452 = vunpack.c.l.b16 %v8350
      %v8453 = vunpack.c.l.b16 %v8351
      %v8454 = vunpack.c.l.b16 %v8352
      %v8455 = vunpack.c.l.b16 %v8353
      %v8456 = vunpack.c.l.b16 %v8354
      %v8457 = vunpack.c.l.b16 %v8355
      %v8458 = vunpack.c.l.b16 %v8356
      %v8459 = vunpack.c.l.b16 %v8357
      %v8460 = vunpack.c.l.b16 %v8358
      %v8461 = vunpack.c.l.b16 %v8359
      %v8462 = vunpack.c.l.b16 %v8360
      %v8463 = vpack.c.b16 %v8416, %v8415
      %v8464 = vpack.c.b16 %v8418, %v8417
      %v8465 = vpack.c.b16 %v8420, %v8419
      %v8466 = vpack.c.b16 %v8422, %v8421
      %v8467 = vpack.c.b16 %v8424, %v8423
      %v8468 = vpack.c.b16 %v8426, %v8425
      %v8469 = vpack.c.b16 %v8428, %v8427
      %v8470 = vpack.c.b16 %v8430, %v8429
      %v8471 = vpack.c.b16 %v8432, %v8431
      %v8472 = vpack.c.b16 %v8434, %v8433
      %v8473 = vpack.c.b16 %v8436, %v8435
      %v8474 = vpack.c.b16 %v8438, %v8437
      %v8475 = vpack.c.b16 %v8440, %v8439
      %v8476 = vpack.c.b16 %v8442, %v8441
      %v8477 = vpack.c.b16 %v8444, %v8443
      %v8478 = vpack.c.b16 %v8446, %v8445
      %v8479 = vpack.c.b16 %v8448, %v8447
      %v8480 = vpack.c.b16 %v8450, %v8449
      %v8481 = vpack.c.b16 %v8452, %v8451
      %v8482 = vpack.c.b16 %v8454, %v8453
      %v8483 = vpack.c.b16 %v8456, %v8455
      %v8484 = vpack.c.b16 %v8458, %v8457
      %v8485 = vpack.c.b16 %v8460, %v8459
      %v8486 = vpack.c.b16 %v8462, %v8461
      %8511 = vmatprep.subr.bf16.mxu0 0
      %8512 = vmatpush1.bf16.msra.mxu0 %v8470
      %8513 = vmatprep.subr.bf16.mxu0 0
      %8514 = vmatpush1.bf16.msra.mxu0 %v8469
      %8515 = vmatprep.subr.bf16.mxu0 0
      %8516 = vmatpush1.bf16.msra.mxu0 %v8468
      %8517 = vmatprep.subr.bf16.mxu0 0
      %8518 = vmatpush1.bf16.msra.mxu0 %v8467
      %8519 = vmatprep.subr.bf16.mxu0 0
      %8520 = vmatpush1.bf16.msra.mxu0 %v8466
      %8521 = vmatprep.subr.bf16.mxu0 0
      %8522 = vmatpush1.bf16.msra.mxu0 %v8465
      %8523 = vmatprep.subr.bf16.mxu0 0
      %8524 = vmatpush1.bf16.msra.mxu0 %v8464
      %8525 = vmatprep.subr.bf16.mxu0 0
      %8526 = vmatpush1.bf16.msra.mxu0 %v8463
      %8527 = vmatprep.subr.bf16.mxu0 0
      %8528 = vmatpush2.bf16.msra.mxu0 %v8478
      %8529 = vmatprep.subr.bf16.mxu0 0
      %8530 = vmatpush2.bf16.msra.mxu0 %v8477
      %8531 = vmatprep.subr.bf16.mxu0 0
      %8532 = vmatpush2.bf16.msra.mxu0 %v8476
      %8533 = vmatprep.subr.bf16.mxu0 0
      %8534 = vmatpush2.bf16.msra.mxu0 %v8475
      %8535 = vmatprep.subr.bf16.mxu0 0
      %8536 = vmatpush2.bf16.msra.mxu0 %v8474
      %8537 = vmatprep.subr.bf16.mxu0 0
      %8538 = vmatpush2.bf16.msra.mxu0 %v8473
      %8539 = vmatprep.subr.bf16.mxu0 0
      %8540 = vmatpush2.bf16.msra.mxu0 %v8472
      %8541 = vmatprep.subr.bf16.mxu0 0
      %8542 = vmatpush2.bf16.msra.mxu0 %v8471
      %8543 = vmatprep.mubr.bf16.mxu0 %v7349
      %8544 = vmatmul.mubr.bf16.gmra.mxu0 %v7348
      %v8545 = vpop.f32.mrf.mxu0
      %v8546 = vadd.f32 0.0, %v8545
      %v8547 = vpop.f32.mrf.mxu0
      %v8548 = vpop.f32.mrf.mxu0
      %v8549 = vadd.f32 0.0, %v8548
      %v8550 = vpop.f32.mrf.mxu0
      %8551 = vmatprep.mubr.bf16.mxu0 %v7352
      %8552 = vmatmul.mubr.bf16.gmra.mxu0 %v7351
      %v8553 = vpop.f32.mrf.mxu0
      %v8554 = vadd.f32 0.0, %v8553
      %v8555 = vpop.f32.mrf.mxu0
      %v8556 = vpop.f32.mrf.mxu0
      %v8557 = vadd.f32 0.0, %v8556
      %v8558 = vpop.f32.mrf.mxu0
      %8559 = vmatprep.mubr.bf16.mxu0 %v7355
      %8560 = vmatmul.mubr.bf16.gmra.mxu0 %v7354
      %v8561 = vpop.f32.mrf.mxu0
      %v8562 = vadd.f32 0.0, %v8561
      %v8563 = vpop.f32.mrf.mxu0
      %v8564 = vpop.f32.mrf.mxu0
      %v8565 = vadd.f32 0.0, %v8564
      %v8566 = vpop.f32.mrf.mxu0
      %8567 = vmatprep.mubr.bf16.mxu0 %v8362
      %8568 = vmatmul.mubr.bf16.gmra.mxu0 %v8361
      %v8569 = vpop.f32.mrf.mxu0
      %v8570 = vadd.f32 0.0, %v8569
      %v8571 = vpop.f32.mrf.mxu0
      %v8572 = vpop.f32.mrf.mxu0
      %v8573 = vadd.f32 0.0, %v8572
      %v8574 = vpop.f32.mrf.mxu0
      %8575 = vdwg.mxu0
      %8576 = vmatprep.subr.bf16.mxu0 0
      %8577 = vmatpush1.bf16.msra.mxu0 %v8486
      %8578 = vmatprep.subr.bf16.mxu0 0
      %8579 = vmatpush1.bf16.msra.mxu0 %v8485
      %8580 = vmatprep.subr.bf16.mxu0 0
      %8581 = vmatpush1.bf16.msra.mxu0 %v8484
      %8582 = vmatprep.subr.bf16.mxu0 0
      %8583 = vmatpush1.bf16.msra.mxu0 %v8483
      %8584 = vmatprep.subr.bf16.mxu0 0
      %8585 = vmatpush1.bf16.msra.mxu0 %v8482
      %8586 = vmatprep.subr.bf16.mxu0 0
      %8587 = vmatpush1.bf16.msra.mxu0 %v8481
      %8588 = vmatprep.subr.bf16.mxu0 0
      %8589 = vmatpush1.bf16.msra.mxu0 %v8480
      %8590 = vmatprep.subr.bf16.mxu0 0
      %8591 = vmatpush1.bf16.msra.mxu0 %v8479
      %8592 = vmatprep.subr.bf16.mxu0 0
      %8593 = vmatpush2.bf16.msra.mxu0 0
      %8594 = vmatprep.subr.bf16.mxu0 0
      %8595 = vmatpush2.bf16.msra.mxu0 0
      %8596 = vmatprep.subr.bf16.mxu0 0
      %8597 = vmatpush2.bf16.msra.mxu0 0
      %8598 = vmatprep.subr.bf16.mxu0 0
      %8599 = vmatpush2.bf16.msra.mxu0 0
      %8600 = vmatprep.subr.bf16.mxu0 0
      %8601 = vmatpush2.bf16.msra.mxu0 0
      %8602 = vmatprep.subr.bf16.mxu0 0
      %8603 = vmatpush2.bf16.msra.mxu0 0
      %8604 = vmatprep.subr.bf16.mxu0 0
      %8605 = vmatpush2.bf16.msra.mxu0 0
      %8606 = vmatprep.subr.bf16.mxu0 0
      %8607 = vmatpush2.bf16.msra.mxu0 0
      %8608 = vmatprep.mubr.bf16.mxu0 0
      %8609 = vmatmul.mubr.bf16.gmra.mxu0 %v7350
      %v8610 = vpop.f32.mrf.mxu0
      %v8611 = vadd.f32 %v8546, %v8610
      %v8612 = vpop.f32.mrf.mxu0
      %v8613 = vpop.f32.mrf.mxu0
      %v8614 = vadd.f32 %v8549, %v8613
      %v8615 = vpop.f32.mrf.mxu0
      %8616 = vmatprep.mubr.bf16.mxu0 0
      %8617 = vmatmul.mubr.bf16.gmra.mxu0 %v7353
      %v8618 = vpop.f32.mrf.mxu0
      %v8619 = vadd.f32 %v8554, %v8618
      %v8620 = vpop.f32.mrf.mxu0
      %v8621 = vpop.f32.mrf.mxu0
      %v8622 = vadd.f32 %v8557, %v8621
      %v8623 = vpop.f32.mrf.mxu0
      %8624 = vmatprep.mubr.bf16.mxu0 0
      %8625 = vmatmul.mubr.bf16.gmra.mxu0 %v7356
      %v8626 = vpop.f32.mrf.mxu0
      %v8627 = vadd.f32 %v8562, %v8626
      %v8628 = vpop.f32.mrf.mxu0
      %v8629 = vpop.f32.mrf.mxu0
      %v8630 = vadd.f32 %v8565, %v8629
      %v8631 = vpop.f32.mrf.mxu0
      %8632 = vmatprep.mubr.bf16.mxu0 0
      %8633 = vmatmul.mubr.bf16.gmra.mxu0 %v8363
      %v8634 = vpop.f32.mrf.mxu0
      %v8635 = vadd.f32 %v8570, %v8634
      %v8636 = vpop.f32.mrf.mxu0
      %v8637 = vpop.f32.mrf.mxu0
      %v8638 = vadd.f32 %v8573, %v8637
      %v8639 = vpop.f32.mrf.mxu0
      %8640 = vdwg.mxu0
      %v8641 = vadd.f32 %v8151, %v8611
      %v8642 = vadd.f32 %v8152, %v8614
      %v8643 = vadd.f32 %v8153, %v8619
      %v8644 = vadd.f32 %v8154, %v8622
      %v8645 = vadd.f32 %v8155, %v8627
      %v8646 = vadd.f32 %v8156, %v8630
      %v8647 = vadd.f32 %v8157, %v8635
      %v8648 = vadd.f32 %v8158, %v8638
      %8649 = vmatprep.subr.bf16.mxu0 0
      %8650 = vmatpush1.bf16.msra.mxu0 %v6823
      %8651 = vmatprep.subr.bf16.mxu0 0
      %8652 = vmatpush1.bf16.msra.mxu0 %v6822
      %8653 = vmatprep.subr.bf16.mxu0 0
      %8654 = vmatpush1.bf16.msra.mxu0 %v6821
      %8655 = vmatprep.subr.bf16.mxu0 0
      %8656 = vmatpush1.bf16.msra.mxu0 %v6820
      %8657 = vmatprep.subr.bf16.mxu0 0
      %8658 = vmatpush1.bf16.msra.mxu0 %v6819
      %8659 = vmatprep.subr.bf16.mxu0 0
      %8660 = vmatpush1.bf16.msra.mxu0 %v6818
      %8661 = vmatprep.subr.bf16.mxu0 0
      %8662 = vmatpush1.bf16.msra.mxu0 %v6817
      %8663 = vmatprep.subr.bf16.mxu0 0
      %8664 = vmatpush1.bf16.msra.mxu0 %v6816
      %8665 = vmatprep.subr.bf16.mxu0 0
      %8666 = vmatpush2.bf16.msra.mxu0 %v6831
      %8667 = vmatprep.subr.bf16.mxu0 0
      %8668 = vmatpush2.bf16.msra.mxu0 %v6830
      %8669 = vmatprep.subr.bf16.mxu0 0
      %8670 = vmatpush2.bf16.msra.mxu0 %v6829
      %8671 = vmatprep.subr.bf16.mxu0 0
      %8672 = vmatpush2.bf16.msra.mxu0 %v6828
      %8673 = vmatprep.subr.bf16.mxu0 0
      %8674 = vmatpush2.bf16.msra.mxu0 %v6827
      %8675 = vmatprep.subr.bf16.mxu0 0
      %8676 = vmatpush2.bf16.msra.mxu0 %v6826
      %8677 = vmatprep.subr.bf16.mxu0 0
      %8678 = vmatpush2.bf16.msra.mxu0 %v6825
      %8679 = vmatprep.subr.bf16.mxu0 0
      %8680 = vmatpush2.bf16.msra.mxu0 %v6824
      %8681 = vmatprep.mubr.bf16.mxu0 %v7349
      %8682 = vmatmul.mubr.bf16.gmra.mxu0 %v7348
      %v8683 = vpop.f32.mrf.mxu0
      %v8684 = vadd.f32 0.0, %v8683
      %v8685 = vpop.f32.mrf.mxu0
      %v8686 = vpop.f32.mrf.mxu0
      %v8687 = vadd.f32 0.0, %v8686
      %v8688 = vpop.f32.mrf.mxu0
      %8689 = vmatprep.mubr.bf16.mxu0 %v7352
      %8690 = vmatmul.mubr.bf16.gmra.mxu0 %v7351
      %v8691 = vpop.f32.mrf.mxu0
      %v8692 = vadd.f32 0.0, %v8691
      %v8693 = vpop.f32.mrf.mxu0
      %v8694 = vpop.f32.mrf.mxu0
      %v8695 = vadd.f32 0.0, %v8694
      %v8696 = vpop.f32.mrf.mxu0
      %8697 = vmatprep.mubr.bf16.mxu0 %v7355
      %8698 = vmatmul.mubr.bf16.gmra.mxu0 %v7354
      %v8699 = vpop.f32.mrf.mxu0
      %v8700 = vadd.f32 0.0, %v8699
      %v8701 = vpop.f32.mrf.mxu0
      %v8702 = vpop.f32.mrf.mxu0
      %v8703 = vadd.f32 0.0, %v8702
      %v8704 = vpop.f32.mrf.mxu0
      %8705 = vmatprep.mubr.bf16.mxu0 %v8362
      %8706 = vmatmul.mubr.bf16.gmra.mxu0 %v8361
      %v8707 = vpop.f32.mrf.mxu0
      %v8708 = vadd.f32 0.0, %v8707
      %v8709 = vpop.f32.mrf.mxu0
      %v8710 = vpop.f32.mrf.mxu0
      %v8711 = vadd.f32 0.0, %v8710
      %v8712 = vpop.f32.mrf.mxu0
      %8713 = vdwg.mxu0
      %8714 = vmatprep.subr.bf16.mxu0 0
      %8715 = vmatpush1.bf16.msra.mxu0 %v6839
      %8716 = vmatprep.subr.bf16.mxu0 0
      %8717 = vmatpush1.bf16.msra.mxu0 %v6838
      %8718 = vmatprep.subr.bf16.mxu0 0
      %8719 = vmatpush1.bf16.msra.mxu0 %v6837
      %8720 = vmatprep.subr.bf16.mxu0 0
      %8721 = vmatpush1.bf16.msra.mxu0 %v6836
      %8722 = vmatprep.subr.bf16.mxu0 0
      %8723 = vmatpush1.bf16.msra.mxu0 %v6835
      %8724 = vmatprep.subr.bf16.mxu0 0
      %8725 = vmatpush1.bf16.msra.mxu0 %v6834
      %8726 = vmatprep.subr.bf16.mxu0 0
      %8727 = vmatpush1.bf16.msra.mxu0 %v6833
      %8728 = vmatprep.subr.bf16.mxu0 0
      %8729 = vmatpush1.bf16.msra.mxu0 %v6832
      %8730 = vmatprep.subr.bf16.mxu0 0
      %8731 = vmatpush2.bf16.msra.mxu0 0
      %8732 = vmatprep.subr.bf16.mxu0 0
      %8733 = vmatpush2.bf16.msra.mxu0 0
      %8734 = vmatprep.subr.bf16.mxu0 0
      %8735 = vmatpush2.bf16.msra.mxu0 0
      %8736 = vmatprep.subr.bf16.mxu0 0
      %8737 = vmatpush2.bf16.msra.mxu0 0
      %8738 = vmatprep.subr.bf16.mxu0 0
      %8739 = vmatpush2.bf16.msra.mxu0 0
      %8740 = vmatprep.subr.bf16.mxu0 0
      %8741 = vmatpush2.bf16.msra.mxu0 0
      %8742 = vmatprep.subr.bf16.mxu0 0
      %8743 = vmatpush2.bf16.msra.mxu0 0
      %8744 = vmatprep.subr.bf16.mxu0 0
      %8745 = vmatpush2.bf16.msra.mxu0 0
      %8746 = vmatprep.mubr.bf16.mxu0 0
      %8747 = vmatmul.mubr.bf16.gmra.mxu0 %v7350
      %v8748 = vpop.f32.mrf.mxu0
      %v8749 = vadd.f32 %v8684, %v8748
      %v8750 = vpop.f32.mrf.mxu0
      %v8751 = vpop.f32.mrf.mxu0
      %v8752 = vadd.f32 %v8687, %v8751
      %v8753 = vpop.f32.mrf.mxu0
      %8754 = vmatprep.mubr.bf16.mxu0 0
      %8755 = vmatmul.mubr.bf16.gmra.mxu0 %v7353
      %v8756 = vpop.f32.mrf.mxu0
      %v8757 = vadd.f32 %v8692, %v8756
      %v8758 = vpop.f32.mrf.mxu0
      %v8759 = vpop.f32.mrf.mxu0
      %v8760 = vadd.f32 %v8695, %v8759
      %v8761 = vpop.f32.mrf.mxu0
      %8762 = vmatprep.mubr.bf16.mxu0 0
      %8763 = vmatmul.mubr.bf16.gmra.mxu0 %v7356
      %v8764 = vpop.f32.mrf.mxu0
      %v8765 = vadd.f32 %v8700, %v8764
      %v8766 = vpop.f32.mrf.mxu0
      %v8767 = vpop.f32.mrf.mxu0
      %v8768 = vadd.f32 %v8703, %v8767
      %v8769 = vpop.f32.mrf.mxu0
      %8770 = vmatprep.mubr.bf16.mxu0 0
      %8771 = vmatmul.mubr.bf16.gmra.mxu0 %v8363
      %v8772 = vpop.f32.mrf.mxu0
      %v8773 = vadd.f32 %v8708, %v8772
      %v8774 = vpop.f32.mrf.mxu0
      %v8775 = vpop.f32.mrf.mxu0
      %v8776 = vadd.f32 %v8711, %v8775
      %v8777 = vpop.f32.mrf.mxu0
      %8778 = vdwg.mxu0
      %v8779 = vadd.f32 %v8289, %v8749
      %v8780 = vadd.f32 %v8290, %v8752
      %v8781 = vadd.f32 %v8291, %v8757
      %v8782 = vadd.f32 %v8292, %v8760
      %v8783 = vadd.f32 %v8293, %v8765
      %v8784 = vadd.f32 %v8294, %v8768
      %v8785 = vadd.f32 %v8295, %v8773
      %v8786 = vadd.f32 %v8296, %v8776
      %s8787 = sadd.s32 %s4293, 3
      %p8788 = scmp.lt.s32.totalorder %s8787, 0
      %s8789 = ssub.s32 0, %s8787
      %s8790 = scalar_select %p8788, %s8789, %s8787
      %s8791 = sand.u32 %s8790, 3
      %s8792 = ssub.s32 0, %s8791
      %s8793 = scalar_select %p8788, %s8792, %s8791
      %p8794 = scmp.ne.s32.totalorder %s8793, 0
      %p8795 = scmp.lt.s32.totalorder %s8793, 0
      %p8796 = pnand %p8795, %p8794
      %p8797 = pneg %p8796
      %s8798 = sadd.s32 %s8793, 4
      %s8799 = scalar_select %p8797, %s8798, %s8793
      %s8800 = smul.u32 %s8799, 20
      %s8801 = smul.addr %s8800, 4
      %s8802 = scalar_lea.vmem [#allocation2], %s8801
      %v8803 = vld [vmem:[%s8802] sm:$0xf]
      %v8804 = vld [vmem:[%s8802 + $0x4] sm:$0x1]
      %v8805 = vld [vmem:[%s8802 + $0x8] sm:$0xf]
      %v8806 = vld [vmem:[%s8802 + $0xc] sm:$0x1]
      %v8807 = vld [vmem:[%s8802 + $0x10] sm:$0xf]
      %v8808 = vld [vmem:[%s8802 + $0x14] sm:$0x1]
      %v8809 = vld [vmem:[%s8802 + $0x18] sm:$0xf]
      %v8810 = vld [vmem:[%s8802 + $0x1c] sm:$0x1]
      %v8811 = vld [vmem:[%s8802 + $0x20] sm:$0xf]
      %v8812 = vld [vmem:[%s8802 + $0x24] sm:$0x1]
      %v8813 = vld [vmem:[%s8802 + $0x28] sm:$0xf]
      %v8814 = vld [vmem:[%s8802 + $0x2c] sm:$0x1]
      %v8815 = vld [vmem:[%s8802 + $0x30] sm:$0xf]
      %v8816 = vld [vmem:[%s8802 + $0x34] sm:$0x1]
      %v8817 = vld [vmem:[%s8802 + $0x38] sm:$0xf]
      %v8818 = vld [vmem:[%s8802 + $0x3c] sm:$0x1]
      %v8819 = vld [vmem:[%s8802 + $0x40] sm:$0xf]
      %v8820 = vld [vmem:[%s8802 + $0x44] sm:$0x1]
      %v8821 = vld [vmem:[%s8802 + $0x48] sm:$0xf]
      %v8822 = vld [vmem:[%s8802 + $0x4c] sm:$0x1]
      %v8839 = vunpack.c.l.b16 %v8803
      %v8840 = vunpack.c.l.b16 %v8804
      %v8841 = vunpack.c.l.b16 %v8805
      %v8842 = vunpack.c.l.b16 %v8806
      %v8843 = vunpack.c.l.b16 %v8807
      %v8844 = vunpack.c.l.b16 %v8808
      %v8845 = vunpack.c.l.b16 %v8809
      %v8846 = vunpack.c.l.b16 %v8810
      %v8847 = vunpack.c.l.b16 %v8811
      %v8848 = vunpack.c.l.b16 %v8812
      %v8849 = vunpack.c.l.b16 %v8813
      %v8850 = vunpack.c.l.b16 %v8814
      %v8851 = vunpack.c.l.b16 %v8815
      %v8852 = vunpack.c.l.b16 %v8816
      %v8853 = vunpack.c.l.b16 %v8817
      %v8854 = vunpack.c.l.b16 %v8818
      %v8855 = vpack.c.b16 %v8840, %v8839
      %v8856 = vpack.c.b16 %v8842, %v8841
      %v8857 = vpack.c.b16 %v8844, %v8843
      %v8858 = vpack.c.b16 %v8846, %v8845
      %v8859 = vpack.c.b16 %v8848, %v8847
      %v8860 = vpack.c.b16 %v8850, %v8849
      %v8861 = vpack.c.b16 %v8852, %v8851
      %v8862 = vpack.c.b16 %v8854, %v8853
      %v8864 = vshrl.u32 %v8855, 16
      %v8866 = vshll.u32 %v8855, 16
      %v8868 = vrot.slane %v8866, 1
      %v8869 = vor.u32 %v8864, %v8868
      %v8871 = vshrl.u32 %v8856, 16
      %v8873 = vshll.u32 %v8856, 16
      %v8875 = vrot.slane %v8873, 1
      %v8876 = vor.u32 %v8871, %v8875
      %v8878 = vshrl.u32 %v8857, 16
      %v8880 = vshll.u32 %v8857, 16
      %v8882 = vrot.slane %v8880, 1
      %v8883 = vor.u32 %v8878, %v8882
      %v8885 = vshrl.u32 %v8858, 16
      %v8887 = vshll.u32 %v8858, 16
      %v8889 = vrot.slane %v8887, 1
      %v8890 = vor.u32 %v8885, %v8889
      %v8892 = vshrl.u32 %v8859, 16
      %v8894 = vshll.u32 %v8859, 16
      %v8896 = vrot.slane %v8894, 1
      %v8897 = vor.u32 %v8892, %v8896
      %v8899 = vshrl.u32 %v8860, 16
      %v8901 = vshll.u32 %v8860, 16
      %v8903 = vrot.slane %v8901, 1
      %v8904 = vor.u32 %v8899, %v8903
      %v8906 = vshrl.u32 %v8861, 16
      %v8908 = vshll.u32 %v8861, 16
      %v8910 = vrot.slane %v8908, 1
      %v8911 = vor.u32 %v8906, %v8910
      %v8913 = vshrl.u32 %v8862, 16
      %v8915 = vshll.u32 %v8862, 16
      %v8917 = vrot.slane %v8915, 1
      %v8918 = vor.u32 %v8913, %v8917
      %v8919 = vrot.slane %v8855, 1
      %v8920 = vrot.slane %v8856, 1
      %v8921 = vrot.slane %v8857, 1
      %v8922 = vrot.slane %v8858, 1
      %v8923 = vrot.slane %v8859, 1
      %v8924 = vrot.slane %v8860, 1
      %v8925 = vrot.slane %v8861, 1
      %v8926 = vrot.slane %v8862, 1
      %v8927 = vunpack.c.l.b16 %v8869
      %v8928 = vunpack.c.l.b16 %v8919
      %v8929 = vunpack.c.l.b16 %v8876
      %v8930 = vunpack.c.l.b16 %v8920
      %v8931 = vunpack.c.l.b16 %v8883
      %v8932 = vunpack.c.l.b16 %v8921
      %v8933 = vunpack.c.l.b16 %v8890
      %v8934 = vunpack.c.l.b16 %v8922
      %v8935 = vunpack.c.l.b16 %v8897
      %v8936 = vunpack.c.l.b16 %v8923
      %v8937 = vunpack.c.l.b16 %v8904
      %v8938 = vunpack.c.l.b16 %v8924
      %v8939 = vunpack.c.l.b16 %v8911
      %v8940 = vunpack.c.l.b16 %v8925
      %v8941 = vunpack.c.l.b16 %v8918
      %v8942 = vunpack.c.l.b16 %v8926
      %v8943 = vpack.c.b16 %v8841, %v8839
      %v8944 = vpack.c.b16 %v8929, %v8927
      %v8945 = vpack.c.b16 %v8930, %v8928
      %v8946 = vpack.c.b16 %v8845, %v8843
      %v8947 = vpack.c.b16 %v8933, %v8931
      %v8948 = vpack.c.b16 %v8934, %v8932
      %v8949 = vpack.c.b16 %v8849, %v8847
      %v8950 = vpack.c.b16 %v8937, %v8935
      %v8951 = vpack.c.b16 %v8938, %v8936
      %v8952 = vpack.c.b16 %v8853, %v8851
      %v8953 = vpack.c.b16 %v8941, %v8939
      %v8954 = vpack.c.b16 %v8942, %v8940
      %8967 = vmatprep.subr.bf16.mxu0 0
      %8968 = vmatpush1.bf16.msra.mxu0 %v7472
      %8969 = vmatprep.subr.bf16.mxu0 0
      %8970 = vmatpush1.bf16.msra.mxu0 %v7471
      %8971 = vmatprep.subr.bf16.mxu0 0
      %8972 = vmatpush1.bf16.msra.mxu0 %v7470
      %8973 = vmatprep.subr.bf16.mxu0 0
      %8974 = vmatpush1.bf16.msra.mxu0 %v7469
      %8975 = vmatprep.subr.bf16.mxu0 0
      %8976 = vmatpush1.bf16.msra.mxu0 %v7468
      %8977 = vmatprep.subr.bf16.mxu0 0
      %8978 = vmatpush1.bf16.msra.mxu0 %v7467
      %8979 = vmatprep.subr.bf16.mxu0 0
      %8980 = vmatpush1.bf16.msra.mxu0 %v7466
      %8981 = vmatprep.subr.bf16.mxu0 0
      %8982 = vmatpush1.bf16.msra.mxu0 %v7465
      %8983 = vmatprep.subr.bf16.mxu0 0
      %8984 = vmatpush2.bf16.msra.mxu0 %v7480
      %8985 = vmatprep.subr.bf16.mxu0 0
      %8986 = vmatpush2.bf16.msra.mxu0 %v7479
      %8987 = vmatprep.subr.bf16.mxu0 0
      %8988 = vmatpush2.bf16.msra.mxu0 %v7478
      %8989 = vmatprep.subr.bf16.mxu0 0
      %8990 = vmatpush2.bf16.msra.mxu0 %v7477
      %8991 = vmatprep.subr.bf16.mxu0 0
      %8992 = vmatpush2.bf16.msra.mxu0 %v7476
      %8993 = vmatprep.subr.bf16.mxu0 0
      %8994 = vmatpush2.bf16.msra.mxu0 %v7475
      %8995 = vmatprep.subr.bf16.mxu0 0
      %8996 = vmatpush2.bf16.msra.mxu0 %v7474
      %8997 = vmatprep.subr.bf16.mxu0 0
      %8998 = vmatpush2.bf16.msra.mxu0 %v7473
      %8999 = vmatprep.mubr.bf16.mxu0 %v8944
      %9000 = vmatmul.mubr.bf16.gmra.mxu0 %v8943
      %v9001 = vpop.f32.mrf.mxu0
      %v9002 = vadd.f32 0.0, %v9001
      %v9003 = vpop.f32.mrf.mxu0
      %v9004 = vpop.f32.mrf.mxu0
      %v9005 = vadd.f32 0.0, %v9004
      %v9006 = vpop.f32.mrf.mxu0
      %9007 = vmatprep.mubr.bf16.mxu0 %v8947
      %9008 = vmatmul.mubr.bf16.gmra.mxu0 %v8946
      %v9009 = vpop.f32.mrf.mxu0
      %v9010 = vadd.f32 0.0, %v9009
      %v9011 = vpop.f32.mrf.mxu0
      %v9012 = vpop.f32.mrf.mxu0
      %v9013 = vadd.f32 0.0, %v9012
      %v9014 = vpop.f32.mrf.mxu0
      %9015 = vmatprep.mubr.bf16.mxu0 %v8950
      %9016 = vmatmul.mubr.bf16.gmra.mxu0 %v8949
      %v9017 = vpop.f32.mrf.mxu0
      %v9018 = vadd.f32 0.0, %v9017
      %v9019 = vpop.f32.mrf.mxu0
      %v9020 = vpop.f32.mrf.mxu0
      %v9021 = vadd.f32 0.0, %v9020
      %v9022 = vpop.f32.mrf.mxu0
      %9023 = vmatprep.mubr.bf16.mxu0 %v8953
      %9024 = vmatmul.mubr.bf16.gmra.mxu0 %v8952
      %v9025 = vpop.f32.mrf.mxu0
      %v9026 = vadd.f32 0.0, %v9025
      %v9027 = vpop.f32.mrf.mxu0
      %v9028 = vpop.f32.mrf.mxu0
      %v9029 = vadd.f32 0.0, %v9028
      %v9030 = vpop.f32.mrf.mxu0
      %9031 = vdwg.mxu0
      %9032 = vmatprep.subr.bf16.mxu0 0
      %9033 = vmatpush1.bf16.msra.mxu0 %v7488
      %9034 = vmatprep.subr.bf16.mxu0 0
      %9035 = vmatpush1.bf16.msra.mxu0 %v7487
      %9036 = vmatprep.subr.bf16.mxu0 0
      %9037 = vmatpush1.bf16.msra.mxu0 %v7486
      %9038 = vmatprep.subr.bf16.mxu0 0
      %9039 = vmatpush1.bf16.msra.mxu0 %v7485
      %9040 = vmatprep.subr.bf16.mxu0 0
      %9041 = vmatpush1.bf16.msra.mxu0 %v7484
      %9042 = vmatprep.subr.bf16.mxu0 0
      %9043 = vmatpush1.bf16.msra.mxu0 %v7483
      %9044 = vmatprep.subr.bf16.mxu0 0
      %9045 = vmatpush1.bf16.msra.mxu0 %v7482
      %9046 = vmatprep.subr.bf16.mxu0 0
      %9047 = vmatpush1.bf16.msra.mxu0 %v7481
      %9048 = vmatprep.subr.bf16.mxu0 0
      %9049 = vmatpush2.bf16.msra.mxu0 0
      %9050 = vmatprep.subr.bf16.mxu0 0
      %9051 = vmatpush2.bf16.msra.mxu0 0
      %9052 = vmatprep.subr.bf16.mxu0 0
      %9053 = vmatpush2.bf16.msra.mxu0 0
      %9054 = vmatprep.subr.bf16.mxu0 0
      %9055 = vmatpush2.bf16.msra.mxu0 0
      %9056 = vmatprep.subr.bf16.mxu0 0
      %9057 = vmatpush2.bf16.msra.mxu0 0
      %9058 = vmatprep.subr.bf16.mxu0 0
      %9059 = vmatpush2.bf16.msra.mxu0 0
      %9060 = vmatprep.subr.bf16.mxu0 0
      %9061 = vmatpush2.bf16.msra.mxu0 0
      %9062 = vmatprep.subr.bf16.mxu0 0
      %9063 = vmatpush2.bf16.msra.mxu0 0
      %9064 = vmatprep.mubr.bf16.mxu0 0
      %9065 = vmatmul.mubr.bf16.gmra.mxu0 %v8945
      %v9066 = vpop.f32.mrf.mxu0
      %v9067 = vadd.f32 %v9002, %v9066
      %v9068 = vpop.f32.mrf.mxu0
      %v9069 = vpop.f32.mrf.mxu0
      %v9070 = vadd.f32 %v9005, %v9069
      %v9071 = vpop.f32.mrf.mxu0
      %9072 = vmatprep.mubr.bf16.mxu0 0
      %9073 = vmatmul.mubr.bf16.gmra.mxu0 %v8948
      %v9074 = vpop.f32.mrf.mxu0
      %v9075 = vadd.f32 %v9010, %v9074
      %v9076 = vpop.f32.mrf.mxu0
      %v9077 = vpop.f32.mrf.mxu0
      %v9078 = vadd.f32 %v9013, %v9077
      %v9079 = vpop.f32.mrf.mxu0
      %9080 = vmatprep.mubr.bf16.mxu0 0
      %9081 = vmatmul.mubr.bf16.gmra.mxu0 %v8951
      %v9082 = vpop.f32.mrf.mxu0
      %v9083 = vadd.f32 %v9018, %v9082
      %v9084 = vpop.f32.mrf.mxu0
      %v9085 = vpop.f32.mrf.mxu0
      %v9086 = vadd.f32 %v9021, %v9085
      %v9087 = vpop.f32.mrf.mxu0
      %9088 = vmatprep.mubr.bf16.mxu0 0
      %9089 = vmatmul.mubr.bf16.gmra.mxu0 %v8954
      %v9090 = vpop.f32.mrf.mxu0
      %v9091 = vadd.f32 %v9026, %v9090
      %v9092 = vpop.f32.mrf.mxu0
      %v9093 = vpop.f32.mrf.mxu0
      %v9094 = vadd.f32 %v9029, %v9093
      %v9095 = vpop.f32.mrf.mxu0
      %9096 = vdwg.mxu0
      %v9097 = vadd.f32 %v8779, %v9067
      %v9098 = vadd.f32 %v8780, %v9070
      %v9099 = vadd.f32 %v8781, %v9075
      %v9100 = vadd.f32 %v8782, %v9078
      %v9101 = vadd.f32 %v8783, %v9083
      %v9102 = vadd.f32 %v8784, %v9086
      %v9103 = vadd.f32 %v8785, %v9091
      %v9104 = vadd.f32 %v8786, %v9094
      %v9107 = vunpack.c.l.b16 %v8819
      %v9108 = vunpack.c.l.b16 %v8820
      %v9109 = vpack.c.b16 %v9108, %v9107
      %v9111 = vshrl.u32 %v9109, 16
      %v9113 = vshll.u32 %v9109, 16
      %v9115 = vrot.slane %v9113, 1
      %v9116 = vor.u32 %v9111, %v9115
      %v9117 = vrot.slane %v9109, 1
      %v9118 = vunpack.c.l.b16 %v9116
      %v9119 = vunpack.c.l.b16 %v9117
      %v9120 = vpack.c.b16 %v8843, %v8841
      %v9121 = vpack.c.b16 %v8931, %v8929
      %v9122 = vpack.c.b16 %v8932, %v8930
      %v9123 = vpack.c.b16 %v8847, %v8845
      %v9124 = vpack.c.b16 %v8935, %v8933
      %v9125 = vpack.c.b16 %v8936, %v8934
      %v9126 = vpack.c.b16 %v8851, %v8849
      %v9127 = vpack.c.b16 %v8939, %v8937
      %v9128 = vpack.c.b16 %v8940, %v8938
      %v9129 = vpack.c.b16 %v9107, %v8853
      %v9130 = vpack.c.b16 %v9118, %v8941
      %v9131 = vpack.c.b16 %v9119, %v8942
      %9144 = vmatprep.subr.bf16.mxu0 0
      %9145 = vmatpush1.bf16.msra.mxu0 %v7980
      %9146 = vmatprep.subr.bf16.mxu0 0
      %9147 = vmatpush1.bf16.msra.mxu0 %v7979
      %9148 = vmatprep.subr.bf16.mxu0 0
      %9149 = vmatpush1.bf16.msra.mxu0 %v7978
      %9150 = vmatprep.subr.bf16.mxu0 0
      %9151 = vmatpush1.bf16.msra.mxu0 %v7977
      %9152 = vmatprep.subr.bf16.mxu0 0
      %9153 = vmatpush1.bf16.msra.mxu0 %v7976
      %9154 = vmatprep.subr.bf16.mxu0 0
      %9155 = vmatpush1.bf16.msra.mxu0 %v7975
      %9156 = vmatprep.subr.bf16.mxu0 0
      %9157 = vmatpush1.bf16.msra.mxu0 %v7974
      %9158 = vmatprep.subr.bf16.mxu0 0
      %9159 = vmatpush1.bf16.msra.mxu0 %v7973
      %9160 = vmatprep.subr.bf16.mxu0 0
      %9161 = vmatpush2.bf16.msra.mxu0 %v7988
      %9162 = vmatprep.subr.bf16.mxu0 0
      %9163 = vmatpush2.bf16.msra.mxu0 %v7987
      %9164 = vmatprep.subr.bf16.mxu0 0
      %9165 = vmatpush2.bf16.msra.mxu0 %v7986
      %9166 = vmatprep.subr.bf16.mxu0 0
      %9167 = vmatpush2.bf16.msra.mxu0 %v7985
      %9168 = vmatprep.subr.bf16.mxu0 0
      %9169 = vmatpush2.bf16.msra.mxu0 %v7984
      %9170 = vmatprep.subr.bf16.mxu0 0
      %9171 = vmatpush2.bf16.msra.mxu0 %v7983
      %9172 = vmatprep.subr.bf16.mxu0 0
      %9173 = vmatpush2.bf16.msra.mxu0 %v7982
      %9174 = vmatprep.subr.bf16.mxu0 0
      %9175 = vmatpush2.bf16.msra.mxu0 %v7981
      %9176 = vmatprep.mubr.bf16.mxu0 %v9121
      %9177 = vmatmul.mubr.bf16.gmra.mxu0 %v9120
      %v9178 = vpop.f32.mrf.mxu0
      %v9179 = vadd.f32 0.0, %v9178
      %v9180 = vpop.f32.mrf.mxu0
      %v9181 = vpop.f32.mrf.mxu0
      %v9182 = vadd.f32 0.0, %v9181
      %v9183 = vpop.f32.mrf.mxu0
      %9184 = vmatprep.mubr.bf16.mxu0 %v9124
      %9185 = vmatmul.mubr.bf16.gmra.mxu0 %v9123
      %v9186 = vpop.f32.mrf.mxu0
      %v9187 = vadd.f32 0.0, %v9186
      %v9188 = vpop.f32.mrf.mxu0
      %v9189 = vpop.f32.mrf.mxu0
      %v9190 = vadd.f32 0.0, %v9189
      %v9191 = vpop.f32.mrf.mxu0
      %9192 = vmatprep.mubr.bf16.mxu0 %v9127
      %9193 = vmatmul.mubr.bf16.gmra.mxu0 %v9126
      %v9194 = vpop.f32.mrf.mxu0
      %v9195 = vadd.f32 0.0, %v9194
      %v9196 = vpop.f32.mrf.mxu0
      %v9197 = vpop.f32.mrf.mxu0
      %v9198 = vadd.f32 0.0, %v9197
      %v9199 = vpop.f32.mrf.mxu0
      %9200 = vmatprep.mubr.bf16.mxu0 %v9130
      %9201 = vmatmul.mubr.bf16.gmra.mxu0 %v9129
      %v9202 = vpop.f32.mrf.mxu0
      %v9203 = vadd.f32 0.0, %v9202
      %v9204 = vpop.f32.mrf.mxu0
      %v9205 = vpop.f32.mrf.mxu0
      %v9206 = vadd.f32 0.0, %v9205
      %v9207 = vpop.f32.mrf.mxu0
      %9208 = vdwg.mxu0
      %9209 = vmatprep.subr.bf16.mxu0 0
      %9210 = vmatpush1.bf16.msra.mxu0 %v7996
      %9211 = vmatprep.subr.bf16.mxu0 0
      %9212 = vmatpush1.bf16.msra.mxu0 %v7995
      %9213 = vmatprep.subr.bf16.mxu0 0
      %9214 = vmatpush1.bf16.msra.mxu0 %v7994
      %9215 = vmatprep.subr.bf16.mxu0 0
      %9216 = vmatpush1.bf16.msra.mxu0 %v7993
      %9217 = vmatprep.subr.bf16.mxu0 0
      %9218 = vmatpush1.bf16.msra.mxu0 %v7992
      %9219 = vmatprep.subr.bf16.mxu0 0
      %9220 = vmatpush1.bf16.msra.mxu0 %v7991
      %9221 = vmatprep.subr.bf16.mxu0 0
      %9222 = vmatpush1.bf16.msra.mxu0 %v7990
      %9223 = vmatprep.subr.bf16.mxu0 0
      %9224 = vmatpush1.bf16.msra.mxu0 %v7989
      %9225 = vmatprep.subr.bf16.mxu0 0
      %9226 = vmatpush2.bf16.msra.mxu0 0
      %9227 = vmatprep.subr.bf16.mxu0 0
      %9228 = vmatpush2.bf16.msra.mxu0 0
      %9229 = vmatprep.subr.bf16.mxu0 0
      %9230 = vmatpush2.bf16.msra.mxu0 0
      %9231 = vmatprep.subr.bf16.mxu0 0
      %9232 = vmatpush2.bf16.msra.mxu0 0
      %9233 = vmatprep.subr.bf16.mxu0 0
      %9234 = vmatpush2.bf16.msra.mxu0 0
      %9235 = vmatprep.subr.bf16.mxu0 0
      %9236 = vmatpush2.bf16.msra.mxu0 0
      %9237 = vmatprep.subr.bf16.mxu0 0
      %9238 = vmatpush2.bf16.msra.mxu0 0
      %9239 = vmatprep.subr.bf16.mxu0 0
      %9240 = vmatpush2.bf16.msra.mxu0 0
      %9241 = vmatprep.mubr.bf16.mxu0 0
      %9242 = vmatmul.mubr.bf16.gmra.mxu0 %v9122
      %v9243 = vpop.f32.mrf.mxu0
      %v9244 = vadd.f32 %v9179, %v9243
      %v9245 = vpop.f32.mrf.mxu0
      %v9246 = vpop.f32.mrf.mxu0
      %v9247 = vadd.f32 %v9182, %v9246
      %v9248 = vpop.f32.mrf.mxu0
      %9249 = vmatprep.mubr.bf16.mxu0 0
      %9250 = vmatmul.mubr.bf16.gmra.mxu0 %v9125
      %v9251 = vpop.f32.mrf.mxu0
      %v9252 = vadd.f32 %v9187, %v9251
      %v9253 = vpop.f32.mrf.mxu0
      %v9254 = vpop.f32.mrf.mxu0
      %v9255 = vadd.f32 %v9190, %v9254
      %v9256 = vpop.f32.mrf.mxu0
      %9257 = vmatprep.mubr.bf16.mxu0 0
      %9258 = vmatmul.mubr.bf16.gmra.mxu0 %v9128
      %v9259 = vpop.f32.mrf.mxu0
      %v9260 = vadd.f32 %v9195, %v9259
      %v9261 = vpop.f32.mrf.mxu0
      %v9262 = vpop.f32.mrf.mxu0
      %v9263 = vadd.f32 %v9198, %v9262
      %v9264 = vpop.f32.mrf.mxu0
      %9265 = vmatprep.mubr.bf16.mxu0 0
      %9266 = vmatmul.mubr.bf16.gmra.mxu0 %v9131
      %v9267 = vpop.f32.mrf.mxu0
      %v9268 = vadd.f32 %v9203, %v9267
      %v9269 = vpop.f32.mrf.mxu0
      %v9270 = vpop.f32.mrf.mxu0
      %v9271 = vadd.f32 %v9206, %v9270
      %v9272 = vpop.f32.mrf.mxu0
      %9273 = vdwg.mxu0
      %v9274 = vadd.f32 %v9097, %v9244
      %v9275 = vadd.f32 %v9098, %v9247
      %v9276 = vadd.f32 %v9099, %v9252
      %v9277 = vadd.f32 %v9100, %v9255
      %v9278 = vadd.f32 %v9101, %v9260
      %v9279 = vadd.f32 %v9102, %v9263
      %v9280 = vadd.f32 %v9103, %v9268
      %v9281 = vadd.f32 %v9104, %v9271
      %v9284 = vunpack.c.l.b16 %v8821
      %v9285 = vunpack.c.l.b16 %v8822
      %v9286 = vpack.c.b16 %v9285, %v9284
      %v9288 = vshrl.u32 %v9286, 16
      %v9290 = vshll.u32 %v9286, 16
      %v9292 = vrot.slane %v9290, 1
      %v9293 = vor.u32 %v9288, %v9292
      %v9294 = vrot.slane %v9286, 1
      %v9295 = vunpack.c.l.b16 %v9293
      %v9296 = vunpack.c.l.b16 %v9294
      %v9297 = vpack.c.b16 %v9284, %v9107
      %v9298 = vpack.c.b16 %v9295, %v9118
      %v9299 = vpack.c.b16 %v9296, %v9119
      %9303 = vmatprep.subr.bf16.mxu0 0
      %9304 = vmatpush1.bf16.msra.mxu0 %v8470
      %9305 = vmatprep.subr.bf16.mxu0 0
      %9306 = vmatpush1.bf16.msra.mxu0 %v8469
      %9307 = vmatprep.subr.bf16.mxu0 0
      %9308 = vmatpush1.bf16.msra.mxu0 %v8468
      %9309 = vmatprep.subr.bf16.mxu0 0
      %9310 = vmatpush1.bf16.msra.mxu0 %v8467
      %9311 = vmatprep.subr.bf16.mxu0 0
      %9312 = vmatpush1.bf16.msra.mxu0 %v8466
      %9313 = vmatprep.subr.bf16.mxu0 0
      %9314 = vmatpush1.bf16.msra.mxu0 %v8465
      %9315 = vmatprep.subr.bf16.mxu0 0
      %9316 = vmatpush1.bf16.msra.mxu0 %v8464
      %9317 = vmatprep.subr.bf16.mxu0 0
      %9318 = vmatpush1.bf16.msra.mxu0 %v8463
      %9319 = vmatprep.subr.bf16.mxu0 0
      %9320 = vmatpush2.bf16.msra.mxu0 %v8478
      %9321 = vmatprep.subr.bf16.mxu0 0
      %9322 = vmatpush2.bf16.msra.mxu0 %v8477
      %9323 = vmatprep.subr.bf16.mxu0 0
      %9324 = vmatpush2.bf16.msra.mxu0 %v8476
      %9325 = vmatprep.subr.bf16.mxu0 0
      %9326 = vmatpush2.bf16.msra.mxu0 %v8475
      %9327 = vmatprep.subr.bf16.mxu0 0
      %9328 = vmatpush2.bf16.msra.mxu0 %v8474
      %9329 = vmatprep.subr.bf16.mxu0 0
      %9330 = vmatpush2.bf16.msra.mxu0 %v8473
      %9331 = vmatprep.subr.bf16.mxu0 0
      %9332 = vmatpush2.bf16.msra.mxu0 %v8472
      %9333 = vmatprep.subr.bf16.mxu0 0
      %9334 = vmatpush2.bf16.msra.mxu0 %v8471
      %9335 = vmatprep.mubr.bf16.mxu0 %v8947
      %9336 = vmatmul.mubr.bf16.gmra.mxu0 %v8946
      %v9337 = vpop.f32.mrf.mxu0
      %v9338 = vadd.f32 0.0, %v9337
      %v9339 = vpop.f32.mrf.mxu0
      %v9340 = vpop.f32.mrf.mxu0
      %v9341 = vadd.f32 0.0, %v9340
      %v9342 = vpop.f32.mrf.mxu0
      %9343 = vmatprep.mubr.bf16.mxu0 %v8950
      %9344 = vmatmul.mubr.bf16.gmra.mxu0 %v8949
      %v9345 = vpop.f32.mrf.mxu0
      %v9346 = vadd.f32 0.0, %v9345
      %v9347 = vpop.f32.mrf.mxu0
      %v9348 = vpop.f32.mrf.mxu0
      %v9349 = vadd.f32 0.0, %v9348
      %v9350 = vpop.f32.mrf.mxu0
      %9351 = vmatprep.mubr.bf16.mxu0 %v8953
      %9352 = vmatmul.mubr.bf16.gmra.mxu0 %v8952
      %v9353 = vpop.f32.mrf.mxu0
      %v9354 = vadd.f32 0.0, %v9353
      %v9355 = vpop.f32.mrf.mxu0
      %v9356 = vpop.f32.mrf.mxu0
      %v9357 = vadd.f32 0.0, %v9356
      %v9358 = vpop.f32.mrf.mxu0
      %9359 = vmatprep.mubr.bf16.mxu0 %v9298
      %9360 = vmatmul.mubr.bf16.gmra.mxu0 %v9297
      %v9361 = vpop.f32.mrf.mxu0
      %v9362 = vadd.f32 0.0, %v9361
      %v9363 = vpop.f32.mrf.mxu0
      %v9364 = vpop.f32.mrf.mxu0
      %v9365 = vadd.f32 0.0, %v9364
      %v9366 = vpop.f32.mrf.mxu0
      %9367 = vdwg.mxu0
      %9368 = vmatprep.subr.bf16.mxu0 0
      %9369 = vmatpush1.bf16.msra.mxu0 %v8486
      %9370 = vmatprep.subr.bf16.mxu0 0
      %9371 = vmatpush1.bf16.msra.mxu0 %v8485
      %9372 = vmatprep.subr.bf16.mxu0 0
      %9373 = vmatpush1.bf16.msra.mxu0 %v8484
      %9374 = vmatprep.subr.bf16.mxu0 0
      %9375 = vmatpush1.bf16.msra.mxu0 %v8483
      %9376 = vmatprep.subr.bf16.mxu0 0
      %9377 = vmatpush1.bf16.msra.mxu0 %v8482
      %9378 = vmatprep.subr.bf16.mxu0 0
      %9379 = vmatpush1.bf16.msra.mxu0 %v8481
      %9380 = vmatprep.subr.bf16.mxu0 0
      %9381 = vmatpush1.bf16.msra.mxu0 %v8480
      %9382 = vmatprep.subr.bf16.mxu0 0
      %9383 = vmatpush1.bf16.msra.mxu0 %v8479
      %9384 = vmatprep.subr.bf16.mxu0 0
      %9385 = vmatpush2.bf16.msra.mxu0 0
      %9386 = vmatprep.subr.bf16.mxu0 0
      %9387 = vmatpush2.bf16.msra.mxu0 0
      %9388 = vmatprep.subr.bf16.mxu0 0
      %9389 = vmatpush2.bf16.msra.mxu0 0
      %9390 = vmatprep.subr.bf16.mxu0 0
      %9391 = vmatpush2.bf16.msra.mxu0 0
      %9392 = vmatprep.subr.bf16.mxu0 0
      %9393 = vmatpush2.bf16.msra.mxu0 0
      %9394 = vmatprep.subr.bf16.mxu0 0
      %9395 = vmatpush2.bf16.msra.mxu0 0
      %9396 = vmatprep.subr.bf16.mxu0 0
      %9397 = vmatpush2.bf16.msra.mxu0 0
      %9398 = vmatprep.subr.bf16.mxu0 0
      %9399 = vmatpush2.bf16.msra.mxu0 0
      %9400 = vmatprep.mubr.bf16.mxu0 0
      %9401 = vmatmul.mubr.bf16.gmra.mxu0 %v8948
      %v9402 = vpop.f32.mrf.mxu0
      %v9403 = vadd.f32 %v9338, %v9402
      %v9404 = vpop.f32.mrf.mxu0
      %v9405 = vpop.f32.mrf.mxu0
      %v9406 = vadd.f32 %v9341, %v9405
      %v9407 = vpop.f32.mrf.mxu0
      %9408 = vmatprep.mubr.bf16.mxu0 0
      %9409 = vmatmul.mubr.bf16.gmra.mxu0 %v8951
      %v9410 = vpop.f32.mrf.mxu0
      %v9411 = vadd.f32 %v9346, %v9410
      %v9412 = vpop.f32.mrf.mxu0
      %v9413 = vpop.f32.mrf.mxu0
      %v9414 = vadd.f32 %v9349, %v9413
      %v9415 = vpop.f32.mrf.mxu0
      %9416 = vmatprep.mubr.bf16.mxu0 0
      %9417 = vmatmul.mubr.bf16.gmra.mxu0 %v8954
      %v9418 = vpop.f32.mrf.mxu0
      %v9419 = vadd.f32 %v9354, %v9418
      %v9420 = vpop.f32.mrf.mxu0
      %v9421 = vpop.f32.mrf.mxu0
      %v9422 = vadd.f32 %v9357, %v9421
      %v9423 = vpop.f32.mrf.mxu0
      %9424 = vmatprep.mubr.bf16.mxu0 0
      %9425 = vmatmul.mubr.bf16.gmra.mxu0 %v9299
      %v9426 = vpop.f32.mrf.mxu0
      %v9427 = vadd.f32 %v9362, %v9426
      %v9428 = vpop.f32.mrf.mxu0
      %v9429 = vpop.f32.mrf.mxu0
      %v9430 = vadd.f32 %v9365, %v9429
      %v9431 = vpop.f32.mrf.mxu0
      %9432 = vdwg.mxu0
      %v9433 = vadd.f32 %v9274, %v9403
      %v9434 = vadd.f32 %v9275, %v9406
      %v9435 = vadd.f32 %v9276, %v9411
      %v9436 = vadd.f32 %v9277, %v9414
      %v9437 = vadd.f32 %v9278, %v9419
      %v9438 = vadd.f32 %v9279, %v9422
      %v9439 = vadd.f32 %v9280, %v9427
      %v9440 = vadd.f32 %v9281, %v9430
      %v9442 = vlaneseq
      %v9443 = vshrl.u32 %v9442, 7
      %v9444 = vsub.s32 0, %v9443
      %v9445 = vrot.slane %v467, %v9444
      %v9447 = vadd.f32 %v8641, %v9445
      %v9448 = vadd.f32 %v8642, %v9445
      %v9449 = vadd.f32 %v8643, %v9445
      %v9450 = vadd.f32 %v8644, %v9445
      %v9451 = vadd.f32 %v8645, %v9445
      %v9452 = vadd.f32 %v8646, %v9445
      %v9453 = vadd.f32 %v8647, %v9445
      %v9454 = vadd.f32 %v8648, %v9445
      %v9455 = vmax.f32 %v9447, 0.0
      %v9456 = vmax.f32 %v9448, 0.0
      %v9457 = vmax.f32 %v9449, 0.0
      %v9458 = vmax.f32 %v9450, 0.0
      %v9459 = vmax.f32 %v9451, 0.0
      %v9460 = vmax.f32 %v9452, 0.0
      %v9461 = vmax.f32 %v9453, 0.0
      %v9462 = vmax.f32 %v9454, 0.0
      %v9463 = vadd.f32 %v9433, %v9445
      %v9464 = vadd.f32 %v9434, %v9445
      %v9465 = vadd.f32 %v9435, %v9445
      %v9466 = vadd.f32 %v9436, %v9445
      %v9467 = vadd.f32 %v9437, %v9445
      %v9468 = vadd.f32 %v9438, %v9445
      %v9469 = vadd.f32 %v9439, %v9445
      %v9470 = vadd.f32 %v9440, %v9445
      %v9471 = vmax.f32 %v9463, 0.0
      %v9472 = vmax.f32 %v9464, 0.0
      %v9473 = vmax.f32 %v9465, 0.0
      %v9474 = vmax.f32 %v9466, 0.0
      %v9475 = vmax.f32 %v9467, 0.0
      %v9476 = vmax.f32 %v9468, 0.0
      %v9477 = vmax.f32 %v9469, 0.0
      %v9478 = vmax.f32 %v9470, 0.0
      %v9479 = vpack.c.bf16 %v9455, %v9455
      %v9480 = vpack.c.bf16 %v9456, %v9456
      %v9481 = vpack.c.bf16 %v9457, %v9457
      %v9482 = vpack.c.bf16 %v9458, %v9458
      %v9483 = vpack.c.bf16 %v9459, %v9459
      %v9484 = vpack.c.bf16 %v9460, %v9460
      %v9485 = vpack.c.bf16 %v9461, %v9461
      %v9486 = vpack.c.bf16 %v9462, %v9462
      %9487 = vst [vmem:[%s454] sm:$0xf] %v9479
      %9488 = vst [vmem:[%s454 + $0x4] sm:$0xf] %v9480
      %9489 = vst [vmem:[%s454 + $0x8] sm:$0xf] %v9481
      %9490 = vst [vmem:[%s454 + $0xc] sm:$0xf] %v9482
      %9491 = vst [vmem:[%s454 + $0x10] sm:$0xf] %v9483
      %9492 = vst [vmem:[%s454 + $0x14] sm:$0xf] %v9484
      %9493 = vst [vmem:[%s454 + $0x18] sm:$0xf] %v9485
      %9494 = vst [vmem:[%s454 + $0x1c] sm:$0xf] %v9486
      %v9495 = vpack.c.bf16 %v9471, %v9471
      %v9496 = vpack.c.bf16 %v9472, %v9472
      %v9497 = vpack.c.bf16 %v9473, %v9473
      %v9498 = vpack.c.bf16 %v9474, %v9474
      %v9499 = vpack.c.bf16 %v9475, %v9475
      %v9500 = vpack.c.bf16 %v9476, %v9476
      %v9501 = vpack.c.bf16 %v9477, %v9477
      %v9502 = vpack.c.bf16 %v9478, %v9478
      %s9503 = scalar_lea.vmem %s454, 32
      %9504 = vst [vmem:[%s9503] sm:$0xf] %v9495
      %9505 = vst [vmem:[%s9503 + $0x4] sm:$0xf] %v9496
      %9506 = vst [vmem:[%s9503 + $0x8] sm:$0xf] %v9497
      %9507 = vst [vmem:[%s9503 + $0xc] sm:$0xf] %v9498
      %9508 = vst [vmem:[%s9503 + $0x10] sm:$0xf] %v9499
      %9509 = vst [vmem:[%s9503 + $0x14] sm:$0xf] %v9500
      %9510 = vst [vmem:[%s9503 + $0x18] sm:$0xf] %v9501
      %9511 = vst [vmem:[%s9503 + $0x1c] sm:$0xf] %v9502
      %v9512 = vmax.f32 %v9455, %v9471
      %v9513 = vmax.f32 %v9456, %v9472
      %v9514 = vmax.f32 %v9457, %v9473
      %v9515 = vmax.f32 %v9458, %v9474
      %v9516 = vmax.f32 %v9459, %v9475
      %v9517 = vmax.f32 %v9460, %v9476
      %v9518 = vmax.f32 %v9461, %v9477
      %v9519 = vmax.f32 %v9462, %v9478
      %v9528 = vcombine.high %v9512, %v9512
      %v9530 = vunpack.c.l.s4 1983009808
      %v9531 = vunpack.c.0.s8 %v9530
      %v9532 = vlaneseq
      %v9533 = vshrl.u32 %v9532, 7
      %v9534 = vsub.s32 %v9531, %v9533
      %v9535 = vrot.slane %v9512, %v9534
      %v9537 = vunpack.c.l.s4 1983009808
      %v9538 = vunpack.c.0.s8 %v9537
      %v9539 = vlaneseq
      %v9540 = vshrl.u32 %v9539, 7
      %v9541 = vsub.s32 %v9538, %v9540
      %v9542 = vrot.slane %v9528, %v9541
      %v9543 = vcombine.high %v9535, %v9535
      %v9544 = vcombine.high %v9542, %v9542
      %v9545 = vcombine.high %v9513, %v9513
      %v9547 = vunpack.c.l.s4 1983009808
      %v9548 = vunpack.c.0.s8 %v9547
      %v9549 = vlaneseq
      %v9550 = vshrl.u32 %v9549, 7
      %v9551 = vsub.s32 %v9548, %v9550
      %v9552 = vrot.slane %v9513, %v9551
      %v9554 = vunpack.c.l.s4 1983009808
      %v9555 = vunpack.c.0.s8 %v9554
      %v9556 = vlaneseq
      %v9557 = vshrl.u32 %v9556, 7
      %v9558 = vsub.s32 %v9555, %v9557
      %v9559 = vrot.slane %v9545, %v9558
      %v9560 = vcombine.high %v9552, %v9552
      %v9561 = vcombine.high %v9559, %v9559
      %v9562 = vcombine.high %v9514, %v9514
      %v9564 = vunpack.c.l.s4 1983009808
      %v9565 = vunpack.c.0.s8 %v9564
      %v9566 = vlaneseq
      %v9567 = vshrl.u32 %v9566, 7
      %v9568 = vsub.s32 %v9565, %v9567
      %v9569 = vrot.slane %v9514, %v9568
      %v9571 = vunpack.c.l.s4 1983009808
      %v9572 = vunpack.c.0.s8 %v9571
      %v9573 = vlaneseq
      %v9574 = vshrl.u32 %v9573, 7
      %v9575 = vsub.s32 %v9572, %v9574
      %v9576 = vrot.slane %v9562, %v9575
      %v9577 = vcombine.high %v9569, %v9569
      %v9578 = vcombine.high %v9576, %v9576
      %v9579 = vcombine.high %v9515, %v9515
      %v9581 = vunpack.c.l.s4 1983009808
      %v9582 = vunpack.c.0.s8 %v9581
      %v9583 = vlaneseq
      %v9584 = vshrl.u32 %v9583, 7
      %v9585 = vsub.s32 %v9582, %v9584
      %v9586 = vrot.slane %v9515, %v9585
      %v9588 = vunpack.c.l.s4 1983009808
      %v9589 = vunpack.c.0.s8 %v9588
      %v9590 = vlaneseq
      %v9591 = vshrl.u32 %v9590, 7
      %v9592 = vsub.s32 %v9589, %v9591
      %v9593 = vrot.slane %v9579, %v9592
      %v9594 = vcombine.high %v9586, %v9586
      %v9595 = vcombine.high %v9593, %v9593
      %v9596 = vcombine.high %v9516, %v9516
      %v9598 = vunpack.c.l.s4 1983009808
      %v9599 = vunpack.c.0.s8 %v9598
      %v9600 = vlaneseq
      %v9601 = vshrl.u32 %v9600, 7
      %v9602 = vsub.s32 %v9599, %v9601
      %v9603 = vrot.slane %v9516, %v9602
      %v9605 = vunpack.c.l.s4 1983009808
      %v9606 = vunpack.c.0.s8 %v9605
      %v9607 = vlaneseq
      %v9608 = vshrl.u32 %v9607, 7
      %v9609 = vsub.s32 %v9606, %v9608
      %v9610 = vrot.slane %v9596, %v9609
      %v9611 = vcombine.high %v9603, %v9603
      %v9612 = vcombine.high %v9610, %v9610
      %v9613 = vcombine.high %v9517, %v9517
      %v9615 = vunpack.c.l.s4 1983009808
      %v9616 = vunpack.c.0.s8 %v9615
      %v9617 = vlaneseq
      %v9618 = vshrl.u32 %v9617, 7
      %v9619 = vsub.s32 %v9616, %v9618
      %v9620 = vrot.slane %v9517, %v9619
      %v9622 = vunpack.c.l.s4 1983009808
      %v9623 = vunpack.c.0.s8 %v9622
      %v9624 = vlaneseq
      %v9625 = vshrl.u32 %v9624, 7
      %v9626 = vsub.s32 %v9623, %v9625
      %v9627 = vrot.slane %v9613, %v9626
      %v9628 = vcombine.high %v9620, %v9620
      %v9629 = vcombine.high %v9627, %v9627
      %v9630 = vcombine.high %v9518, %v9518
      %v9632 = vunpack.c.l.s4 1983009808
      %v9633 = vunpack.c.0.s8 %v9632
      %v9634 = vlaneseq
      %v9635 = vshrl.u32 %v9634, 7
      %v9636 = vsub.s32 %v9633, %v9635
      %v9637 = vrot.slane %v9518, %v9636
      %v9639 = vunpack.c.l.s4 1983009808
      %v9640 = vunpack.c.0.s8 %v9639
      %v9641 = vlaneseq
      %v9642 = vshrl.u32 %v9641, 7
      %v9643 = vsub.s32 %v9640, %v9642
      %v9644 = vrot.slane %v9630, %v9643
      %v9645 = vcombine.high %v9637, %v9637
      %v9646 = vcombine.high %v9644, %v9644
      %v9647 = vcombine.high %v9519, %v9519
      %v9649 = vunpack.c.l.s4 1983009808
      %v9650 = vunpack.c.0.s8 %v9649
      %v9651 = vlaneseq
      %v9652 = vshrl.u32 %v9651, 7
      %v9653 = vsub.s32 %v9650, %v9652
      %v9654 = vrot.slane %v9519, %v9653
      %v9656 = vunpack.c.l.s4 1983009808
      %v9657 = vunpack.c.0.s8 %v9656
      %v9658 = vlaneseq
      %v9659 = vshrl.u32 %v9658, 7
      %v9660 = vsub.s32 %v9657, %v9659
      %v9661 = vrot.slane %v9647, %v9660
      %v9662 = vcombine.high %v9654, %v9654
      %v9663 = vcombine.high %v9661, %v9661
      %v9696 = vmax.f32 %v9535, %v9552
      %v9697 = vmax.f32 %v9543, %v9560
      %v9698 = vmax.f32 %v9542, %v9559
      %v9699 = vmax.f32 %v9544, %v9561
      %v9700 = vmax.f32 %v9569, %v9586
      %v9701 = vmax.f32 %v9577, %v9594
      %v9702 = vmax.f32 %v9576, %v9593
      %v9703 = vmax.f32 %v9578, %v9595
      %v9704 = vmax.f32 %v9603, %v9620
      %v9705 = vmax.f32 %v9611, %v9628
      %v9706 = vmax.f32 %v9610, %v9627
      %v9707 = vmax.f32 %v9612, %v9629
      %v9708 = vmax.f32 %v9637, %v9654
      %v9709 = vmax.f32 %v9645, %v9662
      %v9710 = vmax.f32 %v9644, %v9661
      %v9711 = vmax.f32 %v9646, %v9663
      %v9728 = vrot.slane %v9696, 7
      %v9729 = vrot.slane %v9728, 2
      %v9730 = vrot.slane %v9697, 7
      %v9731 = vrot.slane %v9730, 2
      %v9732 = vrot.slane %v9698, 7
      %v9733 = vrot.slane %v9732, 2
      %v9734 = vrot.slane %v9699, 7
      %v9735 = vrot.slane %v9734, 2
      %v9736 = vrot.slane %v9700, 7
      %v9737 = vrot.slane %v9736, 2
      %v9738 = vrot.slane %v9701, 7
      %v9739 = vrot.slane %v9738, 2
      %v9740 = vrot.slane %v9702, 7
      %v9741 = vrot.slane %v9740, 2
      %v9742 = vrot.slane %v9703, 7
      %v9743 = vrot.slane %v9742, 2
      %v9744 = vrot.slane %v9704, 7
      %v9745 = vrot.slane %v9744, 2
      %v9746 = vrot.slane %v9705, 7
      %v9747 = vrot.slane %v9746, 2
      %v9748 = vrot.slane %v9706, 7
      %v9749 = vrot.slane %v9748, 2
      %v9750 = vrot.slane %v9707, 7
      %v9751 = vrot.slane %v9750, 2
      %v9752 = vrot.slane %v9708, 7
      %v9753 = vrot.slane %v9752, 2
      %v9754 = vrot.slane %v9709, 7
      %v9755 = vrot.slane %v9754, 2
      %v9756 = vrot.slane %v9710, 7
      %v9757 = vrot.slane %v9756, 2
      %v9758 = vrot.slane %v9711, 7
      %v9759 = vrot.slane %v9758, 2
      %v9776 = vmax.f32 %v9696, %v9729
      %v9777 = vmax.f32 %v9697, %v9731
      %v9778 = vmax.f32 %v9698, %v9733
      %v9779 = vmax.f32 %v9699, %v9735
      %v9780 = vmax.f32 %v9700, %v9737
      %v9781 = vmax.f32 %v9701, %v9739
      %v9782 = vmax.f32 %v9702, %v9741
      %v9783 = vmax.f32 %v9703, %v9743
      %v9784 = vmax.f32 %v9704, %v9745
      %v9785 = vmax.f32 %v9705, %v9747
      %v9786 = vmax.f32 %v9706, %v9749
      %v9787 = vmax.f32 %v9707, %v9751
      %v9788 = vmax.f32 %v9708, %v9753
      %v9789 = vmax.f32 %v9709, %v9755
      %v9790 = vmax.f32 %v9710, %v9757
      %v9791 = vmax.f32 %v9711, %v9759
      %v9792 = vpack.c.bf16 %v9776, %v9776
      %v9793 = vpack.c.bf16 %v9777, %v9777
      %v9794 = vpack.c.bf16 %v9778, %v9778
      %v9795 = vpack.c.bf16 %v9779, %v9779
      %v9796 = vpack.c.bf16 %v9780, %v9780
      %v9797 = vpack.c.bf16 %v9781, %v9781
      %v9798 = vpack.c.bf16 %v9782, %v9782
      %v9799 = vpack.c.bf16 %v9783, %v9783
      %v9800 = vpack.c.bf16 %v9784, %v9784
      %v9801 = vpack.c.bf16 %v9785, %v9785
      %v9802 = vpack.c.bf16 %v9786, %v9786
      %v9803 = vpack.c.bf16 %v9787, %v9787
      %v9804 = vpack.c.bf16 %v9788, %v9788
      %v9805 = vpack.c.bf16 %v9789, %v9789
      %v9806 = vpack.c.bf16 %v9790, %v9790
      %v9807 = vpack.c.bf16 %v9791, %v9791
      %v9825 = vunpack.c.l.s4 1983009808
      %v9826 = vunpack.c.0.s8 %v9825
      %v9827 = vlaneseq
      %v9828 = vshrl.u32 %v9827, 7
      %v9829 = vsub.s32 %v9826, %v9828
      %v9830 = vrot.slane %v9792, %v9829
      %v9832 = vunpack.c.l.s4 1983009808
      %v9833 = vunpack.c.0.s8 %v9832
      %v9834 = vlaneseq
      %v9835 = vshrl.u32 %v9834, 7
      %v9836 = vsub.s32 %v9833, %v9835
      %v9837 = vrot.slane %v9793, %v9836
      %v9839 = vunpack.c.l.s4 1983009808
      %v9840 = vunpack.c.0.s8 %v9839
      %v9841 = vlaneseq
      %v9842 = vshrl.u32 %v9841, 7
      %v9843 = vsub.s32 %v9840, %v9842
      %v9844 = vrot.slane %v9794, %v9843
      %v9846 = vunpack.c.l.s4 1983009808
      %v9847 = vunpack.c.0.s8 %v9846
      %v9848 = vlaneseq
      %v9849 = vshrl.u32 %v9848, 7
      %v9850 = vsub.s32 %v9847, %v9849
      %v9851 = vrot.slane %v9795, %v9850
      %v9853 = vunpack.c.l.s4 1983009808
      %v9854 = vunpack.c.0.s8 %v9853
      %v9855 = vlaneseq
      %v9856 = vshrl.u32 %v9855, 7
      %v9857 = vsub.s32 %v9854, %v9856
      %v9858 = vrot.slane %v9796, %v9857
      %v9860 = vunpack.c.l.s4 1983009808
      %v9861 = vunpack.c.0.s8 %v9860
      %v9862 = vlaneseq
      %v9863 = vshrl.u32 %v9862, 7
      %v9864 = vsub.s32 %v9861, %v9863
      %v9865 = vrot.slane %v9797, %v9864
      %v9867 = vunpack.c.l.s4 1983009808
      %v9868 = vunpack.c.0.s8 %v9867
      %v9869 = vlaneseq
      %v9870 = vshrl.u32 %v9869, 7
      %v9871 = vsub.s32 %v9868, %v9870
      %v9872 = vrot.slane %v9798, %v9871
      %v9874 = vunpack.c.l.s4 1983009808
      %v9875 = vunpack.c.0.s8 %v9874
      %v9876 = vlaneseq
      %v9877 = vshrl.u32 %v9876, 7
      %v9878 = vsub.s32 %v9875, %v9877
      %v9879 = vrot.slane %v9799, %v9878
      %v9881 = vunpack.c.l.s4 1983009808
      %v9882 = vunpack.c.0.s8 %v9881
      %v9883 = vlaneseq
      %v9884 = vshrl.u32 %v9883, 7
      %v9885 = vsub.s32 %v9882, %v9884
      %v9886 = vrot.slane %v9800, %v9885
      %v9888 = vunpack.c.l.s4 1983009808
      %v9889 = vunpack.c.0.s8 %v9888
      %v9890 = vlaneseq
      %v9891 = vshrl.u32 %v9890, 7
      %v9892 = vsub.s32 %v9889, %v9891
      %v9893 = vrot.slane %v9801, %v9892
      %v9895 = vunpack.c.l.s4 1983009808
      %v9896 = vunpack.c.0.s8 %v9895
      %v9897 = vlaneseq
      %v9898 = vshrl.u32 %v9897, 7
      %v9899 = vsub.s32 %v9896, %v9898
      %v9900 = vrot.slane %v9802, %v9899
      %v9902 = vunpack.c.l.s4 1983009808
      %v9903 = vunpack.c.0.s8 %v9902
      %v9904 = vlaneseq
      %v9905 = vshrl.u32 %v9904, 7
      %v9906 = vsub.s32 %v9903, %v9905
      %v9907 = vrot.slane %v9803, %v9906
      %v9909 = vunpack.c.l.s4 1983009808
      %v9910 = vunpack.c.0.s8 %v9909
      %v9911 = vlaneseq
      %v9912 = vshrl.u32 %v9911, 7
      %v9913 = vsub.s32 %v9910, %v9912
      %v9914 = vrot.slane %v9804, %v9913
      %v9916 = vunpack.c.l.s4 1983009808
      %v9917 = vunpack.c.0.s8 %v9916
      %v9918 = vlaneseq
      %v9919 = vshrl.u32 %v9918, 7
      %v9920 = vsub.s32 %v9917, %v9919
      %v9921 = vrot.slane %v9805, %v9920
      %v9923 = vunpack.c.l.s4 1983009808
      %v9924 = vunpack.c.0.s8 %v9923
      %v9925 = vlaneseq
      %v9926 = vshrl.u32 %v9925, 7
      %v9927 = vsub.s32 %v9924, %v9926
      %v9928 = vrot.slane %v9806, %v9927
      %v9930 = vunpack.c.l.s4 1983009808
      %v9931 = vunpack.c.0.s8 %v9930
      %v9932 = vlaneseq
      %v9933 = vshrl.u32 %v9932, 7
      %v9934 = vsub.s32 %v9931, %v9933
      %v9935 = vrot.slane %v9807, %v9934
      %v9937 = vunpack.c.l.s4 1983009808
      %v9938 = vunpack.c.0.s8 %v9937
      %v9939 = vlaneseq
      %v9940 = vshrl.u32 %v9939, 7
      %v9941 = vsub.s32 %v9938, %v9940
      %v9942 = vrot.slane %v9830, %v9941
      %v9944 = vunpack.c.l.s4 1983009808
      %v9945 = vunpack.c.0.s8 %v9944
      %v9946 = vlaneseq
      %v9947 = vshrl.u32 %v9946, 7
      %v9948 = vsub.s32 %v9945, %v9947
      %v9949 = vrot.slane %v9837, %v9948
      %v9951 = vunpack.c.l.s4 1983009808
      %v9952 = vunpack.c.0.s8 %v9951
      %v9953 = vlaneseq
      %v9954 = vshrl.u32 %v9953, 7
      %v9955 = vsub.s32 %v9952, %v9954
      %v9956 = vrot.slane %v9844, %v9955
      %v9958 = vunpack.c.l.s4 1983009808
      %v9959 = vunpack.c.0.s8 %v9958
      %v9960 = vlaneseq
      %v9961 = vshrl.u32 %v9960, 7
      %v9962 = vsub.s32 %v9959, %v9961
      %v9963 = vrot.slane %v9851, %v9962
      %v9965 = vunpack.c.l.s4 1983009808
      %v9966 = vunpack.c.0.s8 %v9965
      %v9967 = vlaneseq
      %v9968 = vshrl.u32 %v9967, 7
      %v9969 = vsub.s32 %v9966, %v9968
      %v9970 = vrot.slane %v9858, %v9969
      %v9972 = vunpack.c.l.s4 1983009808
      %v9973 = vunpack.c.0.s8 %v9972
      %v9974 = vlaneseq
      %v9975 = vshrl.u32 %v9974, 7
      %v9976 = vsub.s32 %v9973, %v9975
      %v9977 = vrot.slane %v9865, %v9976
      %v9979 = vunpack.c.l.s4 1983009808
      %v9980 = vunpack.c.0.s8 %v9979
      %v9981 = vlaneseq
      %v9982 = vshrl.u32 %v9981, 7
      %v9983 = vsub.s32 %v9980, %v9982
      %v9984 = vrot.slane %v9872, %v9983
      %v9986 = vunpack.c.l.s4 1983009808
      %v9987 = vunpack.c.0.s8 %v9986
      %v9988 = vlaneseq
      %v9989 = vshrl.u32 %v9988, 7
      %v9990 = vsub.s32 %v9987, %v9989
      %v9991 = vrot.slane %v9879, %v9990
      %v9993 = vunpack.c.l.s4 1983009808
      %v9994 = vunpack.c.0.s8 %v9993
      %v9995 = vlaneseq
      %v9996 = vshrl.u32 %v9995, 7
      %v9997 = vsub.s32 %v9994, %v9996
      %v9998 = vrot.slane %v9886, %v9997
      %v10000 = vunpack.c.l.s4 1983009808
      %v10001 = vunpack.c.0.s8 %v10000
      %v10002 = vlaneseq
      %v10003 = vshrl.u32 %v10002, 7
      %v10004 = vsub.s32 %v10001, %v10003
      %v10005 = vrot.slane %v9893, %v10004
      %v10007 = vunpack.c.l.s4 1983009808
      %v10008 = vunpack.c.0.s8 %v10007
      %v10009 = vlaneseq
      %v10010 = vshrl.u32 %v10009, 7
      %v10011 = vsub.s32 %v10008, %v10010
      %v10012 = vrot.slane %v9900, %v10011
      %v10014 = vunpack.c.l.s4 1983009808
      %v10015 = vunpack.c.0.s8 %v10014
      %v10016 = vlaneseq
      %v10017 = vshrl.u32 %v10016, 7
      %v10018 = vsub.s32 %v10015, %v10017
      %v10019 = vrot.slane %v9907, %v10018
      %v10021 = vunpack.c.l.s4 1983009808
      %v10022 = vunpack.c.0.s8 %v10021
      %v10023 = vlaneseq
      %v10024 = vshrl.u32 %v10023, 7
      %v10025 = vsub.s32 %v10022, %v10024
      %v10026 = vrot.slane %v9914, %v10025
      %v10028 = vunpack.c.l.s4 1983009808
      %v10029 = vunpack.c.0.s8 %v10028
      %v10030 = vlaneseq
      %v10031 = vshrl.u32 %v10030, 7
      %v10032 = vsub.s32 %v10029, %v10031
      %v10033 = vrot.slane %v9921, %v10032
      %v10035 = vunpack.c.l.s4 1983009808
      %v10036 = vunpack.c.0.s8 %v10035
      %v10037 = vlaneseq
      %v10038 = vshrl.u32 %v10037, 7
      %v10039 = vsub.s32 %v10036, %v10038
      %v10040 = vrot.slane %v9928, %v10039
      %v10042 = vunpack.c.l.s4 1983009808
      %v10043 = vunpack.c.0.s8 %v10042
      %v10044 = vlaneseq
      %v10045 = vshrl.u32 %v10044, 7
      %v10046 = vsub.s32 %v10043, %v10045
      %v10047 = vrot.slane %v9935, %v10046
      %v10048 = vunpack.c.l.b16 %v9942
      %v10049 = vunpack.c.l.b16 %v9949
      %v10050 = vunpack.c.l.b16 %v9956
      %v10051 = vunpack.c.l.b16 %v9963
      %v10052 = vunpack.c.l.b16 %v9970
      %v10053 = vunpack.c.l.b16 %v9977
      %v10054 = vunpack.c.l.b16 %v9984
      %v10055 = vunpack.c.l.b16 %v9991
      %v10056 = vunpack.c.l.b16 %v9998
      %v10057 = vunpack.c.l.b16 %v10005
      %v10058 = vunpack.c.l.b16 %v10012
      %v10059 = vunpack.c.l.b16 %v10019
      %v10060 = vunpack.c.l.b16 %v10026
      %v10061 = vunpack.c.l.b16 %v10033
      %v10062 = vunpack.c.l.b16 %v10040
      %v10063 = vunpack.c.l.b16 %v10047
      %v10064 = vrot.slane %v10049, 7
      %vm10065 = vcmask 1041409
      %v10066 = vsel %vm10065, %v10064, %v10048
      %v10067 = vrot.slane %v10050, 6
      %vm10068 = vcmask 1042434
      %v10069 = vsel %vm10068, %v10067, %v10066
      %v10070 = vrot.slane %v10051, 5
      %vm10071 = vcmask 1043459
      %v10072 = vsel %vm10071, %v10070, %v10069
      %v10073 = vrot.slane %v10053, 7
      %v10074 = vsel %vm10065, %v10073, %v10052
      %v10075 = vrot.slane %v10054, 6
      %v10076 = vsel %vm10068, %v10075, %v10074
      %v10077 = vrot.slane %v10055, 5
      %v10078 = vsel %vm10071, %v10077, %v10076
      %v10079 = vrot.slane %v10057, 7
      %v10080 = vsel %vm10065, %v10079, %v10056
      %v10081 = vrot.slane %v10058, 6
      %v10082 = vsel %vm10068, %v10081, %v10080
      %v10083 = vrot.slane %v10059, 5
      %v10084 = vsel %vm10071, %v10083, %v10082
      %v10085 = vrot.slane %v10061, 7
      %v10086 = vsel %vm10065, %v10085, %v10060
      %v10087 = vrot.slane %v10062, 6
      %v10088 = vsel %vm10068, %v10087, %v10086
      %v10089 = vrot.slane %v10063, 5
      %v10090 = vsel %vm10071, %v10089, %v10088
      %v10091 = vpack.c.b16 %v10072, %v10072
      %v10092 = vpack.c.b16 %v10078, %v10078
      %v10093 = vpack.c.b16 %v10084, %v10084
      %v10094 = vpack.c.b16 %v10090, %v10090
      %v10096 = vunpack.c.l.s4 1983009808
      %v10097 = vunpack.c.0.s8 %v10096
      %v10098 = vlaneseq
      %v10099 = vshrl.u32 %v10098, 7
      %v10100 = vsub.s32 %v10097, %v10099
      %v10101 = vrot.slane %v10091, %v10100
      %v10103 = vunpack.c.l.s4 1983009808
      %v10104 = vunpack.c.0.s8 %v10103
      %v10105 = vlaneseq
      %v10106 = vshrl.u32 %v10105, 7
      %v10107 = vsub.s32 %v10104, %v10106
      %v10108 = vrot.slane %v10092, %v10107
      %v10110 = vunpack.c.l.s4 1983009808
      %v10111 = vunpack.c.0.s8 %v10110
      %v10112 = vlaneseq
      %v10113 = vshrl.u32 %v10112, 7
      %v10114 = vsub.s32 %v10111, %v10113
      %v10115 = vrot.slane %v10093, %v10114
      %v10117 = vunpack.c.l.s4 1983009808
      %v10118 = vunpack.c.0.s8 %v10117
      %v10119 = vlaneseq
      %v10120 = vshrl.u32 %v10119, 7
      %v10121 = vsub.s32 %v10118, %v10120
      %v10122 = vrot.slane %v10094, %v10121
      %10127 = vst [vmem:[%s464] sm:$0x3] %v10101
      %10128 = vst [vmem:[%s464 + $0x2] sm:$0x3] %v10108
      %10129 = vst [vmem:[%s464 + $0x4] sm:$0x3] %v10115
      %10130 = vst [vmem:[%s464 + $0x6] sm:$0x3] %v10122
      %s10131 = smul.u32 2, %s25
      %p10132 = scmp.lt.s32.totalorder %s24, 1
      %s10133 = scalar_select %p10132, %s24, 1
      %p10134 = scmp.lt.s32.totalorder %s10131, 7
      %s10135 = scalar_select %p10134, %s10131, 7
      %s10136 = smul.addr %s10135, 8
      %s10137 = smul.addr %s10133, 64
      %s10138 = sadd.s32 %s10136, %s10137
      %s10139 = smul.addr %s10138, 4
      %s10140 = scalar_lea.vmem %s7, %s10139
      %p10141 = scmp.lt.s32.totalorder %s24, 1
      %s10142 = scalar_select %p10141, %s24, 1
      %p10143 = scmp.lt.s32.totalorder %s25, 3
      %s10144 = scalar_select %p10143, %s25, 3
      %s10145 = smul.addr %s10144, 4
      %s10146 = smul.addr %s10142, 16
      %s10147 = sadd.s32 %s10145, %s10146
      %s10148 = smul.addr %s10147, 2
      %s10149 = scalar_lea.vmem %s8, %s10148
      // Predicated region
      $region61: #{downconv_forward.1} parent=47 // pred_check
        %p10150 = pneg %p224
      $region62: #{downconv_forward.1} parent=47 // pred_check_branch
        %10152 = sbr.rel (%p10150) target = $region64
      $region63: #{downconv_forward.1} parent=47 // pred_region
        %s10153 = smul.u32 2, %s25
      $region64: #{downconv_forward.1} parent=47 // pred_fallthru
        _
      // Predicated region
      $region65: #{downconv_forward.1} parent=47 // pred_check
        %p10154 = pneg %p252
      $region66: #{downconv_forward.1} parent=47 // pred_check_branch
        %10156 = sbr.rel (%p10154) target = $region68
      $region67: #{downconv_forward.1} parent=47 // pred_region
        _
      $region68: #{downconv_forward.1} parent=47 // pred_fallthru
        _
    $region48: #{downconv_forward.1} parent=5 // pred_fallthru
      _
    %p10157 = scmp.le.s32.totalorder 2, %s15
    // Predicated region
    $region69: #{downconv_forward.1} parent=5 // pred_check
      %p10158 = pneg %p10157
    $region70: #{downconv_forward.1} parent=5 // pred_check_branch
      %10160 = sbr.rel (%p10158) target = $region72
    $region71: #{downconv_forward.1} parent=5 // pred_region
      %s10161 = ssub.s32 %s15, 2
      // Predicated region
      $region73: #{downconv_forward.1} parent=71 // pred_check
        %p10162 = pneg %p230
      $region74: #{downconv_forward.1} parent=71 // pred_check_branch
        %10164 = sbr.rel (%p10162) target = $region76
      $region75: #{downconv_forward.1} parent=71 // pred_region
        %s10165 = smul.u32 2, %s27
        %p10166 = scmp.lt.s32.totalorder %s26, 1
        %s10167 = scalar_select %p10166, %s26, 1
        %p10168 = scmp.lt.s32.totalorder %s10165, 7
        %s10169 = scalar_select %p10168, %s10165, 7
        %s10170 = smul.addr %s10169, 8
        %s10171 = smul.addr %s10167, 64
        %s10172 = sadd.s32 %s10170, %s10171
        %s10173 = smul.addr %s10172, 4
        %s10174 = scalar_lea.vmem %s7, %s10173
      $region76: #{downconv_forward.1} parent=71 // pred_fallthru
        _
      // Predicated region
      $region77: #{downconv_forward.1} parent=71 // pred_check
        %p10175 = pneg %p258
      $region78: #{downconv_forward.1} parent=71 // pred_check_branch
        %10177 = sbr.rel (%p10175) target = $region80
      $region79: #{downconv_forward.1} parent=71 // pred_region
        %p10178 = scmp.lt.s32.totalorder %s26, 1
        %s10179 = scalar_select %p10178, %s26, 1
        %p10180 = scmp.lt.s32.totalorder %s27, 3
        %s10181 = scalar_select %p10180, %s27, 3
        %s10182 = smul.addr %s10181, 4
        %s10183 = smul.addr %s10179, 16
        %s10184 = sadd.s32 %s10182, %s10183
        %s10185 = smul.addr %s10184, 2
        %s10186 = scalar_lea.vmem %s8, %s10185
      $region80: #{downconv_forward.1} parent=71 // pred_fallthru
        _
    $region72: #{downconv_forward.1} parent=5 // pred_fallthru
      _
  $region6: #{downconv_forward.1} parent=0 // loop_footer
    %s19 = sadd.s32 1, %s15
  $region7: #{downconv_forward.1} parent=0 // loop_footer_branch
    %14 = sbr.rel target = $region3
  $region8: #{downconv_forward.1} parent=0 // loop_exit
    _

</llo_original>
